<compile_context>
chip_gen: v6e
topology: v6e:2x2x1
jax: 0.10.0
libtpu: 0.0.40
codegen_flags: <defaults>
</compile_context>

<pallas_src>
import functools

import numpy as np
import jax
import jax.numpy as jnp
from jax.experimental import pallas as pl
from jax.experimental.pallas import tpu as pltpu

CONV_C = 128        # conv width: lane-dense stores, full MXU N
NUM_LOGITS = 10     # per-branch classifier width
STEM_K = 128        # stem im2col contraction, zero padded (pd: 9*3=27, fd: 9*12=108)

MEAN = (0.4914, 0.4822, 0.4465)
STD = (0.2023, 0.1994, 0.201)


def _round_up(x, m):
    return (x + m - 1) // m * m


def _vmem_limit_bytes():
    """Generation-aware VMEM budget (v7x: 64 MiB/TC, v5e/v6e: 128 MiB)."""
    try:
        cap = int(pltpu.get_tpu_info().vmem_capacity_bytes)
    except Exception:                      # be conservative: assume v7x
        cap = 64 * 1024 * 1024
    return int(max(32 * 1024 * 1024, min(cap * 3 // 4, 96 * 1024 * 1024)))


# ------------------------------ Pallas kernel -------------------------------

def _branch_body(x, mask, w1_ref, b1_ref, w2_ref, b2_ref, w3_ref, b3_ref,
                 fw_ref, fb_ref, Hp, Wp, inv_hw):
    """One branch: stem matmul -> conv -> conv(+residual) -> GAP -> FC.

    x    : (Mp, STEM_K) bf16 stem im2col rows over the zero-padded (Hp, Wp) grid
           (row-major, Mp = Hp*Wp rounded up to 16; extra rows are zero).
    mask : (Mp, 1) f32, 1 at interior padded positions, 0 on the border/pad rows.
    Activations live in the flat padded layout so every 3x3 tap is a sublane
    roll (XLU) — no unaligned slices, no HBM traffic between layers.
    """
    Mp = x.shape[0]

    def conv_patches(a):
        # a: (Mp, C) f32, zero outside the interior -> (Mp, 9C) bf16 im2col.
        taps = []
        for kh in range(3):
            for kw in range(3):
                off = (kh - 1) * Wp + (kw - 1)      # patch[p] = a[p + off]
                if off == 0:
                    taps.append(a)
                else:
                    taps.append(pltpu.roll(a, (-off) % Mp, axis=0))
        return jnp.concatenate(taps, axis=-1).astype(jnp.bfloat16)

    # layer 1 (stem): single MXU matmul over the wrapper-built im2col.
    h = jnp.dot(x, w1_ref[...], preferred_element_type=jnp.float32) + b1_ref[...]
    h = jnp.maximum(h, 0.0) * mask                       # zero border -> SAME pad

    # layer 2: 3x3 conv, 9 taps merged into one K=9C matmul.
    r = jnp.dot(conv_patches(h), w2_ref[...],
                preferred_element_type=jnp.float32) + b2_ref[...]
    r = jnp.maximum(r, 0.0) * mask

    # layer 3: 3x3 conv + residual (h) + ReLU.
    y = jnp.dot(conv_patches(r), w3_ref[...],
                preferred_element_type=jnp.float32) + b3_ref[...]
    y = jnp.maximum(y + h, 0.0) * mask

    # GAP (border/pad rows are zero, so a full-row sum equals the interior sum)
    pooled = jnp.sum(y, axis=0, keepdims=True) * inv_hw          # (1, C)
    return jnp.dot(pooled, fw_ref[...],
                   preferred_element_type=jnp.float32) + fb_ref[...]  # (1, nlog)


def _combined_kernel(xp_ref, xf_ref, pmask_ref, fmask_ref,
                     p_w1, p_b1, p_w2, p_b2, p_w3, p_b3, p_fw, p_fb,
                     f_w1, f_b1, f_w2, f_b2, f_w3, f_b3, f_fw, f_fb,
                     h_w1a, h_w1b, h_b1, h_w2, h_b2,
                     o_ref, *, pd_geom, fd_geom):
    """Full CombinedDetector forward for one image (one grid step)."""
    pd_logits = _branch_body(xp_ref[0], pmask_ref[...],
                             p_w1, p_b1, p_w2, p_b2, p_w3, p_b3, p_fw, p_fb,
                             *pd_geom)
    fd_logits = _branch_body(xf_ref[0], fmask_ref[...],
                             f_w1, f_b1, f_w2, f_b2, f_w3, f_b3, f_fw, f_fb,
                             *fd_geom)

    # SID head: concat folded via split first-layer weights.
    z = (jnp.dot(pd_logits, h_w1a[...], preferred_element_type=jnp.float32)
         + jnp.dot(fd_logits, h_w1b[...], preferred_element_type=jnp.float32)
         + h_b1[...])
    z = jnp.maximum(z, 0.0)
    logits = jnp.dot(z, h_w2[...],
                     preferred_element_type=jnp.float32) + h_b2[...]     # (1, 3)

    m = jnp.max(logits, axis=-1, keepdims=True)
    e = jnp.exp(logits - m)
    prob = e / jnp.sum(e, axis=-1, keepdims=True)                        # exact
    p_adv = jnp.maximum(prob[:, 1:2], prob[:, 2:3])
    o_ref[...] = jnp.concatenate([prob[:, 0:1], p_adv], axis=-1).reshape(1, 1, 2)


# --------------------------------- wrappers ---------------------------------

def _normalize(x):
    mean = jnp.asarray(MEAN, jnp.float32)
    inv_std = 1.0 / jnp.asarray(STD, jnp.float32)
    return (x - mean) * inv_std


def _space_to_depth2(x):
    # (B, H, W, C) -> (B, H/2, W/2, 4C); channel order (u, v, c)
    B, H, W, C = x.shape
    x = x.reshape(B, H // 2, 2, W // 2, 2, C)
    x = jnp.transpose(x, (0, 1, 3, 2, 4, 5))
    return x.reshape(B, H // 2, W // 2, 4 * C)


def _haar_mix():
    """12x12 matrix mapping space-to-depth channels (u,v,c) -> Haar DWT channels
    (band, c), band order [ll, lh, hl, hh]."""
    signs = jnp.asarray(
        [[[1, 1], [1, 1]],       # ll: a + b + c + d
         [[1, -1], [1, -1]],     # lh: a - b + c - d
         [[1, 1], [-1, -1]],     # hl: a + b - c - d
         [[1, -1], [-1, 1]]],    # hh: a - b - c + d
        jnp.float32)             # indexed [band, u, v]
    eye = jnp.eye(3, dtype=jnp.float32)
    d = 0.5 * signs[:, None, :, :, None] * eye[None, :, None, None, :]
    return d.reshape(12, 12)     # [band*3 + c_out, u*6 + v*3 + c_in]


def _stem_cols(x):
    """(B, H, W, C) -> (B, Mp, STEM_K) bf16 stem im2col over the padded output
    grid (Hp=H+2, Wp=W+2).  Tiny (C<=12) XLA producer; the matmul stays on MXU."""
    B, H, W, C = x.shape
    assert 9 * C <= STEM_K
    Hp, Wp = H + 2, W + 2
    M = Hp * Wp
    Mp = _round_up(M, 16)
    xp2 = jnp.pad(x, ((0, 0), (2, 2), (2, 2), (0, 0)))
    cols = jnp.concatenate(
        [xp2[:, kh:kh + Hp, kw:kw + Wp, :] for kh in range(3) for kw in range(3)],
        axis=-1).reshape(B, M, 9 * C)
    cols = jnp.pad(cols, ((0, 0), (0, Mp - M), (0, STEM_K - 9 * C)))
    return cols.astype(jnp.bfloat16), (Hp, Wp, Mp)


def _interior_mask(Hp, Wp, Mp):
    m = np.zeros((Hp, Wp), np.float32)
    m[1:-1, 1:-1] = 1.0
    m = np.pad(m.reshape(Hp * Wp, 1), ((0, Mp - Hp * Wp), (0, 0)))
    return jnp.asarray(m)


def _const_spec(shape):
    nd = len(shape)

    def imap(b):
        return (0,) * nd

    return pl.BlockSpec(shape, imap)


def combined_detector(data_nchw, pp):
    """Forward pass; `pp` are prepared params from `prepare_params`."""
    x = jnp.transpose(data_nchw, (0, 2, 3, 1)).astype(jnp.float32)   # NCHW->NHWC
    xn = _normalize(x)
    B, H, W, _ = xn.shape
    assert H % 2 == 0 and W % 2 == 0

    xp_cols, (pHp, pWp, pMp) = _stem_cols(xn)
    xf_cols, (fHp, fWp, fMp) = _stem_cols(_space_to_depth2(xn))
    pd_mask = _interior_mask(pHp, pWp, pMp)
    fd_mask = _interior_mask(fHp, fWp, fMp)

    pd, fd, hd = pp["pd"], pp["fd"], pp["head"]

    in_specs = [
        pl.BlockSpec((1, pMp, STEM_K), lambda b: (b, 0, 0)),
        pl.BlockSpec((1, fMp, STEM_K), lambda b: (b, 0, 0)),
        _const_spec(pd_mask.shape),
        _const_spec(fd_mask.shape),
    ]
    args = [xp_cols, xf_cols, pd_mask, fd_mask]
    for br in (pd, fd):
        for k in ("w1", "b1", "w2", "b2", "w3", "b3", "fw", "fb"):
            in_specs.append(_const_spec(br[k].shape))
            args.append(br[k])
    for k in ("w1a", "w1b", "b1", "w2", "b2"):
        in_specs.append(_const_spec(hd[k].shape))
        args.append(hd[k])

    kern = functools.partial(
        _combined_kernel,
        pd_geom=(pHp, pWp, 1.0 / float(H * W)),
        fd_geom=(fHp, fWp, 1.0 / float((H // 2) * (W // 2))),
    )
    out = pl.pallas_call(
        kern,
        out_shape=jax.ShapeDtypeStruct((B, 1, 2), jnp.float32),
        grid_spec=pltpu.PrefetchScalarGridSpec(
            num_scalar_prefetch=0,
            grid=(B,),
            in_specs=in_specs,
            out_specs=pl.BlockSpec((1, 1, 2), lambda b: (b, 0, 0)),
        ),
        compiler_params=pltpu.CompilerParams(
            dimension_semantics=("parallel",),
            vmem_limit_bytes=_vmem_limit_bytes(),
        ),
    )(*args)
    return out.reshape(B, 2)


# ----------------------- parameter prep (hoisted, once) ---------------------

def prepare_params(params):
    """Hoist all per-call weight preprocessing out of the forward:
    bf16 casts, tap-merged conv weights, Haar-DWT fold into the fd stem,
    bias reshapes and head-weight splitting."""
    pd, fd, sid = params["pd"], params["fd"], params["sid"]

    def stem_w(w9):                     # (9, cin, C) -> (STEM_K, C) bf16
        wf = w9.reshape(-1, w9.shape[-1])
        wf = jnp.pad(wf, ((0, STEM_K - wf.shape[0]), (0, 0)))
        return wf.astype(jnp.bfloat16)

    def conv_w(w9):                     # (9, C, C) -> (9C, C) bf16 (tap-merged)
        return w9.reshape(-1, w9.shape[-1]).astype(jnp.bfloat16)

    def b_row(b):
        return b.reshape(1, -1).astype(jnp.float32)

    def branch(p):
        return dict(w1=stem_w(p["c1_w"]), b1=b_row(p["c1_b"]),
                    w2=conv_w(p["c2_w"]), b2=b_row(p["c2_b"]),
                    w3=conv_w(p["c3_w"]), b3=b_row(p["c3_b"]),
                    fw=p["fc_w"].astype(jnp.float32), fb=b_row(p["fc_b"]))

    # fold the Haar DWT (12-ch domain) into the fd stem weights (s2d domain)
    fd_folded = dict(fd, c1_w=jnp.einsum("tmo,mj->tjo", fd["c1_w"], _haar_mix()))

    nl = pd["fc_w"].shape[-1]
    head = dict(w1a=sid["w1"][:nl].astype(jnp.float32),
                w1b=sid["w1"][nl:].astype(jnp.float32),
                b1=b_row(sid["b1"]),
                w2=sid["w2"].astype(jnp.float32),
                b2=b_row(sid["b2"]))
    return dict(pd=branch(pd), fd=branch(fd_folded), head=head)


# --------------------------- pure-JAX reference -----------------------------

def reference_forward(data_nchw, params):
    x = jnp.transpose(data_nchw, (0, 2, 3, 1)).astype(jnp.float32)
    xn = _normalize(x)

    def conv3x3(x, w9, b):
        cin, cout = w9.shape[1:]
        w = w9.reshape(3, 3, cin, cout)
        y = jax.lax.conv_general_dilated(
            x, w, window_strides=(1, 1), padding="SAME",
            dimension_numbers=("NHWC", "HWIO", "NHWC"))
        return y + b

    def branch(x, p):
        h = jax.nn.relu(conv3x3(x, p["c1_w"], p["c1_b"]))
        r = jax.nn.relu(conv3x3(h, p["c2_w"], p["c2_b"]))
        r = jax.nn.relu(conv3x3(r, p["c3_w"], p["c3_b"]) + h)
        return jnp.mean(r, axis=(1, 2)) @ p["fc_w"] + p["fc_b"]

    pd_out = branch(xn, params["pd"])

    a = xn[:, 0::2, 0::2, :]
    b_ = xn[:, 0::2, 1::2, :]
    c = xn[:, 1::2, 0::2, :]
    d = xn[:, 1::2, 1::2, :]
    dwt = jnp.concatenate([0.5 * (a + b_ + c + d), 0.5 * (a - b_ + c - d),
                           0.5 * (a + b_ - c - d), 0.5 * (a - b_ - c + d)],
                          axis=-1)
    fd_out = branch(dwt, params["fd"])

    sid = params["sid"]
    z = jnp.concatenate([pd_out, fd_out], axis=-1)
    h = jax.nn.relu(z @ sid["w1"] + sid["b1"])
    logits = h @ sid["w2"] + sid["b2"]
    p = jax.nn.softmax(logits, axis=1)
    p_adv = jnp.maximum(p[:, 1:2], p[:, 2:3])
    return jnp.concatenate([p[:, 0:1], p_adv], axis=-1)


# --------------------------- deterministic init -----------------------------

def init_params(key):
    ks = jax.random.split(key, 16)
    C = CONV_C

    def w_init(k, shape, scale=0.05):
        w = scale * jax.random.normal(k, shape, jnp.float32)
        # keep master weights exactly bf16-representable so the kernel's bf16
        # matmul inputs match the f32 reference up to accumulation order
        return w.astype(jnp.bfloat16).astype(jnp.float32)

    def branch(keys, in_c):
        return dict(
            c1_w=w_init(keys[0], (9, in_c, C)), c1_b=jnp.zeros((C,), jnp.float32),
            c2_w=w_init(keys[1], (9, C, C)), c2_b=jnp.zeros((C,), jnp.float32),
            c3_w=w_init(keys[2], (9, C, C)), c3_b=jnp.zeros((C,), jnp.float32),
            fc_w=w_init(keys[3], (C, NUM_LOGITS), scale=0.1),
            fc_b=w_init(keys[4], (NUM_LOGITS,), scale=0.1),
        )

    pd = branch(ks[0:5], 3)
    fd = branch(ks[5:10], 12)   # fd c1 weights live in the DWT (12-ch) domain
    sid = dict(w1=w_init(ks[10], (2 * NUM_LOGITS, 32), scale=0.2),
               b1=w_init(ks[11], (32,), scale=0.1),
               w2=w_init(ks[12], (32, 3), scale=0.2),
               b2=w_init(ks[13], (3,), scale=0.3))
    return dict(pd=pd, fd=fd, sid=sid)


if __name__ == "__main__":
    data = jax.random.uniform(jax.random.PRNGKey(0), (2, 3, 16, 16), jnp.float32)
    params = init_params(jax.random.PRNGKey(42))
    prepped = prepare_params(params)          # hoisted weight prep (once)

    out = jax.block_until_ready(jax.jit(combined_detector)(data, prepped))
    ref = jax.block_until_ready(jax.jit(reference_forward)(data, params))

    assert out.shape == (2, 2), out.shape
    assert bool(jnp.all(jnp.isfinite(out)))
    assert bool(jnp.all((out >= 0.0) & (out <= 1.0 + 1e-3)))
    assert bool(jnp.allclose(out, ref, atol=1e-2, rtol=0.0)), (out, ref)
    print("KERNEL_OK")
</pallas_src>

<mosaic_0001>
module attributes {stable_mosaic.version = 11 : i64} {
  func.func @_combined_kernel(%arg0: i32, %arg1: memref<1x336x128xbf16, #tpu.memory_space<vmem>>, %arg2: memref<1x112x128xbf16, #tpu.memory_space<vmem>>, %arg3: memref<336x1xf32, #tpu.memory_space<vmem>>, %arg4: memref<112x1xf32, #tpu.memory_space<vmem>>, %arg5: memref<128x128xbf16, #tpu.memory_space<vmem>>, %arg6: memref<1x128xf32, #tpu.memory_space<vmem>>, %arg7: memref<1152x128xbf16, #tpu.memory_space<vmem>>, %arg8: memref<1x128xf32, #tpu.memory_space<vmem>>, %arg9: memref<1152x128xbf16, #tpu.memory_space<vmem>>, %arg10: memref<1x128xf32, #tpu.memory_space<vmem>>, %arg11: memref<128x10xf32, #tpu.memory_space<vmem>>, %arg12: memref<1x10xf32, #tpu.memory_space<vmem>>, %arg13: memref<128x128xbf16, #tpu.memory_space<vmem>>, %arg14: memref<1x128xf32, #tpu.memory_space<vmem>>, %arg15: memref<1152x128xbf16, #tpu.memory_space<vmem>>, %arg16: memref<1x128xf32, #tpu.memory_space<vmem>>, %arg17: memref<1152x128xbf16, #tpu.memory_space<vmem>>, %arg18: memref<1x128xf32, #tpu.memory_space<vmem>>, %arg19: memref<128x10xf32, #tpu.memory_space<vmem>>, %arg20: memref<1x10xf32, #tpu.memory_space<vmem>>, %arg21: memref<10x32xf32, #tpu.memory_space<vmem>>, %arg22: memref<10x32xf32, #tpu.memory_space<vmem>>, %arg23: memref<1x32xf32, #tpu.memory_space<vmem>>, %arg24: memref<32x3xf32, #tpu.memory_space<vmem>>, %arg25: memref<1x3xf32, #tpu.memory_space<vmem>>, %arg26: memref<1x1x2xf32, #tpu.memory_space<vmem>>) attributes {dimension_semantics = [#tpu.dimension_semantics<parallel>], iteration_bounds = array<i64: 2>, scalar_prefetch = 0 : i64, scratch_operands = 0 : i64, tpu.core_type = #tpu.core_type<tc>, window_params = [{transform_indices = @transform_0, window_bounds = array<i64: 1, 336, 128>}, {transform_indices = @transform_1, window_bounds = array<i64: 1, 112, 128>}, {pipeline_mode = #tpu.pipeline_mode<synchronous>, transform_indices = @transform_2, window_bounds = array<i64: 336, 1>}, {pipeline_mode = #tpu.pipeline_mode<synchronous>, transform_indices = @transform_3, window_bounds = array<i64: 112, 1>}, {pipeline_mode = #tpu.pipeline_mode<synchronous>, transform_indices = @transform_4, window_bounds = array<i64: 128, 128>}, {pipeline_mode = #tpu.pipeline_mode<synchronous>, transform_indices = @transform_5, window_bounds = array<i64: 1, 128>}, {pipeline_mode = #tpu.pipeline_mode<synchronous>, transform_indices = @transform_6, window_bounds = array<i64: 1152, 128>}, {pipeline_mode = #tpu.pipeline_mode<synchronous>, transform_indices = @transform_7, window_bounds = array<i64: 1, 128>}, {pipeline_mode = #tpu.pipeline_mode<synchronous>, transform_indices = @transform_8, window_bounds = array<i64: 1152, 128>}, {pipeline_mode = #tpu.pipeline_mode<synchronous>, transform_indices = @transform_9, window_bounds = array<i64: 1, 128>}, {pipeline_mode = #tpu.pipeline_mode<synchronous>, transform_indices = @transform_10, window_bounds = array<i64: 128, 10>}, {pipeline_mode = #tpu.pipeline_mode<synchronous>, transform_indices = @transform_11, window_bounds = array<i64: 1, 10>}, {pipeline_mode = #tpu.pipeline_mode<synchronous>, transform_indices = @transform_12, window_bounds = array<i64: 128, 128>}, {pipeline_mode = #tpu.pipeline_mode<synchronous>, transform_indices = @transform_13, window_bounds = array<i64: 1, 128>}, {pipeline_mode = #tpu.pipeline_mode<synchronous>, transform_indices = @transform_14, window_bounds = array<i64: 1152, 128>}, {pipeline_mode = #tpu.pipeline_mode<synchronous>, transform_indices = @transform_15, window_bounds = array<i64: 1, 128>}, {pipeline_mode = #tpu.pipeline_mode<synchronous>, transform_indices = @transform_16, window_bounds = array<i64: 1152, 128>}, {pipeline_mode = #tpu.pipeline_mode<synchronous>, transform_indices = @transform_17, window_bounds = array<i64: 1, 128>}, {pipeline_mode = #tpu.pipeline_mode<synchronous>, transform_indices = @transform_18, window_bounds = array<i64: 128, 10>}, {pipeline_mode = #tpu.pipeline_mode<synchronous>, transform_indices = @transform_19, window_bounds = array<i64: 1, 10>}, {pipeline_mode = #tpu.pipeline_mode<synchronous>, transform_indices = @transform_20, window_bounds = array<i64: 10, 32>}, {pipeline_mode = #tpu.pipeline_mode<synchronous>, transform_indices = @transform_21, window_bounds = array<i64: 10, 32>}, {pipeline_mode = #tpu.pipeline_mode<synchronous>, transform_indices = @transform_22, window_bounds = array<i64: 1, 32>}, {pipeline_mode = #tpu.pipeline_mode<synchronous>, transform_indices = @transform_23, window_bounds = array<i64: 32, 3>}, {pipeline_mode = #tpu.pipeline_mode<synchronous>, transform_indices = @transform_24, window_bounds = array<i64: 1, 3>}, {transform_indices = @transform_25, window_bounds = array<i64: 1, 1, 2>}]} {
    %c0 = arith.constant 0 : index
    %c0_0 = arith.constant 0 : index
    %c0_1 = arith.constant 0 : index
    %0 = vector.load %arg1[%c0, %c0_0, %c0_1] : memref<1x336x128xbf16, #tpu.memory_space<vmem>>, vector<1x336x128xbf16>
    %1 = vector.shape_cast %0 : vector<1x336x128xbf16> to vector<336x128xbf16>
    %c0_2 = arith.constant 0 : index
    %c0_3 = arith.constant 0 : index
    %2 = vector.load %arg3[%c0_2, %c0_3] : memref<336x1xf32, #tpu.memory_space<vmem>>, vector<336x1xf32>
    %c0_4 = arith.constant 0 : index
    %c0_5 = arith.constant 0 : index
    %3 = vector.load %arg5[%c0_4, %c0_5] : memref<128x128xbf16, #tpu.memory_space<vmem>>, vector<128x128xbf16>
    %cst = arith.constant dense<0.000000e+00> : vector<336x128xf32>
    %4 = tpu.matmul %1, %3, %cst {dimension_numbers = #tpu.dot_dimension_numbers<[1], [0], [0], [1], [0, 0, 1, 1], [], []>} : vector<336x128xbf16>, vector<128x128xbf16>, vector<336x128xf32> -> vector<336x128xf32>
    %c0_6 = arith.constant 0 : index
    %c0_7 = arith.constant 0 : index
    %5 = vector.load %arg6[%c0_6, %c0_7] : memref<1x128xf32, #tpu.memory_space<vmem>>, vector<1x128xf32>
    %6 = vector.broadcast %5 : vector<1x128xf32> to vector<336x128xf32>
    %7 = arith.addf %4, %6 : vector<336x128xf32>
    %cst_8 = arith.constant 0.000000e+00 : f32
    %8 = vector.broadcast %cst_8 : f32 to vector<336x128xf32>
    %9 = arith.maximumf %7, %8 : vector<336x128xf32>
    %10 = vector.broadcast %2 : vector<336x1xf32> to vector<336x128xf32>
    %11 = arith.mulf %9, %10 : vector<336x128xf32>
    %c19_i32 = arith.constant 19 : i32
    %12 = tpu.dynamic_rotate %11 by %c19_i32 dim 0 : vector<336x128xf32>, i32 -> vector<336x128xf32>
    %c18_i32 = arith.constant 18 : i32
    %13 = tpu.dynamic_rotate %11 by %c18_i32 dim 0 : vector<336x128xf32>, i32 -> vector<336x128xf32>
    %c17_i32 = arith.constant 17 : i32
    %14 = tpu.dynamic_rotate %11 by %c17_i32 dim 0 : vector<336x128xf32>, i32 -> vector<336x128xf32>
    %c1_i32 = arith.constant 1 : i32
    %15 = tpu.dynamic_rotate %11 by %c1_i32 dim 0 : vector<336x128xf32>, i32 -> vector<336x128xf32>
    %c335_i32 = arith.constant 335 : i32
    %16 = tpu.dynamic_rotate %11 by %c335_i32 dim 0 : vector<336x128xf32>, i32 -> vector<336x128xf32>
    %c319_i32 = arith.constant 319 : i32
    %17 = tpu.dynamic_rotate %11 by %c319_i32 dim 0 : vector<336x128xf32>, i32 -> vector<336x128xf32>
    %c318_i32 = arith.constant 318 : i32
    %18 = tpu.dynamic_rotate %11 by %c318_i32 dim 0 : vector<336x128xf32>, i32 -> vector<336x128xf32>
    %c317_i32 = arith.constant 317 : i32
    %19 = tpu.dynamic_rotate %11 by %c317_i32 dim 0 : vector<336x128xf32>, i32 -> vector<336x128xf32>
    %20 = tpu.concatenate %12, %13, %14, %15, %11, %16, %17, %18, %19 in 1 : vector<336x128xf32>, vector<336x128xf32>, vector<336x128xf32>, vector<336x128xf32>, vector<336x128xf32>, vector<336x128xf32>, vector<336x128xf32>, vector<336x128xf32>, vector<336x128xf32> -> vector<336x1152xf32>
    %21 = arith.truncf %20 : vector<336x1152xf32> to vector<336x1152xbf16>
    %c0_9 = arith.constant 0 : index
    %c0_10 = arith.constant 0 : index
    %22 = vector.load %arg7[%c0_9, %c0_10] : memref<1152x128xbf16, #tpu.memory_space<vmem>>, vector<1152x128xbf16>
    %cst_11 = arith.constant dense<0.000000e+00> : vector<336x128xf32>
    %23 = tpu.matmul %21, %22, %cst_11 {dimension_numbers = #tpu.dot_dimension_numbers<[1], [0], [0], [1], [0, 0, 1, 1], [], []>} : vector<336x1152xbf16>, vector<1152x128xbf16>, vector<336x128xf32> -> vector<336x128xf32>
    %c0_12 = arith.constant 0 : index
    %c0_13 = arith.constant 0 : index
    %24 = vector.load %arg8[%c0_12, %c0_13] : memref<1x128xf32, #tpu.memory_space<vmem>>, vector<1x128xf32>
    %25 = vector.broadcast %24 : vector<1x128xf32> to vector<336x128xf32>
    %26 = arith.addf %23, %25 : vector<336x128xf32>
    %cst_14 = arith.constant 0.000000e+00 : f32
    %27 = vector.broadcast %cst_14 : f32 to vector<336x128xf32>
    %28 = arith.maximumf %26, %27 : vector<336x128xf32>
    %29 = vector.broadcast %2 : vector<336x1xf32> to vector<336x128xf32>
    %30 = arith.mulf %28, %29 : vector<336x128xf32>
    %c19_i32_15 = arith.constant 19 : i32
    %31 = tpu.dynamic_rotate %30 by %c19_i32_15 dim 0 : vector<336x128xf32>, i32 -> vector<336x128xf32>
    %c18_i32_16 = arith.constant 18 : i32
    %32 = tpu.dynamic_rotate %30 by %c18_i32_16 dim 0 : vector<336x128xf32>, i32 -> vector<336x128xf32>
    %c17_i32_17 = arith.constant 17 : i32
    %33 = tpu.dynamic_rotate %30 by %c17_i32_17 dim 0 : vector<336x128xf32>, i32 -> vector<336x128xf32>
    %c1_i32_18 = arith.constant 1 : i32
    %34 = tpu.dynamic_rotate %30 by %c1_i32_18 dim 0 : vector<336x128xf32>, i32 -> vector<336x128xf32>
    %c335_i32_19 = arith.constant 335 : i32
    %35 = tpu.dynamic_rotate %30 by %c335_i32_19 dim 0 : vector<336x128xf32>, i32 -> vector<336x128xf32>
    %c319_i32_20 = arith.constant 319 : i32
    %36 = tpu.dynamic_rotate %30 by %c319_i32_20 dim 0 : vector<336x128xf32>, i32 -> vector<336x128xf32>
    %c318_i32_21 = arith.constant 318 : i32
    %37 = tpu.dynamic_rotate %30 by %c318_i32_21 dim 0 : vector<336x128xf32>, i32 -> vector<336x128xf32>
    %c317_i32_22 = arith.constant 317 : i32
    %38 = tpu.dynamic_rotate %30 by %c317_i32_22 dim 0 : vector<336x128xf32>, i32 -> vector<336x128xf32>
    %39 = tpu.concatenate %31, %32, %33, %34, %30, %35, %36, %37, %38 in 1 : vector<336x128xf32>, vector<336x128xf32>, vector<336x128xf32>, vector<336x128xf32>, vector<336x128xf32>, vector<336x128xf32>, vector<336x128xf32>, vector<336x128xf32>, vector<336x128xf32> -> vector<336x1152xf32>
    %40 = arith.truncf %39 : vector<336x1152xf32> to vector<336x1152xbf16>
    %c0_23 = arith.constant 0 : index
    %c0_24 = arith.constant 0 : index
    %41 = vector.load %arg9[%c0_23, %c0_24] : memref<1152x128xbf16, #tpu.memory_space<vmem>>, vector<1152x128xbf16>
    %cst_25 = arith.constant dense<0.000000e+00> : vector<336x128xf32>
    %42 = tpu.matmul %40, %41, %cst_25 {dimension_numbers = #tpu.dot_dimension_numbers<[1], [0], [0], [1], [0, 0, 1, 1], [], []>} : vector<336x1152xbf16>, vector<1152x128xbf16>, vector<336x128xf32> -> vector<336x128xf32>
    %c0_26 = arith.constant 0 : index
    %c0_27 = arith.constant 0 : index
    %43 = vector.load %arg10[%c0_26, %c0_27] : memref<1x128xf32, #tpu.memory_space<vmem>>, vector<1x128xf32>
    %44 = vector.broadcast %43 : vector<1x128xf32> to vector<336x128xf32>
    %45 = arith.addf %42, %44 : vector<336x128xf32>
    %46 = arith.addf %45, %11 : vector<336x128xf32>
    %cst_28 = arith.constant 0.000000e+00 : f32
    %47 = vector.broadcast %cst_28 : f32 to vector<336x128xf32>
    %48 = arith.maximumf %46, %47 : vector<336x128xf32>
    %49 = vector.broadcast %2 : vector<336x1xf32> to vector<336x128xf32>
    %50 = arith.mulf %48, %49 : vector<336x128xf32>
    %cst_29 = arith.constant dense<0.000000e+00> : vector<128xf32>
    %51 = vector.multi_reduction <add>, %50, %cst_29 [0] : vector<336x128xf32> to vector<128xf32>
    %52 = vector.shape_cast %51 : vector<128xf32> to vector<1x128xf32>
    %cst_30 = arith.constant 3.906250e-03 : f32
    %53 = vector.broadcast %cst_30 : f32 to vector<1x128xf32>
    %54 = arith.mulf %52, %53 : vector<1x128xf32>
    %c0_31 = arith.constant 0 : index
    %c0_32 = arith.constant 0 : index
    %55 = vector.load %arg11[%c0_31, %c0_32] : memref<128x10xf32, #tpu.memory_space<vmem>>, vector<128x10xf32>
    %cst_33 = arith.constant dense<0.000000e+00> : vector<1x10xf32>
    %56 = tpu.matmul %54, %55, %cst_33 {dimension_numbers = #tpu.dot_dimension_numbers<[1], [0], [0], [1], [0, 0, 1, 1], [], []>} : vector<1x128xf32>, vector<128x10xf32>, vector<1x10xf32> -> vector<1x10xf32>
    %c0_34 = arith.constant 0 : index
    %c0_35 = arith.constant 0 : index
    %57 = vector.load %arg12[%c0_34, %c0_35] : memref<1x10xf32, #tpu.memory_space<vmem>>, vector<1x10xf32>
    %58 = arith.addf %56, %57 : vector<1x10xf32>
    %c0_36 = arith.constant 0 : index
    %c0_37 = arith.constant 0 : index
    %c0_38 = arith.constant 0 : index
    %59 = vector.load %arg2[%c0_36, %c0_37, %c0_38] : memref<1x112x128xbf16, #tpu.memory_space<vmem>>, vector<1x112x128xbf16>
    %60 = vector.shape_cast %59 : vector<1x112x128xbf16> to vector<112x128xbf16>
    %c0_39 = arith.constant 0 : index
    %c0_40 = arith.constant 0 : index
    %61 = vector.load %arg4[%c0_39, %c0_40] : memref<112x1xf32, #tpu.memory_space<vmem>>, vector<112x1xf32>
    %c0_41 = arith.constant 0 : index
    %c0_42 = arith.constant 0 : index
    %62 = vector.load %arg13[%c0_41, %c0_42] : memref<128x128xbf16, #tpu.memory_space<vmem>>, vector<128x128xbf16>
    %cst_43 = arith.constant dense<0.000000e+00> : vector<112x128xf32>
    %63 = tpu.matmul %60, %62, %cst_43 {dimension_numbers = #tpu.dot_dimension_numbers<[1], [0], [0], [1], [0, 0, 1, 1], [], []>} : vector<112x128xbf16>, vector<128x128xbf16>, vector<112x128xf32> -> vector<112x128xf32>
    %c0_44 = arith.constant 0 : index
    %c0_45 = arith.constant 0 : index
    %64 = vector.load %arg14[%c0_44, %c0_45] : memref<1x128xf32, #tpu.memory_space<vmem>>, vector<1x128xf32>
    %65 = vector.broadcast %64 : vector<1x128xf32> to vector<112x128xf32>
    %66 = arith.addf %63, %65 : vector<112x128xf32>
    %cst_46 = arith.constant 0.000000e+00 : f32
    %67 = vector.broadcast %cst_46 : f32 to vector<112x128xf32>
    %68 = arith.maximumf %66, %67 : vector<112x128xf32>
    %69 = vector.broadcast %61 : vector<112x1xf32> to vector<112x128xf32>
    %70 = arith.mulf %68, %69 : vector<112x128xf32>
    %c11_i32 = arith.constant 11 : i32
    %71 = tpu.dynamic_rotate %70 by %c11_i32 dim 0 : vector<112x128xf32>, i32 -> vector<112x128xf32>
    %c10_i32 = arith.constant 10 : i32
    %72 = tpu.dynamic_rotate %70 by %c10_i32 dim 0 : vector<112x128xf32>, i32 -> vector<112x128xf32>
    %c9_i32 = arith.constant 9 : i32
    %73 = tpu.dynamic_rotate %70 by %c9_i32 dim 0 : vector<112x128xf32>, i32 -> vector<112x128xf32>
    %c1_i32_47 = arith.constant 1 : i32
    %74 = tpu.dynamic_rotate %70 by %c1_i32_47 dim 0 : vector<112x128xf32>, i32 -> vector<112x128xf32>
    %c111_i32 = arith.constant 111 : i32
    %75 = tpu.dynamic_rotate %70 by %c111_i32 dim 0 : vector<112x128xf32>, i32 -> vector<112x128xf32>
    %c103_i32 = arith.constant 103 : i32
    %76 = tpu.dynamic_rotate %70 by %c103_i32 dim 0 : vector<112x128xf32>, i32 -> vector<112x128xf32>
    %c102_i32 = arith.constant 102 : i32
    %77 = tpu.dynamic_rotate %70 by %c102_i32 dim 0 : vector<112x128xf32>, i32 -> vector<112x128xf32>
    %c101_i32 = arith.constant 101 : i32
    %78 = tpu.dynamic_rotate %70 by %c101_i32 dim 0 : vector<112x128xf32>, i32 -> vector<112x128xf32>
    %79 = tpu.concatenate %71, %72, %73, %74, %70, %75, %76, %77, %78 in 1 : vector<112x128xf32>, vector<112x128xf32>, vector<112x128xf32>, vector<112x128xf32>, vector<112x128xf32>, vector<112x128xf32>, vector<112x128xf32>, vector<112x128xf32>, vector<112x128xf32> -> vector<112x1152xf32>
    %80 = arith.truncf %79 : vector<112x1152xf32> to vector<112x1152xbf16>
    %c0_48 = arith.constant 0 : index
    %c0_49 = arith.constant 0 : index
    %81 = vector.load %arg15[%c0_48, %c0_49] : memref<1152x128xbf16, #tpu.memory_space<vmem>>, vector<1152x128xbf16>
    %cst_50 = arith.constant dense<0.000000e+00> : vector<112x128xf32>
    %82 = tpu.matmul %80, %81, %cst_50 {dimension_numbers = #tpu.dot_dimension_numbers<[1], [0], [0], [1], [0, 0, 1, 1], [], []>} : vector<112x1152xbf16>, vector<1152x128xbf16>, vector<112x128xf32> -> vector<112x128xf32>
    %c0_51 = arith.constant 0 : index
    %c0_52 = arith.constant 0 : index
    %83 = vector.load %arg16[%c0_51, %c0_52] : memref<1x128xf32, #tpu.memory_space<vmem>>, vector<1x128xf32>
    %84 = vector.broadcast %83 : vector<1x128xf32> to vector<112x128xf32>
    %85 = arith.addf %82, %84 : vector<112x128xf32>
    %cst_53 = arith.constant 0.000000e+00 : f32
    %86 = vector.broadcast %cst_53 : f32 to vector<112x128xf32>
    %87 = arith.maximumf %85, %86 : vector<112x128xf32>
    %88 = vector.broadcast %61 : vector<112x1xf32> to vector<112x128xf32>
    %89 = arith.mulf %87, %88 : vector<112x128xf32>
    %c11_i32_54 = arith.constant 11 : i32
    %90 = tpu.dynamic_rotate %89 by %c11_i32_54 dim 0 : vector<112x128xf32>, i32 -> vector<112x128xf32>
    %c10_i32_55 = arith.constant 10 : i32
    %91 = tpu.dynamic_rotate %89 by %c10_i32_55 dim 0 : vector<112x128xf32>, i32 -> vector<112x128xf32>
    %c9_i32_56 = arith.constant 9 : i32
    %92 = tpu.dynamic_rotate %89 by %c9_i32_56 dim 0 : vector<112x128xf32>, i32 -> vector<112x128xf32>
    %c1_i32_57 = arith.constant 1 : i32
    %93 = tpu.dynamic_rotate %89 by %c1_i32_57 dim 0 : vector<112x128xf32>, i32 -> vector<112x128xf32>
    %c111_i32_58 = arith.constant 111 : i32
    %94 = tpu.dynamic_rotate %89 by %c111_i32_58 dim 0 : vector<112x128xf32>, i32 -> vector<112x128xf32>
    %c103_i32_59 = arith.constant 103 : i32
    %95 = tpu.dynamic_rotate %89 by %c103_i32_59 dim 0 : vector<112x128xf32>, i32 -> vector<112x128xf32>
    %c102_i32_60 = arith.constant 102 : i32
    %96 = tpu.dynamic_rotate %89 by %c102_i32_60 dim 0 : vector<112x128xf32>, i32 -> vector<112x128xf32>
    %c101_i32_61 = arith.constant 101 : i32
    %97 = tpu.dynamic_rotate %89 by %c101_i32_61 dim 0 : vector<112x128xf32>, i32 -> vector<112x128xf32>
    %98 = tpu.concatenate %90, %91, %92, %93, %89, %94, %95, %96, %97 in 1 : vector<112x128xf32>, vector<112x128xf32>, vector<112x128xf32>, vector<112x128xf32>, vector<112x128xf32>, vector<112x128xf32>, vector<112x128xf32>, vector<112x128xf32>, vector<112x128xf32> -> vector<112x1152xf32>
    %99 = arith.truncf %98 : vector<112x1152xf32> to vector<112x1152xbf16>
    %c0_62 = arith.constant 0 : index
    %c0_63 = arith.constant 0 : index
    %100 = vector.load %arg17[%c0_62, %c0_63] : memref<1152x128xbf16, #tpu.memory_space<vmem>>, vector<1152x128xbf16>
    %cst_64 = arith.constant dense<0.000000e+00> : vector<112x128xf32>
    %101 = tpu.matmul %99, %100, %cst_64 {dimension_numbers = #tpu.dot_dimension_numbers<[1], [0], [0], [1], [0, 0, 1, 1], [], []>} : vector<112x1152xbf16>, vector<1152x128xbf16>, vector<112x128xf32> -> vector<112x128xf32>
    %c0_65 = arith.constant 0 : index
    %c0_66 = arith.constant 0 : index
    %102 = vector.load %arg18[%c0_65, %c0_66] : memref<1x128xf32, #tpu.memory_space<vmem>>, vector<1x128xf32>
    %103 = vector.broadcast %102 : vector<1x128xf32> to vector<112x128xf32>
    %104 = arith.addf %101, %103 : vector<112x128xf32>
    %105 = arith.addf %104, %70 : vector<112x128xf32>
    %cst_67 = arith.constant 0.000000e+00 : f32
    %106 = vector.broadcast %cst_67 : f32 to vector<112x128xf32>
    %107 = arith.maximumf %105, %106 : vector<112x128xf32>
    %108 = vector.broadcast %61 : vector<112x1xf32> to vector<112x128xf32>
    %109 = arith.mulf %107, %108 : vector<112x128xf32>
    %cst_68 = arith.constant dense<0.000000e+00> : vector<128xf32>
    %110 = vector.multi_reduction <add>, %109, %cst_68 [0] : vector<112x128xf32> to vector<128xf32>
    %111 = vector.shape_cast %110 : vector<128xf32> to vector<1x128xf32>
    %cst_69 = arith.constant 1.562500e-02 : f32
    %112 = vector.broadcast %cst_69 : f32 to vector<1x128xf32>
    %113 = arith.mulf %111, %112 : vector<1x128xf32>
    %c0_70 = arith.constant 0 : index
    %c0_71 = arith.constant 0 : index
    %114 = vector.load %arg19[%c0_70, %c0_71] : memref<128x10xf32, #tpu.memory_space<vmem>>, vector<128x10xf32>
    %cst_72 = arith.constant dense<0.000000e+00> : vector<1x10xf32>
    %115 = tpu.matmul %113, %114, %cst_72 {dimension_numbers = #tpu.dot_dimension_numbers<[1], [0], [0], [1], [0, 0, 1, 1], [], []>} : vector<1x128xf32>, vector<128x10xf32>, vector<1x10xf32> -> vector<1x10xf32>
    %c0_73 = arith.constant 0 : index
    %c0_74 = arith.constant 0 : index
    %116 = vector.load %arg20[%c0_73, %c0_74] : memref<1x10xf32, #tpu.memory_space<vmem>>, vector<1x10xf32>
    %117 = arith.addf %115, %116 : vector<1x10xf32>
    %c0_75 = arith.constant 0 : index
    %c0_76 = arith.constant 0 : index
    %118 = vector.load %arg21[%c0_75, %c0_76] : memref<10x32xf32, #tpu.memory_space<vmem>>, vector<10x32xf32>
    %cst_77 = arith.constant dense<0.000000e+00> : vector<1x32xf32>
    %119 = tpu.matmul %58, %118, %cst_77 {dimension_numbers = #tpu.dot_dimension_numbers<[1], [0], [0], [1], [0, 0, 1, 1], [], []>} : vector<1x10xf32>, vector<10x32xf32>, vector<1x32xf32> -> vector<1x32xf32>
    %c0_78 = arith.constant 0 : index
    %c0_79 = arith.constant 0 : index
    %120 = vector.load %arg22[%c0_78, %c0_79] : memref<10x32xf32, #tpu.memory_space<vmem>>, vector<10x32xf32>
    %cst_80 = arith.constant dense<0.000000e+00> : vector<1x32xf32>
    %121 = tpu.matmul %117, %120, %cst_80 {dimension_numbers = #tpu.dot_dimension_numbers<[1], [0], [0], [1], [0, 0, 1, 1], [], []>} : vector<1x10xf32>, vector<10x32xf32>, vector<1x32xf32> -> vector<1x32xf32>
    %122 = arith.addf %119, %121 : vector<1x32xf32>
    %c0_81 = arith.constant 0 : index
    %c0_82 = arith.constant 0 : index
    %123 = vector.load %arg23[%c0_81, %c0_82] : memref<1x32xf32, #tpu.memory_space<vmem>>, vector<1x32xf32>
    %124 = arith.addf %122, %123 : vector<1x32xf32>
    %cst_83 = arith.constant 0.000000e+00 : f32
    %125 = vector.broadcast %cst_83 : f32 to vector<1x32xf32>
    %126 = arith.maximumf %124, %125 : vector<1x32xf32>
    %c0_84 = arith.constant 0 : index
    %c0_85 = arith.constant 0 : index
    %127 = vector.load %arg24[%c0_84, %c0_85] : memref<32x3xf32, #tpu.memory_space<vmem>>, vector<32x3xf32>
    %cst_86 = arith.constant dense<0.000000e+00> : vector<1x3xf32>
    %128 = tpu.matmul %126, %127, %cst_86 {dimension_numbers = #tpu.dot_dimension_numbers<[1], [0], [0], [1], [0, 0, 1, 1], [], []>} : vector<1x32xf32>, vector<32x3xf32>, vector<1x3xf32> -> vector<1x3xf32>
    %c0_87 = arith.constant 0 : index
    %c0_88 = arith.constant 0 : index
    %129 = vector.load %arg25[%c0_87, %c0_88] : memref<1x3xf32, #tpu.memory_space<vmem>>, vector<1x3xf32>
    %130 = arith.addf %128, %129 : vector<1x3xf32>
    %cst_89 = arith.constant dense<0xFF800000> : vector<1xf32>
    %131 = vector.multi_reduction <maximumf>, %130, %cst_89 [1] : vector<1x3xf32> to vector<1xf32>
    %132 = vector.shape_cast %131 : vector<1xf32> to vector<1x1xf32>
    %133 = vector.broadcast %132 : vector<1x1xf32> to vector<1x3xf32>
    %134 = arith.subf %130, %133 : vector<1x3xf32>
    %135 = math.exp %134 : vector<1x3xf32>
    %cst_90 = arith.constant dense<0.000000e+00> : vector<1xf32>
    %136 = vector.multi_reduction <add>, %135, %cst_90 [1] : vector<1x3xf32> to vector<1xf32>
    %137 = vector.shape_cast %136 : vector<1xf32> to vector<1x1xf32>
    %138 = vector.broadcast %137 : vector<1x1xf32> to vector<1x3xf32>
    %139 = arith.divf %135, %138 : vector<1x3xf32>
    %140 = vector.extract_strided_slice %139 {offsets = [0, 1], sizes = [1, 1], strides = [1, 1]} : vector<1x3xf32> to vector<1x1xf32>
    %141 = vector.extract_strided_slice %139 {offsets = [0, 2], sizes = [1, 1], strides = [1, 1]} : vector<1x3xf32> to vector<1x1xf32>
    %142 = arith.maximumf %140, %141 : vector<1x1xf32>
    %143 = vector.extract_strided_slice %139 {offsets = [0, 0], sizes = [1, 1], strides = [1, 1]} : vector<1x3xf32> to vector<1x1xf32>
    %144 = tpu.concatenate %143, %142 in 1 : vector<1x1xf32>, vector<1x1xf32> -> vector<1x2xf32>
    %145 = vector.shape_cast %144 : vector<1x2xf32> to vector<1x1x2xf32>
    %c0_91 = arith.constant 0 : index
    %c0_92 = arith.constant 0 : index
    %c0_93 = arith.constant 0 : index
    %146 = vector.load %arg26[%c0_91, %c0_92, %c0_93] : memref<1x1x2xf32, #tpu.memory_space<vmem>>, vector<1x1x2xf32>
    tpu.vector_store %arg26[%c0_91, %c0_92, %c0_93], %145 {strides = array<i32>} : memref<1x1x2xf32, #tpu.memory_space<vmem>>, vector<1x1x2xf32>,
    return
  }
  func.func @transform_0(%arg0: i32) -> (i32, i32, i32) {
    %c0_i32 = arith.constant 0 : i32
    %c0_i32_0 = arith.constant 0 : i32
    %c0_i32_1 = arith.constant 0 : i32
    return %arg0, %c0_i32, %c0_i32_0 : i32, i32, i32
  }
  func.func @transform_1(%arg0: i32) -> (i32, i32, i32) {
    %c0_i32 = arith.constant 0 : i32
    %c0_i32_0 = arith.constant 0 : i32
    %c0_i32_1 = arith.constant 0 : i32
    return %arg0, %c0_i32, %c0_i32_0 : i32, i32, i32
  }
  func.func @transform_2(%arg0: i32) -> (i32, i32) {
    %c0_i32 = arith.constant 0 : i32
    %c0_i32_0 = arith.constant 0 : i32
    %c0_i32_1 = arith.constant 0 : i32
    return %c0_i32, %c0_i32_0 : i32, i32
  }
  func.func @transform_3(%arg0: i32) -> (i32, i32) {
    %c0_i32 = arith.constant 0 : i32
    %c0_i32_0 = arith.constant 0 : i32
    %c0_i32_1 = arith.constant 0 : i32
    return %c0_i32, %c0_i32_0 : i32, i32
  }
  func.func @transform_4(%arg0: i32) -> (i32, i32) {
    %c0_i32 = arith.constant 0 : i32
    %c0_i32_0 = arith.constant 0 : i32
    %c0_i32_1 = arith.constant 0 : i32
    return %c0_i32, %c0_i32_0 : i32, i32
  }
  func.func @transform_5(%arg0: i32) -> (i32, i32) {
    %c0_i32 = arith.constant 0 : i32
    %c0_i32_0 = arith.constant 0 : i32
    %c0_i32_1 = arith.constant 0 : i32
    return %c0_i32, %c0_i32_0 : i32, i32
  }
  func.func @transform_6(%arg0: i32) -> (i32, i32) {
    %c0_i32 = arith.constant 0 : i32
    %c0_i32_0 = arith.constant 0 : i32
    %c0_i32_1 = arith.constant 0 : i32
    return %c0_i32, %c0_i32_0 : i32, i32
  }
  func.func @transform_7(%arg0: i32) -> (i32, i32) {
    %c0_i32 = arith.constant 0 : i32
    %c0_i32_0 = arith.constant 0 : i32
    %c0_i32_1 = arith.constant 0 : i32
    return %c0_i32, %c0_i32_0 : i32, i32
  }
  func.func @transform_8(%arg0: i32) -> (i32, i32) {
    %c0_i32 = arith.constant 0 : i32
    %c0_i32_0 = arith.constant 0 : i32
    %c0_i32_1 = arith.constant 0 : i32
    return %c0_i32, %c0_i32_0 : i32, i32
  }
  func.func @transform_9(%arg0: i32) -> (i32, i32) {
    %c0_i32 = arith.constant 0 : i32
    %c0_i32_0 = arith.constant 0 : i32
    %c0_i32_1 = arith.constant 0 : i32
    return %c0_i32, %c0_i32_0 : i32, i32
  }
  func.func @transform_10(%arg0: i32) -> (i32, i32) {
    %c0_i32 = arith.constant 0 : i32
    %c0_i32_0 = arith.constant 0 : i32
    %c0_i32_1 = arith.constant 0 : i32
    return %c0_i32, %c0_i32_0 : i32, i32
  }
  func.func @transform_11(%arg0: i32) -> (i32, i32) {
    %c0_i32 = arith.constant 0 : i32
    %c0_i32_0 = arith.constant 0 : i32
    %c0_i32_1 = arith.constant 0 : i32
    return %c0_i32, %c0_i32_0 : i32, i32
  }
  func.func @transform_12(%arg0: i32) -> (i32, i32) {
    %c0_i32 = arith.constant 0 : i32
    %c0_i32_0 = arith.constant 0 : i32
    %c0_i32_1 = arith.constant 0 : i32
    return %c0_i32, %c0_i32_0 : i32, i32
  }
  func.func @transform_13(%arg0: i32) -> (i32, i32) {
    %c0_i32 = arith.constant 0 : i32
    %c0_i32_0 = arith.constant 0 : i32
    %c0_i32_1 = arith.constant 0 : i32
    return %c0_i32, %c0_i32_0 : i32, i32
  }
  func.func @transform_14(%arg0: i32) -> (i32, i32) {
    %c0_i32 = arith.constant 0 : i32
    %c0_i32_0 = arith.constant 0 : i32
    %c0_i32_1 = arith.constant 0 : i32
    return %c0_i32, %c0_i32_0 : i32, i32
  }
  func.func @transform_15(%arg0: i32) -> (i32, i32) {
    %c0_i32 = arith.constant 0 : i32
    %c0_i32_0 = arith.constant 0 : i32
    %c0_i32_1 = arith.constant 0 : i32
    return %c0_i32, %c0_i32_0 : i32, i32
  }
  func.func @transform_16(%arg0: i32) -> (i32, i32) {
    %c0_i32 = arith.constant 0 : i32
    %c0_i32_0 = arith.constant 0 : i32
    %c0_i32_1 = arith.constant 0 : i32
    return %c0_i32, %c0_i32_0 : i32, i32
  }
  func.func @transform_17(%arg0: i32) -> (i32, i32) {
    %c0_i32 = arith.constant 0 : i32
    %c0_i32_0 = arith.constant 0 : i32
    %c0_i32_1 = arith.constant 0 : i32
    return %c0_i32, %c0_i32_0 : i32, i32
  }
  func.func @transform_18(%arg0: i32) -> (i32, i32) {
    %c0_i32 = arith.constant 0 : i32
    %c0_i32_0 = arith.constant 0 : i32
    %c0_i32_1 = arith.constant 0 : i32
    return %c0_i32, %c0_i32_0 : i32, i32
  }
  func.func @transform_19(%arg0: i32) -> (i32, i32) {
    %c0_i32 = arith.constant 0 : i32
    %c0_i32_0 = arith.constant 0 : i32
    %c0_i32_1 = arith.constant 0 : i32
    return %c0_i32, %c0_i32_0 : i32, i32
  }
  func.func @transform_20(%arg0: i32) -> (i32, i32) {
    %c0_i32 = arith.constant 0 : i32
    %c0_i32_0 = arith.constant 0 : i32
    %c0_i32_1 = arith.constant 0 : i32
    return %c0_i32, %c0_i32_0 : i32, i32
  }
  func.func @transform_21(%arg0: i32) -> (i32, i32) {
    %c0_i32 = arith.constant 0 : i32
    %c0_i32_0 = arith.constant 0 : i32
    %c0_i32_1 = arith.constant 0 : i32
    return %c0_i32, %c0_i32_0 : i32, i32
  }
  func.func @transform_22(%arg0: i32) -> (i32, i32) {
    %c0_i32 = arith.constant 0 : i32
    %c0_i32_0 = arith.constant 0 : i32
    %c0_i32_1 = arith.constant 0 : i32
    return %c0_i32, %c0_i32_0 : i32, i32
  }
  func.func @transform_23(%arg0: i32) -> (i32, i32) {
    %c0_i32 = arith.constant 0 : i32
    %c0_i32_0 = arith.constant 0 : i32
    %c0_i32_1 = arith.constant 0 : i32
    return %c0_i32, %c0_i32_0 : i32, i32
  }
  func.func @transform_24(%arg0: i32) -> (i32, i32) {
    %c0_i32 = arith.constant 0 : i32
    %c0_i32_0 = arith.constant 0 : i32
    %c0_i32_1 = arith.constant 0 : i32
    return %c0_i32, %c0_i32_0 : i32, i32
  }
  func.func @transform_25(%arg0: i32) -> (i32, i32, i32) {
    %c0_i32 = arith.constant 0 : i32
    %c0_i32_0 = arith.constant 0 : i32
    %c0_i32_1 = arith.constant 0 : i32
    return %arg0, %c0_i32, %c0_i32_0 : i32, i32, i32
  }
}

</mosaic_0001>

<llo_original>
// kernel: combined_detector.1
$region0: #{combined_detector.1}
  #allocation0 [shape = 'u32[]', space=smem, size = 0x4, offset = 0x4, fixed_abs, tag = 'smem constant byte address 0x4 - core index']
  #allocation1 [shape = 'u32[144,128]{1,0:T(1,128)}', space=vmem, size = 0x12000, scoped, tag = 'internal scratch']
  %s0 = inlined_call_operand.vmem [shape: bf16[2,336,128], index: 0, kind: input, shape index: {}]
  %s1 = inlined_call_operand.vmem [shape: bf16[2,112,128], index: 1, kind: input, shape index: {}]
  %s2 = inlined_call_operand.vmem [shape: f32[336,1], index: 2, kind: input, shape index: {}]
  %s3 = inlined_call_operand.vmem [shape: f32[112,1], index: 3, kind: input, shape index: {}]
  %s4 = inlined_call_operand.vmem [shape: bf16[128,128], index: 4, kind: input, shape index: {}]
  %s5 = inlined_call_operand.vmem [shape: f32[1,128], index: 5, kind: input, shape index: {}]
  %s6 = inlined_call_operand.vmem [shape: bf16[1152,128], index: 6, kind: input, shape index: {}]
  %s7 = inlined_call_operand.vmem [shape: f32[1,128], index: 7, kind: input, shape index: {}]
  %s8 = inlined_call_operand.vmem [shape: bf16[1152,128], index: 8, kind: input, shape index: {}]
  %s9 = inlined_call_operand.vmem [shape: f32[1,128], index: 9, kind: input, shape index: {}]
  %s10 = inlined_call_operand.vmem [shape: f32[128,10], index: 10, kind: input, shape index: {}]
  %s11 = inlined_call_operand.vmem [shape: f32[1,10], index: 11, kind: input, shape index: {}]
  %s12 = inlined_call_operand.vmem [shape: bf16[128,128], index: 12, kind: input, shape index: {}]
  %s13 = inlined_call_operand.vmem [shape: f32[1,128], index: 13, kind: input, shape index: {}]
  %s14 = inlined_call_operand.vmem [shape: bf16[1152,128], index: 14, kind: input, shape index: {}]
  %s15 = inlined_call_operand.vmem [shape: f32[1,128], index: 15, kind: input, shape index: {}]
  %s16 = inlined_call_operand.vmem [shape: bf16[1152,128], index: 16, kind: input, shape index: {}]
  %s17 = inlined_call_operand.vmem [shape: f32[1,128], index: 17, kind: input, shape index: {}]
  %s18 = inlined_call_operand.vmem [shape: f32[128,10], index: 18, kind: input, shape index: {}]
  %s19 = inlined_call_operand.vmem [shape: f32[1,10], index: 19, kind: input, shape index: {}]
  %s20 = inlined_call_operand.vmem [shape: f32[10,32], index: 20, kind: input, shape index: {}]
  %s21 = inlined_call_operand.vmem [shape: f32[10,32], index: 21, kind: input, shape index: {}]
  %s22 = inlined_call_operand.vmem [shape: f32[1,32], index: 22, kind: input, shape index: {}]
  %s23 = inlined_call_operand.vmem [shape: f32[32,3], index: 23, kind: input, shape index: {}]
  %s24 = inlined_call_operand.vmem [shape: f32[1,3], index: 24, kind: input, shape index: {}]
  %s25 = inlined_call_operand.hbm [shape: f32[2,1,2], index: 25, kind: output, shape index: {}]
  %s26 = sld [smem:[#allocation0]]
  $region133: #{combined_detector.1} parent=0
    _
  %s28 = ssub.s32 1, %s26
  %s29 = scalar_select 0, %s28, %s26
  $region1: #{combined_detector.1} parent=0
    #allocation2 [shape = 'u8[1024]{0}', space=vmem, size = 0x400, scoped, tag = 'output window, operand 0']
    #allocation3 [shape = 's32[2]{0}', space=sflag, size = 0x8, scoped, tag = 'scoped memory for combined_detector.1']
    %30 = vsyncpa [#allocation3], 0
    %s31 = scalar_lea.sflag [#allocation3], 1
    %32 = vsyncpa %s31, 0
    loop: start=0, step=1, limit=4
    $region2: #{combined_detector.1} parent=1 // loop_pre_header
      _
    $region3: #{combined_detector.1} parent=1 // loop_header
      %s34 = sphi 0, %s38
      %p35 = scmp.ge.s32.totalorder %s34, 4
      %s44 = sphi 0, %s46
      %s47 = sphi 0, %s44
      %s48 = sphi 0, %s47
      %s64 = sphi 0, %s48
      %s70 = sphi 0, %s72
      %s73 = sphi 0, %s70
      %s74 = sphi 0, %s73
      %s90 = sphi 0, %s74
      %s94 = sphi 0, %s94
      %s96 = sphi 0, %s94
      %s97 = sphi 0, %s96
      %s111 = sphi 0, %s97
      %s115 = sphi 0, %s115
      %s117 = sphi 0, %s115
      %s118 = sphi 0, %s117
      %s132 = sphi 0, %s118
      %s136 = sphi 0, %s136
      %s138 = sphi 0, %s136
      %s139 = sphi 0, %s138
      %s153 = sphi 0, %s139
      %s157 = sphi 0, %s157
      %s159 = sphi 0, %s157
      %s160 = sphi 0, %s159
      %s174 = sphi 0, %s160
      %s178 = sphi 0, %s178
      %s180 = sphi 0, %s178
      %s181 = sphi 0, %s180
      %s195 = sphi 0, %s181
      %s199 = sphi 0, %s199
      %s201 = sphi 0, %s199
      %s202 = sphi 0, %s201
      %s216 = sphi 0, %s202
      %s220 = sphi 0, %s220
      %s222 = sphi 0, %s220
      %s223 = sphi 0, %s222
      %s237 = sphi 0, %s223
      %s241 = sphi 0, %s241
      %s243 = sphi 0, %s241
      %s244 = sphi 0, %s243
      %s258 = sphi 0, %s244
      %s262 = sphi 0, %s262
      %s264 = sphi 0, %s262
      %s265 = sphi 0, %s264
      %s279 = sphi 0, %s265
      %s283 = sphi 0, %s283
      %s285 = sphi 0, %s283
      %s286 = sphi 0, %s285
      %s300 = sphi 0, %s286
      %s304 = sphi 0, %s304
      %s306 = sphi 0, %s304
      %s307 = sphi 0, %s306
      %s321 = sphi 0, %s307
      %s325 = sphi 0, %s325
      %s327 = sphi 0, %s325
      %s328 = sphi 0, %s327
      %s342 = sphi 0, %s328
      %s346 = sphi 0, %s346
      %s348 = sphi 0, %s346
      %s349 = sphi 0, %s348
      %s363 = sphi 0, %s349
      %s367 = sphi 0, %s367
      %s369 = sphi 0, %s367
      %s370 = sphi 0, %s369
      %s384 = sphi 0, %s370
      %s388 = sphi 0, %s388
      %s390 = sphi 0, %s388
      %s391 = sphi 0, %s390
      %s405 = sphi 0, %s391
      %s409 = sphi 0, %s409
      %s411 = sphi 0, %s409
      %s412 = sphi 0, %s411
      %s426 = sphi 0, %s412
      %s430 = sphi 0, %s430
      %s432 = sphi 0, %s430
      %s433 = sphi 0, %s432
      %s447 = sphi 0, %s433
      %s451 = sphi 0, %s451
      %s453 = sphi 0, %s451
      %s454 = sphi 0, %s453
      %s468 = sphi 0, %s454
      %s472 = sphi 0, %s472
      %s474 = sphi 0, %s472
      %s475 = sphi 0, %s474
      %s489 = sphi 0, %s475
      %s493 = sphi 0, %s493
      %s495 = sphi 0, %s493
      %s496 = sphi 0, %s495
      %s510 = sphi 0, %s496
      %s514 = sphi 0, %s514
      %s516 = sphi 0, %s514
      %s517 = sphi 0, %s516
      %s531 = sphi 0, %s517
      %s535 = sphi 0, %s535
      %s537 = sphi 0, %s535
      %s538 = sphi 0, %s537
      %s552 = sphi 0, %s538
      %s556 = sphi 0, %s556
      %s558 = sphi 0, %s556
      %s559 = sphi 0, %s558
      %s573 = sphi 0, %s559
      %s579 = sphi 0, %s581
      %s582 = sphi 0, %s579
      %s583 = sphi 0, %s582
      %s599 = sphi 0, %s583
    $region4: #{combined_detector.1} parent=1 // loop_header_branch
      %37 = sbr.rel (%p35) target = $region8
    $region5: #{combined_detector.1} parent=1 // loop_body
      %s39 = ssub.s32 %s34, 1
      %s40 = ssub.s32 %s34, 2
      %s41 = sadd.s32 %s34, 1
      %s42 = ssub.s32 %s34, %s41
      %p43 = scmp.eq.s32.totalorder %s42, 0
      %s45 = sadd.s32 %s44, 1
      %s46 = scalar_select %p43, %s44, %s45
      %p49 = pneg %p43
      %p50 = scmp.eq.s32.totalorder %s34, 1
      %p51 = por %p49, %p50
      %p52 = scmp.ne.s32.totalorder %s44, %s47
      %p53 = scmp.eq.s32.totalorder %s34, 0
      %p54 = por %p52, %p53
      %p55 = scmp.ne.s32.totalorder %s44, %s47
      %p56 = scmp.eq.s32.totalorder %s39, 1
      %p57 = por %p55, %p56
      %p58 = scmp.ne.s32.totalorder %s47, %s48
      %p59 = scmp.eq.s32.totalorder %s39, 0
      %p60 = por %p58, %p59
      %p61 = scmp.ne.s32.totalorder %s47, %s48
      %p62 = scmp.eq.s32.totalorder %s40, 1
      %p63 = por %p61, %p62
      %p65 = scmp.ne.s32.totalorder %s48, %s64
      %p66 = scmp.eq.s32.totalorder %s40, 0
      %p67 = por %p65, %p66
      %s68 = ssub.s32 %s34, %s41
      %p69 = scmp.eq.s32.totalorder %s68, 0
      %s71 = sadd.s32 %s70, 1
      %s72 = scalar_select %p69, %s70, %s71
      %p75 = pneg %p69
      %p76 = scmp.eq.s32.totalorder %s34, 1
      %p77 = por %p75, %p76
      %p78 = scmp.ne.s32.totalorder %s70, %s73
      %p79 = scmp.eq.s32.totalorder %s34, 0
      %p80 = por %p78, %p79
      %p81 = scmp.ne.s32.totalorder %s70, %s73
      %p82 = scmp.eq.s32.totalorder %s39, 1
      %p83 = por %p81, %p82
      %p84 = scmp.ne.s32.totalorder %s73, %s74
      %p85 = scmp.eq.s32.totalorder %s39, 0
      %p86 = por %p84, %p85
      %p87 = scmp.ne.s32.totalorder %s73, %s74
      %p88 = scmp.eq.s32.totalorder %s40, 1
      %p89 = por %p87, %p88
      %p91 = scmp.ne.s32.totalorder %s74, %s90
      %p92 = scmp.eq.s32.totalorder %s40, 0
      %p93 = por %p91, %p92
      %s95 = sadd.s32 %s94, 1
      %p98 = scmp.eq.s32.totalorder %s34, 1
      %p99 = scmp.ne.s32.totalorder %s94, %s96
      %p100 = scmp.eq.s32.totalorder %s34, 0
      %p101 = por %p99, %p100
      %p102 = scmp.ne.s32.totalorder %s94, %s96
      %p103 = scmp.eq.s32.totalorder %s39, 1
      %p104 = por %p102, %p103
      %p105 = scmp.ne.s32.totalorder %s96, %s97
      %p106 = scmp.eq.s32.totalorder %s39, 0
      %p107 = por %p105, %p106
      %p108 = scmp.ne.s32.totalorder %s96, %s97
      %p109 = scmp.eq.s32.totalorder %s40, 1
      %p110 = por %p108, %p109
      %p112 = scmp.ne.s32.totalorder %s97, %s111
      %p113 = scmp.eq.s32.totalorder %s40, 0
      %p114 = por %p112, %p113
      %s116 = sadd.s32 %s115, 1
      %p119 = scmp.eq.s32.totalorder %s34, 1
      %p120 = scmp.ne.s32.totalorder %s115, %s117
      %p121 = scmp.eq.s32.totalorder %s34, 0
      %p122 = por %p120, %p121
      %p123 = scmp.ne.s32.totalorder %s115, %s117
      %p124 = scmp.eq.s32.totalorder %s39, 1
      %p125 = por %p123, %p124
      %p126 = scmp.ne.s32.totalorder %s117, %s118
      %p127 = scmp.eq.s32.totalorder %s39, 0
      %p128 = por %p126, %p127
      %p129 = scmp.ne.s32.totalorder %s117, %s118
      %p130 = scmp.eq.s32.totalorder %s40, 1
      %p131 = por %p129, %p130
      %p133 = scmp.ne.s32.totalorder %s118, %s132
      %p134 = scmp.eq.s32.totalorder %s40, 0
      %p135 = por %p133, %p134
      %s137 = sadd.s32 %s136, 1
      %p140 = scmp.eq.s32.totalorder %s34, 1
      %p141 = scmp.ne.s32.totalorder %s136, %s138
      %p142 = scmp.eq.s32.totalorder %s34, 0
      %p143 = por %p141, %p142
      %p144 = scmp.ne.s32.totalorder %s136, %s138
      %p145 = scmp.eq.s32.totalorder %s39, 1
      %p146 = por %p144, %p145
      %p147 = scmp.ne.s32.totalorder %s138, %s139
      %p148 = scmp.eq.s32.totalorder %s39, 0
      %p149 = por %p147, %p148
      %p150 = scmp.ne.s32.totalorder %s138, %s139
      %p151 = scmp.eq.s32.totalorder %s40, 1
      %p152 = por %p150, %p151
      %p154 = scmp.ne.s32.totalorder %s139, %s153
      %p155 = scmp.eq.s32.totalorder %s40, 0
      %p156 = por %p154, %p155
      %s158 = sadd.s32 %s157, 1
      %p161 = scmp.eq.s32.totalorder %s34, 1
      %p162 = scmp.ne.s32.totalorder %s157, %s159
      %p163 = scmp.eq.s32.totalorder %s34, 0
      %p164 = por %p162, %p163
      %p165 = scmp.ne.s32.totalorder %s157, %s159
      %p166 = scmp.eq.s32.totalorder %s39, 1
      %p167 = por %p165, %p166
      %p168 = scmp.ne.s32.totalorder %s159, %s160
      %p169 = scmp.eq.s32.totalorder %s39, 0
      %p170 = por %p168, %p169
      %p171 = scmp.ne.s32.totalorder %s159, %s160
      %p172 = scmp.eq.s32.totalorder %s40, 1
      %p173 = por %p171, %p172
      %p175 = scmp.ne.s32.totalorder %s160, %s174
      %p176 = scmp.eq.s32.totalorder %s40, 0
      %p177 = por %p175, %p176
      %s179 = sadd.s32 %s178, 1
      %p182 = scmp.eq.s32.totalorder %s34, 1
      %p183 = scmp.ne.s32.totalorder %s178, %s180
      %p184 = scmp.eq.s32.totalorder %s34, 0
      %p185 = por %p183, %p184
      %p186 = scmp.ne.s32.totalorder %s178, %s180
      %p187 = scmp.eq.s32.totalorder %s39, 1
      %p188 = por %p186, %p187
      %p189 = scmp.ne.s32.totalorder %s180, %s181
      %p190 = scmp.eq.s32.totalorder %s39, 0
      %p191 = por %p189, %p190
      %p192 = scmp.ne.s32.totalorder %s180, %s181
      %p193 = scmp.eq.s32.totalorder %s40, 1
      %p194 = por %p192, %p193
      %p196 = scmp.ne.s32.totalorder %s181, %s195
      %p197 = scmp.eq.s32.totalorder %s40, 0
      %p198 = por %p196, %p197
      %s200 = sadd.s32 %s199, 1
      %p203 = scmp.eq.s32.totalorder %s34, 1
      %p204 = scmp.ne.s32.totalorder %s199, %s201
      %p205 = scmp.eq.s32.totalorder %s34, 0
      %p206 = por %p204, %p205
      %p207 = scmp.ne.s32.totalorder %s199, %s201
      %p208 = scmp.eq.s32.totalorder %s39, 1
      %p209 = por %p207, %p208
      %p210 = scmp.ne.s32.totalorder %s201, %s202
      %p211 = scmp.eq.s32.totalorder %s39, 0
      %p212 = por %p210, %p211
      %p213 = scmp.ne.s32.totalorder %s201, %s202
      %p214 = scmp.eq.s32.totalorder %s40, 1
      %p215 = por %p213, %p214
      %p217 = scmp.ne.s32.totalorder %s202, %s216
      %p218 = scmp.eq.s32.totalorder %s40, 0
      %p219 = por %p217, %p218
      %s221 = sadd.s32 %s220, 1
      %p224 = scmp.eq.s32.totalorder %s34, 1
      %p225 = scmp.ne.s32.totalorder %s220, %s222
      %p226 = scmp.eq.s32.totalorder %s34, 0
      %p227 = por %p225, %p226
      %p228 = scmp.ne.s32.totalorder %s220, %s222
      %p229 = scmp.eq.s32.totalorder %s39, 1
      %p230 = por %p228, %p229
      %p231 = scmp.ne.s32.totalorder %s222, %s223
      %p232 = scmp.eq.s32.totalorder %s39, 0
      %p233 = por %p231, %p232
      %p234 = scmp.ne.s32.totalorder %s222, %s223
      %p235 = scmp.eq.s32.totalorder %s40, 1
      %p236 = por %p234, %p235
      %p238 = scmp.ne.s32.totalorder %s223, %s237
      %p239 = scmp.eq.s32.totalorder %s40, 0
      %p240 = por %p238, %p239
      %s242 = sadd.s32 %s241, 1
      %p245 = scmp.eq.s32.totalorder %s34, 1
      %p246 = scmp.ne.s32.totalorder %s241, %s243
      %p247 = scmp.eq.s32.totalorder %s34, 0
      %p248 = por %p246, %p247
      %p249 = scmp.ne.s32.totalorder %s241, %s243
      %p250 = scmp.eq.s32.totalorder %s39, 1
      %p251 = por %p249, %p250
      %p252 = scmp.ne.s32.totalorder %s243, %s244
      %p253 = scmp.eq.s32.totalorder %s39, 0
      %p254 = por %p252, %p253
      %p255 = scmp.ne.s32.totalorder %s243, %s244
      %p256 = scmp.eq.s32.totalorder %s40, 1
      %p257 = por %p255, %p256
      %p259 = scmp.ne.s32.totalorder %s244, %s258
      %p260 = scmp.eq.s32.totalorder %s40, 0
      %p261 = por %p259, %p260
      %s263 = sadd.s32 %s262, 1
      %p266 = scmp.eq.s32.totalorder %s34, 1
      %p267 = scmp.ne.s32.totalorder %s262, %s264
      %p268 = scmp.eq.s32.totalorder %s34, 0
      %p269 = por %p267, %p268
      %p270 = scmp.ne.s32.totalorder %s262, %s264
      %p271 = scmp.eq.s32.totalorder %s39, 1
      %p272 = por %p270, %p271
      %p273 = scmp.ne.s32.totalorder %s264, %s265
      %p274 = scmp.eq.s32.totalorder %s39, 0
      %p275 = por %p273, %p274
      %p276 = scmp.ne.s32.totalorder %s264, %s265
      %p277 = scmp.eq.s32.totalorder %s40, 1
      %p278 = por %p276, %p277
      %p280 = scmp.ne.s32.totalorder %s265, %s279
      %p281 = scmp.eq.s32.totalorder %s40, 0
      %p282 = por %p280, %p281
      %s284 = sadd.s32 %s283, 1
      %p287 = scmp.eq.s32.totalorder %s34, 1
      %p288 = scmp.ne.s32.totalorder %s283, %s285
      %p289 = scmp.eq.s32.totalorder %s34, 0
      %p290 = por %p288, %p289
      %p291 = scmp.ne.s32.totalorder %s283, %s285
      %p292 = scmp.eq.s32.totalorder %s39, 1
      %p293 = por %p291, %p292
      %p294 = scmp.ne.s32.totalorder %s285, %s286
      %p295 = scmp.eq.s32.totalorder %s39, 0
      %p296 = por %p294, %p295
      %p297 = scmp.ne.s32.totalorder %s285, %s286
      %p298 = scmp.eq.s32.totalorder %s40, 1
      %p299 = por %p297, %p298
      %p301 = scmp.ne.s32.totalorder %s286, %s300
      %p302 = scmp.eq.s32.totalorder %s40, 0
      %p303 = por %p301, %p302
      %s305 = sadd.s32 %s304, 1
      %p308 = scmp.eq.s32.totalorder %s34, 1
      %p309 = scmp.ne.s32.totalorder %s304, %s306
      %p310 = scmp.eq.s32.totalorder %s34, 0
      %p311 = por %p309, %p310
      %p312 = scmp.ne.s32.totalorder %s304, %s306
      %p313 = scmp.eq.s32.totalorder %s39, 1
      %p314 = por %p312, %p313
      %p315 = scmp.ne.s32.totalorder %s306, %s307
      %p316 = scmp.eq.s32.totalorder %s39, 0
      %p317 = por %p315, %p316
      %p318 = scmp.ne.s32.totalorder %s306, %s307
      %p319 = scmp.eq.s32.totalorder %s40, 1
      %p320 = por %p318, %p319
      %p322 = scmp.ne.s32.totalorder %s307, %s321
      %p323 = scmp.eq.s32.totalorder %s40, 0
      %p324 = por %p322, %p323
      %s326 = sadd.s32 %s325, 1
      %p329 = scmp.eq.s32.totalorder %s34, 1
      %p330 = scmp.ne.s32.totalorder %s325, %s327
      %p331 = scmp.eq.s32.totalorder %s34, 0
      %p332 = por %p330, %p331
      %p333 = scmp.ne.s32.totalorder %s325, %s327
      %p334 = scmp.eq.s32.totalorder %s39, 1
      %p335 = por %p333, %p334
      %p336 = scmp.ne.s32.totalorder %s327, %s328
      %p337 = scmp.eq.s32.totalorder %s39, 0
      %p338 = por %p336, %p337
      %p339 = scmp.ne.s32.totalorder %s327, %s328
      %p340 = scmp.eq.s32.totalorder %s40, 1
      %p341 = por %p339, %p340
      %p343 = scmp.ne.s32.totalorder %s328, %s342
      %p344 = scmp.eq.s32.totalorder %s40, 0
      %p345 = por %p343, %p344
      %s347 = sadd.s32 %s346, 1
      %p350 = scmp.eq.s32.totalorder %s34, 1
      %p351 = scmp.ne.s32.totalorder %s346, %s348
      %p352 = scmp.eq.s32.totalorder %s34, 0
      %p353 = por %p351, %p352
      %p354 = scmp.ne.s32.totalorder %s346, %s348
      %p355 = scmp.eq.s32.totalorder %s39, 1
      %p356 = por %p354, %p355
      %p357 = scmp.ne.s32.totalorder %s348, %s349
      %p358 = scmp.eq.s32.totalorder %s39, 0
      %p359 = por %p357, %p358
      %p360 = scmp.ne.s32.totalorder %s348, %s349
      %p361 = scmp.eq.s32.totalorder %s40, 1
      %p362 = por %p360, %p361
      %p364 = scmp.ne.s32.totalorder %s349, %s363
      %p365 = scmp.eq.s32.totalorder %s40, 0
      %p366 = por %p364, %p365
      %s368 = sadd.s32 %s367, 1
      %p371 = scmp.eq.s32.totalorder %s34, 1
      %p372 = scmp.ne.s32.totalorder %s367, %s369
      %p373 = scmp.eq.s32.totalorder %s34, 0
      %p374 = por %p372, %p373
      %p375 = scmp.ne.s32.totalorder %s367, %s369
      %p376 = scmp.eq.s32.totalorder %s39, 1
      %p377 = por %p375, %p376
      %p378 = scmp.ne.s32.totalorder %s369, %s370
      %p379 = scmp.eq.s32.totalorder %s39, 0
      %p380 = por %p378, %p379
      %p381 = scmp.ne.s32.totalorder %s369, %s370
      %p382 = scmp.eq.s32.totalorder %s40, 1
      %p383 = por %p381, %p382
      %p385 = scmp.ne.s32.totalorder %s370, %s384
      %p386 = scmp.eq.s32.totalorder %s40, 0
      %p387 = por %p385, %p386
      %s389 = sadd.s32 %s388, 1
      %p392 = scmp.eq.s32.totalorder %s34, 1
      %p393 = scmp.ne.s32.totalorder %s388, %s390
      %p394 = scmp.eq.s32.totalorder %s34, 0
      %p395 = por %p393, %p394
      %p396 = scmp.ne.s32.totalorder %s388, %s390
      %p397 = scmp.eq.s32.totalorder %s39, 1
      %p398 = por %p396, %p397
      %p399 = scmp.ne.s32.totalorder %s390, %s391
      %p400 = scmp.eq.s32.totalorder %s39, 0
      %p401 = por %p399, %p400
      %p402 = scmp.ne.s32.totalorder %s390, %s391
      %p403 = scmp.eq.s32.totalorder %s40, 1
      %p404 = por %p402, %p403
      %p406 = scmp.ne.s32.totalorder %s391, %s405
      %p407 = scmp.eq.s32.totalorder %s40, 0
      %p408 = por %p406, %p407
      %s410 = sadd.s32 %s409, 1
      %p413 = scmp.eq.s32.totalorder %s34, 1
      %p414 = scmp.ne.s32.totalorder %s409, %s411
      %p415 = scmp.eq.s32.totalorder %s34, 0
      %p416 = por %p414, %p415
      %p417 = scmp.ne.s32.totalorder %s409, %s411
      %p418 = scmp.eq.s32.totalorder %s39, 1
      %p419 = por %p417, %p418
      %p420 = scmp.ne.s32.totalorder %s411, %s412
      %p421 = scmp.eq.s32.totalorder %s39, 0
      %p422 = por %p420, %p421
      %p423 = scmp.ne.s32.totalorder %s411, %s412
      %p424 = scmp.eq.s32.totalorder %s40, 1
      %p425 = por %p423, %p424
      %p427 = scmp.ne.s32.totalorder %s412, %s426
      %p428 = scmp.eq.s32.totalorder %s40, 0
      %p429 = por %p427, %p428
      %s431 = sadd.s32 %s430, 1
      %p434 = scmp.eq.s32.totalorder %s34, 1
      %p435 = scmp.ne.s32.totalorder %s430, %s432
      %p436 = scmp.eq.s32.totalorder %s34, 0
      %p437 = por %p435, %p436
      %p438 = scmp.ne.s32.totalorder %s430, %s432
      %p439 = scmp.eq.s32.totalorder %s39, 1
      %p440 = por %p438, %p439
      %p441 = scmp.ne.s32.totalorder %s432, %s433
      %p442 = scmp.eq.s32.totalorder %s39, 0
      %p443 = por %p441, %p442
      %p444 = scmp.ne.s32.totalorder %s432, %s433
      %p445 = scmp.eq.s32.totalorder %s40, 1
      %p446 = por %p444, %p445
      %p448 = scmp.ne.s32.totalorder %s433, %s447
      %p449 = scmp.eq.s32.totalorder %s40, 0
      %p450 = por %p448, %p449
      %s452 = sadd.s32 %s451, 1
      %p455 = scmp.eq.s32.totalorder %s34, 1
      %p456 = scmp.ne.s32.totalorder %s451, %s453
      %p457 = scmp.eq.s32.totalorder %s34, 0
      %p458 = por %p456, %p457
      %p459 = scmp.ne.s32.totalorder %s451, %s453
      %p460 = scmp.eq.s32.totalorder %s39, 1
      %p461 = por %p459, %p460
      %p462 = scmp.ne.s32.totalorder %s453, %s454
      %p463 = scmp.eq.s32.totalorder %s39, 0
      %p464 = por %p462, %p463
      %p465 = scmp.ne.s32.totalorder %s453, %s454
      %p466 = scmp.eq.s32.totalorder %s40, 1
      %p467 = por %p465, %p466
      %p469 = scmp.ne.s32.totalorder %s454, %s468
      %p470 = scmp.eq.s32.totalorder %s40, 0
      %p471 = por %p469, %p470
      %s473 = sadd.s32 %s472, 1
      %p476 = scmp.eq.s32.totalorder %s34, 1
      %p477 = scmp.ne.s32.totalorder %s472, %s474
      %p478 = scmp.eq.s32.totalorder %s34, 0
      %p479 = por %p477, %p478
      %p480 = scmp.ne.s32.totalorder %s472, %s474
      %p481 = scmp.eq.s32.totalorder %s39, 1
      %p482 = por %p480, %p481
      %p483 = scmp.ne.s32.totalorder %s474, %s475
      %p484 = scmp.eq.s32.totalorder %s39, 0
      %p485 = por %p483, %p484
      %p486 = scmp.ne.s32.totalorder %s474, %s475
      %p487 = scmp.eq.s32.totalorder %s40, 1
      %p488 = por %p486, %p487
      %p490 = scmp.ne.s32.totalorder %s475, %s489
      %p491 = scmp.eq.s32.totalorder %s40, 0
      %p492 = por %p490, %p491
      %s494 = sadd.s32 %s493, 1
      %p497 = scmp.eq.s32.totalorder %s34, 1
      %p498 = scmp.ne.s32.totalorder %s493, %s495
      %p499 = scmp.eq.s32.totalorder %s34, 0
      %p500 = por %p498, %p499
      %p501 = scmp.ne.s32.totalorder %s493, %s495
      %p502 = scmp.eq.s32.totalorder %s39, 1
      %p503 = por %p501, %p502
      %p504 = scmp.ne.s32.totalorder %s495, %s496
      %p505 = scmp.eq.s32.totalorder %s39, 0
      %p506 = por %p504, %p505
      %p507 = scmp.ne.s32.totalorder %s495, %s496
      %p508 = scmp.eq.s32.totalorder %s40, 1
      %p509 = por %p507, %p508
      %p511 = scmp.ne.s32.totalorder %s496, %s510
      %p512 = scmp.eq.s32.totalorder %s40, 0
      %p513 = por %p511, %p512
      %s515 = sadd.s32 %s514, 1
      %p518 = scmp.eq.s32.totalorder %s34, 1
      %p519 = scmp.ne.s32.totalorder %s514, %s516
      %p520 = scmp.eq.s32.totalorder %s34, 0
      %p521 = por %p519, %p520
      %p522 = scmp.ne.s32.totalorder %s514, %s516
      %p523 = scmp.eq.s32.totalorder %s39, 1
      %p524 = por %p522, %p523
      %p525 = scmp.ne.s32.totalorder %s516, %s517
      %p526 = scmp.eq.s32.totalorder %s39, 0
      %p527 = por %p525, %p526
      %p528 = scmp.ne.s32.totalorder %s516, %s517
      %p529 = scmp.eq.s32.totalorder %s40, 1
      %p530 = por %p528, %p529
      %p532 = scmp.ne.s32.totalorder %s517, %s531
      %p533 = scmp.eq.s32.totalorder %s40, 0
      %p534 = por %p532, %p533
      %s536 = sadd.s32 %s535, 1
      %p539 = scmp.eq.s32.totalorder %s34, 1
      %p540 = scmp.ne.s32.totalorder %s535, %s537
      %p541 = scmp.eq.s32.totalorder %s34, 0
      %p542 = por %p540, %p541
      %p543 = scmp.ne.s32.totalorder %s535, %s537
      %p544 = scmp.eq.s32.totalorder %s39, 1
      %p545 = por %p543, %p544
      %p546 = scmp.ne.s32.totalorder %s537, %s538
      %p547 = scmp.eq.s32.totalorder %s39, 0
      %p548 = por %p546, %p547
      %p549 = scmp.ne.s32.totalorder %s537, %s538
      %p550 = scmp.eq.s32.totalorder %s40, 1
      %p551 = por %p549, %p550
      %p553 = scmp.ne.s32.totalorder %s538, %s552
      %p554 = scmp.eq.s32.totalorder %s40, 0
      %p555 = por %p553, %p554
      %s557 = sadd.s32 %s556, 1
      %p560 = scmp.eq.s32.totalorder %s34, 1
      %p561 = scmp.ne.s32.totalorder %s556, %s558
      %p562 = scmp.eq.s32.totalorder %s34, 0
      %p563 = por %p561, %p562
      %p564 = scmp.ne.s32.totalorder %s556, %s558
      %p565 = scmp.eq.s32.totalorder %s39, 1
      %p566 = por %p564, %p565
      %p567 = scmp.ne.s32.totalorder %s558, %s559
      %p568 = scmp.eq.s32.totalorder %s39, 0
      %p569 = por %p567, %p568
      %p570 = scmp.ne.s32.totalorder %s558, %s559
      %p571 = scmp.eq.s32.totalorder %s40, 1
      %p572 = por %p570, %p571
      %p574 = scmp.ne.s32.totalorder %s559, %s573
      %p575 = scmp.eq.s32.totalorder %s40, 0
      %p576 = por %p574, %p575
      %s577 = ssub.s32 %s34, %s41
      %p578 = scmp.eq.s32.totalorder %s577, 0
      %s580 = sadd.s32 %s579, 1
      %s581 = scalar_select %p578, %s579, %s580
      %p584 = pneg %p578
      %p585 = scmp.eq.s32.totalorder %s34, 1
      %p586 = por %p584, %p585
      %p587 = scmp.ne.s32.totalorder %s579, %s582
      %p588 = scmp.eq.s32.totalorder %s34, 0
      %p589 = por %p587, %p588
      %p590 = scmp.ne.s32.totalorder %s579, %s582
      %p591 = scmp.eq.s32.totalorder %s39, 1
      %p592 = por %p590, %p591
      %p593 = scmp.ne.s32.totalorder %s582, %s583
      %p594 = scmp.eq.s32.totalorder %s39, 0
      %p595 = por %p593, %p594
      %p596 = scmp.ne.s32.totalorder %s582, %s583
      %p597 = scmp.eq.s32.totalorder %s40, 1
      %p598 = por %p596, %p597
      %p600 = scmp.ne.s32.totalorder %s583, %s599
      %p601 = scmp.eq.s32.totalorder %s40, 0
      %p602 = por %p600, %p601
      %p603 = scmp.le.s32.totalorder 1, %s34
      %p604 = scmp.lt.s32.totalorder %s34, 3
      %p605 = pnand %p603, %p604
      %p606 = pneg %p605
      // Predicated region
      $region9: #{combined_detector.1} parent=5 // pred_check
        _
      $region10: #{combined_detector.1} parent=5 // pred_check_branch
        %608 = sbr.rel (%p605) target = $region12
      $region11: #{combined_detector.1} parent=5 // pred_region
        %s609 = ssub.s32 %s34, 1
        // Predicated region
        $region13: #{combined_detector.1} parent=11 // pred_check
          %p610 = pneg %p107
        $region14: #{combined_detector.1} parent=11 // pred_check_branch
          %612 = sbr.rel (%p610) target = $region16
        $region15: #{combined_detector.1} parent=11 // pred_region
          _
        $region16: #{combined_detector.1} parent=11 // pred_fallthru
          _
        // Predicated region
        $region17: #{combined_detector.1} parent=11 // pred_check
          %p613 = pneg %p128
        $region18: #{combined_detector.1} parent=11 // pred_check_branch
          %615 = sbr.rel (%p613) target = $region20
        $region19: #{combined_detector.1} parent=11 // pred_region
          _
        $region20: #{combined_detector.1} parent=11 // pred_fallthru
          _
        // Predicated region
        $region21: #{combined_detector.1} parent=11 // pred_check
          %p616 = pneg %p149
        $region22: #{combined_detector.1} parent=11 // pred_check_branch
          %618 = sbr.rel (%p616) target = $region24
        $region23: #{combined_detector.1} parent=11 // pred_region
          _
        $region24: #{combined_detector.1} parent=11 // pred_fallthru
          _
        // Predicated region
        $region25: #{combined_detector.1} parent=11 // pred_check
          %p619 = pneg %p170
        $region26: #{combined_detector.1} parent=11 // pred_check_branch
          %621 = sbr.rel (%p619) target = $region28
        $region27: #{combined_detector.1} parent=11 // pred_region
          _
        $region28: #{combined_detector.1} parent=11 // pred_fallthru
          _
        // Predicated region
        $region29: #{combined_detector.1} parent=11 // pred_check
          %p622 = pneg %p191
        $region30: #{combined_detector.1} parent=11 // pred_check_branch
          %624 = sbr.rel (%p622) target = $region32
        $region31: #{combined_detector.1} parent=11 // pred_region
          _
        $region32: #{combined_detector.1} parent=11 // pred_fallthru
          _
        // Predicated region
        $region33: #{combined_detector.1} parent=11 // pred_check
          %p625 = pneg %p212
        $region34: #{combined_detector.1} parent=11 // pred_check_branch
          %627 = sbr.rel (%p625) target = $region36
        $region35: #{combined_detector.1} parent=11 // pred_region
          _
        $region36: #{combined_detector.1} parent=11 // pred_fallthru
          _
        // Predicated region
        $region37: #{combined_detector.1} parent=11 // pred_check
          %p628 = pneg %p233
        $region38: #{combined_detector.1} parent=11 // pred_check_branch
          %630 = sbr.rel (%p628) target = $region40
        $region39: #{combined_detector.1} parent=11 // pred_region
          _
        $region40: #{combined_detector.1} parent=11 // pred_fallthru
          _
        // Predicated region
        $region41: #{combined_detector.1} parent=11 // pred_check
          %p631 = pneg %p254
        $region42: #{combined_detector.1} parent=11 // pred_check_branch
          %633 = sbr.rel (%p631) target = $region44
        $region43: #{combined_detector.1} parent=11 // pred_region
          _
        $region44: #{combined_detector.1} parent=11 // pred_fallthru
          _
        // Predicated region
        $region45: #{combined_detector.1} parent=11 // pred_check
          %p634 = pneg %p275
        $region46: #{combined_detector.1} parent=11 // pred_check_branch
          %636 = sbr.rel (%p634) target = $region48
        $region47: #{combined_detector.1} parent=11 // pred_region
          _
        $region48: #{combined_detector.1} parent=11 // pred_fallthru
          _
        // Predicated region
        $region49: #{combined_detector.1} parent=11 // pred_check
          %p637 = pneg %p296
        $region50: #{combined_detector.1} parent=11 // pred_check_branch
          %639 = sbr.rel (%p637) target = $region52
        $region51: #{combined_detector.1} parent=11 // pred_region
          _
        $region52: #{combined_detector.1} parent=11 // pred_fallthru
          _
        // Predicated region
        $region53: #{combined_detector.1} parent=11 // pred_check
          %p640 = pneg %p317
        $region54: #{combined_detector.1} parent=11 // pred_check_branch
          %642 = sbr.rel (%p640) target = $region56
        $region55: #{combined_detector.1} parent=11 // pred_region
          _
        $region56: #{combined_detector.1} parent=11 // pred_fallthru
          _
        // Predicated region
        $region57: #{combined_detector.1} parent=11 // pred_check
          %p643 = pneg %p338
        $region58: #{combined_detector.1} parent=11 // pred_check_branch
          %645 = sbr.rel (%p643) target = $region60
        $region59: #{combined_detector.1} parent=11 // pred_region
          _
        $region60: #{combined_detector.1} parent=11 // pred_fallthru
          _
        // Predicated region
        $region61: #{combined_detector.1} parent=11 // pred_check
          %p646 = pneg %p359
        $region62: #{combined_detector.1} parent=11 // pred_check_branch
          %648 = sbr.rel (%p646) target = $region64
        $region63: #{combined_detector.1} parent=11 // pred_region
          _
        $region64: #{combined_detector.1} parent=11 // pred_fallthru
          _
        // Predicated region
        $region65: #{combined_detector.1} parent=11 // pred_check
          %p649 = pneg %p380
        $region66: #{combined_detector.1} parent=11 // pred_check_branch
          %651 = sbr.rel (%p649) target = $region68
        $region67: #{combined_detector.1} parent=11 // pred_region
          _
        $region68: #{combined_detector.1} parent=11 // pred_fallthru
          _
        // Predicated region
        $region69: #{combined_detector.1} parent=11 // pred_check
          %p652 = pneg %p401
        $region70: #{combined_detector.1} parent=11 // pred_check_branch
          %654 = sbr.rel (%p652) target = $region72
        $region71: #{combined_detector.1} parent=11 // pred_region
          _
        $region72: #{combined_detector.1} parent=11 // pred_fallthru
          _
        // Predicated region
        $region73: #{combined_detector.1} parent=11 // pred_check
          %p655 = pneg %p422
        $region74: #{combined_detector.1} parent=11 // pred_check_branch
          %657 = sbr.rel (%p655) target = $region76
        $region75: #{combined_detector.1} parent=11 // pred_region
          _
        $region76: #{combined_detector.1} parent=11 // pred_fallthru
          _
        // Predicated region
        $region77: #{combined_detector.1} parent=11 // pred_check
          %p658 = pneg %p443
        $region78: #{combined_detector.1} parent=11 // pred_check_branch
          %660 = sbr.rel (%p658) target = $region80
        $region79: #{combined_detector.1} parent=11 // pred_region
          _
        $region80: #{combined_detector.1} parent=11 // pred_fallthru
          _
        // Predicated region
        $region81: #{combined_detector.1} parent=11 // pred_check
          %p661 = pneg %p464
        $region82: #{combined_detector.1} parent=11 // pred_check_branch
          %663 = sbr.rel (%p661) target = $region84
        $region83: #{combined_detector.1} parent=11 // pred_region
          _
        $region84: #{combined_detector.1} parent=11 // pred_fallthru
          _
        // Predicated region
        $region85: #{combined_detector.1} parent=11 // pred_check
          %p664 = pneg %p485
        $region86: #{combined_detector.1} parent=11 // pred_check_branch
          %666 = sbr.rel (%p664) target = $region88
        $region87: #{combined_detector.1} parent=11 // pred_region
          _
        $region88: #{combined_detector.1} parent=11 // pred_fallthru
          _
        // Predicated region
        $region89: #{combined_detector.1} parent=11 // pred_check
          %p667 = pneg %p506
        $region90: #{combined_detector.1} parent=11 // pred_check_branch
          %669 = sbr.rel (%p667) target = $region92
        $region91: #{combined_detector.1} parent=11 // pred_region
          _
        $region92: #{combined_detector.1} parent=11 // pred_fallthru
          _
        // Predicated region
        $region93: #{combined_detector.1} parent=11 // pred_check
          %p670 = pneg %p527
        $region94: #{combined_detector.1} parent=11 // pred_check_branch
          %672 = sbr.rel (%p670) target = $region96
        $region95: #{combined_detector.1} parent=11 // pred_region
          _
        $region96: #{combined_detector.1} parent=11 // pred_fallthru
          _
        // Predicated region
        $region97: #{combined_detector.1} parent=11 // pred_check
          %p673 = pneg %p548
        $region98: #{combined_detector.1} parent=11 // pred_check_branch
          %675 = sbr.rel (%p673) target = $region100
        $region99: #{combined_detector.1} parent=11 // pred_region
          _
        $region100: #{combined_detector.1} parent=11 // pred_fallthru
          _
        // Predicated region
        $region101: #{combined_detector.1} parent=11 // pred_check
          %p676 = pneg %p569
        $region102: #{combined_detector.1} parent=11 // pred_check_branch
          %678 = sbr.rel (%p676) target = $region104
        $region103: #{combined_detector.1} parent=11 // pred_region
          _
        $region104: #{combined_detector.1} parent=11 // pred_fallthru
          _
      $region12: #{combined_detector.1} parent=5 // pred_fallthru
        _
      %p679 = scmp.lt.s32.totalorder %s34, 2
      // Predicated region
      $region105: #{combined_detector.1} parent=5 // pred_check
        %p680 = pneg %p679
      $region106: #{combined_detector.1} parent=5 // pred_check_branch
        %682 = sbr.rel (%p680) target = $region108
      $region107: #{combined_detector.1} parent=5 // pred_region
        // Predicated region
        $region109: #{combined_detector.1} parent=107 // pred_check
          %p683 = pneg %p54
        $region110: #{combined_detector.1} parent=107 // pred_check_branch
          %685 = sbr.rel (%p683) target = $region112
        $region111: #{combined_detector.1} parent=107 // pred_region
          %p686 = scmp.lt.s32.totalorder %s34, 1
          %s687 = scalar_select %p686, %s34, 1
          %s688 = smul.addr %s687, 42
          %s689 = smul.addr %s688, 4
          %s690 = scalar_lea.vmem %s0, %s689
        $region112: #{combined_detector.1} parent=107 // pred_fallthru
          _
        // Predicated region
        $region113: #{combined_detector.1} parent=107 // pred_check
          %p691 = pneg %p80
        $region114: #{combined_detector.1} parent=107 // pred_check_branch
          %693 = sbr.rel (%p691) target = $region116
        $region115: #{combined_detector.1} parent=107 // pred_region
          %p694 = scmp.lt.s32.totalorder %s34, 1
          %s695 = scalar_select %p694, %s34, 1
          %s696 = smul.addr %s695, 14
          %s697 = smul.addr %s696, 4
          %s698 = scalar_lea.vmem %s1, %s697
        $region116: #{combined_detector.1} parent=107 // pred_fallthru
          _
      $region108: #{combined_detector.1} parent=5 // pred_fallthru
        _
      %p699 = scmp.le.s32.totalorder 1, %s34
      %p700 = scmp.lt.s32.totalorder %s34, 3
      %p701 = pnand %p699, %p700
      %p702 = pneg %p701
      // Predicated region
      $region117: #{combined_detector.1} parent=5 // pred_check
        _
      $region118: #{combined_detector.1} parent=5 // pred_check_branch
        %704 = sbr.rel (%p701) target = $region120
      $region119: #{combined_detector.1} parent=5 // pred_region
        %s705 = ssub.s32 %s34, 1
        %p706 = scmp.lt.s32.totalorder %s39, 1
        %s707 = scalar_select %p706, %s39, 1
        %s708 = smul.addr %s707, 42
        %s709 = smul.addr %s708, 4
        %s710 = scalar_lea.vmem %s0, %s709
        %p711 = pneg %p60
        %p712 = pneg %p57
        %p713 = scmp.lt.s32.totalorder %s39, 1
        %s714 = scalar_select %p713, %s39, 1
        %s715 = smul.addr %s714, 14
        %s716 = smul.addr %s715, 4
        %s717 = scalar_lea.vmem %s1, %s716
        %p718 = pneg %p86
        %p719 = pneg %p83
        %p720 = pneg %p107
        %p721 = pneg %p104
        %p722 = pneg %p128
        %p723 = pneg %p125
        %p724 = pneg %p149
        %p725 = pneg %p146
        %p726 = pneg %p170
        %p727 = pneg %p167
        %p728 = pneg %p191
        %p729 = pneg %p188
        %p730 = pneg %p212
        %p731 = pneg %p209
        %p732 = pneg %p233
        %p733 = pneg %p230
        %p734 = pneg %p254
        %p735 = pneg %p251
        %p736 = pneg %p275
        %p737 = pneg %p272
        %p738 = pneg %p296
        %p739 = pneg %p293
        %p740 = pneg %p317
        %p741 = pneg %p314
        %p742 = pneg %p338
        %p743 = pneg %p335
        %p744 = pneg %p359
        %p745 = pneg %p356
        %p746 = pneg %p380
        %p747 = pneg %p377
        %p748 = pneg %p401
        %p749 = pneg %p398
        %p750 = pneg %p422
        %p751 = pneg %p419
        %p752 = pneg %p443
        %p753 = pneg %p440
        %p754 = pneg %p464
        %p755 = pneg %p461
        %p756 = pneg %p485
        %p757 = pneg %p482
        %p758 = pneg %p506
        %p759 = pneg %p503
        %p760 = pneg %p527
        %p761 = pneg %p524
        %p762 = pneg %p548
        %p763 = pneg %p545
        %p764 = pneg %p569
        %p765 = pneg %p566
        %p766 = pneg %p595
        %p767 = pneg %p592
        %s768 = sand.u32 %s582, 1
        %s769 = scalar_lea.sflag [#allocation3], %s768
        %s770 = sand.u32 %s582, 1
        %s771 = scalar_lea.vmem [#allocation2], %s770
        %p772 = scmp.lt.s32.totalorder %s39, 1
        %s773 = scalar_select %p772, %s39, 1
        %s774 = smul.addr %s773, 42
        %s775 = smul.addr %s774, 4
        %s776 = scalar_lea.vmem %s0, %s775
        %p777 = scmp.lt.s32.totalorder %s39, 1
        %s778 = scalar_select %p777, %s39, 1
        %s779 = smul.addr %s778, 14
        %s780 = smul.addr %s779, 4
        %s781 = scalar_lea.vmem %s1, %s780
        %v783 = vld [vmem:[%s776] sm:$0xf]
        %v784 = vld [vmem:[%s776 + $0x4] sm:$0xf]
        %v785 = vld [vmem:[%s776 + $0x8] sm:$0xf]
        %v786 = vld [vmem:[%s776 + $0xc] sm:$0xf]
        %v787 = vld [vmem:[%s776 + $0x10] sm:$0xf]
        %v788 = vld [vmem:[%s776 + $0x14] sm:$0xf]
        %v789 = vld [vmem:[%s776 + $0x18] sm:$0xf]
        %v790 = vld [vmem:[%s776 + $0x1c] sm:$0xf]
        %v791 = vld [vmem:[%s776 + $0x20] sm:$0xf]
        %v792 = vld [vmem:[%s776 + $0x24] sm:$0xf]
        %v793 = vld [vmem:[%s776 + $0x28] sm:$0xf]
        %v794 = vld [vmem:[%s776 + $0x2c] sm:$0xf]
        %v795 = vld [vmem:[%s776 + $0x30] sm:$0xf]
        %v796 = vld [vmem:[%s776 + $0x34] sm:$0xf]
        %v797 = vld [vmem:[%s776 + $0x38] sm:$0xf]
        %v798 = vld [vmem:[%s776 + $0x3c] sm:$0xf]
        %v799 = vld [vmem:[%s776 + $0x40] sm:$0xf]
        %v800 = vld [vmem:[%s776 + $0x44] sm:$0xf]
        %v801 = vld [vmem:[%s776 + $0x48] sm:$0xf]
        %v802 = vld [vmem:[%s776 + $0x4c] sm:$0xf]
        %v803 = vld [vmem:[%s776 + $0x50] sm:$0xf]
        %v804 = vld [vmem:[%s776 + $0x54] sm:$0xf]
        %v805 = vld [vmem:[%s776 + $0x58] sm:$0xf]
        %v806 = vld [vmem:[%s776 + $0x5c] sm:$0xf]
        %v807 = vld [vmem:[%s776 + $0x60] sm:$0xf]
        %v808 = vld [vmem:[%s776 + $0x64] sm:$0xf]
        %v809 = vld [vmem:[%s776 + $0x68] sm:$0xf]
        %v810 = vld [vmem:[%s776 + $0x6c] sm:$0xf]
        %v811 = vld [vmem:[%s776 + $0x70] sm:$0xf]
        %v812 = vld [vmem:[%s776 + $0x74] sm:$0xf]
        %v813 = vld [vmem:[%s776 + $0x78] sm:$0xf]
        %v814 = vld [vmem:[%s776 + $0x7c] sm:$0xf]
        %v815 = vld [vmem:[%s776 + $0x80] sm:$0xf]
        %v816 = vld [vmem:[%s776 + $0x84] sm:$0xf]
        %v817 = vld [vmem:[%s776 + $0x88] sm:$0xf]
        %v818 = vld [vmem:[%s776 + $0x8c] sm:$0xf]
        %v819 = vld [vmem:[%s776 + $0x90] sm:$0xf]
        %v820 = vld [vmem:[%s776 + $0x94] sm:$0xf]
        %v821 = vld [vmem:[%s776 + $0x98] sm:$0xf]
        %v822 = vld [vmem:[%s776 + $0x9c] sm:$0xf]
        %v823 = vld [vmem:[%s776 + $0xa0] sm:$0xf]
        %v824 = vld [vmem:[%s776 + $0xa4] sm:$0xf]
        %v825 = vld [vmem:[%s2] sm:$0xff]
        %v826 = vld [vmem:[%s2 + $0x8] sm:$0xff]
        %v827 = vld [vmem:[%s2 + $0x10] sm:$0xff]
        %v828 = vld [vmem:[%s2 + $0x18] sm:$0xff]
        %v829 = vld [vmem:[%s2 + $0x20] sm:$0xff]
        %v830 = vld [vmem:[%s2 + $0x28] sm:$0xff]
        %v831 = vld [vmem:[%s2 + $0x30] sm:$0xff]
        %v832 = vld [vmem:[%s2 + $0x38] sm:$0xff]
        %v833 = vld [vmem:[%s2 + $0x40] sm:$0xff]
        %v834 = vld [vmem:[%s2 + $0x48] sm:$0xff]
        %v835 = vld [vmem:[%s2 + $0x50] sm:$0xff]
        %v836 = vld [vmem:[%s2 + $0x58] sm:$0xff]
        %v837 = vld [vmem:[%s2 + $0x60] sm:$0xff]
        %v838 = vld [vmem:[%s2 + $0x68] sm:$0xff]
        %v839 = vld [vmem:[%s2 + $0x70] sm:$0xff]
        %v840 = vld [vmem:[%s2 + $0x78] sm:$0xff]
        %v841 = vld [vmem:[%s2 + $0x80] sm:$0xff]
        %v842 = vld [vmem:[%s2 + $0x88] sm:$0xff]
        %v843 = vld [vmem:[%s2 + $0x90] sm:$0xff]
        %v844 = vld [vmem:[%s2 + $0x98] sm:$0xff]
        %v845 = vld [vmem:[%s2 + $0xa0] sm:$0xff]
        %v846 = vld [vmem:[%s2 + $0xa8] sm:$0xff]
        %v847 = vld [vmem:[%s2 + $0xb0] sm:$0xff]
        %v848 = vld [vmem:[%s2 + $0xb8] sm:$0xff]
        %v849 = vld [vmem:[%s2 + $0xc0] sm:$0xff]
        %v850 = vld [vmem:[%s2 + $0xc8] sm:$0xff]
        %v851 = vld [vmem:[%s2 + $0xd0] sm:$0xff]
        %v852 = vld [vmem:[%s2 + $0xd8] sm:$0xff]
        %v853 = vld [vmem:[%s2 + $0xe0] sm:$0xff]
        %v854 = vld [vmem:[%s2 + $0xe8] sm:$0xff]
        %v855 = vld [vmem:[%s2 + $0xf0] sm:$0xff]
        %v856 = vld [vmem:[%s2 + $0xf8] sm:$0xff]
        %v857 = vld [vmem:[%s2 + $0x100] sm:$0xff]
        %v858 = vld [vmem:[%s2 + $0x108] sm:$0xff]
        %v859 = vld [vmem:[%s2 + $0x110] sm:$0xff]
        %v860 = vld [vmem:[%s2 + $0x118] sm:$0xff]
        %v861 = vld [vmem:[%s2 + $0x120] sm:$0xff]
        %v862 = vld [vmem:[%s2 + $0x128] sm:$0xff]
        %v863 = vld [vmem:[%s2 + $0x130] sm:$0xff]
        %v864 = vld [vmem:[%s2 + $0x138] sm:$0xff]
        %v865 = vld [vmem:[%s2 + $0x140] sm:$0xff]
        %v866 = vld [vmem:[%s2 + $0x148] sm:$0xff]
        %v867 = vld [vmem:[%s4] sm:$0xf]
        %v868 = vld [vmem:[%s4 + $0x4] sm:$0xf]
        %v869 = vld [vmem:[%s4 + $0x8] sm:$0xf]
        %v870 = vld [vmem:[%s4 + $0xc] sm:$0xf]
        %v871 = vld [vmem:[%s4 + $0x10] sm:$0xf]
        %v872 = vld [vmem:[%s4 + $0x14] sm:$0xf]
        %v873 = vld [vmem:[%s4 + $0x18] sm:$0xf]
        %v874 = vld [vmem:[%s4 + $0x1c] sm:$0xf]
        %v875 = vld [vmem:[%s4 + $0x20] sm:$0xf]
        %v876 = vld [vmem:[%s4 + $0x24] sm:$0xf]
        %v877 = vld [vmem:[%s4 + $0x28] sm:$0xf]
        %v878 = vld [vmem:[%s4 + $0x2c] sm:$0xf]
        %v879 = vld [vmem:[%s4 + $0x30] sm:$0xf]
        %v880 = vld [vmem:[%s4 + $0x34] sm:$0xf]
        %v881 = vld [vmem:[%s4 + $0x38] sm:$0xf]
        %v882 = vld [vmem:[%s4 + $0x3c] sm:$0xf]
        %v883 = vld [vmem:[%s5] sm:$0x1]
        %v885 = vlaneseq
        %v886 = vshrl.u32 %v885, 7
        %v887 = vsub.s32 0, %v886
        %v888 = vrot.slane %v883, %v887
        %v932 = vunpack.c.l.b16 %v783
        %v933 = vunpack.c.l.b16 %v784
        %v934 = vunpack.c.l.b16 %v785
        %v935 = vunpack.c.l.b16 %v786
        %v936 = vunpack.c.l.b16 %v787
        %v937 = vunpack.c.l.b16 %v788
        %v938 = vunpack.c.l.b16 %v789
        %v939 = vunpack.c.l.b16 %v790
        %v940 = vunpack.c.l.b16 %v791
        %v941 = vunpack.c.l.b16 %v792
        %v942 = vunpack.c.l.b16 %v793
        %v943 = vunpack.c.l.b16 %v794
        %v944 = vunpack.c.l.b16 %v795
        %v945 = vunpack.c.l.b16 %v796
        %v946 = vunpack.c.l.b16 %v797
        %v947 = vunpack.c.l.b16 %v798
        %v948 = vunpack.c.l.b16 %v799
        %v949 = vunpack.c.l.b16 %v800
        %v950 = vunpack.c.l.b16 %v801
        %v951 = vunpack.c.l.b16 %v802
        %v952 = vunpack.c.l.b16 %v803
        %v953 = vunpack.c.l.b16 %v804
        %v954 = vunpack.c.l.b16 %v805
        %v955 = vunpack.c.l.b16 %v806
        %v956 = vunpack.c.l.b16 %v807
        %v957 = vunpack.c.l.b16 %v808
        %v958 = vunpack.c.l.b16 %v809
        %v959 = vunpack.c.l.b16 %v810
        %v960 = vunpack.c.l.b16 %v811
        %v961 = vunpack.c.l.b16 %v812
        %v962 = vunpack.c.l.b16 %v813
        %v963 = vunpack.c.l.b16 %v814
        %v964 = vunpack.c.l.b16 %v815
        %v965 = vunpack.c.l.b16 %v816
        %v966 = vunpack.c.l.b16 %v817
        %v967 = vunpack.c.l.b16 %v818
        %v968 = vunpack.c.l.b16 %v819
        %v969 = vunpack.c.l.b16 %v820
        %v970 = vunpack.c.l.b16 %v821
        %v971 = vunpack.c.l.b16 %v822
        %v972 = vunpack.c.l.b16 %v823
        %v973 = vunpack.c.l.b16 %v824
        %v974 = vpack.c.b16 %v933, %v932
        %v975 = vpack.c.b16 %v935, %v934
        %v976 = vpack.c.b16 %v937, %v936
        %v977 = vpack.c.b16 %v939, %v938
        %v978 = vpack.c.b16 %v941, %v940
        %v979 = vpack.c.b16 %v943, %v942
        %v980 = vpack.c.b16 %v945, %v944
        %v981 = vpack.c.b16 %v947, %v946
        %v982 = vpack.c.b16 %v949, %v948
        %v983 = vpack.c.b16 %v951, %v950
        %v984 = vpack.c.b16 %v953, %v952
        %v985 = vpack.c.b16 %v955, %v954
        %v986 = vpack.c.b16 %v957, %v956
        %v987 = vpack.c.b16 %v959, %v958
        %v988 = vpack.c.b16 %v961, %v960
        %v989 = vpack.c.b16 %v963, %v962
        %v990 = vpack.c.b16 %v965, %v964
        %v991 = vpack.c.b16 %v967, %v966
        %v992 = vpack.c.b16 %v969, %v968
        %v993 = vpack.c.b16 %v971, %v970
        %v994 = vpack.c.b16 %v973, %v972
        %v1032 = vunpack.c.l.b16 %v867
        %v1033 = vunpack.c.l.b16 %v868
        %v1034 = vunpack.c.l.b16 %v869
        %v1035 = vunpack.c.l.b16 %v870
        %v1036 = vunpack.c.l.b16 %v871
        %v1037 = vunpack.c.l.b16 %v872
        %v1038 = vunpack.c.l.b16 %v873
        %v1039 = vunpack.c.l.b16 %v874
        %v1040 = vunpack.c.l.b16 %v875
        %v1041 = vunpack.c.l.b16 %v876
        %v1042 = vunpack.c.l.b16 %v877
        %v1043 = vunpack.c.l.b16 %v878
        %v1044 = vunpack.c.l.b16 %v879
        %v1045 = vunpack.c.l.b16 %v880
        %v1046 = vunpack.c.l.b16 %v881
        %v1047 = vunpack.c.l.b16 %v882
        %v1048 = vpack.c.b16 %v1033, %v1032
        %v1049 = vpack.c.b16 %v1035, %v1034
        %v1050 = vpack.c.b16 %v1037, %v1036
        %v1051 = vpack.c.b16 %v1039, %v1038
        %v1052 = vpack.c.b16 %v1041, %v1040
        %v1053 = vpack.c.b16 %v1043, %v1042
        %v1054 = vpack.c.b16 %v1045, %v1044
        %v1055 = vpack.c.b16 %v1047, %v1046
        %1064 = vmatprep.subr.bf16.mxu0 0
        %1065 = vmatpush1.bf16.msra.mxu0 %v1055
        %1066 = vmatprep.subr.bf16.mxu0 0
        %1067 = vmatpush1.bf16.msra.mxu0 %v1054
        %1068 = vmatprep.subr.bf16.mxu0 0
        %1069 = vmatpush1.bf16.msra.mxu0 %v1053
        %1070 = vmatprep.subr.bf16.mxu0 0
        %1071 = vmatpush1.bf16.msra.mxu0 %v1052
        %1072 = vmatprep.subr.bf16.mxu0 0
        %1073 = vmatpush1.bf16.msra.mxu0 %v1051
        %1074 = vmatprep.subr.bf16.mxu0 0
        %1075 = vmatpush1.bf16.msra.mxu0 %v1050
        %1076 = vmatprep.subr.bf16.mxu0 0
        %1077 = vmatpush1.bf16.msra.mxu0 %v1049
        %1078 = vmatprep.subr.bf16.mxu0 0
        %1079 = vmatpush1.bf16.msra.mxu0 %v1048
        %1080 = vmatprep.subr.bf16.mxu0 0
        %1081 = vmatpush2.bf16.msra.mxu0 0
        %1082 = vmatprep.subr.bf16.mxu0 0
        %1083 = vmatpush2.bf16.msra.mxu0 0
        %1084 = vmatprep.subr.bf16.mxu0 0
        %1085 = vmatpush2.bf16.msra.mxu0 0
        %1086 = vmatprep.subr.bf16.mxu0 0
        %1087 = vmatpush2.bf16.msra.mxu0 0
        %1088 = vmatprep.subr.bf16.mxu0 0
        %1089 = vmatpush2.bf16.msra.mxu0 0
        %1090 = vmatprep.subr.bf16.mxu0 0
        %1091 = vmatpush2.bf16.msra.mxu0 0
        %1092 = vmatprep.subr.bf16.mxu0 0
        %1093 = vmatpush2.bf16.msra.mxu0 0
        %1094 = vmatprep.subr.bf16.mxu0 0
        %1095 = vmatpush2.bf16.msra.mxu0 0
        %1096 = vmatprep.mubr.bf16.mxu0 0
        %1097 = vmatmul.mubr.bf16.gmra.mxu0 %v974
        %v1098 = vpop.f32.mrf.mxu0
        %v1099 = vadd.f32 %v888, %v1098
        %v1100 = vpop.f32.mrf.mxu0
        %v1101 = vpop.f32.mrf.mxu0
        %v1102 = vadd.f32 %v888, %v1101
        %v1103 = vpop.f32.mrf.mxu0
        %1104 = vmatprep.mubr.bf16.mxu0 0
        %1105 = vmatmul.mubr.bf16.gmra.mxu0 %v975
        %v1106 = vpop.f32.mrf.mxu0
        %v1107 = vadd.f32 %v888, %v1106
        %v1108 = vpop.f32.mrf.mxu0
        %v1109 = vpop.f32.mrf.mxu0
        %v1110 = vadd.f32 %v888, %v1109
        %v1111 = vpop.f32.mrf.mxu0
        %1112 = vmatprep.mubr.bf16.mxu0 0
        %1113 = vmatmul.mubr.bf16.gmra.mxu0 %v976
        %v1114 = vpop.f32.mrf.mxu0
        %v1115 = vadd.f32 %v888, %v1114
        %v1116 = vpop.f32.mrf.mxu0
        %v1117 = vpop.f32.mrf.mxu0
        %v1118 = vadd.f32 %v888, %v1117
        %v1119 = vpop.f32.mrf.mxu0
        %1120 = vmatprep.mubr.bf16.mxu0 0
        %1121 = vmatmul.mubr.bf16.gmra.mxu0 %v977
        %v1122 = vpop.f32.mrf.mxu0
        %v1123 = vadd.f32 %v888, %v1122
        %v1124 = vpop.f32.mrf.mxu0
        %v1125 = vpop.f32.mrf.mxu0
        %v1126 = vadd.f32 %v888, %v1125
        %v1127 = vpop.f32.mrf.mxu0
        %1128 = vmatprep.mubr.bf16.mxu0 0
        %1129 = vmatmul.mubr.bf16.gmra.mxu0 %v978
        %v1130 = vpop.f32.mrf.mxu0
        %v1131 = vadd.f32 %v888, %v1130
        %v1132 = vpop.f32.mrf.mxu0
        %v1133 = vpop.f32.mrf.mxu0
        %v1134 = vadd.f32 %v888, %v1133
        %v1135 = vpop.f32.mrf.mxu0
        %1136 = vmatprep.mubr.bf16.mxu0 0
        %1137 = vmatmul.mubr.bf16.gmra.mxu0 %v979
        %v1138 = vpop.f32.mrf.mxu0
        %v1139 = vadd.f32 %v888, %v1138
        %v1140 = vpop.f32.mrf.mxu0
        %v1141 = vpop.f32.mrf.mxu0
        %v1142 = vadd.f32 %v888, %v1141
        %v1143 = vpop.f32.mrf.mxu0
        %1144 = vmatprep.mubr.bf16.mxu0 0
        %1145 = vmatmul.mubr.bf16.gmra.mxu0 %v980
        %v1146 = vpop.f32.mrf.mxu0
        %v1147 = vadd.f32 %v888, %v1146
        %v1148 = vpop.f32.mrf.mxu0
        %v1149 = vpop.f32.mrf.mxu0
        %v1150 = vadd.f32 %v888, %v1149
        %v1151 = vpop.f32.mrf.mxu0
        %1152 = vmatprep.mubr.bf16.mxu0 0
        %1153 = vmatmul.mubr.bf16.gmra.mxu0 %v981
        %v1154 = vpop.f32.mrf.mxu0
        %v1155 = vadd.f32 %v888, %v1154
        %v1156 = vpop.f32.mrf.mxu0
        %v1157 = vpop.f32.mrf.mxu0
        %v1158 = vadd.f32 %v888, %v1157
        %v1159 = vpop.f32.mrf.mxu0
        %1160 = vmatprep.mubr.bf16.mxu0 0
        %1161 = vmatmul.mubr.bf16.gmra.mxu0 %v982
        %v1162 = vpop.f32.mrf.mxu0
        %v1163 = vadd.f32 %v888, %v1162
        %v1164 = vpop.f32.mrf.mxu0
        %v1165 = vpop.f32.mrf.mxu0
        %v1166 = vadd.f32 %v888, %v1165
        %v1167 = vpop.f32.mrf.mxu0
        %1168 = vmatprep.mubr.bf16.mxu0 0
        %1169 = vmatmul.mubr.bf16.gmra.mxu0 %v983
        %v1170 = vpop.f32.mrf.mxu0
        %v1171 = vadd.f32 %v888, %v1170
        %v1172 = vpop.f32.mrf.mxu0
        %v1173 = vpop.f32.mrf.mxu0
        %v1174 = vadd.f32 %v888, %v1173
        %v1175 = vpop.f32.mrf.mxu0
        %1176 = vmatprep.mubr.bf16.mxu0 0
        %1177 = vmatmul.mubr.bf16.gmra.mxu0 %v984
        %v1178 = vpop.f32.mrf.mxu0
        %v1179 = vadd.f32 %v888, %v1178
        %v1180 = vpop.f32.mrf.mxu0
        %v1181 = vpop.f32.mrf.mxu0
        %v1182 = vadd.f32 %v888, %v1181
        %v1183 = vpop.f32.mrf.mxu0
        %1184 = vmatprep.mubr.bf16.mxu0 0
        %1185 = vmatmul.mubr.bf16.gmra.mxu0 %v985
        %v1186 = vpop.f32.mrf.mxu0
        %v1187 = vadd.f32 %v888, %v1186
        %v1188 = vpop.f32.mrf.mxu0
        %v1189 = vpop.f32.mrf.mxu0
        %v1190 = vadd.f32 %v888, %v1189
        %v1191 = vpop.f32.mrf.mxu0
        %1192 = vmatprep.mubr.bf16.mxu0 0
        %1193 = vmatmul.mubr.bf16.gmra.mxu0 %v986
        %v1194 = vpop.f32.mrf.mxu0
        %v1195 = vadd.f32 %v888, %v1194
        %v1196 = vpop.f32.mrf.mxu0
        %v1197 = vpop.f32.mrf.mxu0
        %v1198 = vadd.f32 %v888, %v1197
        %v1199 = vpop.f32.mrf.mxu0
        %1200 = vmatprep.mubr.bf16.mxu0 0
        %1201 = vmatmul.mubr.bf16.gmra.mxu0 %v987
        %v1202 = vpop.f32.mrf.mxu0
        %v1203 = vadd.f32 %v888, %v1202
        %v1204 = vpop.f32.mrf.mxu0
        %v1205 = vpop.f32.mrf.mxu0
        %v1206 = vadd.f32 %v888, %v1205
        %v1207 = vpop.f32.mrf.mxu0
        %1208 = vmatprep.mubr.bf16.mxu0 0
        %1209 = vmatmul.mubr.bf16.gmra.mxu0 %v988
        %v1210 = vpop.f32.mrf.mxu0
        %v1211 = vadd.f32 %v888, %v1210
        %v1212 = vpop.f32.mrf.mxu0
        %v1213 = vpop.f32.mrf.mxu0
        %v1214 = vadd.f32 %v888, %v1213
        %v1215 = vpop.f32.mrf.mxu0
        %1216 = vmatprep.mubr.bf16.mxu0 0
        %1217 = vmatmul.mubr.bf16.gmra.mxu0 %v989
        %v1218 = vpop.f32.mrf.mxu0
        %v1219 = vadd.f32 %v888, %v1218
        %v1220 = vpop.f32.mrf.mxu0
        %v1221 = vpop.f32.mrf.mxu0
        %v1222 = vadd.f32 %v888, %v1221
        %v1223 = vpop.f32.mrf.mxu0
        %1224 = vmatprep.mubr.bf16.mxu0 0
        %1225 = vmatmul.mubr.bf16.gmra.mxu0 %v990
        %v1226 = vpop.f32.mrf.mxu0
        %v1227 = vadd.f32 %v888, %v1226
        %v1228 = vpop.f32.mrf.mxu0
        %v1229 = vpop.f32.mrf.mxu0
        %v1230 = vadd.f32 %v888, %v1229
        %v1231 = vpop.f32.mrf.mxu0
        %1232 = vmatprep.mubr.bf16.mxu0 0
        %1233 = vmatmul.mubr.bf16.gmra.mxu0 %v991
        %v1234 = vpop.f32.mrf.mxu0
        %v1235 = vadd.f32 %v888, %v1234
        %v1236 = vpop.f32.mrf.mxu0
        %v1237 = vpop.f32.mrf.mxu0
        %v1238 = vadd.f32 %v888, %v1237
        %v1239 = vpop.f32.mrf.mxu0
        %1240 = vmatprep.mubr.bf16.mxu0 0
        %1241 = vmatmul.mubr.bf16.gmra.mxu0 %v992
        %v1242 = vpop.f32.mrf.mxu0
        %v1243 = vadd.f32 %v888, %v1242
        %v1244 = vpop.f32.mrf.mxu0
        %v1245 = vpop.f32.mrf.mxu0
        %v1246 = vadd.f32 %v888, %v1245
        %v1247 = vpop.f32.mrf.mxu0
        %1248 = vmatprep.mubr.bf16.mxu0 0
        %1249 = vmatmul.mubr.bf16.gmra.mxu0 %v993
        %v1250 = vpop.f32.mrf.mxu0
        %v1251 = vadd.f32 %v888, %v1250
        %v1252 = vpop.f32.mrf.mxu0
        %v1253 = vpop.f32.mrf.mxu0
        %v1254 = vadd.f32 %v888, %v1253
        %v1255 = vpop.f32.mrf.mxu0
        %1256 = vmatprep.mubr.bf16.mxu0 0
        %1257 = vmatmul.mubr.bf16.gmra.mxu0 %v994
        %v1258 = vpop.f32.mrf.mxu0
        %v1259 = vadd.f32 %v888, %v1258
        %v1260 = vpop.f32.mrf.mxu0
        %v1261 = vpop.f32.mrf.mxu0
        %v1262 = vadd.f32 %v888, %v1261
        %v1263 = vpop.f32.mrf.mxu0
        %1264 = vdwg.mxu0
        %v1265 = vmax.f32 %v1099, 0.0
        %v1266 = vmax.f32 %v1102, 0.0
        %v1267 = vmax.f32 %v1107, 0.0
        %v1268 = vmax.f32 %v1110, 0.0
        %v1269 = vmax.f32 %v1115, 0.0
        %v1270 = vmax.f32 %v1118, 0.0
        %v1271 = vmax.f32 %v1123, 0.0
        %v1272 = vmax.f32 %v1126, 0.0
        %v1273 = vmax.f32 %v1131, 0.0
        %v1274 = vmax.f32 %v1134, 0.0
        %v1275 = vmax.f32 %v1139, 0.0
        %v1276 = vmax.f32 %v1142, 0.0
        %v1277 = vmax.f32 %v1147, 0.0
        %v1278 = vmax.f32 %v1150, 0.0
        %v1279 = vmax.f32 %v1155, 0.0
        %v1280 = vmax.f32 %v1158, 0.0
        %v1281 = vmax.f32 %v1163, 0.0
        %v1282 = vmax.f32 %v1166, 0.0
        %v1283 = vmax.f32 %v1171, 0.0
        %v1284 = vmax.f32 %v1174, 0.0
        %v1285 = vmax.f32 %v1179, 0.0
        %v1286 = vmax.f32 %v1182, 0.0
        %v1287 = vmax.f32 %v1187, 0.0
        %v1288 = vmax.f32 %v1190, 0.0
        %v1289 = vmax.f32 %v1195, 0.0
        %v1290 = vmax.f32 %v1198, 0.0
        %v1291 = vmax.f32 %v1203, 0.0
        %v1292 = vmax.f32 %v1206, 0.0
        %v1293 = vmax.f32 %v1211, 0.0
        %v1294 = vmax.f32 %v1214, 0.0
        %v1295 = vmax.f32 %v1219, 0.0
        %v1296 = vmax.f32 %v1222, 0.0
        %v1297 = vmax.f32 %v1227, 0.0
        %v1298 = vmax.f32 %v1230, 0.0
        %v1299 = vmax.f32 %v1235, 0.0
        %v1300 = vmax.f32 %v1238, 0.0
        %v1301 = vmax.f32 %v1243, 0.0
        %v1302 = vmax.f32 %v1246, 0.0
        %v1303 = vmax.f32 %v1251, 0.0
        %v1304 = vmax.f32 %v1254, 0.0
        %v1305 = vmax.f32 %v1259, 0.0
        %v1306 = vmax.f32 %v1262, 0.0
        %1308 = vset.pattern.permute.xlu0 0
        %1309 = vperm.xlu0 %1308, %v825
        %v1310 = vpop.permute.xlu0 %1309
        %1313 = vset.pattern.permute.xlu0 0
        %1314 = vperm.xlu0 %1313, %v826
        %v1315 = vpop.permute.xlu0 %1314
        %1318 = vset.pattern.permute.xlu0 0
        %1319 = vperm.xlu0 %1318, %v827
        %v1320 = vpop.permute.xlu0 %1319
        %1323 = vset.pattern.permute.xlu0 0
        %1324 = vperm.xlu0 %1323, %v828
        %v1325 = vpop.permute.xlu0 %1324
        %1328 = vset.pattern.permute.xlu0 0
        %1329 = vperm.xlu0 %1328, %v829
        %v1330 = vpop.permute.xlu0 %1329
        %1333 = vset.pattern.permute.xlu0 0
        %1334 = vperm.xlu0 %1333, %v830
        %v1335 = vpop.permute.xlu0 %1334
        %1338 = vset.pattern.permute.xlu0 0
        %1339 = vperm.xlu0 %1338, %v831
        %v1340 = vpop.permute.xlu0 %1339
        %1343 = vset.pattern.permute.xlu0 0
        %1344 = vperm.xlu0 %1343, %v832
        %v1345 = vpop.permute.xlu0 %1344
        %1348 = vset.pattern.permute.xlu0 0
        %1349 = vperm.xlu0 %1348, %v833
        %v1350 = vpop.permute.xlu0 %1349
        %1353 = vset.pattern.permute.xlu0 0
        %1354 = vperm.xlu0 %1353, %v834
        %v1355 = vpop.permute.xlu0 %1354
        %1358 = vset.pattern.permute.xlu0 0
        %1359 = vperm.xlu0 %1358, %v835
        %v1360 = vpop.permute.xlu0 %1359
        %1363 = vset.pattern.permute.xlu0 0
        %1364 = vperm.xlu0 %1363, %v836
        %v1365 = vpop.permute.xlu0 %1364
        %1368 = vset.pattern.permute.xlu0 0
        %1369 = vperm.xlu0 %1368, %v837
        %v1370 = vpop.permute.xlu0 %1369
        %1373 = vset.pattern.permute.xlu0 0
        %1374 = vperm.xlu0 %1373, %v838
        %v1375 = vpop.permute.xlu0 %1374
        %1378 = vset.pattern.permute.xlu0 0
        %1379 = vperm.xlu0 %1378, %v839
        %v1380 = vpop.permute.xlu0 %1379
        %1383 = vset.pattern.permute.xlu0 0
        %1384 = vperm.xlu0 %1383, %v840
        %v1385 = vpop.permute.xlu0 %1384
        %1388 = vset.pattern.permute.xlu0 0
        %1389 = vperm.xlu0 %1388, %v841
        %v1390 = vpop.permute.xlu0 %1389
        %1393 = vset.pattern.permute.xlu0 0
        %1394 = vperm.xlu0 %1393, %v842
        %v1395 = vpop.permute.xlu0 %1394
        %1398 = vset.pattern.permute.xlu0 0
        %1399 = vperm.xlu0 %1398, %v843
        %v1400 = vpop.permute.xlu0 %1399
        %1403 = vset.pattern.permute.xlu0 0
        %1404 = vperm.xlu0 %1403, %v844
        %v1405 = vpop.permute.xlu0 %1404
        %1408 = vset.pattern.permute.xlu0 0
        %1409 = vperm.xlu0 %1408, %v845
        %v1410 = vpop.permute.xlu0 %1409
        %1413 = vset.pattern.permute.xlu0 0
        %1414 = vperm.xlu0 %1413, %v846
        %v1415 = vpop.permute.xlu0 %1414
        %1418 = vset.pattern.permute.xlu0 0
        %1419 = vperm.xlu0 %1418, %v847
        %v1420 = vpop.permute.xlu0 %1419
        %1423 = vset.pattern.permute.xlu0 0
        %1424 = vperm.xlu0 %1423, %v848
        %v1425 = vpop.permute.xlu0 %1424
        %1428 = vset.pattern.permute.xlu0 0
        %1429 = vperm.xlu0 %1428, %v849
        %v1430 = vpop.permute.xlu0 %1429
        %1433 = vset.pattern.permute.xlu0 0
        %1434 = vperm.xlu0 %1433, %v850
        %v1435 = vpop.permute.xlu0 %1434
        %1438 = vset.pattern.permute.xlu0 0
        %1439 = vperm.xlu0 %1438, %v851
        %v1440 = vpop.permute.xlu0 %1439
        %1443 = vset.pattern.permute.xlu0 0
        %1444 = vperm.xlu0 %1443, %v852
        %v1445 = vpop.permute.xlu0 %1444
        %1448 = vset.pattern.permute.xlu0 0
        %1449 = vperm.xlu0 %1448, %v853
        %v1450 = vpop.permute.xlu0 %1449
        %1453 = vset.pattern.permute.xlu0 0
        %1454 = vperm.xlu0 %1453, %v854
        %v1455 = vpop.permute.xlu0 %1454
        %1458 = vset.pattern.permute.xlu0 0
        %1459 = vperm.xlu0 %1458, %v855
        %v1460 = vpop.permute.xlu0 %1459
        %1463 = vset.pattern.permute.xlu0 0
        %1464 = vperm.xlu0 %1463, %v856
        %v1465 = vpop.permute.xlu0 %1464
        %1468 = vset.pattern.permute.xlu0 0
        %1469 = vperm.xlu0 %1468, %v857
        %v1470 = vpop.permute.xlu0 %1469
        %1473 = vset.pattern.permute.xlu0 0
        %1474 = vperm.xlu0 %1473, %v858
        %v1475 = vpop.permute.xlu0 %1474
        %1478 = vset.pattern.permute.xlu0 0
        %1479 = vperm.xlu0 %1478, %v859
        %v1480 = vpop.permute.xlu0 %1479
        %1483 = vset.pattern.permute.xlu0 0
        %1484 = vperm.xlu0 %1483, %v860
        %v1485 = vpop.permute.xlu0 %1484
        %1488 = vset.pattern.permute.xlu0 0
        %1489 = vperm.xlu0 %1488, %v861
        %v1490 = vpop.permute.xlu0 %1489
        %1493 = vset.pattern.permute.xlu0 0
        %1494 = vperm.xlu0 %1493, %v862
        %v1495 = vpop.permute.xlu0 %1494
        %1498 = vset.pattern.permute.xlu0 0
        %1499 = vperm.xlu0 %1498, %v863
        %v1500 = vpop.permute.xlu0 %1499
        %1503 = vset.pattern.permute.xlu0 0
        %1504 = vperm.xlu0 %1503, %v864
        %v1505 = vpop.permute.xlu0 %1504
        %1508 = vset.pattern.permute.xlu0 0
        %1509 = vperm.xlu0 %1508, %v865
        %v1510 = vpop.permute.xlu0 %1509
        %1513 = vset.pattern.permute.xlu0 0
        %1514 = vperm.xlu0 %1513, %v866
        %v1515 = vpop.permute.xlu0 %1514
        %v1517 = vmul.f32 %v1265, %v1310
        %v1518 = vmul.f32 %v1266, %v1315
        %v1519 = vmul.f32 %v1267, %v1320
        %v1520 = vmul.f32 %v1268, %v1325
        %v1521 = vmul.f32 %v1269, %v1330
        %v1522 = vmul.f32 %v1270, %v1335
        %v1523 = vmul.f32 %v1271, %v1340
        %v1524 = vmul.f32 %v1272, %v1345
        %v1525 = vmul.f32 %v1273, %v1350
        %v1526 = vmul.f32 %v1274, %v1355
        %v1527 = vmul.f32 %v1275, %v1360
        %v1528 = vmul.f32 %v1276, %v1365
        %v1529 = vmul.f32 %v1277, %v1370
        %v1530 = vmul.f32 %v1278, %v1375
        %v1531 = vmul.f32 %v1279, %v1380
        %v1532 = vmul.f32 %v1280, %v1385
        %v1533 = vmul.f32 %v1281, %v1390
        %v1534 = vmul.f32 %v1282, %v1395
        %v1535 = vmul.f32 %v1283, %v1400
        %v1536 = vmul.f32 %v1284, %v1405
        %v1537 = vmul.f32 %v1285, %v1410
        %v1538 = vmul.f32 %v1286, %v1415
        %v1539 = vmul.f32 %v1287, %v1420
        %v1540 = vmul.f32 %v1288, %v1425
        %v1541 = vmul.f32 %v1289, %v1430
        %v1542 = vmul.f32 %v1290, %v1435
        %v1543 = vmul.f32 %v1291, %v1440
        %v1544 = vmul.f32 %v1292, %v1445
        %v1545 = vmul.f32 %v1293, %v1450
        %v1546 = vmul.f32 %v1294, %v1455
        %v1547 = vmul.f32 %v1295, %v1460
        %v1548 = vmul.f32 %v1296, %v1465
        %v1549 = vmul.f32 %v1297, %v1470
        %v1550 = vmul.f32 %v1298, %v1475
        %v1551 = vmul.f32 %v1299, %v1480
        %v1552 = vmul.f32 %v1300, %v1485
        %v1553 = vmul.f32 %v1301, %v1490
        %v1554 = vmul.f32 %v1302, %v1495
        %v1555 = vmul.f32 %v1303, %v1500
        %v1556 = vmul.f32 %v1304, %v1505
        %v1557 = vmul.f32 %v1305, %v1510
        %v1558 = vmul.f32 %v1306, %v1515
        %v1559 = vrot.slane %v1517, 5
        %v1560 = vrot.slane %v1518, 5
        %v1561 = vrot.slane %v1519, 5
        %v1562 = vrot.slane %v1520, 5
        %v1563 = vrot.slane %v1521, 5
        %v1564 = vrot.slane %v1522, 5
        %v1565 = vrot.slane %v1523, 5
        %v1566 = vrot.slane %v1524, 5
        %v1567 = vrot.slane %v1525, 5
        %v1568 = vrot.slane %v1526, 5
        %v1569 = vrot.slane %v1527, 5
        %v1570 = vrot.slane %v1528, 5
        %v1571 = vrot.slane %v1529, 5
        %v1572 = vrot.slane %v1530, 5
        %v1573 = vrot.slane %v1531, 5
        %v1574 = vrot.slane %v1532, 5
        %v1575 = vrot.slane %v1533, 5
        %v1576 = vrot.slane %v1534, 5
        %v1577 = vrot.slane %v1535, 5
        %v1578 = vrot.slane %v1536, 5
        %v1579 = vrot.slane %v1537, 5
        %v1580 = vrot.slane %v1538, 5
        %v1581 = vrot.slane %v1539, 5
        %v1582 = vrot.slane %v1540, 5
        %v1583 = vrot.slane %v1541, 5
        %v1584 = vrot.slane %v1542, 5
        %v1585 = vrot.slane %v1543, 5
        %v1586 = vrot.slane %v1544, 5
        %v1587 = vrot.slane %v1545, 5
        %v1588 = vrot.slane %v1546, 5
        %v1589 = vrot.slane %v1547, 5
        %v1590 = vrot.slane %v1548, 5
        %v1591 = vrot.slane %v1549, 5
        %v1592 = vrot.slane %v1550, 5
        %v1593 = vrot.slane %v1551, 5
        %v1594 = vrot.slane %v1552, 5
        %v1595 = vrot.slane %v1553, 5
        %v1596 = vrot.slane %v1554, 5
        %v1597 = vrot.slane %v1555, 5
        %v1598 = vrot.slane %v1556, 5
        %v1599 = vrot.slane %v1557, 5
        %v1600 = vrot.slane %v1558, 5
        %v1601 = vlaneseq
        %v1602 = vshrl.u32 %v1601, 7
        %vm1603 = vcmp.lt.s32.totalorder %v1602, 3
        %v1604 = vsel %vm1603, %v1599, %v1600
        %v1605 = vsel %vm1603, %v1598, %v1599
        %v1606 = vsel %vm1603, %v1597, %v1598
        %v1607 = vsel %vm1603, %v1596, %v1597
        %v1608 = vsel %vm1603, %v1595, %v1596
        %v1609 = vsel %vm1603, %v1594, %v1595
        %v1610 = vsel %vm1603, %v1593, %v1594
        %v1611 = vsel %vm1603, %v1592, %v1593
        %v1612 = vsel %vm1603, %v1591, %v1592
        %v1613 = vsel %vm1603, %v1590, %v1591
        %v1614 = vsel %vm1603, %v1589, %v1590
        %v1615 = vsel %vm1603, %v1588, %v1589
        %v1616 = vsel %vm1603, %v1587, %v1588
        %v1617 = vsel %vm1603, %v1586, %v1587
        %v1618 = vsel %vm1603, %v1585, %v1586
        %v1619 = vsel %vm1603, %v1584, %v1585
        %v1620 = vsel %vm1603, %v1583, %v1584
        %v1621 = vsel %vm1603, %v1582, %v1583
        %v1622 = vsel %vm1603, %v1581, %v1582
        %v1623 = vsel %vm1603, %v1580, %v1581
        %v1624 = vsel %vm1603, %v1579, %v1580
        %v1625 = vsel %vm1603, %v1578, %v1579
        %v1626 = vsel %vm1603, %v1577, %v1578
        %v1627 = vsel %vm1603, %v1576, %v1577
        %v1628 = vsel %vm1603, %v1575, %v1576
        %v1629 = vsel %vm1603, %v1574, %v1575
        %v1630 = vsel %vm1603, %v1573, %v1574
        %v1631 = vsel %vm1603, %v1572, %v1573
        %v1632 = vsel %vm1603, %v1571, %v1572
        %v1633 = vsel %vm1603, %v1570, %v1571
        %v1634 = vsel %vm1603, %v1569, %v1570
        %v1635 = vsel %vm1603, %v1568, %v1569
        %v1636 = vsel %vm1603, %v1567, %v1568
        %v1637 = vsel %vm1603, %v1566, %v1567
        %v1638 = vsel %vm1603, %v1565, %v1566
        %v1639 = vsel %vm1603, %v1564, %v1565
        %v1640 = vsel %vm1603, %v1563, %v1564
        %v1641 = vsel %vm1603, %v1562, %v1563
        %v1642 = vsel %vm1603, %v1561, %v1562
        %v1643 = vsel %vm1603, %v1560, %v1561
        %v1644 = vsel %vm1603, %v1559, %v1560
        %v1645 = vsel %vm1603, %v1600, %v1559
        %v1646 = vrot.slane %v1517, 6
        %v1647 = vrot.slane %v1518, 6
        %v1648 = vrot.slane %v1519, 6
        %v1649 = vrot.slane %v1520, 6
        %v1650 = vrot.slane %v1521, 6
        %v1651 = vrot.slane %v1522, 6
        %v1652 = vrot.slane %v1523, 6
        %v1653 = vrot.slane %v1524, 6
        %v1654 = vrot.slane %v1525, 6
        %v1655 = vrot.slane %v1526, 6
        %v1656 = vrot.slane %v1527, 6
        %v1657 = vrot.slane %v1528, 6
        %v1658 = vrot.slane %v1529, 6
        %v1659 = vrot.slane %v1530, 6
        %v1660 = vrot.slane %v1531, 6
        %v1661 = vrot.slane %v1532, 6
        %v1662 = vrot.slane %v1533, 6
        %v1663 = vrot.slane %v1534, 6
        %v1664 = vrot.slane %v1535, 6
        %v1665 = vrot.slane %v1536, 6
        %v1666 = vrot.slane %v1537, 6
        %v1667 = vrot.slane %v1538, 6
        %v1668 = vrot.slane %v1539, 6
        %v1669 = vrot.slane %v1540, 6
        %v1670 = vrot.slane %v1541, 6
        %v1671 = vrot.slane %v1542, 6
        %v1672 = vrot.slane %v1543, 6
        %v1673 = vrot.slane %v1544, 6
        %v1674 = vrot.slane %v1545, 6
        %v1675 = vrot.slane %v1546, 6
        %v1676 = vrot.slane %v1547, 6
        %v1677 = vrot.slane %v1548, 6
        %v1678 = vrot.slane %v1549, 6
        %v1679 = vrot.slane %v1550, 6
        %v1680 = vrot.slane %v1551, 6
        %v1681 = vrot.slane %v1552, 6
        %v1682 = vrot.slane %v1553, 6
        %v1683 = vrot.slane %v1554, 6
        %v1684 = vrot.slane %v1555, 6
        %v1685 = vrot.slane %v1556, 6
        %v1686 = vrot.slane %v1557, 6
        %v1687 = vrot.slane %v1558, 6
        %vm1688 = vcmp.lt.s32.totalorder %v1602, 2
        %v1689 = vsel %vm1688, %v1686, %v1687
        %v1690 = vsel %vm1688, %v1685, %v1686
        %v1691 = vsel %vm1688, %v1684, %v1685
        %v1692 = vsel %vm1688, %v1683, %v1684
        %v1693 = vsel %vm1688, %v1682, %v1683
        %v1694 = vsel %vm1688, %v1681, %v1682
        %v1695 = vsel %vm1688, %v1680, %v1681
        %v1696 = vsel %vm1688, %v1679, %v1680
        %v1697 = vsel %vm1688, %v1678, %v1679
        %v1698 = vsel %vm1688, %v1677, %v1678
        %v1699 = vsel %vm1688, %v1676, %v1677
        %v1700 = vsel %vm1688, %v1675, %v1676
        %v1701 = vsel %vm1688, %v1674, %v1675
        %v1702 = vsel %vm1688, %v1673, %v1674
        %v1703 = vsel %vm1688, %v1672, %v1673
        %v1704 = vsel %vm1688, %v1671, %v1672
        %v1705 = vsel %vm1688, %v1670, %v1671
        %v1706 = vsel %vm1688, %v1669, %v1670
        %v1707 = vsel %vm1688, %v1668, %v1669
        %v1708 = vsel %vm1688, %v1667, %v1668
        %v1709 = vsel %vm1688, %v1666, %v1667
        %v1710 = vsel %vm1688, %v1665, %v1666
        %v1711 = vsel %vm1688, %v1664, %v1665
        %v1712 = vsel %vm1688, %v1663, %v1664
        %v1713 = vsel %vm1688, %v1662, %v1663
        %v1714 = vsel %vm1688, %v1661, %v1662
        %v1715 = vsel %vm1688, %v1660, %v1661
        %v1716 = vsel %vm1688, %v1659, %v1660
        %v1717 = vsel %vm1688, %v1658, %v1659
        %v1718 = vsel %vm1688, %v1657, %v1658
        %v1719 = vsel %vm1688, %v1656, %v1657
        %v1720 = vsel %vm1688, %v1655, %v1656
        %v1721 = vsel %vm1688, %v1654, %v1655
        %v1722 = vsel %vm1688, %v1653, %v1654
        %v1723 = vsel %vm1688, %v1652, %v1653
        %v1724 = vsel %vm1688, %v1651, %v1652
        %v1725 = vsel %vm1688, %v1650, %v1651
        %v1726 = vsel %vm1688, %v1649, %v1650
        %v1727 = vsel %vm1688, %v1648, %v1649
        %v1728 = vsel %vm1688, %v1647, %v1648
        %v1729 = vsel %vm1688, %v1646, %v1647
        %v1730 = vsel %vm1688, %v1687, %v1646
        %v1731 = vrot.slane %v1517, 7
        %v1732 = vrot.slane %v1518, 7
        %v1733 = vrot.slane %v1519, 7
        %v1734 = vrot.slane %v1520, 7
        %v1735 = vrot.slane %v1521, 7
        %v1736 = vrot.slane %v1522, 7
        %v1737 = vrot.slane %v1523, 7
        %v1738 = vrot.slane %v1524, 7
        %v1739 = vrot.slane %v1525, 7
        %v1740 = vrot.slane %v1526, 7
        %v1741 = vrot.slane %v1527, 7
        %v1742 = vrot.slane %v1528, 7
        %v1743 = vrot.slane %v1529, 7
        %v1744 = vrot.slane %v1530, 7
        %v1745 = vrot.slane %v1531, 7
        %v1746 = vrot.slane %v1532, 7
        %v1747 = vrot.slane %v1533, 7
        %v1748 = vrot.slane %v1534, 7
        %v1749 = vrot.slane %v1535, 7
        %v1750 = vrot.slane %v1536, 7
        %v1751 = vrot.slane %v1537, 7
        %v1752 = vrot.slane %v1538, 7
        %v1753 = vrot.slane %v1539, 7
        %v1754 = vrot.slane %v1540, 7
        %v1755 = vrot.slane %v1541, 7
        %v1756 = vrot.slane %v1542, 7
        %v1757 = vrot.slane %v1543, 7
        %v1758 = vrot.slane %v1544, 7
        %v1759 = vrot.slane %v1545, 7
        %v1760 = vrot.slane %v1546, 7
        %v1761 = vrot.slane %v1547, 7
        %v1762 = vrot.slane %v1548, 7
        %v1763 = vrot.slane %v1549, 7
        %v1764 = vrot.slane %v1550, 7
        %v1765 = vrot.slane %v1551, 7
        %v1766 = vrot.slane %v1552, 7
        %v1767 = vrot.slane %v1553, 7
        %v1768 = vrot.slane %v1554, 7
        %v1769 = vrot.slane %v1555, 7
        %v1770 = vrot.slane %v1556, 7
        %v1771 = vrot.slane %v1557, 7
        %v1772 = vrot.slane %v1558, 7
        %vm1773 = vcmp.lt.s32.totalorder %v1602, 1
        %v1774 = vsel %vm1773, %v1771, %v1772
        %v1775 = vsel %vm1773, %v1770, %v1771
        %v1776 = vsel %vm1773, %v1769, %v1770
        %v1777 = vsel %vm1773, %v1768, %v1769
        %v1778 = vsel %vm1773, %v1767, %v1768
        %v1779 = vsel %vm1773, %v1766, %v1767
        %v1780 = vsel %vm1773, %v1765, %v1766
        %v1781 = vsel %vm1773, %v1764, %v1765
        %v1782 = vsel %vm1773, %v1763, %v1764
        %v1783 = vsel %vm1773, %v1762, %v1763
        %v1784 = vsel %vm1773, %v1761, %v1762
        %v1785 = vsel %vm1773, %v1760, %v1761
        %v1786 = vsel %vm1773, %v1759, %v1760
        %v1787 = vsel %vm1773, %v1758, %v1759
        %v1788 = vsel %vm1773, %v1757, %v1758
        %v1789 = vsel %vm1773, %v1756, %v1757
        %v1790 = vsel %vm1773, %v1755, %v1756
        %v1791 = vsel %vm1773, %v1754, %v1755
        %v1792 = vsel %vm1773, %v1753, %v1754
        %v1793 = vsel %vm1773, %v1752, %v1753
        %v1794 = vsel %vm1773, %v1751, %v1752
        %v1795 = vsel %vm1773, %v1750, %v1751
        %v1796 = vsel %vm1773, %v1749, %v1750
        %v1797 = vsel %vm1773, %v1748, %v1749
        %v1798 = vsel %vm1773, %v1747, %v1748
        %v1799 = vsel %vm1773, %v1746, %v1747
        %v1800 = vsel %vm1773, %v1745, %v1746
        %v1801 = vsel %vm1773, %v1744, %v1745
        %v1802 = vsel %vm1773, %v1743, %v1744
        %v1803 = vsel %vm1773, %v1742, %v1743
        %v1804 = vsel %vm1773, %v1741, %v1742
        %v1805 = vsel %vm1773, %v1740, %v1741
        %v1806 = vsel %vm1773, %v1739, %v1740
        %v1807 = vsel %vm1773, %v1738, %v1739
        %v1808 = vsel %vm1773, %v1737, %v1738
        %v1809 = vsel %vm1773, %v1736, %v1737
        %v1810 = vsel %vm1773, %v1735, %v1736
        %v1811 = vsel %vm1773, %v1734, %v1735
        %v1812 = vsel %vm1773, %v1733, %v1734
        %v1813 = vsel %vm1773, %v1732, %v1733
        %v1814 = vsel %vm1773, %v1731, %v1732
        %v1815 = vsel %vm1773, %v1772, %v1731
        %v1816 = vrot.slane %v1517, 1
        %v1817 = vrot.slane %v1518, 1
        %v1818 = vrot.slane %v1519, 1
        %v1819 = vrot.slane %v1520, 1
        %v1820 = vrot.slane %v1521, 1
        %v1821 = vrot.slane %v1522, 1
        %v1822 = vrot.slane %v1523, 1
        %v1823 = vrot.slane %v1524, 1
        %v1824 = vrot.slane %v1525, 1
        %v1825 = vrot.slane %v1526, 1
        %v1826 = vrot.slane %v1527, 1
        %v1827 = vrot.slane %v1528, 1
        %v1828 = vrot.slane %v1529, 1
        %v1829 = vrot.slane %v1530, 1
        %v1830 = vrot.slane %v1531, 1
        %v1831 = vrot.slane %v1532, 1
        %v1832 = vrot.slane %v1533, 1
        %v1833 = vrot.slane %v1534, 1
        %v1834 = vrot.slane %v1535, 1
        %v1835 = vrot.slane %v1536, 1
        %v1836 = vrot.slane %v1537, 1
        %v1837 = vrot.slane %v1538, 1
        %v1838 = vrot.slane %v1539, 1
        %v1839 = vrot.slane %v1540, 1
        %v1840 = vrot.slane %v1541, 1
        %v1841 = vrot.slane %v1542, 1
        %v1842 = vrot.slane %v1543, 1
        %v1843 = vrot.slane %v1544, 1
        %v1844 = vrot.slane %v1545, 1
        %v1845 = vrot.slane %v1546, 1
        %v1846 = vrot.slane %v1547, 1
        %v1847 = vrot.slane %v1548, 1
        %v1848 = vrot.slane %v1549, 1
        %v1849 = vrot.slane %v1550, 1
        %v1850 = vrot.slane %v1551, 1
        %v1851 = vrot.slane %v1552, 1
        %v1852 = vrot.slane %v1553, 1
        %v1853 = vrot.slane %v1554, 1
        %v1854 = vrot.slane %v1555, 1
        %v1855 = vrot.slane %v1556, 1
        %v1856 = vrot.slane %v1557, 1
        %v1857 = vrot.slane %v1558, 1
        %vm1858 = vcmp.lt.s32.totalorder %v1602, 7
        %v1859 = vsel %vm1858, %v1856, %v1857
        %v1860 = vsel %vm1858, %v1855, %v1856
        %v1861 = vsel %vm1858, %v1854, %v1855
        %v1862 = vsel %vm1858, %v1853, %v1854
        %v1863 = vsel %vm1858, %v1852, %v1853
        %v1864 = vsel %vm1858, %v1851, %v1852
        %v1865 = vsel %vm1858, %v1850, %v1851
        %v1866 = vsel %vm1858, %v1849, %v1850
        %v1867 = vsel %vm1858, %v1848, %v1849
        %v1868 = vsel %vm1858, %v1847, %v1848
        %v1869 = vsel %vm1858, %v1846, %v1847
        %v1870 = vsel %vm1858, %v1845, %v1846
        %v1871 = vsel %vm1858, %v1844, %v1845
        %v1872 = vsel %vm1858, %v1843, %v1844
        %v1873 = vsel %vm1858, %v1842, %v1843
        %v1874 = vsel %vm1858, %v1841, %v1842
        %v1875 = vsel %vm1858, %v1840, %v1841
        %v1876 = vsel %vm1858, %v1839, %v1840
        %v1877 = vsel %vm1858, %v1838, %v1839
        %v1878 = vsel %vm1858, %v1837, %v1838
        %v1879 = vsel %vm1858, %v1836, %v1837
        %v1880 = vsel %vm1858, %v1835, %v1836
        %v1881 = vsel %vm1858, %v1834, %v1835
        %v1882 = vsel %vm1858, %v1833, %v1834
        %v1883 = vsel %vm1858, %v1832, %v1833
        %v1884 = vsel %vm1858, %v1831, %v1832
        %v1885 = vsel %vm1858, %v1830, %v1831
        %v1886 = vsel %vm1858, %v1829, %v1830
        %v1887 = vsel %vm1858, %v1828, %v1829
        %v1888 = vsel %vm1858, %v1827, %v1828
        %v1889 = vsel %vm1858, %v1826, %v1827
        %v1890 = vsel %vm1858, %v1825, %v1826
        %v1891 = vsel %vm1858, %v1824, %v1825
        %v1892 = vsel %vm1858, %v1823, %v1824
        %v1893 = vsel %vm1858, %v1822, %v1823
        %v1894 = vsel %vm1858, %v1821, %v1822
        %v1895 = vsel %vm1858, %v1820, %v1821
        %v1896 = vsel %vm1858, %v1819, %v1820
        %v1897 = vsel %vm1858, %v1818, %v1819
        %v1898 = vsel %vm1858, %v1817, %v1818
        %v1899 = vsel %vm1858, %v1816, %v1817
        %v1900 = vsel %vm1858, %v1857, %v1816
        %v1901 = vrot.slane %v1517, 2
        %v1902 = vrot.slane %v1518, 2
        %v1903 = vrot.slane %v1519, 2
        %v1904 = vrot.slane %v1520, 2
        %v1905 = vrot.slane %v1521, 2
        %v1906 = vrot.slane %v1522, 2
        %v1907 = vrot.slane %v1523, 2
        %v1908 = vrot.slane %v1524, 2
        %v1909 = vrot.slane %v1525, 2
        %v1910 = vrot.slane %v1526, 2
        %v1911 = vrot.slane %v1527, 2
        %v1912 = vrot.slane %v1528, 2
        %v1913 = vrot.slane %v1529, 2
        %v1914 = vrot.slane %v1530, 2
        %v1915 = vrot.slane %v1531, 2
        %v1916 = vrot.slane %v1532, 2
        %v1917 = vrot.slane %v1533, 2
        %v1918 = vrot.slane %v1534, 2
        %v1919 = vrot.slane %v1535, 2
        %v1920 = vrot.slane %v1536, 2
        %v1921 = vrot.slane %v1537, 2
        %v1922 = vrot.slane %v1538, 2
        %v1923 = vrot.slane %v1539, 2
        %v1924 = vrot.slane %v1540, 2
        %v1925 = vrot.slane %v1541, 2
        %v1926 = vrot.slane %v1542, 2
        %v1927 = vrot.slane %v1543, 2
        %v1928 = vrot.slane %v1544, 2
        %v1929 = vrot.slane %v1545, 2
        %v1930 = vrot.slane %v1546, 2
        %v1931 = vrot.slane %v1547, 2
        %v1932 = vrot.slane %v1548, 2
        %v1933 = vrot.slane %v1549, 2
        %v1934 = vrot.slane %v1550, 2
        %v1935 = vrot.slane %v1551, 2
        %v1936 = vrot.slane %v1552, 2
        %v1937 = vrot.slane %v1553, 2
        %v1938 = vrot.slane %v1554, 2
        %v1939 = vrot.slane %v1555, 2
        %v1940 = vrot.slane %v1556, 2
        %v1941 = vrot.slane %v1557, 2
        %v1942 = vrot.slane %v1558, 2
        %vm1943 = vcmp.lt.s32.totalorder %v1602, 6
        %v1944 = vsel %vm1943, %v1941, %v1942
        %v1945 = vsel %vm1943, %v1940, %v1941
        %v1946 = vsel %vm1943, %v1939, %v1940
        %v1947 = vsel %vm1943, %v1938, %v1939
        %v1948 = vsel %vm1943, %v1937, %v1938
        %v1949 = vsel %vm1943, %v1936, %v1937
        %v1950 = vsel %vm1943, %v1935, %v1936
        %v1951 = vsel %vm1943, %v1934, %v1935
        %v1952 = vsel %vm1943, %v1933, %v1934
        %v1953 = vsel %vm1943, %v1932, %v1933
        %v1954 = vsel %vm1943, %v1931, %v1932
        %v1955 = vsel %vm1943, %v1930, %v1931
        %v1956 = vsel %vm1943, %v1929, %v1930
        %v1957 = vsel %vm1943, %v1928, %v1929
        %v1958 = vsel %vm1943, %v1927, %v1928
        %v1959 = vsel %vm1943, %v1926, %v1927
        %v1960 = vsel %vm1943, %v1925, %v1926
        %v1961 = vsel %vm1943, %v1924, %v1925
        %v1962 = vsel %vm1943, %v1923, %v1924
        %v1963 = vsel %vm1943, %v1922, %v1923
        %v1964 = vsel %vm1943, %v1921, %v1922
        %v1965 = vsel %vm1943, %v1920, %v1921
        %v1966 = vsel %vm1943, %v1919, %v1920
        %v1967 = vsel %vm1943, %v1918, %v1919
        %v1968 = vsel %vm1943, %v1917, %v1918
        %v1969 = vsel %vm1943, %v1916, %v1917
        %v1970 = vsel %vm1943, %v1915, %v1916
        %v1971 = vsel %vm1943, %v1914, %v1915
        %v1972 = vsel %vm1943, %v1913, %v1914
        %v1973 = vsel %vm1943, %v1912, %v1913
        %v1974 = vsel %vm1943, %v1911, %v1912
        %v1975 = vsel %vm1943, %v1910, %v1911
        %v1976 = vsel %vm1943, %v1909, %v1910
        %v1977 = vsel %vm1943, %v1908, %v1909
        %v1978 = vsel %vm1943, %v1907, %v1908
        %v1979 = vsel %vm1943, %v1906, %v1907
        %v1980 = vsel %vm1943, %v1905, %v1906
        %v1981 = vsel %vm1943, %v1904, %v1905
        %v1982 = vsel %vm1943, %v1903, %v1904
        %v1983 = vsel %vm1943, %v1902, %v1903
        %v1984 = vsel %vm1943, %v1901, %v1902
        %v1985 = vsel %vm1943, %v1942, %v1901
        %v1986 = vrot.slane %v1517, 3
        %v1987 = vrot.slane %v1518, 3
        %v1988 = vrot.slane %v1519, 3
        %v1989 = vrot.slane %v1520, 3
        %v1990 = vrot.slane %v1521, 3
        %v1991 = vrot.slane %v1522, 3
        %v1992 = vrot.slane %v1523, 3
        %v1993 = vrot.slane %v1524, 3
        %v1994 = vrot.slane %v1525, 3
        %v1995 = vrot.slane %v1526, 3
        %v1996 = vrot.slane %v1527, 3
        %v1997 = vrot.slane %v1528, 3
        %v1998 = vrot.slane %v1529, 3
        %v1999 = vrot.slane %v1530, 3
        %v2000 = vrot.slane %v1531, 3
        %v2001 = vrot.slane %v1532, 3
        %v2002 = vrot.slane %v1533, 3
        %v2003 = vrot.slane %v1534, 3
        %v2004 = vrot.slane %v1535, 3
        %v2005 = vrot.slane %v1536, 3
        %v2006 = vrot.slane %v1537, 3
        %v2007 = vrot.slane %v1538, 3
        %v2008 = vrot.slane %v1539, 3
        %v2009 = vrot.slane %v1540, 3
        %v2010 = vrot.slane %v1541, 3
        %v2011 = vrot.slane %v1542, 3
        %v2012 = vrot.slane %v1543, 3
        %v2013 = vrot.slane %v1544, 3
        %v2014 = vrot.slane %v1545, 3
        %v2015 = vrot.slane %v1546, 3
        %v2016 = vrot.slane %v1547, 3
        %v2017 = vrot.slane %v1548, 3
        %v2018 = vrot.slane %v1549, 3
        %v2019 = vrot.slane %v1550, 3
        %v2020 = vrot.slane %v1551, 3
        %v2021 = vrot.slane %v1552, 3
        %v2022 = vrot.slane %v1553, 3
        %v2023 = vrot.slane %v1554, 3
        %v2024 = vrot.slane %v1555, 3
        %v2025 = vrot.slane %v1556, 3
        %v2026 = vrot.slane %v1557, 3
        %v2027 = vrot.slane %v1558, 3
        %vm2028 = vcmp.lt.s32.totalorder %v1602, 5
        %v2029 = vsel %vm2028, %v2026, %v2027
        %v2030 = vsel %vm2028, %v2025, %v2026
        %v2031 = vsel %vm2028, %v2024, %v2025
        %v2032 = vsel %vm2028, %v2023, %v2024
        %v2033 = vsel %vm2028, %v2022, %v2023
        %v2034 = vsel %vm2028, %v2021, %v2022
        %v2035 = vsel %vm2028, %v2020, %v2021
        %v2036 = vsel %vm2028, %v2019, %v2020
        %v2037 = vsel %vm2028, %v2018, %v2019
        %v2038 = vsel %vm2028, %v2017, %v2018
        %v2039 = vsel %vm2028, %v2016, %v2017
        %v2040 = vsel %vm2028, %v2015, %v2016
        %v2041 = vsel %vm2028, %v2014, %v2015
        %v2042 = vsel %vm2028, %v2013, %v2014
        %v2043 = vsel %vm2028, %v2012, %v2013
        %v2044 = vsel %vm2028, %v2011, %v2012
        %v2045 = vsel %vm2028, %v2010, %v2011
        %v2046 = vsel %vm2028, %v2009, %v2010
        %v2047 = vsel %vm2028, %v2008, %v2009
        %v2048 = vsel %vm2028, %v2007, %v2008
        %v2049 = vsel %vm2028, %v2006, %v2007
        %v2050 = vsel %vm2028, %v2005, %v2006
        %v2051 = vsel %vm2028, %v2004, %v2005
        %v2052 = vsel %vm2028, %v2003, %v2004
        %v2053 = vsel %vm2028, %v2002, %v2003
        %v2054 = vsel %vm2028, %v2001, %v2002
        %v2055 = vsel %vm2028, %v2000, %v2001
        %v2056 = vsel %vm2028, %v1999, %v2000
        %v2057 = vsel %vm2028, %v1998, %v1999
        %v2058 = vsel %vm2028, %v1997, %v1998
        %v2059 = vsel %vm2028, %v1996, %v1997
        %v2060 = vsel %vm2028, %v1995, %v1996
        %v2061 = vsel %vm2028, %v1994, %v1995
        %v2062 = vsel %vm2028, %v1993, %v1994
        %v2063 = vsel %vm2028, %v1992, %v1993
        %v2064 = vsel %vm2028, %v1991, %v1992
        %v2065 = vsel %vm2028, %v1990, %v1991
        %v2066 = vsel %vm2028, %v1989, %v1990
        %v2067 = vsel %vm2028, %v1988, %v1989
        %v2068 = vsel %vm2028, %v1987, %v1988
        %v2069 = vsel %vm2028, %v1986, %v1987
        %v2070 = vsel %vm2028, %v2027, %v1986
        %v2071 = vpack.c.bf16 %v1604, %v1605
        %v2072 = vpack.c.bf16 %v1689, %v1690
        %v2073 = vpack.c.bf16 %v1774, %v1775
        %v2074 = vpack.c.bf16 %v1814, %v1815
        %v2075 = vpack.c.bf16 %v1518, %v1517
        %v2076 = vpack.c.bf16 %v1898, %v1899
        %v2077 = vpack.c.bf16 %v1896, %v1897
        %v2078 = vpack.c.bf16 %v1981, %v1982
        %v2079 = vpack.c.bf16 %v2066, %v2067
        %v2080 = vpack.c.bf16 %v1644, %v1645
        %v2081 = vpack.c.bf16 %v1729, %v1730
        %v2082 = vpack.c.bf16 %v1812, %v1813
        %v2083 = vpack.c.bf16 %v1520, %v1519
        %v2084 = vpack.c.bf16 %v1894, %v1895
        %v2085 = vpack.c.bf16 %v1979, %v1980
        %v2086 = vpack.c.bf16 %v2064, %v2065
        %v2087 = vpack.c.bf16 %v1642, %v1643
        %v2088 = vpack.c.bf16 %v1727, %v1728
        %v2089 = vpack.c.bf16 %v1810, %v1811
        %v2090 = vpack.c.bf16 %v1522, %v1521
        %v2091 = vpack.c.bf16 %v1892, %v1893
        %v2092 = vpack.c.bf16 %v1977, %v1978
        %v2093 = vpack.c.bf16 %v2062, %v2063
        %v2094 = vpack.c.bf16 %v1640, %v1641
        %v2095 = vpack.c.bf16 %v1725, %v1726
        %v2096 = vpack.c.bf16 %v1808, %v1809
        %v2097 = vpack.c.bf16 %v1524, %v1523
        %v2098 = vpack.c.bf16 %v1890, %v1891
        %v2099 = vpack.c.bf16 %v1975, %v1976
        %v2100 = vpack.c.bf16 %v2060, %v2061
        %v2101 = vpack.c.bf16 %v1638, %v1639
        %v2102 = vpack.c.bf16 %v1723, %v1724
        %v2103 = vpack.c.bf16 %v1806, %v1807
        %v2104 = vpack.c.bf16 %v1526, %v1525
        %v2105 = vpack.c.bf16 %v1888, %v1889
        %v2106 = vpack.c.bf16 %v1973, %v1974
        %v2107 = vpack.c.bf16 %v2058, %v2059
        %v2108 = vpack.c.bf16 %v1636, %v1637
        %v2109 = vpack.c.bf16 %v1721, %v1722
        %v2110 = vpack.c.bf16 %v1804, %v1805
        %v2111 = vpack.c.bf16 %v1528, %v1527
        %v2112 = vpack.c.bf16 %v1886, %v1887
        %v2113 = vpack.c.bf16 %v1971, %v1972
        %v2114 = vpack.c.bf16 %v2056, %v2057
        %v2115 = vpack.c.bf16 %v1634, %v1635
        %v2116 = vpack.c.bf16 %v1719, %v1720
        %v2117 = vpack.c.bf16 %v1802, %v1803
        %v2118 = vpack.c.bf16 %v1530, %v1529
        %v2119 = vpack.c.bf16 %v1884, %v1885
        %v2120 = vpack.c.bf16 %v1969, %v1970
        %v2121 = vpack.c.bf16 %v2054, %v2055
        %v2122 = vpack.c.bf16 %v1632, %v1633
        %v2123 = vpack.c.bf16 %v1717, %v1718
        %v2124 = vpack.c.bf16 %v1800, %v1801
        %v2125 = vpack.c.bf16 %v1532, %v1531
        %v2126 = vpack.c.bf16 %v1882, %v1883
        %v2127 = vpack.c.bf16 %v1967, %v1968
        %v2128 = vpack.c.bf16 %v2052, %v2053
        %v2129 = vpack.c.bf16 %v1630, %v1631
        %v2130 = vpack.c.bf16 %v1715, %v1716
        %v2131 = vpack.c.bf16 %v1798, %v1799
        %v2132 = vpack.c.bf16 %v1534, %v1533
        %v2133 = vpack.c.bf16 %v1880, %v1881
        %v2134 = vpack.c.bf16 %v1965, %v1966
        %v2135 = vpack.c.bf16 %v2050, %v2051
        %v2136 = vpack.c.bf16 %v1628, %v1629
        %v2137 = vpack.c.bf16 %v1713, %v1714
        %v2138 = vpack.c.bf16 %v1796, %v1797
        %v2139 = vpack.c.bf16 %v1536, %v1535
        %v2140 = vpack.c.bf16 %v1878, %v1879
        %v2141 = vpack.c.bf16 %v1963, %v1964
        %v2142 = vpack.c.bf16 %v2048, %v2049
        %v2143 = vpack.c.bf16 %v1626, %v1627
        %v2144 = vpack.c.bf16 %v1711, %v1712
        %v2145 = vpack.c.bf16 %v1794, %v1795
        %v2146 = vpack.c.bf16 %v1538, %v1537
        %v2147 = vpack.c.bf16 %v1876, %v1877
        %v2148 = vpack.c.bf16 %v1961, %v1962
        %v2149 = vpack.c.bf16 %v2046, %v2047
        %v2150 = vpack.c.bf16 %v1624, %v1625
        %v2151 = vpack.c.bf16 %v1709, %v1710
        %v2152 = vpack.c.bf16 %v1792, %v1793
        %v2153 = vpack.c.bf16 %v1540, %v1539
        %v2154 = vpack.c.bf16 %v1874, %v1875
        %v2155 = vpack.c.bf16 %v1959, %v1960
        %v2156 = vpack.c.bf16 %v2044, %v2045
        %v2157 = vpack.c.bf16 %v1622, %v1623
        %v2158 = vpack.c.bf16 %v1707, %v1708
        %v2159 = vpack.c.bf16 %v1790, %v1791
        %v2160 = vpack.c.bf16 %v1542, %v1541
        %v2161 = vpack.c.bf16 %v1872, %v1873
        %v2162 = vpack.c.bf16 %v1957, %v1958
        %v2163 = vpack.c.bf16 %v2042, %v2043
        %v2164 = vpack.c.bf16 %v1620, %v1621
        %v2165 = vpack.c.bf16 %v1705, %v1706
        %v2166 = vpack.c.bf16 %v1788, %v1789
        %v2167 = vpack.c.bf16 %v1544, %v1543
        %v2168 = vpack.c.bf16 %v1870, %v1871
        %v2169 = vpack.c.bf16 %v1955, %v1956
        %v2170 = vpack.c.bf16 %v2040, %v2041
        %v2171 = vpack.c.bf16 %v1618, %v1619
        %v2172 = vpack.c.bf16 %v1703, %v1704
        %v2173 = vpack.c.bf16 %v1786, %v1787
        %v2174 = vpack.c.bf16 %v1546, %v1545
        %v2175 = vpack.c.bf16 %v1868, %v1869
        %v2176 = vpack.c.bf16 %v1953, %v1954
        %v2177 = vpack.c.bf16 %v2038, %v2039
        %v2178 = vpack.c.bf16 %v1616, %v1617
        %v2179 = vpack.c.bf16 %v1701, %v1702
        %v2180 = vpack.c.bf16 %v1784, %v1785
        %v2181 = vpack.c.bf16 %v1548, %v1547
        %v2182 = vpack.c.bf16 %v1866, %v1867
        %v2183 = vpack.c.bf16 %v1951, %v1952
        %v2184 = vpack.c.bf16 %v2036, %v2037
        %v2185 = vpack.c.bf16 %v1614, %v1615
        %v2186 = vpack.c.bf16 %v1699, %v1700
        %v2187 = vpack.c.bf16 %v1782, %v1783
        %v2188 = vpack.c.bf16 %v1550, %v1549
        %v2189 = vpack.c.bf16 %v1864, %v1865
        %v2190 = vpack.c.bf16 %v1949, %v1950
        %v2191 = vpack.c.bf16 %v2034, %v2035
        %v2192 = vpack.c.bf16 %v1612, %v1613
        %v2193 = vpack.c.bf16 %v1697, %v1698
        %v2194 = vpack.c.bf16 %v1780, %v1781
        %v2195 = vpack.c.bf16 %v1552, %v1551
        %v2196 = vpack.c.bf16 %v1862, %v1863
        %v2197 = vpack.c.bf16 %v1947, %v1948
        %v2198 = vpack.c.bf16 %v2032, %v2033
        %v2199 = vpack.c.bf16 %v1610, %v1611
        %v2200 = vpack.c.bf16 %v1695, %v1696
        %v2201 = vpack.c.bf16 %v1778, %v1779
        %v2202 = vpack.c.bf16 %v1554, %v1553
        %v2203 = vpack.c.bf16 %v1860, %v1861
        %v2204 = vpack.c.bf16 %v1945, %v1946
        %v2205 = vpack.c.bf16 %v2030, %v2031
        %v2206 = vpack.c.bf16 %v1608, %v1609
        %v2207 = vpack.c.bf16 %v1693, %v1694
        %v2208 = vpack.c.bf16 %v1776, %v1777
        %v2209 = vpack.c.bf16 %v1556, %v1555
        %v2210 = vpack.c.bf16 %v1900, %v1859
        %v2211 = vpack.c.bf16 %v1985, %v1944
        %v2212 = vpack.c.bf16 %v2070, %v2029
        %v2213 = vpack.c.bf16 %v1606, %v1607
        %v2214 = vpack.c.bf16 %v1691, %v1692
        %v2215 = vpack.c.bf16 %v1558, %v1557
        %v2216 = vpack.c.bf16 %v1983, %v1984
        %v2217 = vpack.c.bf16 %v2068, %v2069
        %v2218 = vld [vmem:[%s6] sm:$0xf]
        %v2219 = vld [vmem:[%s6 + $0x4] sm:$0xf]
        %v2220 = vld [vmem:[%s6 + $0x8] sm:$0xf]
        %v2221 = vld [vmem:[%s6 + $0xc] sm:$0xf]
        %v2222 = vld [vmem:[%s6 + $0x10] sm:$0xf]
        %v2223 = vld [vmem:[%s6 + $0x14] sm:$0xf]
        %v2224 = vld [vmem:[%s6 + $0x18] sm:$0xf]
        %v2225 = vld [vmem:[%s6 + $0x1c] sm:$0xf]
        %v2226 = vld [vmem:[%s6 + $0x20] sm:$0xf]
        %v2227 = vld [vmem:[%s6 + $0x24] sm:$0xf]
        %v2228 = vld [vmem:[%s6 + $0x28] sm:$0xf]
        %v2229 = vld [vmem:[%s6 + $0x2c] sm:$0xf]
        %v2230 = vld [vmem:[%s6 + $0x30] sm:$0xf]
        %v2231 = vld [vmem:[%s6 + $0x34] sm:$0xf]
        %v2232 = vld [vmem:[%s6 + $0x38] sm:$0xf]
        %v2233 = vld [vmem:[%s6 + $0x3c] sm:$0xf]
        %v2234 = vld [vmem:[%s6 + $0x40] sm:$0xf]
        %v2235 = vld [vmem:[%s6 + $0x44] sm:$0xf]
        %v2236 = vld [vmem:[%s6 + $0x48] sm:$0xf]
        %v2237 = vld [vmem:[%s6 + $0x4c] sm:$0xf]
        %v2238 = vld [vmem:[%s6 + $0x50] sm:$0xf]
        %v2239 = vld [vmem:[%s6 + $0x54] sm:$0xf]
        %v2240 = vld [vmem:[%s6 + $0x58] sm:$0xf]
        %v2241 = vld [vmem:[%s6 + $0x5c] sm:$0xf]
        %v2242 = vld [vmem:[%s6 + $0x60] sm:$0xf]
        %v2243 = vld [vmem:[%s6 + $0x64] sm:$0xf]
        %v2244 = vld [vmem:[%s6 + $0x68] sm:$0xf]
        %v2245 = vld [vmem:[%s6 + $0x6c] sm:$0xf]
        %v2246 = vld [vmem:[%s6 + $0x70] sm:$0xf]
        %v2247 = vld [vmem:[%s6 + $0x74] sm:$0xf]
        %v2248 = vld [vmem:[%s6 + $0x78] sm:$0xf]
        %v2249 = vld [vmem:[%s6 + $0x7c] sm:$0xf]
        %v2250 = vld [vmem:[%s6 + $0x80] sm:$0xf]
        %v2251 = vld [vmem:[%s6 + $0x84] sm:$0xf]
        %v2252 = vld [vmem:[%s6 + $0x88] sm:$0xf]
        %v2253 = vld [vmem:[%s6 + $0x8c] sm:$0xf]
        %v2254 = vld [vmem:[%s6 + $0x90] sm:$0xf]
        %v2255 = vld [vmem:[%s6 + $0x94] sm:$0xf]
        %v2256 = vld [vmem:[%s6 + $0x98] sm:$0xf]
        %v2257 = vld [vmem:[%s6 + $0x9c] sm:$0xf]
        %v2258 = vld [vmem:[%s6 + $0xa0] sm:$0xf]
        %v2259 = vld [vmem:[%s6 + $0xa4] sm:$0xf]
        %v2260 = vld [vmem:[%s6 + $0xa8] sm:$0xf]
        %v2261 = vld [vmem:[%s6 + $0xac] sm:$0xf]
        %v2262 = vld [vmem:[%s6 + $0xb0] sm:$0xf]
        %v2263 = vld [vmem:[%s6 + $0xb4] sm:$0xf]
        %v2264 = vld [vmem:[%s6 + $0xb8] sm:$0xf]
        %v2265 = vld [vmem:[%s6 + $0xbc] sm:$0xf]
        %v2266 = vld [vmem:[%s6 + $0xc0] sm:$0xf]
        %v2267 = vld [vmem:[%s6 + $0xc4] sm:$0xf]
        %v2268 = vld [vmem:[%s6 + $0xc8] sm:$0xf]
        %v2269 = vld [vmem:[%s6 + $0xcc] sm:$0xf]
        %v2270 = vld [vmem:[%s6 + $0xd0] sm:$0xf]
        %v2271 = vld [vmem:[%s6 + $0xd4] sm:$0xf]
        %v2272 = vld [vmem:[%s6 + $0xd8] sm:$0xf]
        %v2273 = vld [vmem:[%s6 + $0xdc] sm:$0xf]
        %v2274 = vld [vmem:[%s6 + $0xe0] sm:$0xf]
        %v2275 = vld [vmem:[%s6 + $0xe4] sm:$0xf]
        %v2276 = vld [vmem:[%s6 + $0xe8] sm:$0xf]
        %v2277 = vld [vmem:[%s6 + $0xec] sm:$0xf]
        %v2278 = vld [vmem:[%s6 + $0xf0] sm:$0xf]
        %v2279 = vld [vmem:[%s6 + $0xf4] sm:$0xf]
        %v2280 = vld [vmem:[%s6 + $0xf8] sm:$0xf]
        %v2281 = vld [vmem:[%s6 + $0xfc] sm:$0xf]
        %v2282 = vld [vmem:[%s6 + $0x100] sm:$0xf]
        %v2283 = vld [vmem:[%s6 + $0x104] sm:$0xf]
        %v2284 = vld [vmem:[%s6 + $0x108] sm:$0xf]
        %v2285 = vld [vmem:[%s6 + $0x10c] sm:$0xf]
        %v2286 = vld [vmem:[%s6 + $0x110] sm:$0xf]
        %v2287 = vld [vmem:[%s6 + $0x114] sm:$0xf]
        %v2288 = vld [vmem:[%s6 + $0x118] sm:$0xf]
        %v2289 = vld [vmem:[%s6 + $0x11c] sm:$0xf]
        %v2290 = vld [vmem:[%s6 + $0x120] sm:$0xf]
        %v2291 = vld [vmem:[%s6 + $0x124] sm:$0xf]
        %v2292 = vld [vmem:[%s6 + $0x128] sm:$0xf]
        %v2293 = vld [vmem:[%s6 + $0x12c] sm:$0xf]
        %v2294 = vld [vmem:[%s6 + $0x130] sm:$0xf]
        %v2295 = vld [vmem:[%s6 + $0x134] sm:$0xf]
        %v2296 = vld [vmem:[%s6 + $0x138] sm:$0xf]
        %v2297 = vld [vmem:[%s6 + $0x13c] sm:$0xf]
        %v2298 = vld [vmem:[%s6 + $0x140] sm:$0xf]
        %v2299 = vld [vmem:[%s6 + $0x144] sm:$0xf]
        %v2300 = vld [vmem:[%s6 + $0x148] sm:$0xf]
        %v2301 = vld [vmem:[%s6 + $0x14c] sm:$0xf]
        %v2302 = vld [vmem:[%s6 + $0x150] sm:$0xf]
        %v2303 = vld [vmem:[%s6 + $0x154] sm:$0xf]
        %v2304 = vld [vmem:[%s6 + $0x158] sm:$0xf]
        %v2305 = vld [vmem:[%s6 + $0x15c] sm:$0xf]
        %v2306 = vld [vmem:[%s6 + $0x160] sm:$0xf]
        %v2307 = vld [vmem:[%s6 + $0x164] sm:$0xf]
        %v2308 = vld [vmem:[%s6 + $0x168] sm:$0xf]
        %v2309 = vld [vmem:[%s6 + $0x16c] sm:$0xf]
        %v2310 = vld [vmem:[%s6 + $0x170] sm:$0xf]
        %v2311 = vld [vmem:[%s6 + $0x174] sm:$0xf]
        %v2312 = vld [vmem:[%s6 + $0x178] sm:$0xf]
        %v2313 = vld [vmem:[%s6 + $0x17c] sm:$0xf]
        %v2314 = vld [vmem:[%s6 + $0x180] sm:$0xf]
        %v2315 = vld [vmem:[%s6 + $0x184] sm:$0xf]
        %v2316 = vld [vmem:[%s6 + $0x188] sm:$0xf]
        %v2317 = vld [vmem:[%s6 + $0x18c] sm:$0xf]
        %v2318 = vld [vmem:[%s6 + $0x190] sm:$0xf]
        %v2319 = vld [vmem:[%s6 + $0x194] sm:$0xf]
        %v2320 = vld [vmem:[%s6 + $0x198] sm:$0xf]
        %v2321 = vld [vmem:[%s6 + $0x19c] sm:$0xf]
        %v2322 = vld [vmem:[%s6 + $0x1a0] sm:$0xf]
        %v2323 = vld [vmem:[%s6 + $0x1a4] sm:$0xf]
        %v2324 = vld [vmem:[%s6 + $0x1a8] sm:$0xf]
        %v2325 = vld [vmem:[%s6 + $0x1ac] sm:$0xf]
        %v2326 = vld [vmem:[%s6 + $0x1b0] sm:$0xf]
        %v2327 = vld [vmem:[%s6 + $0x1b4] sm:$0xf]
        %v2328 = vld [vmem:[%s6 + $0x1b8] sm:$0xf]
        %v2329 = vld [vmem:[%s6 + $0x1bc] sm:$0xf]
        %v2330 = vld [vmem:[%s6 + $0x1c0] sm:$0xf]
        %v2331 = vld [vmem:[%s6 + $0x1c4] sm:$0xf]
        %v2332 = vld [vmem:[%s6 + $0x1c8] sm:$0xf]
        %v2333 = vld [vmem:[%s6 + $0x1cc] sm:$0xf]
        %v2334 = vld [vmem:[%s6 + $0x1d0] sm:$0xf]
        %v2335 = vld [vmem:[%s6 + $0x1d4] sm:$0xf]
        %v2336 = vld [vmem:[%s6 + $0x1d8] sm:$0xf]
        %v2337 = vld [vmem:[%s6 + $0x1dc] sm:$0xf]
        %v2338 = vld [vmem:[%s6 + $0x1e0] sm:$0xf]
        %v2339 = vld [vmem:[%s6 + $0x1e4] sm:$0xf]
        %v2340 = vld [vmem:[%s6 + $0x1e8] sm:$0xf]
        %v2341 = vld [vmem:[%s6 + $0x1ec] sm:$0xf]
        %v2342 = vld [vmem:[%s6 + $0x1f0] sm:$0xf]
        %v2343 = vld [vmem:[%s6 + $0x1f4] sm:$0xf]
        %v2344 = vld [vmem:[%s6 + $0x1f8] sm:$0xf]
        %v2345 = vld [vmem:[%s6 + $0x1fc] sm:$0xf]
        %v2346 = vld [vmem:[%s6 + $0x200] sm:$0xf]
        %v2347 = vld [vmem:[%s6 + $0x204] sm:$0xf]
        %v2348 = vld [vmem:[%s6 + $0x208] sm:$0xf]
        %v2349 = vld [vmem:[%s6 + $0x20c] sm:$0xf]
        %v2350 = vld [vmem:[%s6 + $0x210] sm:$0xf]
        %v2351 = vld [vmem:[%s6 + $0x214] sm:$0xf]
        %v2352 = vld [vmem:[%s6 + $0x218] sm:$0xf]
        %v2353 = vld [vmem:[%s6 + $0x21c] sm:$0xf]
        %v2354 = vld [vmem:[%s6 + $0x220] sm:$0xf]
        %v2355 = vld [vmem:[%s6 + $0x224] sm:$0xf]
        %v2356 = vld [vmem:[%s6 + $0x228] sm:$0xf]
        %v2357 = vld [vmem:[%s6 + $0x22c] sm:$0xf]
        %v2358 = vld [vmem:[%s6 + $0x230] sm:$0xf]
        %v2359 = vld [vmem:[%s6 + $0x234] sm:$0xf]
        %v2360 = vld [vmem:[%s6 + $0x238] sm:$0xf]
        %v2361 = vld [vmem:[%s6 + $0x23c] sm:$0xf]
        %v2362 = vld [vmem:[%s7] sm:$0x1]
        %v2364 = vlaneseq
        %v2365 = vshrl.u32 %v2364, 7
        %v2366 = vsub.s32 0, %v2365
        %v2367 = vrot.slane %v2362, %v2366
        %v2513 = vunpack.c.l.b16 %v2218
        %v2514 = vunpack.c.l.b16 %v2219
        %v2515 = vunpack.c.l.b16 %v2220
        %v2516 = vunpack.c.l.b16 %v2221
        %v2517 = vunpack.c.l.b16 %v2222
        %v2518 = vunpack.c.l.b16 %v2223
        %v2519 = vunpack.c.l.b16 %v2224
        %v2520 = vunpack.c.l.b16 %v2225
        %v2521 = vunpack.c.l.b16 %v2226
        %v2522 = vunpack.c.l.b16 %v2227
        %v2523 = vunpack.c.l.b16 %v2228
        %v2524 = vunpack.c.l.b16 %v2229
        %v2525 = vunpack.c.l.b16 %v2230
        %v2526 = vunpack.c.l.b16 %v2231
        %v2527 = vunpack.c.l.b16 %v2232
        %v2528 = vunpack.c.l.b16 %v2233
        %v2529 = vunpack.c.l.b16 %v2234
        %v2530 = vunpack.c.l.b16 %v2235
        %v2531 = vunpack.c.l.b16 %v2236
        %v2532 = vunpack.c.l.b16 %v2237
        %v2533 = vunpack.c.l.b16 %v2238
        %v2534 = vunpack.c.l.b16 %v2239
        %v2535 = vunpack.c.l.b16 %v2240
        %v2536 = vunpack.c.l.b16 %v2241
        %v2537 = vunpack.c.l.b16 %v2242
        %v2538 = vunpack.c.l.b16 %v2243
        %v2539 = vunpack.c.l.b16 %v2244
        %v2540 = vunpack.c.l.b16 %v2245
        %v2541 = vunpack.c.l.b16 %v2246
        %v2542 = vunpack.c.l.b16 %v2247
        %v2543 = vunpack.c.l.b16 %v2248
        %v2544 = vunpack.c.l.b16 %v2249
        %v2545 = vunpack.c.l.b16 %v2250
        %v2546 = vunpack.c.l.b16 %v2251
        %v2547 = vunpack.c.l.b16 %v2252
        %v2548 = vunpack.c.l.b16 %v2253
        %v2549 = vunpack.c.l.b16 %v2254
        %v2550 = vunpack.c.l.b16 %v2255
        %v2551 = vunpack.c.l.b16 %v2256
        %v2552 = vunpack.c.l.b16 %v2257
        %v2553 = vunpack.c.l.b16 %v2258
        %v2554 = vunpack.c.l.b16 %v2259
        %v2555 = vunpack.c.l.b16 %v2260
        %v2556 = vunpack.c.l.b16 %v2261
        %v2557 = vunpack.c.l.b16 %v2262
        %v2558 = vunpack.c.l.b16 %v2263
        %v2559 = vunpack.c.l.b16 %v2264
        %v2560 = vunpack.c.l.b16 %v2265
        %v2561 = vunpack.c.l.b16 %v2266
        %v2562 = vunpack.c.l.b16 %v2267
        %v2563 = vunpack.c.l.b16 %v2268
        %v2564 = vunpack.c.l.b16 %v2269
        %v2565 = vunpack.c.l.b16 %v2270
        %v2566 = vunpack.c.l.b16 %v2271
        %v2567 = vunpack.c.l.b16 %v2272
        %v2568 = vunpack.c.l.b16 %v2273
        %v2569 = vunpack.c.l.b16 %v2274
        %v2570 = vunpack.c.l.b16 %v2275
        %v2571 = vunpack.c.l.b16 %v2276
        %v2572 = vunpack.c.l.b16 %v2277
        %v2573 = vunpack.c.l.b16 %v2278
        %v2574 = vunpack.c.l.b16 %v2279
        %v2575 = vunpack.c.l.b16 %v2280
        %v2576 = vunpack.c.l.b16 %v2281
        %v2577 = vunpack.c.l.b16 %v2282
        %v2578 = vunpack.c.l.b16 %v2283
        %v2579 = vunpack.c.l.b16 %v2284
        %v2580 = vunpack.c.l.b16 %v2285
        %v2581 = vunpack.c.l.b16 %v2286
        %v2582 = vunpack.c.l.b16 %v2287
        %v2583 = vunpack.c.l.b16 %v2288
        %v2584 = vunpack.c.l.b16 %v2289
        %v2585 = vunpack.c.l.b16 %v2290
        %v2586 = vunpack.c.l.b16 %v2291
        %v2587 = vunpack.c.l.b16 %v2292
        %v2588 = vunpack.c.l.b16 %v2293
        %v2589 = vunpack.c.l.b16 %v2294
        %v2590 = vunpack.c.l.b16 %v2295
        %v2591 = vunpack.c.l.b16 %v2296
        %v2592 = vunpack.c.l.b16 %v2297
        %v2593 = vunpack.c.l.b16 %v2298
        %v2594 = vunpack.c.l.b16 %v2299
        %v2595 = vunpack.c.l.b16 %v2300
        %v2596 = vunpack.c.l.b16 %v2301
        %v2597 = vunpack.c.l.b16 %v2302
        %v2598 = vunpack.c.l.b16 %v2303
        %v2599 = vunpack.c.l.b16 %v2304
        %v2600 = vunpack.c.l.b16 %v2305
        %v2601 = vunpack.c.l.b16 %v2306
        %v2602 = vunpack.c.l.b16 %v2307
        %v2603 = vunpack.c.l.b16 %v2308
        %v2604 = vunpack.c.l.b16 %v2309
        %v2605 = vunpack.c.l.b16 %v2310
        %v2606 = vunpack.c.l.b16 %v2311
        %v2607 = vunpack.c.l.b16 %v2312
        %v2608 = vunpack.c.l.b16 %v2313
        %v2609 = vunpack.c.l.b16 %v2314
        %v2610 = vunpack.c.l.b16 %v2315
        %v2611 = vunpack.c.l.b16 %v2316
        %v2612 = vunpack.c.l.b16 %v2317
        %v2613 = vunpack.c.l.b16 %v2318
        %v2614 = vunpack.c.l.b16 %v2319
        %v2615 = vunpack.c.l.b16 %v2320
        %v2616 = vunpack.c.l.b16 %v2321
        %v2617 = vunpack.c.l.b16 %v2322
        %v2618 = vunpack.c.l.b16 %v2323
        %v2619 = vunpack.c.l.b16 %v2324
        %v2620 = vunpack.c.l.b16 %v2325
        %v2621 = vunpack.c.l.b16 %v2326
        %v2622 = vunpack.c.l.b16 %v2327
        %v2623 = vunpack.c.l.b16 %v2328
        %v2624 = vunpack.c.l.b16 %v2329
        %v2625 = vunpack.c.l.b16 %v2330
        %v2626 = vunpack.c.l.b16 %v2331
        %v2627 = vunpack.c.l.b16 %v2332
        %v2628 = vunpack.c.l.b16 %v2333
        %v2629 = vunpack.c.l.b16 %v2334
        %v2630 = vunpack.c.l.b16 %v2335
        %v2631 = vunpack.c.l.b16 %v2336
        %v2632 = vunpack.c.l.b16 %v2337
        %v2633 = vunpack.c.l.b16 %v2338
        %v2634 = vunpack.c.l.b16 %v2339
        %v2635 = vunpack.c.l.b16 %v2340
        %v2636 = vunpack.c.l.b16 %v2341
        %v2637 = vunpack.c.l.b16 %v2342
        %v2638 = vunpack.c.l.b16 %v2343
        %v2639 = vunpack.c.l.b16 %v2344
        %v2640 = vunpack.c.l.b16 %v2345
        %v2641 = vunpack.c.l.b16 %v2346
        %v2642 = vunpack.c.l.b16 %v2347
        %v2643 = vunpack.c.l.b16 %v2348
        %v2644 = vunpack.c.l.b16 %v2349
        %v2645 = vunpack.c.l.b16 %v2350
        %v2646 = vunpack.c.l.b16 %v2351
        %v2647 = vunpack.c.l.b16 %v2352
        %v2648 = vunpack.c.l.b16 %v2353
        %v2649 = vunpack.c.l.b16 %v2354
        %v2650 = vunpack.c.l.b16 %v2355
        %v2651 = vunpack.c.l.b16 %v2356
        %v2652 = vunpack.c.l.b16 %v2357
        %v2653 = vunpack.c.l.b16 %v2358
        %v2654 = vunpack.c.l.b16 %v2359
        %v2655 = vunpack.c.l.b16 %v2360
        %v2656 = vunpack.c.l.b16 %v2361
        %v2657 = vpack.c.b16 %v2514, %v2513
        %v2658 = vpack.c.b16 %v2516, %v2515
        %v2659 = vpack.c.b16 %v2518, %v2517
        %v2660 = vpack.c.b16 %v2520, %v2519
        %v2661 = vpack.c.b16 %v2522, %v2521
        %v2662 = vpack.c.b16 %v2524, %v2523
        %v2663 = vpack.c.b16 %v2526, %v2525
        %v2664 = vpack.c.b16 %v2528, %v2527
        %v2665 = vpack.c.b16 %v2530, %v2529
        %v2666 = vpack.c.b16 %v2532, %v2531
        %v2667 = vpack.c.b16 %v2534, %v2533
        %v2668 = vpack.c.b16 %v2536, %v2535
        %v2669 = vpack.c.b16 %v2538, %v2537
        %v2670 = vpack.c.b16 %v2540, %v2539
        %v2671 = vpack.c.b16 %v2542, %v2541
        %v2672 = vpack.c.b16 %v2544, %v2543
        %v2673 = vpack.c.b16 %v2546, %v2545
        %v2674 = vpack.c.b16 %v2548, %v2547
        %v2675 = vpack.c.b16 %v2550, %v2549
        %v2676 = vpack.c.b16 %v2552, %v2551
        %v2677 = vpack.c.b16 %v2554, %v2553
        %v2678 = vpack.c.b16 %v2556, %v2555
        %v2679 = vpack.c.b16 %v2558, %v2557
        %v2680 = vpack.c.b16 %v2560, %v2559
        %v2681 = vpack.c.b16 %v2562, %v2561
        %v2682 = vpack.c.b16 %v2564, %v2563
        %v2683 = vpack.c.b16 %v2566, %v2565
        %v2684 = vpack.c.b16 %v2568, %v2567
        %v2685 = vpack.c.b16 %v2570, %v2569
        %v2686 = vpack.c.b16 %v2572, %v2571
        %v2687 = vpack.c.b16 %v2574, %v2573
        %v2688 = vpack.c.b16 %v2576, %v2575
        %v2689 = vpack.c.b16 %v2578, %v2577
        %v2690 = vpack.c.b16 %v2580, %v2579
        %v2691 = vpack.c.b16 %v2582, %v2581
        %v2692 = vpack.c.b16 %v2584, %v2583
        %v2693 = vpack.c.b16 %v2586, %v2585
        %v2694 = vpack.c.b16 %v2588, %v2587
        %v2695 = vpack.c.b16 %v2590, %v2589
        %v2696 = vpack.c.b16 %v2592, %v2591
        %v2697 = vpack.c.b16 %v2594, %v2593
        %v2698 = vpack.c.b16 %v2596, %v2595
        %v2699 = vpack.c.b16 %v2598, %v2597
        %v2700 = vpack.c.b16 %v2600, %v2599
        %v2701 = vpack.c.b16 %v2602, %v2601
        %v2702 = vpack.c.b16 %v2604, %v2603
        %v2703 = vpack.c.b16 %v2606, %v2605
        %v2704 = vpack.c.b16 %v2608, %v2607
        %v2705 = vpack.c.b16 %v2610, %v2609
        %v2706 = vpack.c.b16 %v2612, %v2611
        %v2707 = vpack.c.b16 %v2614, %v2613
        %v2708 = vpack.c.b16 %v2616, %v2615
        %v2709 = vpack.c.b16 %v2618, %v2617
        %v2710 = vpack.c.b16 %v2620, %v2619
        %v2711 = vpack.c.b16 %v2622, %v2621
        %v2712 = vpack.c.b16 %v2624, %v2623
        %v2713 = vpack.c.b16 %v2626, %v2625
        %v2714 = vpack.c.b16 %v2628, %v2627
        %v2715 = vpack.c.b16 %v2630, %v2629
        %v2716 = vpack.c.b16 %v2632, %v2631
        %v2717 = vpack.c.b16 %v2634, %v2633
        %v2718 = vpack.c.b16 %v2636, %v2635
        %v2719 = vpack.c.b16 %v2638, %v2637
        %v2720 = vpack.c.b16 %v2640, %v2639
        %v2721 = vpack.c.b16 %v2642, %v2641
        %v2722 = vpack.c.b16 %v2644, %v2643
        %v2723 = vpack.c.b16 %v2646, %v2645
        %v2724 = vpack.c.b16 %v2648, %v2647
        %v2725 = vpack.c.b16 %v2650, %v2649
        %v2726 = vpack.c.b16 %v2652, %v2651
        %v2727 = vpack.c.b16 %v2654, %v2653
        %v2728 = vpack.c.b16 %v2656, %v2655
        %2801 = vmatprep.subr.bf16.mxu0 0
        %2802 = vmatpush1.bf16.msra.mxu0 %v2664
        %2803 = vmatprep.subr.bf16.mxu0 0
        %2804 = vmatpush1.bf16.msra.mxu0 %v2663
        %2805 = vmatprep.subr.bf16.mxu0 0
        %2806 = vmatpush1.bf16.msra.mxu0 %v2662
        %2807 = vmatprep.subr.bf16.mxu0 0
        %2808 = vmatpush1.bf16.msra.mxu0 %v2661
        %2809 = vmatprep.subr.bf16.mxu0 0
        %2810 = vmatpush1.bf16.msra.mxu0 %v2660
        %2811 = vmatprep.subr.bf16.mxu0 0
        %2812 = vmatpush1.bf16.msra.mxu0 %v2659
        %2813 = vmatprep.subr.bf16.mxu0 0
        %2814 = vmatpush1.bf16.msra.mxu0 %v2658
        %2815 = vmatprep.subr.bf16.mxu0 0
        %2816 = vmatpush1.bf16.msra.mxu0 %v2657
        %2817 = vmatprep.subr.bf16.mxu0 0
        %2818 = vmatpush2.bf16.msra.mxu0 %v2672
        %2819 = vmatprep.subr.bf16.mxu0 0
        %2820 = vmatpush2.bf16.msra.mxu0 %v2671
        %2821 = vmatprep.subr.bf16.mxu0 0
        %2822 = vmatpush2.bf16.msra.mxu0 %v2670
        %2823 = vmatprep.subr.bf16.mxu0 0
        %2824 = vmatpush2.bf16.msra.mxu0 %v2669
        %2825 = vmatprep.subr.bf16.mxu0 0
        %2826 = vmatpush2.bf16.msra.mxu0 %v2668
        %2827 = vmatprep.subr.bf16.mxu0 0
        %2828 = vmatpush2.bf16.msra.mxu0 %v2667
        %2829 = vmatprep.subr.bf16.mxu0 0
        %2830 = vmatpush2.bf16.msra.mxu0 %v2666
        %2831 = vmatprep.subr.bf16.mxu0 0
        %2832 = vmatpush2.bf16.msra.mxu0 %v2665
        %2833 = vmatprep.mubr.bf16.mxu0 %v2072
        %2834 = vmatmul.mubr.bf16.gmra.mxu0 %v2071
        %v2835 = vpop.f32.mrf.mxu0
        %v2836 = vadd.f32 %v2367, %v2835
        %v2837 = vpop.f32.mrf.mxu0
        %v2838 = vpop.f32.mrf.mxu0
        %v2839 = vadd.f32 %v2367, %v2838
        %v2840 = vpop.f32.mrf.mxu0
        %2841 = vmatprep.mubr.bf16.mxu0 %v2081
        %2842 = vmatmul.mubr.bf16.gmra.mxu0 %v2080
        %v2843 = vpop.f32.mrf.mxu0
        %v2844 = vadd.f32 %v2367, %v2843
        %v2845 = vpop.f32.mrf.mxu0
        %v2846 = vpop.f32.mrf.mxu0
        %v2847 = vadd.f32 %v2367, %v2846
        %v2848 = vpop.f32.mrf.mxu0
        %2849 = vmatprep.mubr.bf16.mxu0 %v2088
        %2850 = vmatmul.mubr.bf16.gmra.mxu0 %v2087
        %v2851 = vpop.f32.mrf.mxu0
        %v2852 = vadd.f32 %v2367, %v2851
        %v2853 = vpop.f32.mrf.mxu0
        %v2854 = vpop.f32.mrf.mxu0
        %v2855 = vadd.f32 %v2367, %v2854
        %v2856 = vpop.f32.mrf.mxu0
        %2857 = vmatprep.mubr.bf16.mxu0 %v2095
        %2858 = vmatmul.mubr.bf16.gmra.mxu0 %v2094
        %v2859 = vpop.f32.mrf.mxu0
        %v2860 = vadd.f32 %v2367, %v2859
        %v2861 = vpop.f32.mrf.mxu0
        %v2862 = vpop.f32.mrf.mxu0
        %v2863 = vadd.f32 %v2367, %v2862
        %v2864 = vpop.f32.mrf.mxu0
        %2865 = vmatprep.mubr.bf16.mxu0 %v2102
        %2866 = vmatmul.mubr.bf16.gmra.mxu0 %v2101
        %v2867 = vpop.f32.mrf.mxu0
        %v2868 = vadd.f32 %v2367, %v2867
        %v2869 = vpop.f32.mrf.mxu0
        %v2870 = vpop.f32.mrf.mxu0
        %v2871 = vadd.f32 %v2367, %v2870
        %v2872 = vpop.f32.mrf.mxu0
        %2873 = vmatprep.mubr.bf16.mxu0 %v2109
        %2874 = vmatmul.mubr.bf16.gmra.mxu0 %v2108
        %v2875 = vpop.f32.mrf.mxu0
        %v2876 = vadd.f32 %v2367, %v2875
        %v2877 = vpop.f32.mrf.mxu0
        %v2878 = vpop.f32.mrf.mxu0
        %v2879 = vadd.f32 %v2367, %v2878
        %v2880 = vpop.f32.mrf.mxu0
        %2881 = vmatprep.mubr.bf16.mxu0 %v2116
        %2882 = vmatmul.mubr.bf16.gmra.mxu0 %v2115
        %v2883 = vpop.f32.mrf.mxu0
        %v2884 = vadd.f32 %v2367, %v2883
        %v2885 = vpop.f32.mrf.mxu0
        %v2886 = vpop.f32.mrf.mxu0
        %v2887 = vadd.f32 %v2367, %v2886
        %v2888 = vpop.f32.mrf.mxu0
        %2889 = vmatprep.mubr.bf16.mxu0 %v2123
        %2890 = vmatmul.mubr.bf16.gmra.mxu0 %v2122
        %v2891 = vpop.f32.mrf.mxu0
        %v2892 = vadd.f32 %v2367, %v2891
        %v2893 = vpop.f32.mrf.mxu0
        %v2894 = vpop.f32.mrf.mxu0
        %v2895 = vadd.f32 %v2367, %v2894
        %v2896 = vpop.f32.mrf.mxu0
        %2897 = vmatprep.mubr.bf16.mxu0 %v2130
        %2898 = vmatmul.mubr.bf16.gmra.mxu0 %v2129
        %v2899 = vpop.f32.mrf.mxu0
        %v2900 = vadd.f32 %v2367, %v2899
        %v2901 = vpop.f32.mrf.mxu0
        %v2902 = vpop.f32.mrf.mxu0
        %v2903 = vadd.f32 %v2367, %v2902
        %v2904 = vpop.f32.mrf.mxu0
        %2905 = vmatprep.mubr.bf16.mxu0 %v2137
        %2906 = vmatmul.mubr.bf16.gmra.mxu0 %v2136
        %v2907 = vpop.f32.mrf.mxu0
        %v2908 = vadd.f32 %v2367, %v2907
        %v2909 = vpop.f32.mrf.mxu0
        %v2910 = vpop.f32.mrf.mxu0
        %v2911 = vadd.f32 %v2367, %v2910
        %v2912 = vpop.f32.mrf.mxu0
        %2913 = vmatprep.mubr.bf16.mxu0 %v2144
        %2914 = vmatmul.mubr.bf16.gmra.mxu0 %v2143
        %v2915 = vpop.f32.mrf.mxu0
        %v2916 = vadd.f32 %v2367, %v2915
        %v2917 = vpop.f32.mrf.mxu0
        %v2918 = vpop.f32.mrf.mxu0
        %v2919 = vadd.f32 %v2367, %v2918
        %v2920 = vpop.f32.mrf.mxu0
        %2921 = vmatprep.mubr.bf16.mxu0 %v2151
        %2922 = vmatmul.mubr.bf16.gmra.mxu0 %v2150
        %v2923 = vpop.f32.mrf.mxu0
        %v2924 = vadd.f32 %v2367, %v2923
        %v2925 = vpop.f32.mrf.mxu0
        %v2926 = vpop.f32.mrf.mxu0
        %v2927 = vadd.f32 %v2367, %v2926
        %v2928 = vpop.f32.mrf.mxu0
        %2929 = vmatprep.mubr.bf16.mxu0 %v2158
        %2930 = vmatmul.mubr.bf16.gmra.mxu0 %v2157
        %v2931 = vpop.f32.mrf.mxu0
        %v2932 = vadd.f32 %v2367, %v2931
        %v2933 = vpop.f32.mrf.mxu0
        %v2934 = vpop.f32.mrf.mxu0
        %v2935 = vadd.f32 %v2367, %v2934
        %v2936 = vpop.f32.mrf.mxu0
        %2937 = vmatprep.mubr.bf16.mxu0 %v2165
        %2938 = vmatmul.mubr.bf16.gmra.mxu0 %v2164
        %v2939 = vpop.f32.mrf.mxu0
        %v2940 = vadd.f32 %v2367, %v2939
        %v2941 = vpop.f32.mrf.mxu0
        %v2942 = vpop.f32.mrf.mxu0
        %v2943 = vadd.f32 %v2367, %v2942
        %v2944 = vpop.f32.mrf.mxu0
        %2945 = vmatprep.mubr.bf16.mxu0 %v2172
        %2946 = vmatmul.mubr.bf16.gmra.mxu0 %v2171
        %v2947 = vpop.f32.mrf.mxu0
        %v2948 = vadd.f32 %v2367, %v2947
        %v2949 = vpop.f32.mrf.mxu0
        %v2950 = vpop.f32.mrf.mxu0
        %v2951 = vadd.f32 %v2367, %v2950
        %v2952 = vpop.f32.mrf.mxu0
        %2953 = vmatprep.mubr.bf16.mxu0 %v2179
        %2954 = vmatmul.mubr.bf16.gmra.mxu0 %v2178
        %v2955 = vpop.f32.mrf.mxu0
        %v2956 = vadd.f32 %v2367, %v2955
        %v2957 = vpop.f32.mrf.mxu0
        %v2958 = vpop.f32.mrf.mxu0
        %v2959 = vadd.f32 %v2367, %v2958
        %v2960 = vpop.f32.mrf.mxu0
        %2961 = vmatprep.mubr.bf16.mxu0 %v2186
        %2962 = vmatmul.mubr.bf16.gmra.mxu0 %v2185
        %v2963 = vpop.f32.mrf.mxu0
        %v2964 = vadd.f32 %v2367, %v2963
        %v2965 = vpop.f32.mrf.mxu0
        %v2966 = vpop.f32.mrf.mxu0
        %v2967 = vadd.f32 %v2367, %v2966
        %v2968 = vpop.f32.mrf.mxu0
        %2969 = vmatprep.mubr.bf16.mxu0 %v2193
        %2970 = vmatmul.mubr.bf16.gmra.mxu0 %v2192
        %v2971 = vpop.f32.mrf.mxu0
        %v2972 = vadd.f32 %v2367, %v2971
        %v2973 = vpop.f32.mrf.mxu0
        %v2974 = vpop.f32.mrf.mxu0
        %v2975 = vadd.f32 %v2367, %v2974
        %v2976 = vpop.f32.mrf.mxu0
        %2977 = vmatprep.mubr.bf16.mxu0 %v2200
        %2978 = vmatmul.mubr.bf16.gmra.mxu0 %v2199
        %v2979 = vpop.f32.mrf.mxu0
        %v2980 = vadd.f32 %v2367, %v2979
        %v2981 = vpop.f32.mrf.mxu0
        %v2982 = vpop.f32.mrf.mxu0
        %v2983 = vadd.f32 %v2367, %v2982
        %v2984 = vpop.f32.mrf.mxu0
        %2985 = vmatprep.mubr.bf16.mxu0 %v2207
        %2986 = vmatmul.mubr.bf16.gmra.mxu0 %v2206
        %v2987 = vpop.f32.mrf.mxu0
        %v2988 = vadd.f32 %v2367, %v2987
        %v2989 = vpop.f32.mrf.mxu0
        %v2990 = vpop.f32.mrf.mxu0
        %v2991 = vadd.f32 %v2367, %v2990
        %v2992 = vpop.f32.mrf.mxu0
        %2993 = vmatprep.mubr.bf16.mxu0 %v2214
        %2994 = vmatmul.mubr.bf16.gmra.mxu0 %v2213
        %v2995 = vpop.f32.mrf.mxu0
        %v2996 = vadd.f32 %v2367, %v2995
        %v2997 = vpop.f32.mrf.mxu0
        %v2998 = vpop.f32.mrf.mxu0
        %v2999 = vadd.f32 %v2367, %v2998
        %v3000 = vpop.f32.mrf.mxu0
        %3001 = vdwg.mxu0
        %3002 = vmatprep.subr.bf16.mxu0 0
        %3003 = vmatpush1.bf16.msra.mxu0 %v2680
        %3004 = vmatprep.subr.bf16.mxu0 0
        %3005 = vmatpush1.bf16.msra.mxu0 %v2679
        %3006 = vmatprep.subr.bf16.mxu0 0
        %3007 = vmatpush1.bf16.msra.mxu0 %v2678
        %3008 = vmatprep.subr.bf16.mxu0 0
        %3009 = vmatpush1.bf16.msra.mxu0 %v2677
        %3010 = vmatprep.subr.bf16.mxu0 0
        %3011 = vmatpush1.bf16.msra.mxu0 %v2676
        %3012 = vmatprep.subr.bf16.mxu0 0
        %3013 = vmatpush1.bf16.msra.mxu0 %v2675
        %3014 = vmatprep.subr.bf16.mxu0 0
        %3015 = vmatpush1.bf16.msra.mxu0 %v2674
        %3016 = vmatprep.subr.bf16.mxu0 0
        %3017 = vmatpush1.bf16.msra.mxu0 %v2673
        %3018 = vmatprep.subr.bf16.mxu0 0
        %3019 = vmatpush2.bf16.msra.mxu0 %v2688
        %3020 = vmatprep.subr.bf16.mxu0 0
        %3021 = vmatpush2.bf16.msra.mxu0 %v2687
        %3022 = vmatprep.subr.bf16.mxu0 0
        %3023 = vmatpush2.bf16.msra.mxu0 %v2686
        %3024 = vmatprep.subr.bf16.mxu0 0
        %3025 = vmatpush2.bf16.msra.mxu0 %v2685
        %3026 = vmatprep.subr.bf16.mxu0 0
        %3027 = vmatpush2.bf16.msra.mxu0 %v2684
        %3028 = vmatprep.subr.bf16.mxu0 0
        %3029 = vmatpush2.bf16.msra.mxu0 %v2683
        %3030 = vmatprep.subr.bf16.mxu0 0
        %3031 = vmatpush2.bf16.msra.mxu0 %v2682
        %3032 = vmatprep.subr.bf16.mxu0 0
        %3033 = vmatpush2.bf16.msra.mxu0 %v2681
        %3034 = vmatprep.mubr.bf16.mxu0 %v2074
        %3035 = vmatmul.mubr.bf16.gmra.mxu0 %v2073
        %v3036 = vpop.f32.mrf.mxu0
        %v3037 = vadd.f32 %v2836, %v3036
        %v3038 = vpop.f32.mrf.mxu0
        %v3039 = vpop.f32.mrf.mxu0
        %v3040 = vadd.f32 %v2839, %v3039
        %v3041 = vpop.f32.mrf.mxu0
        %3042 = vmatprep.mubr.bf16.mxu0 %v2082
        %3043 = vmatmul.mubr.bf16.gmra.mxu0 %v2074
        %v3044 = vpop.f32.mrf.mxu0
        %v3045 = vadd.f32 %v2844, %v3044
        %v3046 = vpop.f32.mrf.mxu0
        %v3047 = vpop.f32.mrf.mxu0
        %v3048 = vadd.f32 %v2847, %v3047
        %v3049 = vpop.f32.mrf.mxu0
        %3050 = vmatprep.mubr.bf16.mxu0 %v2089
        %3051 = vmatmul.mubr.bf16.gmra.mxu0 %v2082
        %v3052 = vpop.f32.mrf.mxu0
        %v3053 = vadd.f32 %v2852, %v3052
        %v3054 = vpop.f32.mrf.mxu0
        %v3055 = vpop.f32.mrf.mxu0
        %v3056 = vadd.f32 %v2855, %v3055
        %v3057 = vpop.f32.mrf.mxu0
        %3058 = vmatprep.mubr.bf16.mxu0 %v2096
        %3059 = vmatmul.mubr.bf16.gmra.mxu0 %v2089
        %v3060 = vpop.f32.mrf.mxu0
        %v3061 = vadd.f32 %v2860, %v3060
        %v3062 = vpop.f32.mrf.mxu0
        %v3063 = vpop.f32.mrf.mxu0
        %v3064 = vadd.f32 %v2863, %v3063
        %v3065 = vpop.f32.mrf.mxu0
        %3066 = vmatprep.mubr.bf16.mxu0 %v2103
        %3067 = vmatmul.mubr.bf16.gmra.mxu0 %v2096
        %v3068 = vpop.f32.mrf.mxu0
        %v3069 = vadd.f32 %v2868, %v3068
        %v3070 = vpop.f32.mrf.mxu0
        %v3071 = vpop.f32.mrf.mxu0
        %v3072 = vadd.f32 %v2871, %v3071
        %v3073 = vpop.f32.mrf.mxu0
        %3074 = vmatprep.mubr.bf16.mxu0 %v2110
        %3075 = vmatmul.mubr.bf16.gmra.mxu0 %v2103
        %v3076 = vpop.f32.mrf.mxu0
        %v3077 = vadd.f32 %v2876, %v3076
        %v3078 = vpop.f32.mrf.mxu0
        %v3079 = vpop.f32.mrf.mxu0
        %v3080 = vadd.f32 %v2879, %v3079
        %v3081 = vpop.f32.mrf.mxu0
        %3082 = vmatprep.mubr.bf16.mxu0 %v2117
        %3083 = vmatmul.mubr.bf16.gmra.mxu0 %v2110
        %v3084 = vpop.f32.mrf.mxu0
        %v3085 = vadd.f32 %v2884, %v3084
        %v3086 = vpop.f32.mrf.mxu0
        %v3087 = vpop.f32.mrf.mxu0
        %v3088 = vadd.f32 %v2887, %v3087
        %v3089 = vpop.f32.mrf.mxu0
        %3090 = vmatprep.mubr.bf16.mxu0 %v2124
        %3091 = vmatmul.mubr.bf16.gmra.mxu0 %v2117
        %v3092 = vpop.f32.mrf.mxu0
        %v3093 = vadd.f32 %v2892, %v3092
        %v3094 = vpop.f32.mrf.mxu0
        %v3095 = vpop.f32.mrf.mxu0
        %v3096 = vadd.f32 %v2895, %v3095
        %v3097 = vpop.f32.mrf.mxu0
        %3098 = vmatprep.mubr.bf16.mxu0 %v2131
        %3099 = vmatmul.mubr.bf16.gmra.mxu0 %v2124
        %v3100 = vpop.f32.mrf.mxu0
        %v3101 = vadd.f32 %v2900, %v3100
        %v3102 = vpop.f32.mrf.mxu0
        %v3103 = vpop.f32.mrf.mxu0
        %v3104 = vadd.f32 %v2903, %v3103
        %v3105 = vpop.f32.mrf.mxu0
        %3106 = vmatprep.mubr.bf16.mxu0 %v2138
        %3107 = vmatmul.mubr.bf16.gmra.mxu0 %v2131
        %v3108 = vpop.f32.mrf.mxu0
        %v3109 = vadd.f32 %v2908, %v3108
        %v3110 = vpop.f32.mrf.mxu0
        %v3111 = vpop.f32.mrf.mxu0
        %v3112 = vadd.f32 %v2911, %v3111
        %v3113 = vpop.f32.mrf.mxu0
        %3114 = vmatprep.mubr.bf16.mxu0 %v2145
        %3115 = vmatmul.mubr.bf16.gmra.mxu0 %v2138
        %v3116 = vpop.f32.mrf.mxu0
        %v3117 = vadd.f32 %v2916, %v3116
        %v3118 = vpop.f32.mrf.mxu0
        %v3119 = vpop.f32.mrf.mxu0
        %v3120 = vadd.f32 %v2919, %v3119
        %v3121 = vpop.f32.mrf.mxu0
        %3122 = vmatprep.mubr.bf16.mxu0 %v2152
        %3123 = vmatmul.mubr.bf16.gmra.mxu0 %v2145
        %v3124 = vpop.f32.mrf.mxu0
        %v3125 = vadd.f32 %v2924, %v3124
        %v3126 = vpop.f32.mrf.mxu0
        %v3127 = vpop.f32.mrf.mxu0
        %v3128 = vadd.f32 %v2927, %v3127
        %v3129 = vpop.f32.mrf.mxu0
        %3130 = vmatprep.mubr.bf16.mxu0 %v2159
        %3131 = vmatmul.mubr.bf16.gmra.mxu0 %v2152
        %v3132 = vpop.f32.mrf.mxu0
        %v3133 = vadd.f32 %v2932, %v3132
        %v3134 = vpop.f32.mrf.mxu0
        %v3135 = vpop.f32.mrf.mxu0
        %v3136 = vadd.f32 %v2935, %v3135
        %v3137 = vpop.f32.mrf.mxu0
        %3138 = vmatprep.mubr.bf16.mxu0 %v2166
        %3139 = vmatmul.mubr.bf16.gmra.mxu0 %v2159
        %v3140 = vpop.f32.mrf.mxu0
        %v3141 = vadd.f32 %v2940, %v3140
        %v3142 = vpop.f32.mrf.mxu0
        %v3143 = vpop.f32.mrf.mxu0
        %v3144 = vadd.f32 %v2943, %v3143
        %v3145 = vpop.f32.mrf.mxu0
        %3146 = vmatprep.mubr.bf16.mxu0 %v2173
        %3147 = vmatmul.mubr.bf16.gmra.mxu0 %v2166
        %v3148 = vpop.f32.mrf.mxu0
        %v3149 = vadd.f32 %v2948, %v3148
        %v3150 = vpop.f32.mrf.mxu0
        %v3151 = vpop.f32.mrf.mxu0
        %v3152 = vadd.f32 %v2951, %v3151
        %v3153 = vpop.f32.mrf.mxu0
        %3154 = vmatprep.mubr.bf16.mxu0 %v2180
        %3155 = vmatmul.mubr.bf16.gmra.mxu0 %v2173
        %v3156 = vpop.f32.mrf.mxu0
        %v3157 = vadd.f32 %v2956, %v3156
        %v3158 = vpop.f32.mrf.mxu0
        %v3159 = vpop.f32.mrf.mxu0
        %v3160 = vadd.f32 %v2959, %v3159
        %v3161 = vpop.f32.mrf.mxu0
        %3162 = vmatprep.mubr.bf16.mxu0 %v2187
        %3163 = vmatmul.mubr.bf16.gmra.mxu0 %v2180
        %v3164 = vpop.f32.mrf.mxu0
        %v3165 = vadd.f32 %v2964, %v3164
        %v3166 = vpop.f32.mrf.mxu0
        %v3167 = vpop.f32.mrf.mxu0
        %v3168 = vadd.f32 %v2967, %v3167
        %v3169 = vpop.f32.mrf.mxu0
        %3170 = vmatprep.mubr.bf16.mxu0 %v2194
        %3171 = vmatmul.mubr.bf16.gmra.mxu0 %v2187
        %v3172 = vpop.f32.mrf.mxu0
        %v3173 = vadd.f32 %v2972, %v3172
        %v3174 = vpop.f32.mrf.mxu0
        %v3175 = vpop.f32.mrf.mxu0
        %v3176 = vadd.f32 %v2975, %v3175
        %v3177 = vpop.f32.mrf.mxu0
        %3178 = vmatprep.mubr.bf16.mxu0 %v2201
        %3179 = vmatmul.mubr.bf16.gmra.mxu0 %v2194
        %v3180 = vpop.f32.mrf.mxu0
        %v3181 = vadd.f32 %v2980, %v3180
        %v3182 = vpop.f32.mrf.mxu0
        %v3183 = vpop.f32.mrf.mxu0
        %v3184 = vadd.f32 %v2983, %v3183
        %v3185 = vpop.f32.mrf.mxu0
        %3186 = vmatprep.mubr.bf16.mxu0 %v2208
        %3187 = vmatmul.mubr.bf16.gmra.mxu0 %v2201
        %v3188 = vpop.f32.mrf.mxu0
        %v3189 = vadd.f32 %v2988, %v3188
        %v3190 = vpop.f32.mrf.mxu0
        %v3191 = vpop.f32.mrf.mxu0
        %v3192 = vadd.f32 %v2991, %v3191
        %v3193 = vpop.f32.mrf.mxu0
        %3194 = vmatprep.mubr.bf16.mxu0 %v2073
        %3195 = vmatmul.mubr.bf16.gmra.mxu0 %v2208
        %v3196 = vpop.f32.mrf.mxu0
        %v3197 = vadd.f32 %v2996, %v3196
        %v3198 = vpop.f32.mrf.mxu0
        %v3199 = vpop.f32.mrf.mxu0
        %v3200 = vadd.f32 %v2999, %v3199
        %v3201 = vpop.f32.mrf.mxu0
        %3202 = vdwg.mxu0
        %3203 = vmatprep.subr.bf16.mxu0 0
        %3204 = vmatpush1.bf16.msra.mxu0 %v2696
        %3205 = vmatprep.subr.bf16.mxu0 0
        %3206 = vmatpush1.bf16.msra.mxu0 %v2695
        %3207 = vmatprep.subr.bf16.mxu0 0
        %3208 = vmatpush1.bf16.msra.mxu0 %v2694
        %3209 = vmatprep.subr.bf16.mxu0 0
        %3210 = vmatpush1.bf16.msra.mxu0 %v2693
        %3211 = vmatprep.subr.bf16.mxu0 0
        %3212 = vmatpush1.bf16.msra.mxu0 %v2692
        %3213 = vmatprep.subr.bf16.mxu0 0
        %3214 = vmatpush1.bf16.msra.mxu0 %v2691
        %3215 = vmatprep.subr.bf16.mxu0 0
        %3216 = vmatpush1.bf16.msra.mxu0 %v2690
        %3217 = vmatprep.subr.bf16.mxu0 0
        %3218 = vmatpush1.bf16.msra.mxu0 %v2689
        %3219 = vmatprep.subr.bf16.mxu0 0
        %3220 = vmatpush2.bf16.msra.mxu0 %v2704
        %3221 = vmatprep.subr.bf16.mxu0 0
        %3222 = vmatpush2.bf16.msra.mxu0 %v2703
        %3223 = vmatprep.subr.bf16.mxu0 0
        %3224 = vmatpush2.bf16.msra.mxu0 %v2702
        %3225 = vmatprep.subr.bf16.mxu0 0
        %3226 = vmatpush2.bf16.msra.mxu0 %v2701
        %3227 = vmatprep.subr.bf16.mxu0 0
        %3228 = vmatpush2.bf16.msra.mxu0 %v2700
        %3229 = vmatprep.subr.bf16.mxu0 0
        %3230 = vmatpush2.bf16.msra.mxu0 %v2699
        %3231 = vmatprep.subr.bf16.mxu0 0
        %3232 = vmatpush2.bf16.msra.mxu0 %v2698
        %3233 = vmatprep.subr.bf16.mxu0 0
        %3234 = vmatpush2.bf16.msra.mxu0 %v2697
        %3235 = vmatprep.mubr.bf16.mxu0 %v2076
        %3236 = vmatmul.mubr.bf16.gmra.mxu0 %v2075
        %v3237 = vpop.f32.mrf.mxu0
        %v3238 = vadd.f32 %v3037, %v3237
        %v3239 = vpop.f32.mrf.mxu0
        %v3240 = vpop.f32.mrf.mxu0
        %v3241 = vadd.f32 %v3040, %v3240
        %v3242 = vpop.f32.mrf.mxu0
        %3243 = vmatprep.mubr.bf16.mxu0 %v2077
        %3244 = vmatmul.mubr.bf16.gmra.mxu0 %v2083
        %v3245 = vpop.f32.mrf.mxu0
        %v3246 = vadd.f32 %v3045, %v3245
        %v3247 = vpop.f32.mrf.mxu0
        %v3248 = vpop.f32.mrf.mxu0
        %v3249 = vadd.f32 %v3048, %v3248
        %v3250 = vpop.f32.mrf.mxu0
        %3251 = vmatprep.mubr.bf16.mxu0 %v2084
        %3252 = vmatmul.mubr.bf16.gmra.mxu0 %v2090
        %v3253 = vpop.f32.mrf.mxu0
        %v3254 = vadd.f32 %v3053, %v3253
        %v3255 = vpop.f32.mrf.mxu0
        %v3256 = vpop.f32.mrf.mxu0
        %v3257 = vadd.f32 %v3056, %v3256
        %v3258 = vpop.f32.mrf.mxu0
        %3259 = vmatprep.mubr.bf16.mxu0 %v2091
        %3260 = vmatmul.mubr.bf16.gmra.mxu0 %v2097
        %v3261 = vpop.f32.mrf.mxu0
        %v3262 = vadd.f32 %v3061, %v3261
        %v3263 = vpop.f32.mrf.mxu0
        %v3264 = vpop.f32.mrf.mxu0
        %v3265 = vadd.f32 %v3064, %v3264
        %v3266 = vpop.f32.mrf.mxu0
        %3267 = vmatprep.mubr.bf16.mxu0 %v2098
        %3268 = vmatmul.mubr.bf16.gmra.mxu0 %v2104
        %v3269 = vpop.f32.mrf.mxu0
        %v3270 = vadd.f32 %v3069, %v3269
        %v3271 = vpop.f32.mrf.mxu0
        %v3272 = vpop.f32.mrf.mxu0
        %v3273 = vadd.f32 %v3072, %v3272
        %v3274 = vpop.f32.mrf.mxu0
        %3275 = vmatprep.mubr.bf16.mxu0 %v2105
        %3276 = vmatmul.mubr.bf16.gmra.mxu0 %v2111
        %v3277 = vpop.f32.mrf.mxu0
        %v3278 = vadd.f32 %v3077, %v3277
        %v3279 = vpop.f32.mrf.mxu0
        %v3280 = vpop.f32.mrf.mxu0
        %v3281 = vadd.f32 %v3080, %v3280
        %v3282 = vpop.f32.mrf.mxu0
        %3283 = vmatprep.mubr.bf16.mxu0 %v2112
        %3284 = vmatmul.mubr.bf16.gmra.mxu0 %v2118
        %v3285 = vpop.f32.mrf.mxu0
        %v3286 = vadd.f32 %v3085, %v3285
        %v3287 = vpop.f32.mrf.mxu0
        %v3288 = vpop.f32.mrf.mxu0
        %v3289 = vadd.f32 %v3088, %v3288
        %v3290 = vpop.f32.mrf.mxu0
        %3291 = vmatprep.mubr.bf16.mxu0 %v2119
        %3292 = vmatmul.mubr.bf16.gmra.mxu0 %v2125
        %v3293 = vpop.f32.mrf.mxu0
        %v3294 = vadd.f32 %v3093, %v3293
        %v3295 = vpop.f32.mrf.mxu0
        %v3296 = vpop.f32.mrf.mxu0
        %v3297 = vadd.f32 %v3096, %v3296
        %v3298 = vpop.f32.mrf.mxu0
        %3299 = vmatprep.mubr.bf16.mxu0 %v2126
        %3300 = vmatmul.mubr.bf16.gmra.mxu0 %v2132
        %v3301 = vpop.f32.mrf.mxu0
        %v3302 = vadd.f32 %v3101, %v3301
        %v3303 = vpop.f32.mrf.mxu0
        %v3304 = vpop.f32.mrf.mxu0
        %v3305 = vadd.f32 %v3104, %v3304
        %v3306 = vpop.f32.mrf.mxu0
        %3307 = vmatprep.mubr.bf16.mxu0 %v2133
        %3308 = vmatmul.mubr.bf16.gmra.mxu0 %v2139
        %v3309 = vpop.f32.mrf.mxu0
        %v3310 = vadd.f32 %v3109, %v3309
        %v3311 = vpop.f32.mrf.mxu0
        %v3312 = vpop.f32.mrf.mxu0
        %v3313 = vadd.f32 %v3112, %v3312
        %v3314 = vpop.f32.mrf.mxu0
        %3315 = vmatprep.mubr.bf16.mxu0 %v2140
        %3316 = vmatmul.mubr.bf16.gmra.mxu0 %v2146
        %v3317 = vpop.f32.mrf.mxu0
        %v3318 = vadd.f32 %v3117, %v3317
        %v3319 = vpop.f32.mrf.mxu0
        %v3320 = vpop.f32.mrf.mxu0
        %v3321 = vadd.f32 %v3120, %v3320
        %v3322 = vpop.f32.mrf.mxu0
        %3323 = vmatprep.mubr.bf16.mxu0 %v2147
        %3324 = vmatmul.mubr.bf16.gmra.mxu0 %v2153
        %v3325 = vpop.f32.mrf.mxu0
        %v3326 = vadd.f32 %v3125, %v3325
        %v3327 = vpop.f32.mrf.mxu0
        %v3328 = vpop.f32.mrf.mxu0
        %v3329 = vadd.f32 %v3128, %v3328
        %v3330 = vpop.f32.mrf.mxu0
        %3331 = vmatprep.mubr.bf16.mxu0 %v2154
        %3332 = vmatmul.mubr.bf16.gmra.mxu0 %v2160
        %v3333 = vpop.f32.mrf.mxu0
        %v3334 = vadd.f32 %v3133, %v3333
        %v3335 = vpop.f32.mrf.mxu0
        %v3336 = vpop.f32.mrf.mxu0
        %v3337 = vadd.f32 %v3136, %v3336
        %v3338 = vpop.f32.mrf.mxu0
        %3339 = vmatprep.mubr.bf16.mxu0 %v2161
        %3340 = vmatmul.mubr.bf16.gmra.mxu0 %v2167
        %v3341 = vpop.f32.mrf.mxu0
        %v3342 = vadd.f32 %v3141, %v3341
        %v3343 = vpop.f32.mrf.mxu0
        %v3344 = vpop.f32.mrf.mxu0
        %v3345 = vadd.f32 %v3144, %v3344
        %v3346 = vpop.f32.mrf.mxu0
        %3347 = vmatprep.mubr.bf16.mxu0 %v2168
        %3348 = vmatmul.mubr.bf16.gmra.mxu0 %v2174
        %v3349 = vpop.f32.mrf.mxu0
        %v3350 = vadd.f32 %v3149, %v3349
        %v3351 = vpop.f32.mrf.mxu0
        %v3352 = vpop.f32.mrf.mxu0
        %v3353 = vadd.f32 %v3152, %v3352
        %v3354 = vpop.f32.mrf.mxu0
        %3355 = vmatprep.mubr.bf16.mxu0 %v2175
        %3356 = vmatmul.mubr.bf16.gmra.mxu0 %v2181
        %v3357 = vpop.f32.mrf.mxu0
        %v3358 = vadd.f32 %v3157, %v3357
        %v3359 = vpop.f32.mrf.mxu0
        %v3360 = vpop.f32.mrf.mxu0
        %v3361 = vadd.f32 %v3160, %v3360
        %v3362 = vpop.f32.mrf.mxu0
        %3363 = vmatprep.mubr.bf16.mxu0 %v2182
        %3364 = vmatmul.mubr.bf16.gmra.mxu0 %v2188
        %v3365 = vpop.f32.mrf.mxu0
        %v3366 = vadd.f32 %v3165, %v3365
        %v3367 = vpop.f32.mrf.mxu0
        %v3368 = vpop.f32.mrf.mxu0
        %v3369 = vadd.f32 %v3168, %v3368
        %v3370 = vpop.f32.mrf.mxu0
        %3371 = vmatprep.mubr.bf16.mxu0 %v2189
        %3372 = vmatmul.mubr.bf16.gmra.mxu0 %v2195
        %v3373 = vpop.f32.mrf.mxu0
        %v3374 = vadd.f32 %v3173, %v3373
        %v3375 = vpop.f32.mrf.mxu0
        %v3376 = vpop.f32.mrf.mxu0
        %v3377 = vadd.f32 %v3176, %v3376
        %v3378 = vpop.f32.mrf.mxu0
        %3379 = vmatprep.mubr.bf16.mxu0 %v2196
        %3380 = vmatmul.mubr.bf16.gmra.mxu0 %v2202
        %v3381 = vpop.f32.mrf.mxu0
        %v3382 = vadd.f32 %v3181, %v3381
        %v3383 = vpop.f32.mrf.mxu0
        %v3384 = vpop.f32.mrf.mxu0
        %v3385 = vadd.f32 %v3184, %v3384
        %v3386 = vpop.f32.mrf.mxu0
        %3387 = vmatprep.mubr.bf16.mxu0 %v2203
        %3388 = vmatmul.mubr.bf16.gmra.mxu0 %v2209
        %v3389 = vpop.f32.mrf.mxu0
        %v3390 = vadd.f32 %v3189, %v3389
        %v3391 = vpop.f32.mrf.mxu0
        %v3392 = vpop.f32.mrf.mxu0
        %v3393 = vadd.f32 %v3192, %v3392
        %v3394 = vpop.f32.mrf.mxu0
        %3395 = vmatprep.mubr.bf16.mxu0 %v2210
        %3396 = vmatmul.mubr.bf16.gmra.mxu0 %v2215
        %v3397 = vpop.f32.mrf.mxu0
        %v3398 = vadd.f32 %v3197, %v3397
        %v3399 = vpop.f32.mrf.mxu0
        %v3400 = vpop.f32.mrf.mxu0
        %v3401 = vadd.f32 %v3200, %v3400
        %v3402 = vpop.f32.mrf.mxu0
        %3403 = vdwg.mxu0
        %3404 = vmatprep.subr.bf16.mxu0 0
        %3405 = vmatpush1.bf16.msra.mxu0 %v2712
        %3406 = vmatprep.subr.bf16.mxu0 0
        %3407 = vmatpush1.bf16.msra.mxu0 %v2711
        %3408 = vmatprep.subr.bf16.mxu0 0
        %3409 = vmatpush1.bf16.msra.mxu0 %v2710
        %3410 = vmatprep.subr.bf16.mxu0 0
        %3411 = vmatpush1.bf16.msra.mxu0 %v2709
        %3412 = vmatprep.subr.bf16.mxu0 0
        %3413 = vmatpush1.bf16.msra.mxu0 %v2708
        %3414 = vmatprep.subr.bf16.mxu0 0
        %3415 = vmatpush1.bf16.msra.mxu0 %v2707
        %3416 = vmatprep.subr.bf16.mxu0 0
        %3417 = vmatpush1.bf16.msra.mxu0 %v2706
        %3418 = vmatprep.subr.bf16.mxu0 0
        %3419 = vmatpush1.bf16.msra.mxu0 %v2705
        %3420 = vmatprep.subr.bf16.mxu0 0
        %3421 = vmatpush2.bf16.msra.mxu0 %v2720
        %3422 = vmatprep.subr.bf16.mxu0 0
        %3423 = vmatpush2.bf16.msra.mxu0 %v2719
        %3424 = vmatprep.subr.bf16.mxu0 0
        %3425 = vmatpush2.bf16.msra.mxu0 %v2718
        %3426 = vmatprep.subr.bf16.mxu0 0
        %3427 = vmatpush2.bf16.msra.mxu0 %v2717
        %3428 = vmatprep.subr.bf16.mxu0 0
        %3429 = vmatpush2.bf16.msra.mxu0 %v2716
        %3430 = vmatprep.subr.bf16.mxu0 0
        %3431 = vmatpush2.bf16.msra.mxu0 %v2715
        %3432 = vmatprep.subr.bf16.mxu0 0
        %3433 = vmatpush2.bf16.msra.mxu0 %v2714
        %3434 = vmatprep.subr.bf16.mxu0 0
        %3435 = vmatpush2.bf16.msra.mxu0 %v2713
        %3436 = vmatprep.mubr.bf16.mxu0 %v2078
        %3437 = vmatmul.mubr.bf16.gmra.mxu0 %v2077
        %v3438 = vpop.f32.mrf.mxu0
        %v3439 = vadd.f32 %v3238, %v3438
        %v3440 = vpop.f32.mrf.mxu0
        %v3441 = vpop.f32.mrf.mxu0
        %v3442 = vadd.f32 %v3241, %v3441
        %v3443 = vpop.f32.mrf.mxu0
        %3444 = vmatprep.mubr.bf16.mxu0 %v2085
        %3445 = vmatmul.mubr.bf16.gmra.mxu0 %v2084
        %v3446 = vpop.f32.mrf.mxu0
        %v3447 = vadd.f32 %v3246, %v3446
        %v3448 = vpop.f32.mrf.mxu0
        %v3449 = vpop.f32.mrf.mxu0
        %v3450 = vadd.f32 %v3249, %v3449
        %v3451 = vpop.f32.mrf.mxu0
        %3452 = vmatprep.mubr.bf16.mxu0 %v2092
        %3453 = vmatmul.mubr.bf16.gmra.mxu0 %v2091
        %v3454 = vpop.f32.mrf.mxu0
        %v3455 = vadd.f32 %v3254, %v3454
        %v3456 = vpop.f32.mrf.mxu0
        %v3457 = vpop.f32.mrf.mxu0
        %v3458 = vadd.f32 %v3257, %v3457
        %v3459 = vpop.f32.mrf.mxu0
        %3460 = vmatprep.mubr.bf16.mxu0 %v2099
        %3461 = vmatmul.mubr.bf16.gmra.mxu0 %v2098
        %v3462 = vpop.f32.mrf.mxu0
        %v3463 = vadd.f32 %v3262, %v3462
        %v3464 = vpop.f32.mrf.mxu0
        %v3465 = vpop.f32.mrf.mxu0
        %v3466 = vadd.f32 %v3265, %v3465
        %v3467 = vpop.f32.mrf.mxu0
        %3468 = vmatprep.mubr.bf16.mxu0 %v2106
        %3469 = vmatmul.mubr.bf16.gmra.mxu0 %v2105
        %v3470 = vpop.f32.mrf.mxu0
        %v3471 = vadd.f32 %v3270, %v3470
        %v3472 = vpop.f32.mrf.mxu0
        %v3473 = vpop.f32.mrf.mxu0
        %v3474 = vadd.f32 %v3273, %v3473
        %v3475 = vpop.f32.mrf.mxu0
        %3476 = vmatprep.mubr.bf16.mxu0 %v2113
        %3477 = vmatmul.mubr.bf16.gmra.mxu0 %v2112
        %v3478 = vpop.f32.mrf.mxu0
        %v3479 = vadd.f32 %v3278, %v3478
        %v3480 = vpop.f32.mrf.mxu0
        %v3481 = vpop.f32.mrf.mxu0
        %v3482 = vadd.f32 %v3281, %v3481
        %v3483 = vpop.f32.mrf.mxu0
        %3484 = vmatprep.mubr.bf16.mxu0 %v2120
        %3485 = vmatmul.mubr.bf16.gmra.mxu0 %v2119
        %v3486 = vpop.f32.mrf.mxu0
        %v3487 = vadd.f32 %v3286, %v3486
        %v3488 = vpop.f32.mrf.mxu0
        %v3489 = vpop.f32.mrf.mxu0
        %v3490 = vadd.f32 %v3289, %v3489
        %v3491 = vpop.f32.mrf.mxu0
        %3492 = vmatprep.mubr.bf16.mxu0 %v2127
        %3493 = vmatmul.mubr.bf16.gmra.mxu0 %v2126
        %v3494 = vpop.f32.mrf.mxu0
        %v3495 = vadd.f32 %v3294, %v3494
        %v3496 = vpop.f32.mrf.mxu0
        %v3497 = vpop.f32.mrf.mxu0
        %v3498 = vadd.f32 %v3297, %v3497
        %v3499 = vpop.f32.mrf.mxu0
        %3500 = vmatprep.mubr.bf16.mxu0 %v2134
        %3501 = vmatmul.mubr.bf16.gmra.mxu0 %v2133
        %v3502 = vpop.f32.mrf.mxu0
        %v3503 = vadd.f32 %v3302, %v3502
        %v3504 = vpop.f32.mrf.mxu0
        %v3505 = vpop.f32.mrf.mxu0
        %v3506 = vadd.f32 %v3305, %v3505
        %v3507 = vpop.f32.mrf.mxu0
        %3508 = vmatprep.mubr.bf16.mxu0 %v2141
        %3509 = vmatmul.mubr.bf16.gmra.mxu0 %v2140
        %v3510 = vpop.f32.mrf.mxu0
        %v3511 = vadd.f32 %v3310, %v3510
        %v3512 = vpop.f32.mrf.mxu0
        %v3513 = vpop.f32.mrf.mxu0
        %v3514 = vadd.f32 %v3313, %v3513
        %v3515 = vpop.f32.mrf.mxu0
        %3516 = vmatprep.mubr.bf16.mxu0 %v2148
        %3517 = vmatmul.mubr.bf16.gmra.mxu0 %v2147
        %v3518 = vpop.f32.mrf.mxu0
        %v3519 = vadd.f32 %v3318, %v3518
        %v3520 = vpop.f32.mrf.mxu0
        %v3521 = vpop.f32.mrf.mxu0
        %v3522 = vadd.f32 %v3321, %v3521
        %v3523 = vpop.f32.mrf.mxu0
        %3524 = vmatprep.mubr.bf16.mxu0 %v2155
        %3525 = vmatmul.mubr.bf16.gmra.mxu0 %v2154
        %v3526 = vpop.f32.mrf.mxu0
        %v3527 = vadd.f32 %v3326, %v3526
        %v3528 = vpop.f32.mrf.mxu0
        %v3529 = vpop.f32.mrf.mxu0
        %v3530 = vadd.f32 %v3329, %v3529
        %v3531 = vpop.f32.mrf.mxu0
        %3532 = vmatprep.mubr.bf16.mxu0 %v2162
        %3533 = vmatmul.mubr.bf16.gmra.mxu0 %v2161
        %v3534 = vpop.f32.mrf.mxu0
        %v3535 = vadd.f32 %v3334, %v3534
        %v3536 = vpop.f32.mrf.mxu0
        %v3537 = vpop.f32.mrf.mxu0
        %v3538 = vadd.f32 %v3337, %v3537
        %v3539 = vpop.f32.mrf.mxu0
        %3540 = vmatprep.mubr.bf16.mxu0 %v2169
        %3541 = vmatmul.mubr.bf16.gmra.mxu0 %v2168
        %v3542 = vpop.f32.mrf.mxu0
        %v3543 = vadd.f32 %v3342, %v3542
        %v3544 = vpop.f32.mrf.mxu0
        %v3545 = vpop.f32.mrf.mxu0
        %v3546 = vadd.f32 %v3345, %v3545
        %v3547 = vpop.f32.mrf.mxu0
        %3548 = vmatprep.mubr.bf16.mxu0 %v2176
        %3549 = vmatmul.mubr.bf16.gmra.mxu0 %v2175
        %v3550 = vpop.f32.mrf.mxu0
        %v3551 = vadd.f32 %v3350, %v3550
        %v3552 = vpop.f32.mrf.mxu0
        %v3553 = vpop.f32.mrf.mxu0
        %v3554 = vadd.f32 %v3353, %v3553
        %v3555 = vpop.f32.mrf.mxu0
        %3556 = vmatprep.mubr.bf16.mxu0 %v2183
        %3557 = vmatmul.mubr.bf16.gmra.mxu0 %v2182
        %v3558 = vpop.f32.mrf.mxu0
        %v3559 = vadd.f32 %v3358, %v3558
        %v3560 = vpop.f32.mrf.mxu0
        %v3561 = vpop.f32.mrf.mxu0
        %v3562 = vadd.f32 %v3361, %v3561
        %v3563 = vpop.f32.mrf.mxu0
        %3564 = vmatprep.mubr.bf16.mxu0 %v2190
        %3565 = vmatmul.mubr.bf16.gmra.mxu0 %v2189
        %v3566 = vpop.f32.mrf.mxu0
        %v3567 = vadd.f32 %v3366, %v3566
        %v3568 = vpop.f32.mrf.mxu0
        %v3569 = vpop.f32.mrf.mxu0
        %v3570 = vadd.f32 %v3369, %v3569
        %v3571 = vpop.f32.mrf.mxu0
        %3572 = vmatprep.mubr.bf16.mxu0 %v2197
        %3573 = vmatmul.mubr.bf16.gmra.mxu0 %v2196
        %v3574 = vpop.f32.mrf.mxu0
        %v3575 = vadd.f32 %v3374, %v3574
        %v3576 = vpop.f32.mrf.mxu0
        %v3577 = vpop.f32.mrf.mxu0
        %v3578 = vadd.f32 %v3377, %v3577
        %v3579 = vpop.f32.mrf.mxu0
        %3580 = vmatprep.mubr.bf16.mxu0 %v2204
        %3581 = vmatmul.mubr.bf16.gmra.mxu0 %v2203
        %v3582 = vpop.f32.mrf.mxu0
        %v3583 = vadd.f32 %v3382, %v3582
        %v3584 = vpop.f32.mrf.mxu0
        %v3585 = vpop.f32.mrf.mxu0
        %v3586 = vadd.f32 %v3385, %v3585
        %v3587 = vpop.f32.mrf.mxu0
        %3588 = vmatprep.mubr.bf16.mxu0 %v2211
        %3589 = vmatmul.mubr.bf16.gmra.mxu0 %v2210
        %v3590 = vpop.f32.mrf.mxu0
        %v3591 = vadd.f32 %v3390, %v3590
        %v3592 = vpop.f32.mrf.mxu0
        %v3593 = vpop.f32.mrf.mxu0
        %v3594 = vadd.f32 %v3393, %v3593
        %v3595 = vpop.f32.mrf.mxu0
        %3596 = vmatprep.mubr.bf16.mxu0 %v2216
        %3597 = vmatmul.mubr.bf16.gmra.mxu0 %v2076
        %v3598 = vpop.f32.mrf.mxu0
        %v3599 = vadd.f32 %v3398, %v3598
        %v3600 = vpop.f32.mrf.mxu0
        %v3601 = vpop.f32.mrf.mxu0
        %v3602 = vadd.f32 %v3401, %v3601
        %v3603 = vpop.f32.mrf.mxu0
        %3604 = vdwg.mxu0
        %3605 = vmatprep.subr.bf16.mxu0 0
        %3606 = vmatpush1.bf16.msra.mxu0 %v2728
        %3607 = vmatprep.subr.bf16.mxu0 0
        %3608 = vmatpush1.bf16.msra.mxu0 %v2727
        %3609 = vmatprep.subr.bf16.mxu0 0
        %3610 = vmatpush1.bf16.msra.mxu0 %v2726
        %3611 = vmatprep.subr.bf16.mxu0 0
        %3612 = vmatpush1.bf16.msra.mxu0 %v2725
        %3613 = vmatprep.subr.bf16.mxu0 0
        %3614 = vmatpush1.bf16.msra.mxu0 %v2724
        %3615 = vmatprep.subr.bf16.mxu0 0
        %3616 = vmatpush1.bf16.msra.mxu0 %v2723
        %3617 = vmatprep.subr.bf16.mxu0 0
        %3618 = vmatpush1.bf16.msra.mxu0 %v2722
        %3619 = vmatprep.subr.bf16.mxu0 0
        %3620 = vmatpush1.bf16.msra.mxu0 %v2721
        %3621 = vmatprep.subr.bf16.mxu0 0
        %3622 = vmatpush2.bf16.msra.mxu0 0
        %3623 = vmatprep.subr.bf16.mxu0 0
        %3624 = vmatpush2.bf16.msra.mxu0 0
        %3625 = vmatprep.subr.bf16.mxu0 0
        %3626 = vmatpush2.bf16.msra.mxu0 0
        %3627 = vmatprep.subr.bf16.mxu0 0
        %3628 = vmatpush2.bf16.msra.mxu0 0
        %3629 = vmatprep.subr.bf16.mxu0 0
        %3630 = vmatpush2.bf16.msra.mxu0 0
        %3631 = vmatprep.subr.bf16.mxu0 0
        %3632 = vmatpush2.bf16.msra.mxu0 0
        %3633 = vmatprep.subr.bf16.mxu0 0
        %3634 = vmatpush2.bf16.msra.mxu0 0
        %3635 = vmatprep.subr.bf16.mxu0 0
        %3636 = vmatpush2.bf16.msra.mxu0 0
        %3637 = vmatprep.mubr.bf16.mxu0 0
        %3638 = vmatmul.mubr.bf16.gmra.mxu0 %v2079
        %v3639 = vpop.f32.mrf.mxu0
        %v3640 = vadd.f32 %v3439, %v3639
        %v3641 = vpop.f32.mrf.mxu0
        %v3642 = vpop.f32.mrf.mxu0
        %v3643 = vadd.f32 %v3442, %v3642
        %v3644 = vpop.f32.mrf.mxu0
        %3645 = vmatprep.mubr.bf16.mxu0 0
        %3646 = vmatmul.mubr.bf16.gmra.mxu0 %v2086
        %v3647 = vpop.f32.mrf.mxu0
        %v3648 = vadd.f32 %v3447, %v3647
        %v3649 = vpop.f32.mrf.mxu0
        %v3650 = vpop.f32.mrf.mxu0
        %v3651 = vadd.f32 %v3450, %v3650
        %v3652 = vpop.f32.mrf.mxu0
        %3653 = vmatprep.mubr.bf16.mxu0 0
        %3654 = vmatmul.mubr.bf16.gmra.mxu0 %v2093
        %v3655 = vpop.f32.mrf.mxu0
        %v3656 = vadd.f32 %v3455, %v3655
        %v3657 = vpop.f32.mrf.mxu0
        %v3658 = vpop.f32.mrf.mxu0
        %v3659 = vadd.f32 %v3458, %v3658
        %v3660 = vpop.f32.mrf.mxu0
        %3661 = vmatprep.mubr.bf16.mxu0 0
        %3662 = vmatmul.mubr.bf16.gmra.mxu0 %v2100
        %v3663 = vpop.f32.mrf.mxu0
        %v3664 = vadd.f32 %v3463, %v3663
        %v3665 = vpop.f32.mrf.mxu0
        %v3666 = vpop.f32.mrf.mxu0
        %v3667 = vadd.f32 %v3466, %v3666
        %v3668 = vpop.f32.mrf.mxu0
        %3669 = vmatprep.mubr.bf16.mxu0 0
        %3670 = vmatmul.mubr.bf16.gmra.mxu0 %v2107
        %v3671 = vpop.f32.mrf.mxu0
        %v3672 = vadd.f32 %v3471, %v3671
        %v3673 = vpop.f32.mrf.mxu0
        %v3674 = vpop.f32.mrf.mxu0
        %v3675 = vadd.f32 %v3474, %v3674
        %v3676 = vpop.f32.mrf.mxu0
        %3677 = vmatprep.mubr.bf16.mxu0 0
        %3678 = vmatmul.mubr.bf16.gmra.mxu0 %v2114
        %v3679 = vpop.f32.mrf.mxu0
        %v3680 = vadd.f32 %v3479, %v3679
        %v3681 = vpop.f32.mrf.mxu0
        %v3682 = vpop.f32.mrf.mxu0
        %v3683 = vadd.f32 %v3482, %v3682
        %v3684 = vpop.f32.mrf.mxu0
        %3685 = vmatprep.mubr.bf16.mxu0 0
        %3686 = vmatmul.mubr.bf16.gmra.mxu0 %v2121
        %v3687 = vpop.f32.mrf.mxu0
        %v3688 = vadd.f32 %v3487, %v3687
        %v3689 = vpop.f32.mrf.mxu0
        %v3690 = vpop.f32.mrf.mxu0
        %v3691 = vadd.f32 %v3490, %v3690
        %v3692 = vpop.f32.mrf.mxu0
        %3693 = vmatprep.mubr.bf16.mxu0 0
        %3694 = vmatmul.mubr.bf16.gmra.mxu0 %v2128
        %v3695 = vpop.f32.mrf.mxu0
        %v3696 = vadd.f32 %v3495, %v3695
        %v3697 = vpop.f32.mrf.mxu0
        %v3698 = vpop.f32.mrf.mxu0
        %v3699 = vadd.f32 %v3498, %v3698
        %v3700 = vpop.f32.mrf.mxu0
        %3701 = vmatprep.mubr.bf16.mxu0 0
        %3702 = vmatmul.mubr.bf16.gmra.mxu0 %v2135
        %v3703 = vpop.f32.mrf.mxu0
        %v3704 = vadd.f32 %v3503, %v3703
        %v3705 = vpop.f32.mrf.mxu0
        %v3706 = vpop.f32.mrf.mxu0
        %v3707 = vadd.f32 %v3506, %v3706
        %v3708 = vpop.f32.mrf.mxu0
        %3709 = vmatprep.mubr.bf16.mxu0 0
        %3710 = vmatmul.mubr.bf16.gmra.mxu0 %v2142
        %v3711 = vpop.f32.mrf.mxu0
        %v3712 = vadd.f32 %v3511, %v3711
        %v3713 = vpop.f32.mrf.mxu0
        %v3714 = vpop.f32.mrf.mxu0
        %v3715 = vadd.f32 %v3514, %v3714
        %v3716 = vpop.f32.mrf.mxu0
        %3717 = vmatprep.mubr.bf16.mxu0 0
        %3718 = vmatmul.mubr.bf16.gmra.mxu0 %v2149
        %v3719 = vpop.f32.mrf.mxu0
        %v3720 = vadd.f32 %v3519, %v3719
        %v3721 = vpop.f32.mrf.mxu0
        %v3722 = vpop.f32.mrf.mxu0
        %v3723 = vadd.f32 %v3522, %v3722
        %v3724 = vpop.f32.mrf.mxu0
        %3725 = vmatprep.mubr.bf16.mxu0 0
        %3726 = vmatmul.mubr.bf16.gmra.mxu0 %v2156
        %v3727 = vpop.f32.mrf.mxu0
        %v3728 = vadd.f32 %v3527, %v3727
        %v3729 = vpop.f32.mrf.mxu0
        %v3730 = vpop.f32.mrf.mxu0
        %v3731 = vadd.f32 %v3530, %v3730
        %v3732 = vpop.f32.mrf.mxu0
        %3733 = vmatprep.mubr.bf16.mxu0 0
        %3734 = vmatmul.mubr.bf16.gmra.mxu0 %v2163
        %v3735 = vpop.f32.mrf.mxu0
        %v3736 = vadd.f32 %v3535, %v3735
        %v3737 = vpop.f32.mrf.mxu0
        %v3738 = vpop.f32.mrf.mxu0
        %v3739 = vadd.f32 %v3538, %v3738
        %v3740 = vpop.f32.mrf.mxu0
        %3741 = vmatprep.mubr.bf16.mxu0 0
        %3742 = vmatmul.mubr.bf16.gmra.mxu0 %v2170
        %v3743 = vpop.f32.mrf.mxu0
        %v3744 = vadd.f32 %v3543, %v3743
        %v3745 = vpop.f32.mrf.mxu0
        %v3746 = vpop.f32.mrf.mxu0
        %v3747 = vadd.f32 %v3546, %v3746
        %v3748 = vpop.f32.mrf.mxu0
        %3749 = vmatprep.mubr.bf16.mxu0 0
        %3750 = vmatmul.mubr.bf16.gmra.mxu0 %v2177
        %v3751 = vpop.f32.mrf.mxu0
        %v3752 = vadd.f32 %v3551, %v3751
        %v3753 = vpop.f32.mrf.mxu0
        %v3754 = vpop.f32.mrf.mxu0
        %v3755 = vadd.f32 %v3554, %v3754
        %v3756 = vpop.f32.mrf.mxu0
        %3757 = vmatprep.mubr.bf16.mxu0 0
        %3758 = vmatmul.mubr.bf16.gmra.mxu0 %v2184
        %v3759 = vpop.f32.mrf.mxu0
        %v3760 = vadd.f32 %v3559, %v3759
        %v3761 = vpop.f32.mrf.mxu0
        %v3762 = vpop.f32.mrf.mxu0
        %v3763 = vadd.f32 %v3562, %v3762
        %v3764 = vpop.f32.mrf.mxu0
        %3765 = vmatprep.mubr.bf16.mxu0 0
        %3766 = vmatmul.mubr.bf16.gmra.mxu0 %v2191
        %v3767 = vpop.f32.mrf.mxu0
        %v3768 = vadd.f32 %v3567, %v3767
        %v3769 = vpop.f32.mrf.mxu0
        %v3770 = vpop.f32.mrf.mxu0
        %v3771 = vadd.f32 %v3570, %v3770
        %v3772 = vpop.f32.mrf.mxu0
        %3773 = vmatprep.mubr.bf16.mxu0 0
        %3774 = vmatmul.mubr.bf16.gmra.mxu0 %v2198
        %v3775 = vpop.f32.mrf.mxu0
        %v3776 = vadd.f32 %v3575, %v3775
        %v3777 = vpop.f32.mrf.mxu0
        %v3778 = vpop.f32.mrf.mxu0
        %v3779 = vadd.f32 %v3578, %v3778
        %v3780 = vpop.f32.mrf.mxu0
        %3781 = vmatprep.mubr.bf16.mxu0 0
        %3782 = vmatmul.mubr.bf16.gmra.mxu0 %v2205
        %v3783 = vpop.f32.mrf.mxu0
        %v3784 = vadd.f32 %v3583, %v3783
        %v3785 = vpop.f32.mrf.mxu0
        %v3786 = vpop.f32.mrf.mxu0
        %v3787 = vadd.f32 %v3586, %v3786
        %v3788 = vpop.f32.mrf.mxu0
        %3789 = vmatprep.mubr.bf16.mxu0 0
        %3790 = vmatmul.mubr.bf16.gmra.mxu0 %v2212
        %v3791 = vpop.f32.mrf.mxu0
        %v3792 = vadd.f32 %v3591, %v3791
        %v3793 = vpop.f32.mrf.mxu0
        %v3794 = vpop.f32.mrf.mxu0
        %v3795 = vadd.f32 %v3594, %v3794
        %v3796 = vpop.f32.mrf.mxu0
        %3797 = vmatprep.mubr.bf16.mxu0 0
        %3798 = vmatmul.mubr.bf16.gmra.mxu0 %v2217
        %v3799 = vpop.f32.mrf.mxu0
        %v3800 = vadd.f32 %v3599, %v3799
        %v3801 = vpop.f32.mrf.mxu0
        %v3802 = vpop.f32.mrf.mxu0
        %v3803 = vadd.f32 %v3602, %v3802
        %v3804 = vpop.f32.mrf.mxu0
        %3805 = vdwg.mxu0
        %v3806 = vmax.f32 %v3640, 0.0
        %v3807 = vmax.f32 %v3643, 0.0
        %v3808 = vmax.f32 %v3648, 0.0
        %v3809 = vmax.f32 %v3651, 0.0
        %v3810 = vmax.f32 %v3656, 0.0
        %v3811 = vmax.f32 %v3659, 0.0
        %v3812 = vmax.f32 %v3664, 0.0
        %v3813 = vmax.f32 %v3667, 0.0
        %v3814 = vmax.f32 %v3672, 0.0
        %v3815 = vmax.f32 %v3675, 0.0
        %v3816 = vmax.f32 %v3680, 0.0
        %v3817 = vmax.f32 %v3683, 0.0
        %v3818 = vmax.f32 %v3688, 0.0
        %v3819 = vmax.f32 %v3691, 0.0
        %v3820 = vmax.f32 %v3696, 0.0
        %v3821 = vmax.f32 %v3699, 0.0
        %v3822 = vmax.f32 %v3704, 0.0
        %v3823 = vmax.f32 %v3707, 0.0
        %v3824 = vmax.f32 %v3712, 0.0
        %v3825 = vmax.f32 %v3715, 0.0
        %v3826 = vmax.f32 %v3720, 0.0
        %v3827 = vmax.f32 %v3723, 0.0
        %v3828 = vmax.f32 %v3728, 0.0
        %v3829 = vmax.f32 %v3731, 0.0
        %v3830 = vmax.f32 %v3736, 0.0
        %v3831 = vmax.f32 %v3739, 0.0
        %v3832 = vmax.f32 %v3744, 0.0
        %v3833 = vmax.f32 %v3747, 0.0
        %v3834 = vmax.f32 %v3752, 0.0
        %v3835 = vmax.f32 %v3755, 0.0
        %v3836 = vmax.f32 %v3760, 0.0
        %v3837 = vmax.f32 %v3763, 0.0
        %v3838 = vmax.f32 %v3768, 0.0
        %v3839 = vmax.f32 %v3771, 0.0
        %v3840 = vmax.f32 %v3776, 0.0
        %v3841 = vmax.f32 %v3779, 0.0
        %v3842 = vmax.f32 %v3784, 0.0
        %v3843 = vmax.f32 %v3787, 0.0
        %v3844 = vmax.f32 %v3792, 0.0
        %v3845 = vmax.f32 %v3795, 0.0
        %v3846 = vmax.f32 %v3800, 0.0
        %v3847 = vmax.f32 %v3803, 0.0
        %v3848 = vmul.f32 %v3806, %v1310
        %v3849 = vmul.f32 %v3807, %v1315
        %v3850 = vmul.f32 %v3808, %v1320
        %v3851 = vmul.f32 %v3809, %v1325
        %v3852 = vmul.f32 %v3810, %v1330
        %v3853 = vmul.f32 %v3811, %v1335
        %v3854 = vmul.f32 %v3812, %v1340
        %v3855 = vmul.f32 %v3813, %v1345
        %v3856 = vmul.f32 %v3814, %v1350
        %v3857 = vmul.f32 %v3815, %v1355
        %v3858 = vmul.f32 %v3816, %v1360
        %v3859 = vmul.f32 %v3817, %v1365
        %v3860 = vmul.f32 %v3818, %v1370
        %v3861 = vmul.f32 %v3819, %v1375
        %v3862 = vmul.f32 %v3820, %v1380
        %v3863 = vmul.f32 %v3821, %v1385
        %v3864 = vmul.f32 %v3822, %v1390
        %v3865 = vmul.f32 %v3823, %v1395
        %v3866 = vmul.f32 %v3824, %v1400
        %v3867 = vmul.f32 %v3825, %v1405
        %v3868 = vmul.f32 %v3826, %v1410
        %v3869 = vmul.f32 %v3827, %v1415
        %v3870 = vmul.f32 %v3828, %v1420
        %v3871 = vmul.f32 %v3829, %v1425
        %v3872 = vmul.f32 %v3830, %v1430
        %v3873 = vmul.f32 %v3831, %v1435
        %v3874 = vmul.f32 %v3832, %v1440
        %v3875 = vmul.f32 %v3833, %v1445
        %v3876 = vmul.f32 %v3834, %v1450
        %v3877 = vmul.f32 %v3835, %v1455
        %v3878 = vmul.f32 %v3836, %v1460
        %v3879 = vmul.f32 %v3837, %v1465
        %v3880 = vmul.f32 %v3838, %v1470
        %v3881 = vmul.f32 %v3839, %v1475
        %v3882 = vmul.f32 %v3840, %v1480
        %v3883 = vmul.f32 %v3841, %v1485
        %v3884 = vmul.f32 %v3842, %v1490
        %v3885 = vmul.f32 %v3843, %v1495
        %v3886 = vmul.f32 %v3844, %v1500
        %v3887 = vmul.f32 %v3845, %v1505
        %v3888 = vmul.f32 %v3846, %v1510
        %v3889 = vmul.f32 %v3847, %v1515
        %v3890 = vrot.slane %v3848, 5
        %v3891 = vrot.slane %v3849, 5
        %v3892 = vrot.slane %v3850, 5
        %v3893 = vrot.slane %v3851, 5
        %v3894 = vrot.slane %v3852, 5
        %v3895 = vrot.slane %v3853, 5
        %v3896 = vrot.slane %v3854, 5
        %v3897 = vrot.slane %v3855, 5
        %v3898 = vrot.slane %v3856, 5
        %v3899 = vrot.slane %v3857, 5
        %v3900 = vrot.slane %v3858, 5
        %v3901 = vrot.slane %v3859, 5
        %v3902 = vrot.slane %v3860, 5
        %v3903 = vrot.slane %v3861, 5
        %v3904 = vrot.slane %v3862, 5
        %v3905 = vrot.slane %v3863, 5
        %v3906 = vrot.slane %v3864, 5
        %v3907 = vrot.slane %v3865, 5
        %v3908 = vrot.slane %v3866, 5
        %v3909 = vrot.slane %v3867, 5
        %v3910 = vrot.slane %v3868, 5
        %v3911 = vrot.slane %v3869, 5
        %v3912 = vrot.slane %v3870, 5
        %v3913 = vrot.slane %v3871, 5
        %v3914 = vrot.slane %v3872, 5
        %v3915 = vrot.slane %v3873, 5
        %v3916 = vrot.slane %v3874, 5
        %v3917 = vrot.slane %v3875, 5
        %v3918 = vrot.slane %v3876, 5
        %v3919 = vrot.slane %v3877, 5
        %v3920 = vrot.slane %v3878, 5
        %v3921 = vrot.slane %v3879, 5
        %v3922 = vrot.slane %v3880, 5
        %v3923 = vrot.slane %v3881, 5
        %v3924 = vrot.slane %v3882, 5
        %v3925 = vrot.slane %v3883, 5
        %v3926 = vrot.slane %v3884, 5
        %v3927 = vrot.slane %v3885, 5
        %v3928 = vrot.slane %v3886, 5
        %v3929 = vrot.slane %v3887, 5
        %v3930 = vrot.slane %v3888, 5
        %v3931 = vrot.slane %v3889, 5
        %v3932 = vsel %vm1603, %v3930, %v3931
        %v3933 = vsel %vm1603, %v3929, %v3930
        %v3934 = vsel %vm1603, %v3928, %v3929
        %v3935 = vsel %vm1603, %v3927, %v3928
        %v3936 = vsel %vm1603, %v3926, %v3927
        %v3937 = vsel %vm1603, %v3925, %v3926
        %v3938 = vsel %vm1603, %v3924, %v3925
        %v3939 = vsel %vm1603, %v3923, %v3924
        %v3940 = vsel %vm1603, %v3922, %v3923
        %v3941 = vsel %vm1603, %v3921, %v3922
        %v3942 = vsel %vm1603, %v3920, %v3921
        %v3943 = vsel %vm1603, %v3919, %v3920
        %v3944 = vsel %vm1603, %v3918, %v3919
        %v3945 = vsel %vm1603, %v3917, %v3918
        %v3946 = vsel %vm1603, %v3916, %v3917
        %v3947 = vsel %vm1603, %v3915, %v3916
        %v3948 = vsel %vm1603, %v3914, %v3915
        %v3949 = vsel %vm1603, %v3913, %v3914
        %v3950 = vsel %vm1603, %v3912, %v3913
        %v3951 = vsel %vm1603, %v3911, %v3912
        %v3952 = vsel %vm1603, %v3910, %v3911
        %v3953 = vsel %vm1603, %v3909, %v3910
        %v3954 = vsel %vm1603, %v3908, %v3909
        %v3955 = vsel %vm1603, %v3907, %v3908
        %v3956 = vsel %vm1603, %v3906, %v3907
        %v3957 = vsel %vm1603, %v3905, %v3906
        %v3958 = vsel %vm1603, %v3904, %v3905
        %v3959 = vsel %vm1603, %v3903, %v3904
        %v3960 = vsel %vm1603, %v3902, %v3903
        %v3961 = vsel %vm1603, %v3901, %v3902
        %v3962 = vsel %vm1603, %v3900, %v3901
        %v3963 = vsel %vm1603, %v3899, %v3900
        %v3964 = vsel %vm1603, %v3898, %v3899
        %v3965 = vsel %vm1603, %v3897, %v3898
        %v3966 = vsel %vm1603, %v3896, %v3897
        %v3967 = vsel %vm1603, %v3895, %v3896
        %v3968 = vsel %vm1603, %v3894, %v3895
        %v3969 = vsel %vm1603, %v3893, %v3894
        %v3970 = vsel %vm1603, %v3892, %v3893
        %v3971 = vsel %vm1603, %v3891, %v3892
        %v3972 = vsel %vm1603, %v3890, %v3891
        %v3973 = vsel %vm1603, %v3931, %v3890
        %v3974 = vrot.slane %v3848, 6
        %v3975 = vrot.slane %v3849, 6
        %v3976 = vrot.slane %v3850, 6
        %v3977 = vrot.slane %v3851, 6
        %v3978 = vrot.slane %v3852, 6
        %v3979 = vrot.slane %v3853, 6
        %v3980 = vrot.slane %v3854, 6
        %v3981 = vrot.slane %v3855, 6
        %v3982 = vrot.slane %v3856, 6
        %v3983 = vrot.slane %v3857, 6
        %v3984 = vrot.slane %v3858, 6
        %v3985 = vrot.slane %v3859, 6
        %v3986 = vrot.slane %v3860, 6
        %v3987 = vrot.slane %v3861, 6
        %v3988 = vrot.slane %v3862, 6
        %v3989 = vrot.slane %v3863, 6
        %v3990 = vrot.slane %v3864, 6
        %v3991 = vrot.slane %v3865, 6
        %v3992 = vrot.slane %v3866, 6
        %v3993 = vrot.slane %v3867, 6
        %v3994 = vrot.slane %v3868, 6
        %v3995 = vrot.slane %v3869, 6
        %v3996 = vrot.slane %v3870, 6
        %v3997 = vrot.slane %v3871, 6
        %v3998 = vrot.slane %v3872, 6
        %v3999 = vrot.slane %v3873, 6
        %v4000 = vrot.slane %v3874, 6
        %v4001 = vrot.slane %v3875, 6
        %v4002 = vrot.slane %v3876, 6
        %v4003 = vrot.slane %v3877, 6
        %v4004 = vrot.slane %v3878, 6
        %v4005 = vrot.slane %v3879, 6
        %v4006 = vrot.slane %v3880, 6
        %v4007 = vrot.slane %v3881, 6
        %v4008 = vrot.slane %v3882, 6
        %v4009 = vrot.slane %v3883, 6
        %v4010 = vrot.slane %v3884, 6
        %v4011 = vrot.slane %v3885, 6
        %v4012 = vrot.slane %v3886, 6
        %v4013 = vrot.slane %v3887, 6
        %v4014 = vrot.slane %v3888, 6
        %v4015 = vrot.slane %v3889, 6
        %v4016 = vsel %vm1688, %v4014, %v4015
        %v4017 = vsel %vm1688, %v4013, %v4014
        %v4018 = vsel %vm1688, %v4012, %v4013
        %v4019 = vsel %vm1688, %v4011, %v4012
        %v4020 = vsel %vm1688, %v4010, %v4011
        %v4021 = vsel %vm1688, %v4009, %v4010
        %v4022 = vsel %vm1688, %v4008, %v4009
        %v4023 = vsel %vm1688, %v4007, %v4008
        %v4024 = vsel %vm1688, %v4006, %v4007
        %v4025 = vsel %vm1688, %v4005, %v4006
        %v4026 = vsel %vm1688, %v4004, %v4005
        %v4027 = vsel %vm1688, %v4003, %v4004
        %v4028 = vsel %vm1688, %v4002, %v4003
        %v4029 = vsel %vm1688, %v4001, %v4002
        %v4030 = vsel %vm1688, %v4000, %v4001
        %v4031 = vsel %vm1688, %v3999, %v4000
        %v4032 = vsel %vm1688, %v3998, %v3999
        %v4033 = vsel %vm1688, %v3997, %v3998
        %v4034 = vsel %vm1688, %v3996, %v3997
        %v4035 = vsel %vm1688, %v3995, %v3996
        %v4036 = vsel %vm1688, %v3994, %v3995
        %v4037 = vsel %vm1688, %v3993, %v3994
        %v4038 = vsel %vm1688, %v3992, %v3993
        %v4039 = vsel %vm1688, %v3991, %v3992
        %v4040 = vsel %vm1688, %v3990, %v3991
        %v4041 = vsel %vm1688, %v3989, %v3990
        %v4042 = vsel %vm1688, %v3988, %v3989
        %v4043 = vsel %vm1688, %v3987, %v3988
        %v4044 = vsel %vm1688, %v3986, %v3987
        %v4045 = vsel %vm1688, %v3985, %v3986
        %v4046 = vsel %vm1688, %v3984, %v3985
        %v4047 = vsel %vm1688, %v3983, %v3984
        %v4048 = vsel %vm1688, %v3982, %v3983
        %v4049 = vsel %vm1688, %v3981, %v3982
        %v4050 = vsel %vm1688, %v3980, %v3981
        %v4051 = vsel %vm1688, %v3979, %v3980
        %v4052 = vsel %vm1688, %v3978, %v3979
        %v4053 = vsel %vm1688, %v3977, %v3978
        %v4054 = vsel %vm1688, %v3976, %v3977
        %v4055 = vsel %vm1688, %v3975, %v3976
        %v4056 = vsel %vm1688, %v3974, %v3975
        %v4057 = vsel %vm1688, %v4015, %v3974
        %v4058 = vrot.slane %v3848, 7
        %v4059 = vrot.slane %v3849, 7
        %v4060 = vrot.slane %v3850, 7
        %v4061 = vrot.slane %v3851, 7
        %v4062 = vrot.slane %v3852, 7
        %v4063 = vrot.slane %v3853, 7
        %v4064 = vrot.slane %v3854, 7
        %v4065 = vrot.slane %v3855, 7
        %v4066 = vrot.slane %v3856, 7
        %v4067 = vrot.slane %v3857, 7
        %v4068 = vrot.slane %v3858, 7
        %v4069 = vrot.slane %v3859, 7
        %v4070 = vrot.slane %v3860, 7
        %v4071 = vrot.slane %v3861, 7
        %v4072 = vrot.slane %v3862, 7
        %v4073 = vrot.slane %v3863, 7
        %v4074 = vrot.slane %v3864, 7
        %v4075 = vrot.slane %v3865, 7
        %v4076 = vrot.slane %v3866, 7
        %v4077 = vrot.slane %v3867, 7
        %v4078 = vrot.slane %v3868, 7
        %v4079 = vrot.slane %v3869, 7
        %v4080 = vrot.slane %v3870, 7
        %v4081 = vrot.slane %v3871, 7
        %v4082 = vrot.slane %v3872, 7
        %v4083 = vrot.slane %v3873, 7
        %v4084 = vrot.slane %v3874, 7
        %v4085 = vrot.slane %v3875, 7
        %v4086 = vrot.slane %v3876, 7
        %v4087 = vrot.slane %v3877, 7
        %v4088 = vrot.slane %v3878, 7
        %v4089 = vrot.slane %v3879, 7
        %v4090 = vrot.slane %v3880, 7
        %v4091 = vrot.slane %v3881, 7
        %v4092 = vrot.slane %v3882, 7
        %v4093 = vrot.slane %v3883, 7
        %v4094 = vrot.slane %v3884, 7
        %v4095 = vrot.slane %v3885, 7
        %v4096 = vrot.slane %v3886, 7
        %v4097 = vrot.slane %v3887, 7
        %v4098 = vrot.slane %v3888, 7
        %v4099 = vrot.slane %v3889, 7
        %v4100 = vsel %vm1773, %v4098, %v4099
        %v4101 = vsel %vm1773, %v4097, %v4098
        %v4102 = vsel %vm1773, %v4096, %v4097
        %v4103 = vsel %vm1773, %v4095, %v4096
        %v4104 = vsel %vm1773, %v4094, %v4095
        %v4105 = vsel %vm1773, %v4093, %v4094
        %v4106 = vsel %vm1773, %v4092, %v4093
        %v4107 = vsel %vm1773, %v4091, %v4092
        %v4108 = vsel %vm1773, %v4090, %v4091
        %v4109 = vsel %vm1773, %v4089, %v4090
        %v4110 = vsel %vm1773, %v4088, %v4089
        %v4111 = vsel %vm1773, %v4087, %v4088
        %v4112 = vsel %vm1773, %v4086, %v4087
        %v4113 = vsel %vm1773, %v4085, %v4086
        %v4114 = vsel %vm1773, %v4084, %v4085
        %v4115 = vsel %vm1773, %v4083, %v4084
        %v4116 = vsel %vm1773, %v4082, %v4083
        %v4117 = vsel %vm1773, %v4081, %v4082
        %v4118 = vsel %vm1773, %v4080, %v4081
        %v4119 = vsel %vm1773, %v4079, %v4080
        %v4120 = vsel %vm1773, %v4078, %v4079
        %v4121 = vsel %vm1773, %v4077, %v4078
        %v4122 = vsel %vm1773, %v4076, %v4077
        %v4123 = vsel %vm1773, %v4075, %v4076
        %v4124 = vsel %vm1773, %v4074, %v4075
        %v4125 = vsel %vm1773, %v4073, %v4074
        %v4126 = vsel %vm1773, %v4072, %v4073
        %v4127 = vsel %vm1773, %v4071, %v4072
        %v4128 = vsel %vm1773, %v4070, %v4071
        %v4129 = vsel %vm1773, %v4069, %v4070
        %v4130 = vsel %vm1773, %v4068, %v4069
        %v4131 = vsel %vm1773, %v4067, %v4068
        %v4132 = vsel %vm1773, %v4066, %v4067
        %v4133 = vsel %vm1773, %v4065, %v4066
        %v4134 = vsel %vm1773, %v4064, %v4065
        %v4135 = vsel %vm1773, %v4063, %v4064
        %v4136 = vsel %vm1773, %v4062, %v4063
        %v4137 = vsel %vm1773, %v4061, %v4062
        %v4138 = vsel %vm1773, %v4060, %v4061
        %v4139 = vsel %vm1773, %v4059, %v4060
        %v4140 = vsel %vm1773, %v4058, %v4059
        %v4141 = vsel %vm1773, %v4099, %v4058
        %v4142 = vrot.slane %v3848, 1
        %v4143 = vrot.slane %v3849, 1
        %v4144 = vrot.slane %v3850, 1
        %v4145 = vrot.slane %v3851, 1
        %v4146 = vrot.slane %v3852, 1
        %v4147 = vrot.slane %v3853, 1
        %v4148 = vrot.slane %v3854, 1
        %v4149 = vrot.slane %v3855, 1
        %v4150 = vrot.slane %v3856, 1
        %v4151 = vrot.slane %v3857, 1
        %v4152 = vrot.slane %v3858, 1
        %v4153 = vrot.slane %v3859, 1
        %v4154 = vrot.slane %v3860, 1
        %v4155 = vrot.slane %v3861, 1
        %v4156 = vrot.slane %v3862, 1
        %v4157 = vrot.slane %v3863, 1
        %v4158 = vrot.slane %v3864, 1
        %v4159 = vrot.slane %v3865, 1
        %v4160 = vrot.slane %v3866, 1
        %v4161 = vrot.slane %v3867, 1
        %v4162 = vrot.slane %v3868, 1
        %v4163 = vrot.slane %v3869, 1
        %v4164 = vrot.slane %v3870, 1
        %v4165 = vrot.slane %v3871, 1
        %v4166 = vrot.slane %v3872, 1
        %v4167 = vrot.slane %v3873, 1
        %v4168 = vrot.slane %v3874, 1
        %v4169 = vrot.slane %v3875, 1
        %v4170 = vrot.slane %v3876, 1
        %v4171 = vrot.slane %v3877, 1
        %v4172 = vrot.slane %v3878, 1
        %v4173 = vrot.slane %v3879, 1
        %v4174 = vrot.slane %v3880, 1
        %v4175 = vrot.slane %v3881, 1
        %v4176 = vrot.slane %v3882, 1
        %v4177 = vrot.slane %v3883, 1
        %v4178 = vrot.slane %v3884, 1
        %v4179 = vrot.slane %v3885, 1
        %v4180 = vrot.slane %v3886, 1
        %v4181 = vrot.slane %v3887, 1
        %v4182 = vrot.slane %v3888, 1
        %v4183 = vrot.slane %v3889, 1
        %v4184 = vsel %vm1858, %v4182, %v4183
        %v4185 = vsel %vm1858, %v4181, %v4182
        %v4186 = vsel %vm1858, %v4180, %v4181
        %v4187 = vsel %vm1858, %v4179, %v4180
        %v4188 = vsel %vm1858, %v4178, %v4179
        %v4189 = vsel %vm1858, %v4177, %v4178
        %v4190 = vsel %vm1858, %v4176, %v4177
        %v4191 = vsel %vm1858, %v4175, %v4176
        %v4192 = vsel %vm1858, %v4174, %v4175
        %v4193 = vsel %vm1858, %v4173, %v4174
        %v4194 = vsel %vm1858, %v4172, %v4173
        %v4195 = vsel %vm1858, %v4171, %v4172
        %v4196 = vsel %vm1858, %v4170, %v4171
        %v4197 = vsel %vm1858, %v4169, %v4170
        %v4198 = vsel %vm1858, %v4168, %v4169
        %v4199 = vsel %vm1858, %v4167, %v4168
        %v4200 = vsel %vm1858, %v4166, %v4167
        %v4201 = vsel %vm1858, %v4165, %v4166
        %v4202 = vsel %vm1858, %v4164, %v4165
        %v4203 = vsel %vm1858, %v4163, %v4164
        %v4204 = vsel %vm1858, %v4162, %v4163
        %v4205 = vsel %vm1858, %v4161, %v4162
        %v4206 = vsel %vm1858, %v4160, %v4161
        %v4207 = vsel %vm1858, %v4159, %v4160
        %v4208 = vsel %vm1858, %v4158, %v4159
        %v4209 = vsel %vm1858, %v4157, %v4158
        %v4210 = vsel %vm1858, %v4156, %v4157
        %v4211 = vsel %vm1858, %v4155, %v4156
        %v4212 = vsel %vm1858, %v4154, %v4155
        %v4213 = vsel %vm1858, %v4153, %v4154
        %v4214 = vsel %vm1858, %v4152, %v4153
        %v4215 = vsel %vm1858, %v4151, %v4152
        %v4216 = vsel %vm1858, %v4150, %v4151
        %v4217 = vsel %vm1858, %v4149, %v4150
        %v4218 = vsel %vm1858, %v4148, %v4149
        %v4219 = vsel %vm1858, %v4147, %v4148
        %v4220 = vsel %vm1858, %v4146, %v4147
        %v4221 = vsel %vm1858, %v4145, %v4146
        %v4222 = vsel %vm1858, %v4144, %v4145
        %v4223 = vsel %vm1858, %v4143, %v4144
        %v4224 = vsel %vm1858, %v4142, %v4143
        %v4225 = vsel %vm1858, %v4183, %v4142
        %v4226 = vrot.slane %v3848, 2
        %v4227 = vrot.slane %v3849, 2
        %v4228 = vrot.slane %v3850, 2
        %v4229 = vrot.slane %v3851, 2
        %v4230 = vrot.slane %v3852, 2
        %v4231 = vrot.slane %v3853, 2
        %v4232 = vrot.slane %v3854, 2
        %v4233 = vrot.slane %v3855, 2
        %v4234 = vrot.slane %v3856, 2
        %v4235 = vrot.slane %v3857, 2
        %v4236 = vrot.slane %v3858, 2
        %v4237 = vrot.slane %v3859, 2
        %v4238 = vrot.slane %v3860, 2
        %v4239 = vrot.slane %v3861, 2
        %v4240 = vrot.slane %v3862, 2
        %v4241 = vrot.slane %v3863, 2
        %v4242 = vrot.slane %v3864, 2
        %v4243 = vrot.slane %v3865, 2
        %v4244 = vrot.slane %v3866, 2
        %v4245 = vrot.slane %v3867, 2
        %v4246 = vrot.slane %v3868, 2
        %v4247 = vrot.slane %v3869, 2
        %v4248 = vrot.slane %v3870, 2
        %v4249 = vrot.slane %v3871, 2
        %v4250 = vrot.slane %v3872, 2
        %v4251 = vrot.slane %v3873, 2
        %v4252 = vrot.slane %v3874, 2
        %v4253 = vrot.slane %v3875, 2
        %v4254 = vrot.slane %v3876, 2
        %v4255 = vrot.slane %v3877, 2
        %v4256 = vrot.slane %v3878, 2
        %v4257 = vrot.slane %v3879, 2
        %v4258 = vrot.slane %v3880, 2
        %v4259 = vrot.slane %v3881, 2
        %v4260 = vrot.slane %v3882, 2
        %v4261 = vrot.slane %v3883, 2
        %v4262 = vrot.slane %v3884, 2
        %v4263 = vrot.slane %v3885, 2
        %v4264 = vrot.slane %v3886, 2
        %v4265 = vrot.slane %v3887, 2
        %v4266 = vrot.slane %v3888, 2
        %v4267 = vrot.slane %v3889, 2
        %v4268 = vsel %vm1943, %v4266, %v4267
        %v4269 = vsel %vm1943, %v4265, %v4266
        %v4270 = vsel %vm1943, %v4264, %v4265
        %v4271 = vsel %vm1943, %v4263, %v4264
        %v4272 = vsel %vm1943, %v4262, %v4263
        %v4273 = vsel %vm1943, %v4261, %v4262
        %v4274 = vsel %vm1943, %v4260, %v4261
        %v4275 = vsel %vm1943, %v4259, %v4260
        %v4276 = vsel %vm1943, %v4258, %v4259
        %v4277 = vsel %vm1943, %v4257, %v4258
        %v4278 = vsel %vm1943, %v4256, %v4257
        %v4279 = vsel %vm1943, %v4255, %v4256
        %v4280 = vsel %vm1943, %v4254, %v4255
        %v4281 = vsel %vm1943, %v4253, %v4254
        %v4282 = vsel %vm1943, %v4252, %v4253
        %v4283 = vsel %vm1943, %v4251, %v4252
        %v4284 = vsel %vm1943, %v4250, %v4251
        %v4285 = vsel %vm1943, %v4249, %v4250
        %v4286 = vsel %vm1943, %v4248, %v4249
        %v4287 = vsel %vm1943, %v4247, %v4248
        %v4288 = vsel %vm1943, %v4246, %v4247
        %v4289 = vsel %vm1943, %v4245, %v4246
        %v4290 = vsel %vm1943, %v4244, %v4245
        %v4291 = vsel %vm1943, %v4243, %v4244
        %v4292 = vsel %vm1943, %v4242, %v4243
        %v4293 = vsel %vm1943, %v4241, %v4242
        %v4294 = vsel %vm1943, %v4240, %v4241
        %v4295 = vsel %vm1943, %v4239, %v4240
        %v4296 = vsel %vm1943, %v4238, %v4239
        %v4297 = vsel %vm1943, %v4237, %v4238
        %v4298 = vsel %vm1943, %v4236, %v4237
        %v4299 = vsel %vm1943, %v4235, %v4236
        %v4300 = vsel %vm1943, %v4234, %v4235
        %v4301 = vsel %vm1943, %v4233, %v4234
        %v4302 = vsel %vm1943, %v4232, %v4233
        %v4303 = vsel %vm1943, %v4231, %v4232
        %v4304 = vsel %vm1943, %v4230, %v4231
        %v4305 = vsel %vm1943, %v4229, %v4230
        %v4306 = vsel %vm1943, %v4228, %v4229
        %v4307 = vsel %vm1943, %v4227, %v4228
        %v4308 = vsel %vm1943, %v4226, %v4227
        %v4309 = vsel %vm1943, %v4267, %v4226
        %v4310 = vrot.slane %v3848, 3
        %v4311 = vrot.slane %v3849, 3
        %v4312 = vrot.slane %v3850, 3
        %v4313 = vrot.slane %v3851, 3
        %v4314 = vrot.slane %v3852, 3
        %v4315 = vrot.slane %v3853, 3
        %v4316 = vrot.slane %v3854, 3
        %v4317 = vrot.slane %v3855, 3
        %v4318 = vrot.slane %v3856, 3
        %v4319 = vrot.slane %v3857, 3
        %v4320 = vrot.slane %v3858, 3
        %v4321 = vrot.slane %v3859, 3
        %v4322 = vrot.slane %v3860, 3
        %v4323 = vrot.slane %v3861, 3
        %v4324 = vrot.slane %v3862, 3
        %v4325 = vrot.slane %v3863, 3
        %v4326 = vrot.slane %v3864, 3
        %v4327 = vrot.slane %v3865, 3
        %v4328 = vrot.slane %v3866, 3
        %v4329 = vrot.slane %v3867, 3
        %v4330 = vrot.slane %v3868, 3
        %v4331 = vrot.slane %v3869, 3
        %v4332 = vrot.slane %v3870, 3
        %v4333 = vrot.slane %v3871, 3
        %v4334 = vrot.slane %v3872, 3
        %v4335 = vrot.slane %v3873, 3
        %v4336 = vrot.slane %v3874, 3
        %v4337 = vrot.slane %v3875, 3
        %v4338 = vrot.slane %v3876, 3
        %v4339 = vrot.slane %v3877, 3
        %v4340 = vrot.slane %v3878, 3
        %v4341 = vrot.slane %v3879, 3
        %v4342 = vrot.slane %v3880, 3
        %v4343 = vrot.slane %v3881, 3
        %v4344 = vrot.slane %v3882, 3
        %v4345 = vrot.slane %v3883, 3
        %v4346 = vrot.slane %v3884, 3
        %v4347 = vrot.slane %v3885, 3
        %v4348 = vrot.slane %v3886, 3
        %v4349 = vrot.slane %v3887, 3
        %v4350 = vrot.slane %v3888, 3
        %v4351 = vrot.slane %v3889, 3
        %v4352 = vsel %vm2028, %v4350, %v4351
        %v4353 = vsel %vm2028, %v4349, %v4350
        %v4354 = vsel %vm2028, %v4348, %v4349
        %v4355 = vsel %vm2028, %v4347, %v4348
        %v4356 = vsel %vm2028, %v4346, %v4347
        %v4357 = vsel %vm2028, %v4345, %v4346
        %v4358 = vsel %vm2028, %v4344, %v4345
        %v4359 = vsel %vm2028, %v4343, %v4344
        %v4360 = vsel %vm2028, %v4342, %v4343
        %v4361 = vsel %vm2028, %v4341, %v4342
        %v4362 = vsel %vm2028, %v4340, %v4341
        %v4363 = vsel %vm2028, %v4339, %v4340
        %v4364 = vsel %vm2028, %v4338, %v4339
        %v4365 = vsel %vm2028, %v4337, %v4338
        %v4366 = vsel %vm2028, %v4336, %v4337
        %v4367 = vsel %vm2028, %v4335, %v4336
        %v4368 = vsel %vm2028, %v4334, %v4335
        %v4369 = vsel %vm2028, %v4333, %v4334
        %v4370 = vsel %vm2028, %v4332, %v4333
        %v4371 = vsel %vm2028, %v4331, %v4332
        %v4372 = vsel %vm2028, %v4330, %v4331
        %v4373 = vsel %vm2028, %v4329, %v4330
        %v4374 = vsel %vm2028, %v4328, %v4329
        %v4375 = vsel %vm2028, %v4327, %v4328
        %v4376 = vsel %vm2028, %v4326, %v4327
        %v4377 = vsel %vm2028, %v4325, %v4326
        %v4378 = vsel %vm2028, %v4324, %v4325
        %v4379 = vsel %vm2028, %v4323, %v4324
        %v4380 = vsel %vm2028, %v4322, %v4323
        %v4381 = vsel %vm2028, %v4321, %v4322
        %v4382 = vsel %vm2028, %v4320, %v4321
        %v4383 = vsel %vm2028, %v4319, %v4320
        %v4384 = vsel %vm2028, %v4318, %v4319
        %v4385 = vsel %vm2028, %v4317, %v4318
        %v4386 = vsel %vm2028, %v4316, %v4317
        %v4387 = vsel %vm2028, %v4315, %v4316
        %v4388 = vsel %vm2028, %v4314, %v4315
        %v4389 = vsel %vm2028, %v4313, %v4314
        %v4390 = vsel %vm2028, %v4312, %v4313
        %v4391 = vsel %vm2028, %v4311, %v4312
        %v4392 = vsel %vm2028, %v4310, %v4311
        %v4393 = vsel %vm2028, %v4351, %v4310
        %v4394 = vpack.c.bf16 %v3932, %v3933
        %v4395 = vpack.c.bf16 %v4016, %v4017
        %v4396 = vpack.c.bf16 %v4100, %v4101
        %v4397 = vpack.c.bf16 %v4140, %v4141
        %v4398 = vpack.c.bf16 %v3849, %v3848
        %v4399 = vpack.c.bf16 %v4223, %v4224
        %v4400 = vpack.c.bf16 %v4221, %v4222
        %v4401 = vpack.c.bf16 %v4305, %v4306
        %v4402 = vpack.c.bf16 %v4389, %v4390
        %v4403 = vpack.c.bf16 %v3972, %v3973
        %v4404 = vpack.c.bf16 %v4056, %v4057
        %v4405 = vpack.c.bf16 %v4138, %v4139
        %v4406 = vpack.c.bf16 %v3851, %v3850
        %v4407 = vpack.c.bf16 %v4219, %v4220
        %v4408 = vpack.c.bf16 %v4303, %v4304
        %v4409 = vpack.c.bf16 %v4387, %v4388
        %v4410 = vpack.c.bf16 %v3970, %v3971
        %v4411 = vpack.c.bf16 %v4054, %v4055
        %v4412 = vpack.c.bf16 %v4136, %v4137
        %v4413 = vpack.c.bf16 %v3853, %v3852
        %v4414 = vpack.c.bf16 %v4217, %v4218
        %v4415 = vpack.c.bf16 %v4301, %v4302
        %v4416 = vpack.c.bf16 %v4385, %v4386
        %v4417 = vpack.c.bf16 %v3968, %v3969
        %v4418 = vpack.c.bf16 %v4052, %v4053
        %v4419 = vpack.c.bf16 %v4134, %v4135
        %v4420 = vpack.c.bf16 %v3855, %v3854
        %v4421 = vpack.c.bf16 %v4215, %v4216
        %v4422 = vpack.c.bf16 %v4299, %v4300
        %v4423 = vpack.c.bf16 %v4383, %v4384
        %v4424 = vpack.c.bf16 %v3966, %v3967
        %v4425 = vpack.c.bf16 %v4050, %v4051
        %v4426 = vpack.c.bf16 %v4132, %v4133
        %v4427 = vpack.c.bf16 %v3857, %v3856
        %v4428 = vpack.c.bf16 %v4213, %v4214
        %v4429 = vpack.c.bf16 %v4297, %v4298
        %v4430 = vpack.c.bf16 %v4381, %v4382
        %v4431 = vpack.c.bf16 %v3964, %v3965
        %v4432 = vpack.c.bf16 %v4048, %v4049
        %v4433 = vpack.c.bf16 %v4130, %v4131
        %v4434 = vpack.c.bf16 %v3859, %v3858
        %v4435 = vpack.c.bf16 %v4211, %v4212
        %v4436 = vpack.c.bf16 %v4295, %v4296
        %v4437 = vpack.c.bf16 %v4379, %v4380
        %v4438 = vpack.c.bf16 %v3962, %v3963
        %v4439 = vpack.c.bf16 %v4046, %v4047
        %v4440 = vpack.c.bf16 %v4128, %v4129
        %v4441 = vpack.c.bf16 %v3861, %v3860
        %v4442 = vpack.c.bf16 %v4209, %v4210
        %v4443 = vpack.c.bf16 %v4293, %v4294
        %v4444 = vpack.c.bf16 %v4377, %v4378
        %v4445 = vpack.c.bf16 %v3960, %v3961
        %v4446 = vpack.c.bf16 %v4044, %v4045
        %v4447 = vpack.c.bf16 %v4126, %v4127
        %v4448 = vpack.c.bf16 %v3863, %v3862
        %v4449 = vpack.c.bf16 %v4207, %v4208
        %v4450 = vpack.c.bf16 %v4291, %v4292
        %v4451 = vpack.c.bf16 %v4375, %v4376
        %v4452 = vpack.c.bf16 %v3958, %v3959
        %v4453 = vpack.c.bf16 %v4042, %v4043
        %v4454 = vpack.c.bf16 %v4124, %v4125
        %v4455 = vpack.c.bf16 %v3865, %v3864
        %v4456 = vpack.c.bf16 %v4205, %v4206
        %v4457 = vpack.c.bf16 %v4289, %v4290
        %v4458 = vpack.c.bf16 %v4373, %v4374
        %v4459 = vpack.c.bf16 %v3956, %v3957
        %v4460 = vpack.c.bf16 %v4040, %v4041
        %v4461 = vpack.c.bf16 %v4122, %v4123
        %v4462 = vpack.c.bf16 %v3867, %v3866
        %v4463 = vpack.c.bf16 %v4203, %v4204
        %v4464 = vpack.c.bf16 %v4287, %v4288
        %v4465 = vpack.c.bf16 %v4371, %v4372
        %v4466 = vpack.c.bf16 %v3954, %v3955
        %v4467 = vpack.c.bf16 %v4038, %v4039
        %v4468 = vpack.c.bf16 %v4120, %v4121
        %v4469 = vpack.c.bf16 %v3869, %v3868
        %v4470 = vpack.c.bf16 %v4201, %v4202
        %v4471 = vpack.c.bf16 %v4285, %v4286
        %v4472 = vpack.c.bf16 %v4369, %v4370
        %v4473 = vpack.c.bf16 %v3952, %v3953
        %v4474 = vpack.c.bf16 %v4036, %v4037
        %v4475 = vpack.c.bf16 %v4118, %v4119
        %v4476 = vpack.c.bf16 %v3871, %v3870
        %v4477 = vpack.c.bf16 %v4199, %v4200
        %v4478 = vpack.c.bf16 %v4283, %v4284
        %v4479 = vpack.c.bf16 %v4367, %v4368
        %v4480 = vpack.c.bf16 %v3950, %v3951
        %v4481 = vpack.c.bf16 %v4034, %v4035
        %v4482 = vpack.c.bf16 %v4116, %v4117
        %v4483 = vpack.c.bf16 %v3873, %v3872
        %v4484 = vpack.c.bf16 %v4197, %v4198
        %v4485 = vpack.c.bf16 %v4281, %v4282
        %v4486 = vpack.c.bf16 %v4365, %v4366
        %v4487 = vpack.c.bf16 %v3948, %v3949
        %v4488 = vpack.c.bf16 %v4032, %v4033
        %v4489 = vpack.c.bf16 %v4114, %v4115
        %v4490 = vpack.c.bf16 %v3875, %v3874
        %v4491 = vpack.c.bf16 %v4195, %v4196
        %v4492 = vpack.c.bf16 %v4279, %v4280
        %v4493 = vpack.c.bf16 %v4363, %v4364
        %v4494 = vpack.c.bf16 %v3946, %v3947
        %v4495 = vpack.c.bf16 %v4030, %v4031
        %v4496 = vpack.c.bf16 %v4112, %v4113
        %v4497 = vpack.c.bf16 %v3877, %v3876
        %v4498 = vpack.c.bf16 %v4193, %v4194
        %v4499 = vpack.c.bf16 %v4277, %v4278
        %v4500 = vpack.c.bf16 %v4361, %v4362
        %v4501 = vpack.c.bf16 %v3944, %v3945
        %v4502 = vpack.c.bf16 %v4028, %v4029
        %v4503 = vpack.c.bf16 %v4110, %v4111
        %v4504 = vpack.c.bf16 %v3879, %v3878
        %v4505 = vpack.c.bf16 %v4191, %v4192
        %v4506 = vpack.c.bf16 %v4275, %v4276
        %v4507 = vpack.c.bf16 %v4359, %v4360
        %v4508 = vpack.c.bf16 %v3942, %v3943
        %v4509 = vpack.c.bf16 %v4026, %v4027
        %v4510 = vpack.c.bf16 %v4108, %v4109
        %v4511 = vpack.c.bf16 %v3881, %v3880
        %v4512 = vpack.c.bf16 %v4189, %v4190
        %v4513 = vpack.c.bf16 %v4273, %v4274
        %v4514 = vpack.c.bf16 %v4357, %v4358
        %v4515 = vpack.c.bf16 %v3940, %v3941
        %v4516 = vpack.c.bf16 %v4024, %v4025
        %v4517 = vpack.c.bf16 %v4106, %v4107
        %v4518 = vpack.c.bf16 %v3883, %v3882
        %v4519 = vpack.c.bf16 %v4187, %v4188
        %v4520 = vpack.c.bf16 %v4271, %v4272
        %v4521 = vpack.c.bf16 %v4355, %v4356
        %v4522 = vpack.c.bf16 %v3938, %v3939
        %v4523 = vpack.c.bf16 %v4022, %v4023
        %v4524 = vpack.c.bf16 %v4104, %v4105
        %v4525 = vpack.c.bf16 %v3885, %v3884
        %v4526 = vpack.c.bf16 %v4185, %v4186
        %v4527 = vpack.c.bf16 %v4269, %v4270
        %v4528 = vpack.c.bf16 %v4353, %v4354
        %v4529 = vpack.c.bf16 %v3936, %v3937
        %v4530 = vpack.c.bf16 %v4020, %v4021
        %v4531 = vpack.c.bf16 %v4102, %v4103
        %v4532 = vpack.c.bf16 %v3887, %v3886
        %v4533 = vpack.c.bf16 %v4225, %v4184
        %v4534 = vpack.c.bf16 %v4309, %v4268
        %v4535 = vpack.c.bf16 %v4393, %v4352
        %v4536 = vpack.c.bf16 %v3934, %v3935
        %v4537 = vpack.c.bf16 %v4018, %v4019
        %v4538 = vpack.c.bf16 %v3889, %v3888
        %v4539 = vpack.c.bf16 %v4307, %v4308
        %v4540 = vpack.c.bf16 %v4391, %v4392
        %v4541 = vld [vmem:[%s8] sm:$0xf]
        %v4542 = vld [vmem:[%s8 + $0x4] sm:$0xf]
        %v4543 = vld [vmem:[%s8 + $0x8] sm:$0xf]
        %v4544 = vld [vmem:[%s8 + $0xc] sm:$0xf]
        %v4545 = vld [vmem:[%s8 + $0x10] sm:$0xf]
        %v4546 = vld [vmem:[%s8 + $0x14] sm:$0xf]
        %v4547 = vld [vmem:[%s8 + $0x18] sm:$0xf]
        %v4548 = vld [vmem:[%s8 + $0x1c] sm:$0xf]
        %v4549 = vld [vmem:[%s8 + $0x20] sm:$0xf]
        %v4550 = vld [vmem:[%s8 + $0x24] sm:$0xf]
        %v4551 = vld [vmem:[%s8 + $0x28] sm:$0xf]
        %v4552 = vld [vmem:[%s8 + $0x2c] sm:$0xf]
        %v4553 = vld [vmem:[%s8 + $0x30] sm:$0xf]
        %v4554 = vld [vmem:[%s8 + $0x34] sm:$0xf]
        %v4555 = vld [vmem:[%s8 + $0x38] sm:$0xf]
        %v4556 = vld [vmem:[%s8 + $0x3c] sm:$0xf]
        %v4557 = vld [vmem:[%s8 + $0x40] sm:$0xf]
        %v4558 = vld [vmem:[%s8 + $0x44] sm:$0xf]
        %v4559 = vld [vmem:[%s8 + $0x48] sm:$0xf]
        %v4560 = vld [vmem:[%s8 + $0x4c] sm:$0xf]
        %v4561 = vld [vmem:[%s8 + $0x50] sm:$0xf]
        %v4562 = vld [vmem:[%s8 + $0x54] sm:$0xf]
        %v4563 = vld [vmem:[%s8 + $0x58] sm:$0xf]
        %v4564 = vld [vmem:[%s8 + $0x5c] sm:$0xf]
        %v4565 = vld [vmem:[%s8 + $0x60] sm:$0xf]
        %v4566 = vld [vmem:[%s8 + $0x64] sm:$0xf]
        %v4567 = vld [vmem:[%s8 + $0x68] sm:$0xf]
        %v4568 = vld [vmem:[%s8 + $0x6c] sm:$0xf]
        %v4569 = vld [vmem:[%s8 + $0x70] sm:$0xf]
        %v4570 = vld [vmem:[%s8 + $0x74] sm:$0xf]
        %v4571 = vld [vmem:[%s8 + $0x78] sm:$0xf]
        %v4572 = vld [vmem:[%s8 + $0x7c] sm:$0xf]
        %v4573 = vld [vmem:[%s8 + $0x80] sm:$0xf]
        %v4574 = vld [vmem:[%s8 + $0x84] sm:$0xf]
        %v4575 = vld [vmem:[%s8 + $0x88] sm:$0xf]
        %v4576 = vld [vmem:[%s8 + $0x8c] sm:$0xf]
        %v4577 = vld [vmem:[%s8 + $0x90] sm:$0xf]
        %v4578 = vld [vmem:[%s8 + $0x94] sm:$0xf]
        %v4579 = vld [vmem:[%s8 + $0x98] sm:$0xf]
        %v4580 = vld [vmem:[%s8 + $0x9c] sm:$0xf]
        %v4581 = vld [vmem:[%s8 + $0xa0] sm:$0xf]
        %v4582 = vld [vmem:[%s8 + $0xa4] sm:$0xf]
        %v4583 = vld [vmem:[%s8 + $0xa8] sm:$0xf]
        %v4584 = vld [vmem:[%s8 + $0xac] sm:$0xf]
        %v4585 = vld [vmem:[%s8 + $0xb0] sm:$0xf]
        %v4586 = vld [vmem:[%s8 + $0xb4] sm:$0xf]
        %v4587 = vld [vmem:[%s8 + $0xb8] sm:$0xf]
        %v4588 = vld [vmem:[%s8 + $0xbc] sm:$0xf]
        %v4589 = vld [vmem:[%s8 + $0xc0] sm:$0xf]
        %v4590 = vld [vmem:[%s8 + $0xc4] sm:$0xf]
        %v4591 = vld [vmem:[%s8 + $0xc8] sm:$0xf]
        %v4592 = vld [vmem:[%s8 + $0xcc] sm:$0xf]
        %v4593 = vld [vmem:[%s8 + $0xd0] sm:$0xf]
        %v4594 = vld [vmem:[%s8 + $0xd4] sm:$0xf]
        %v4595 = vld [vmem:[%s8 + $0xd8] sm:$0xf]
        %v4596 = vld [vmem:[%s8 + $0xdc] sm:$0xf]
        %v4597 = vld [vmem:[%s8 + $0xe0] sm:$0xf]
        %v4598 = vld [vmem:[%s8 + $0xe4] sm:$0xf]
        %v4599 = vld [vmem:[%s8 + $0xe8] sm:$0xf]
        %v4600 = vld [vmem:[%s8 + $0xec] sm:$0xf]
        %v4601 = vld [vmem:[%s8 + $0xf0] sm:$0xf]
        %v4602 = vld [vmem:[%s8 + $0xf4] sm:$0xf]
        %v4603 = vld [vmem:[%s8 + $0xf8] sm:$0xf]
        %v4604 = vld [vmem:[%s8 + $0xfc] sm:$0xf]
        %v4605 = vld [vmem:[%s8 + $0x100] sm:$0xf]
        %v4606 = vld [vmem:[%s8 + $0x104] sm:$0xf]
        %v4607 = vld [vmem:[%s8 + $0x108] sm:$0xf]
        %v4608 = vld [vmem:[%s8 + $0x10c] sm:$0xf]
        %v4609 = vld [vmem:[%s8 + $0x110] sm:$0xf]
        %v4610 = vld [vmem:[%s8 + $0x114] sm:$0xf]
        %v4611 = vld [vmem:[%s8 + $0x118] sm:$0xf]
        %v4612 = vld [vmem:[%s8 + $0x11c] sm:$0xf]
        %v4613 = vld [vmem:[%s8 + $0x120] sm:$0xf]
        %v4614 = vld [vmem:[%s8 + $0x124] sm:$0xf]
        %v4615 = vld [vmem:[%s8 + $0x128] sm:$0xf]
        %v4616 = vld [vmem:[%s8 + $0x12c] sm:$0xf]
        %v4617 = vld [vmem:[%s8 + $0x130] sm:$0xf]
        %v4618 = vld [vmem:[%s8 + $0x134] sm:$0xf]
        %v4619 = vld [vmem:[%s8 + $0x138] sm:$0xf]
        %v4620 = vld [vmem:[%s8 + $0x13c] sm:$0xf]
        %v4621 = vld [vmem:[%s8 + $0x140] sm:$0xf]
        %v4622 = vld [vmem:[%s8 + $0x144] sm:$0xf]
        %v4623 = vld [vmem:[%s8 + $0x148] sm:$0xf]
        %v4624 = vld [vmem:[%s8 + $0x14c] sm:$0xf]
        %v4625 = vld [vmem:[%s8 + $0x150] sm:$0xf]
        %v4626 = vld [vmem:[%s8 + $0x154] sm:$0xf]
        %v4627 = vld [vmem:[%s8 + $0x158] sm:$0xf]
        %v4628 = vld [vmem:[%s8 + $0x15c] sm:$0xf]
        %v4629 = vld [vmem:[%s8 + $0x160] sm:$0xf]
        %v4630 = vld [vmem:[%s8 + $0x164] sm:$0xf]
        %v4631 = vld [vmem:[%s8 + $0x168] sm:$0xf]
        %v4632 = vld [vmem:[%s8 + $0x16c] sm:$0xf]
        %v4633 = vld [vmem:[%s8 + $0x170] sm:$0xf]
        %v4634 = vld [vmem:[%s8 + $0x174] sm:$0xf]
        %v4635 = vld [vmem:[%s8 + $0x178] sm:$0xf]
        %v4636 = vld [vmem:[%s8 + $0x17c] sm:$0xf]
        %v4637 = vld [vmem:[%s8 + $0x180] sm:$0xf]
        %v4638 = vld [vmem:[%s8 + $0x184] sm:$0xf]
        %v4639 = vld [vmem:[%s8 + $0x188] sm:$0xf]
        %v4640 = vld [vmem:[%s8 + $0x18c] sm:$0xf]
        %v4641 = vld [vmem:[%s8 + $0x190] sm:$0xf]
        %v4642 = vld [vmem:[%s8 + $0x194] sm:$0xf]
        %v4643 = vld [vmem:[%s8 + $0x198] sm:$0xf]
        %v4644 = vld [vmem:[%s8 + $0x19c] sm:$0xf]
        %v4645 = vld [vmem:[%s8 + $0x1a0] sm:$0xf]
        %v4646 = vld [vmem:[%s8 + $0x1a4] sm:$0xf]
        %v4647 = vld [vmem:[%s8 + $0x1a8] sm:$0xf]
        %v4648 = vld [vmem:[%s8 + $0x1ac] sm:$0xf]
        %v4649 = vld [vmem:[%s8 + $0x1b0] sm:$0xf]
        %v4650 = vld [vmem:[%s8 + $0x1b4] sm:$0xf]
        %v4651 = vld [vmem:[%s8 + $0x1b8] sm:$0xf]
        %v4652 = vld [vmem:[%s8 + $0x1bc] sm:$0xf]
        %v4653 = vld [vmem:[%s8 + $0x1c0] sm:$0xf]
        %v4654 = vld [vmem:[%s8 + $0x1c4] sm:$0xf]
        %v4655 = vld [vmem:[%s8 + $0x1c8] sm:$0xf]
        %v4656 = vld [vmem:[%s8 + $0x1cc] sm:$0xf]
        %v4657 = vld [vmem:[%s8 + $0x1d0] sm:$0xf]
        %v4658 = vld [vmem:[%s8 + $0x1d4] sm:$0xf]
        %v4659 = vld [vmem:[%s8 + $0x1d8] sm:$0xf]
        %v4660 = vld [vmem:[%s8 + $0x1dc] sm:$0xf]
        %v4661 = vld [vmem:[%s8 + $0x1e0] sm:$0xf]
        %v4662 = vld [vmem:[%s8 + $0x1e4] sm:$0xf]
        %v4663 = vld [vmem:[%s8 + $0x1e8] sm:$0xf]
        %v4664 = vld [vmem:[%s8 + $0x1ec] sm:$0xf]
        %v4665 = vld [vmem:[%s8 + $0x1f0] sm:$0xf]
        %v4666 = vld [vmem:[%s8 + $0x1f4] sm:$0xf]
        %v4667 = vld [vmem:[%s8 + $0x1f8] sm:$0xf]
        %v4668 = vld [vmem:[%s8 + $0x1fc] sm:$0xf]
        %v4669 = vld [vmem:[%s8 + $0x200] sm:$0xf]
        %v4670 = vld [vmem:[%s8 + $0x204] sm:$0xf]
        %v4671 = vld [vmem:[%s8 + $0x208] sm:$0xf]
        %v4672 = vld [vmem:[%s8 + $0x20c] sm:$0xf]
        %v4673 = vld [vmem:[%s8 + $0x210] sm:$0xf]
        %v4674 = vld [vmem:[%s8 + $0x214] sm:$0xf]
        %v4675 = vld [vmem:[%s8 + $0x218] sm:$0xf]
        %v4676 = vld [vmem:[%s8 + $0x21c] sm:$0xf]
        %v4677 = vld [vmem:[%s8 + $0x220] sm:$0xf]
        %v4678 = vld [vmem:[%s8 + $0x224] sm:$0xf]
        %v4679 = vld [vmem:[%s8 + $0x228] sm:$0xf]
        %v4680 = vld [vmem:[%s8 + $0x22c] sm:$0xf]
        %v4681 = vld [vmem:[%s8 + $0x230] sm:$0xf]
        %v4682 = vld [vmem:[%s8 + $0x234] sm:$0xf]
        %v4683 = vld [vmem:[%s8 + $0x238] sm:$0xf]
        %v4684 = vld [vmem:[%s8 + $0x23c] sm:$0xf]
        %v4685 = vld [vmem:[%s9] sm:$0x1]
        %v4687 = vlaneseq
        %v4688 = vshrl.u32 %v4687, 7
        %v4689 = vsub.s32 0, %v4688
        %v4690 = vrot.slane %v4685, %v4689
        %v4836 = vunpack.c.l.b16 %v4541
        %v4837 = vunpack.c.l.b16 %v4542
        %v4838 = vunpack.c.l.b16 %v4543
        %v4839 = vunpack.c.l.b16 %v4544
        %v4840 = vunpack.c.l.b16 %v4545
        %v4841 = vunpack.c.l.b16 %v4546
        %v4842 = vunpack.c.l.b16 %v4547
        %v4843 = vunpack.c.l.b16 %v4548
        %v4844 = vunpack.c.l.b16 %v4549
        %v4845 = vunpack.c.l.b16 %v4550
        %v4846 = vunpack.c.l.b16 %v4551
        %v4847 = vunpack.c.l.b16 %v4552
        %v4848 = vunpack.c.l.b16 %v4553
        %v4849 = vunpack.c.l.b16 %v4554
        %v4850 = vunpack.c.l.b16 %v4555
        %v4851 = vunpack.c.l.b16 %v4556
        %v4852 = vunpack.c.l.b16 %v4557
        %v4853 = vunpack.c.l.b16 %v4558
        %v4854 = vunpack.c.l.b16 %v4559
        %v4855 = vunpack.c.l.b16 %v4560
        %v4856 = vunpack.c.l.b16 %v4561
        %v4857 = vunpack.c.l.b16 %v4562
        %v4858 = vunpack.c.l.b16 %v4563
        %v4859 = vunpack.c.l.b16 %v4564
        %v4860 = vunpack.c.l.b16 %v4565
        %v4861 = vunpack.c.l.b16 %v4566
        %v4862 = vunpack.c.l.b16 %v4567
        %v4863 = vunpack.c.l.b16 %v4568
        %v4864 = vunpack.c.l.b16 %v4569
        %v4865 = vunpack.c.l.b16 %v4570
        %v4866 = vunpack.c.l.b16 %v4571
        %v4867 = vunpack.c.l.b16 %v4572
        %v4868 = vunpack.c.l.b16 %v4573
        %v4869 = vunpack.c.l.b16 %v4574
        %v4870 = vunpack.c.l.b16 %v4575
        %v4871 = vunpack.c.l.b16 %v4576
        %v4872 = vunpack.c.l.b16 %v4577
        %v4873 = vunpack.c.l.b16 %v4578
        %v4874 = vunpack.c.l.b16 %v4579
        %v4875 = vunpack.c.l.b16 %v4580
        %v4876 = vunpack.c.l.b16 %v4581
        %v4877 = vunpack.c.l.b16 %v4582
        %v4878 = vunpack.c.l.b16 %v4583
        %v4879 = vunpack.c.l.b16 %v4584
        %v4880 = vunpack.c.l.b16 %v4585
        %v4881 = vunpack.c.l.b16 %v4586
        %v4882 = vunpack.c.l.b16 %v4587
        %v4883 = vunpack.c.l.b16 %v4588
        %v4884 = vunpack.c.l.b16 %v4589
        %v4885 = vunpack.c.l.b16 %v4590
        %v4886 = vunpack.c.l.b16 %v4591
        %v4887 = vunpack.c.l.b16 %v4592
        %v4888 = vunpack.c.l.b16 %v4593
        %v4889 = vunpack.c.l.b16 %v4594
        %v4890 = vunpack.c.l.b16 %v4595
        %v4891 = vunpack.c.l.b16 %v4596
        %v4892 = vunpack.c.l.b16 %v4597
        %v4893 = vunpack.c.l.b16 %v4598
        %v4894 = vunpack.c.l.b16 %v4599
        %v4895 = vunpack.c.l.b16 %v4600
        %v4896 = vunpack.c.l.b16 %v4601
        %v4897 = vunpack.c.l.b16 %v4602
        %v4898 = vunpack.c.l.b16 %v4603
        %v4899 = vunpack.c.l.b16 %v4604
        %v4900 = vunpack.c.l.b16 %v4605
        %v4901 = vunpack.c.l.b16 %v4606
        %v4902 = vunpack.c.l.b16 %v4607
        %v4903 = vunpack.c.l.b16 %v4608
        %v4904 = vunpack.c.l.b16 %v4609
        %v4905 = vunpack.c.l.b16 %v4610
        %v4906 = vunpack.c.l.b16 %v4611
        %v4907 = vunpack.c.l.b16 %v4612
        %v4908 = vunpack.c.l.b16 %v4613
        %v4909 = vunpack.c.l.b16 %v4614
        %v4910 = vunpack.c.l.b16 %v4615
        %v4911 = vunpack.c.l.b16 %v4616
        %v4912 = vunpack.c.l.b16 %v4617
        %v4913 = vunpack.c.l.b16 %v4618
        %v4914 = vunpack.c.l.b16 %v4619
        %v4915 = vunpack.c.l.b16 %v4620
        %v4916 = vunpack.c.l.b16 %v4621
        %v4917 = vunpack.c.l.b16 %v4622
        %v4918 = vunpack.c.l.b16 %v4623
        %v4919 = vunpack.c.l.b16 %v4624
        %v4920 = vunpack.c.l.b16 %v4625
        %v4921 = vunpack.c.l.b16 %v4626
        %v4922 = vunpack.c.l.b16 %v4627
        %v4923 = vunpack.c.l.b16 %v4628
        %v4924 = vunpack.c.l.b16 %v4629
        %v4925 = vunpack.c.l.b16 %v4630
        %v4926 = vunpack.c.l.b16 %v4631
        %v4927 = vunpack.c.l.b16 %v4632
        %v4928 = vunpack.c.l.b16 %v4633
        %v4929 = vunpack.c.l.b16 %v4634
        %v4930 = vunpack.c.l.b16 %v4635
        %v4931 = vunpack.c.l.b16 %v4636
        %v4932 = vunpack.c.l.b16 %v4637
        %v4933 = vunpack.c.l.b16 %v4638
        %v4934 = vunpack.c.l.b16 %v4639
        %v4935 = vunpack.c.l.b16 %v4640
        %v4936 = vunpack.c.l.b16 %v4641
        %v4937 = vunpack.c.l.b16 %v4642
        %v4938 = vunpack.c.l.b16 %v4643
        %v4939 = vunpack.c.l.b16 %v4644
        %v4940 = vunpack.c.l.b16 %v4645
        %v4941 = vunpack.c.l.b16 %v4646
        %v4942 = vunpack.c.l.b16 %v4647
        %v4943 = vunpack.c.l.b16 %v4648
        %v4944 = vunpack.c.l.b16 %v4649
        %v4945 = vunpack.c.l.b16 %v4650
        %v4946 = vunpack.c.l.b16 %v4651
        %v4947 = vunpack.c.l.b16 %v4652
        %v4948 = vunpack.c.l.b16 %v4653
        %v4949 = vunpack.c.l.b16 %v4654
        %v4950 = vunpack.c.l.b16 %v4655
        %v4951 = vunpack.c.l.b16 %v4656
        %v4952 = vunpack.c.l.b16 %v4657
        %v4953 = vunpack.c.l.b16 %v4658
        %v4954 = vunpack.c.l.b16 %v4659
        %v4955 = vunpack.c.l.b16 %v4660
        %v4956 = vunpack.c.l.b16 %v4661
        %v4957 = vunpack.c.l.b16 %v4662
        %v4958 = vunpack.c.l.b16 %v4663
        %v4959 = vunpack.c.l.b16 %v4664
        %v4960 = vunpack.c.l.b16 %v4665
        %v4961 = vunpack.c.l.b16 %v4666
        %v4962 = vunpack.c.l.b16 %v4667
        %v4963 = vunpack.c.l.b16 %v4668
        %v4964 = vunpack.c.l.b16 %v4669
        %v4965 = vunpack.c.l.b16 %v4670
        %v4966 = vunpack.c.l.b16 %v4671
        %v4967 = vunpack.c.l.b16 %v4672
        %v4968 = vunpack.c.l.b16 %v4673
        %v4969 = vunpack.c.l.b16 %v4674
        %v4970 = vunpack.c.l.b16 %v4675
        %v4971 = vunpack.c.l.b16 %v4676
        %v4972 = vunpack.c.l.b16 %v4677
        %v4973 = vunpack.c.l.b16 %v4678
        %v4974 = vunpack.c.l.b16 %v4679
        %v4975 = vunpack.c.l.b16 %v4680
        %v4976 = vunpack.c.l.b16 %v4681
        %v4977 = vunpack.c.l.b16 %v4682
        %v4978 = vunpack.c.l.b16 %v4683
        %v4979 = vunpack.c.l.b16 %v4684
        %v4980 = vpack.c.b16 %v4837, %v4836
        %v4981 = vpack.c.b16 %v4839, %v4838
        %v4982 = vpack.c.b16 %v4841, %v4840
        %v4983 = vpack.c.b16 %v4843, %v4842
        %v4984 = vpack.c.b16 %v4845, %v4844
        %v4985 = vpack.c.b16 %v4847, %v4846
        %v4986 = vpack.c.b16 %v4849, %v4848
        %v4987 = vpack.c.b16 %v4851, %v4850
        %v4988 = vpack.c.b16 %v4853, %v4852
        %v4989 = vpack.c.b16 %v4855, %v4854
        %v4990 = vpack.c.b16 %v4857, %v4856
        %v4991 = vpack.c.b16 %v4859, %v4858
        %v4992 = vpack.c.b16 %v4861, %v4860
        %v4993 = vpack.c.b16 %v4863, %v4862
        %v4994 = vpack.c.b16 %v4865, %v4864
        %v4995 = vpack.c.b16 %v4867, %v4866
        %v4996 = vpack.c.b16 %v4869, %v4868
        %v4997 = vpack.c.b16 %v4871, %v4870
        %v4998 = vpack.c.b16 %v4873, %v4872
        %v4999 = vpack.c.b16 %v4875, %v4874
        %v5000 = vpack.c.b16 %v4877, %v4876
        %v5001 = vpack.c.b16 %v4879, %v4878
        %v5002 = vpack.c.b16 %v4881, %v4880
        %v5003 = vpack.c.b16 %v4883, %v4882
        %v5004 = vpack.c.b16 %v4885, %v4884
        %v5005 = vpack.c.b16 %v4887, %v4886
        %v5006 = vpack.c.b16 %v4889, %v4888
        %v5007 = vpack.c.b16 %v4891, %v4890
        %v5008 = vpack.c.b16 %v4893, %v4892
        %v5009 = vpack.c.b16 %v4895, %v4894
        %v5010 = vpack.c.b16 %v4897, %v4896
        %v5011 = vpack.c.b16 %v4899, %v4898
        %v5012 = vpack.c.b16 %v4901, %v4900
        %v5013 = vpack.c.b16 %v4903, %v4902
        %v5014 = vpack.c.b16 %v4905, %v4904
        %v5015 = vpack.c.b16 %v4907, %v4906
        %v5016 = vpack.c.b16 %v4909, %v4908
        %v5017 = vpack.c.b16 %v4911, %v4910
        %v5018 = vpack.c.b16 %v4913, %v4912
        %v5019 = vpack.c.b16 %v4915, %v4914
        %v5020 = vpack.c.b16 %v4917, %v4916
        %v5021 = vpack.c.b16 %v4919, %v4918
        %v5022 = vpack.c.b16 %v4921, %v4920
        %v5023 = vpack.c.b16 %v4923, %v4922
        %v5024 = vpack.c.b16 %v4925, %v4924
        %v5025 = vpack.c.b16 %v4927, %v4926
        %v5026 = vpack.c.b16 %v4929, %v4928
        %v5027 = vpack.c.b16 %v4931, %v4930
        %v5028 = vpack.c.b16 %v4933, %v4932
        %v5029 = vpack.c.b16 %v4935, %v4934
        %v5030 = vpack.c.b16 %v4937, %v4936
        %v5031 = vpack.c.b16 %v4939, %v4938
        %v5032 = vpack.c.b16 %v4941, %v4940
        %v5033 = vpack.c.b16 %v4943, %v4942
        %v5034 = vpack.c.b16 %v4945, %v4944
        %v5035 = vpack.c.b16 %v4947, %v4946
        %v5036 = vpack.c.b16 %v4949, %v4948
        %v5037 = vpack.c.b16 %v4951, %v4950
        %v5038 = vpack.c.b16 %v4953, %v4952
        %v5039 = vpack.c.b16 %v4955, %v4954
        %v5040 = vpack.c.b16 %v4957, %v4956
        %v5041 = vpack.c.b16 %v4959, %v4958
        %v5042 = vpack.c.b16 %v4961, %v4960
        %v5043 = vpack.c.b16 %v4963, %v4962
        %v5044 = vpack.c.b16 %v4965, %v4964
        %v5045 = vpack.c.b16 %v4967, %v4966
        %v5046 = vpack.c.b16 %v4969, %v4968
        %v5047 = vpack.c.b16 %v4971, %v4970
        %v5048 = vpack.c.b16 %v4973, %v4972
        %v5049 = vpack.c.b16 %v4975, %v4974
        %v5050 = vpack.c.b16 %v4977, %v4976
        %v5051 = vpack.c.b16 %v4979, %v4978
        %5124 = vmatprep.subr.bf16.mxu0 0
        %5125 = vmatpush1.bf16.msra.mxu0 %v4987
        %5126 = vmatprep.subr.bf16.mxu0 0
        %5127 = vmatpush1.bf16.msra.mxu0 %v4986
        %5128 = vmatprep.subr.bf16.mxu0 0
        %5129 = vmatpush1.bf16.msra.mxu0 %v4985
        %5130 = vmatprep.subr.bf16.mxu0 0
        %5131 = vmatpush1.bf16.msra.mxu0 %v4984
        %5132 = vmatprep.subr.bf16.mxu0 0
        %5133 = vmatpush1.bf16.msra.mxu0 %v4983
        %5134 = vmatprep.subr.bf16.mxu0 0
        %5135 = vmatpush1.bf16.msra.mxu0 %v4982
        %5136 = vmatprep.subr.bf16.mxu0 0
        %5137 = vmatpush1.bf16.msra.mxu0 %v4981
        %5138 = vmatprep.subr.bf16.mxu0 0
        %5139 = vmatpush1.bf16.msra.mxu0 %v4980
        %5140 = vmatprep.subr.bf16.mxu0 0
        %5141 = vmatpush2.bf16.msra.mxu0 %v4995
        %5142 = vmatprep.subr.bf16.mxu0 0
        %5143 = vmatpush2.bf16.msra.mxu0 %v4994
        %5144 = vmatprep.subr.bf16.mxu0 0
        %5145 = vmatpush2.bf16.msra.mxu0 %v4993
        %5146 = vmatprep.subr.bf16.mxu0 0
        %5147 = vmatpush2.bf16.msra.mxu0 %v4992
        %5148 = vmatprep.subr.bf16.mxu0 0
        %5149 = vmatpush2.bf16.msra.mxu0 %v4991
        %5150 = vmatprep.subr.bf16.mxu0 0
        %5151 = vmatpush2.bf16.msra.mxu0 %v4990
        %5152 = vmatprep.subr.bf16.mxu0 0
        %5153 = vmatpush2.bf16.msra.mxu0 %v4989
        %5154 = vmatprep.subr.bf16.mxu0 0
        %5155 = vmatpush2.bf16.msra.mxu0 %v4988
        %5156 = vmatprep.mubr.bf16.mxu0 %v4395
        %5157 = vmatmul.mubr.bf16.gmra.mxu0 %v4394
        %v5158 = vpop.f32.mrf.mxu0
        %v5159 = vadd.f32 %v4690, %v5158
        %v5160 = vpop.f32.mrf.mxu0
        %v5161 = vpop.f32.mrf.mxu0
        %v5162 = vadd.f32 %v4690, %v5161
        %v5163 = vpop.f32.mrf.mxu0
        %5164 = vmatprep.mubr.bf16.mxu0 %v4404
        %5165 = vmatmul.mubr.bf16.gmra.mxu0 %v4403
        %v5166 = vpop.f32.mrf.mxu0
        %v5167 = vadd.f32 %v4690, %v5166
        %v5168 = vpop.f32.mrf.mxu0
        %v5169 = vpop.f32.mrf.mxu0
        %v5170 = vadd.f32 %v4690, %v5169
        %v5171 = vpop.f32.mrf.mxu0
        %5172 = vmatprep.mubr.bf16.mxu0 %v4411
        %5173 = vmatmul.mubr.bf16.gmra.mxu0 %v4410
        %v5174 = vpop.f32.mrf.mxu0
        %v5175 = vadd.f32 %v4690, %v5174
        %v5176 = vpop.f32.mrf.mxu0
        %v5177 = vpop.f32.mrf.mxu0
        %v5178 = vadd.f32 %v4690, %v5177
        %v5179 = vpop.f32.mrf.mxu0
        %5180 = vmatprep.mubr.bf16.mxu0 %v4418
        %5181 = vmatmul.mubr.bf16.gmra.mxu0 %v4417
        %v5182 = vpop.f32.mrf.mxu0
        %v5183 = vadd.f32 %v4690, %v5182
        %v5184 = vpop.f32.mrf.mxu0
        %v5185 = vpop.f32.mrf.mxu0
        %v5186 = vadd.f32 %v4690, %v5185
        %v5187 = vpop.f32.mrf.mxu0
        %5188 = vmatprep.mubr.bf16.mxu0 %v4425
        %5189 = vmatmul.mubr.bf16.gmra.mxu0 %v4424
        %v5190 = vpop.f32.mrf.mxu0
        %v5191 = vadd.f32 %v4690, %v5190
        %v5192 = vpop.f32.mrf.mxu0
        %v5193 = vpop.f32.mrf.mxu0
        %v5194 = vadd.f32 %v4690, %v5193
        %v5195 = vpop.f32.mrf.mxu0
        %5196 = vmatprep.mubr.bf16.mxu0 %v4432
        %5197 = vmatmul.mubr.bf16.gmra.mxu0 %v4431
        %v5198 = vpop.f32.mrf.mxu0
        %v5199 = vadd.f32 %v4690, %v5198
        %v5200 = vpop.f32.mrf.mxu0
        %v5201 = vpop.f32.mrf.mxu0
        %v5202 = vadd.f32 %v4690, %v5201
        %v5203 = vpop.f32.mrf.mxu0
        %5204 = vmatprep.mubr.bf16.mxu0 %v4439
        %5205 = vmatmul.mubr.bf16.gmra.mxu0 %v4438
        %v5206 = vpop.f32.mrf.mxu0
        %v5207 = vadd.f32 %v4690, %v5206
        %v5208 = vpop.f32.mrf.mxu0
        %v5209 = vpop.f32.mrf.mxu0
        %v5210 = vadd.f32 %v4690, %v5209
        %v5211 = vpop.f32.mrf.mxu0
        %5212 = vmatprep.mubr.bf16.mxu0 %v4446
        %5213 = vmatmul.mubr.bf16.gmra.mxu0 %v4445
        %v5214 = vpop.f32.mrf.mxu0
        %v5215 = vadd.f32 %v4690, %v5214
        %v5216 = vpop.f32.mrf.mxu0
        %v5217 = vpop.f32.mrf.mxu0
        %v5218 = vadd.f32 %v4690, %v5217
        %v5219 = vpop.f32.mrf.mxu0
        %5220 = vmatprep.mubr.bf16.mxu0 %v4453
        %5221 = vmatmul.mubr.bf16.gmra.mxu0 %v4452
        %v5222 = vpop.f32.mrf.mxu0
        %v5223 = vadd.f32 %v4690, %v5222
        %v5224 = vpop.f32.mrf.mxu0
        %v5225 = vpop.f32.mrf.mxu0
        %v5226 = vadd.f32 %v4690, %v5225
        %v5227 = vpop.f32.mrf.mxu0
        %5228 = vmatprep.mubr.bf16.mxu0 %v4460
        %5229 = vmatmul.mubr.bf16.gmra.mxu0 %v4459
        %v5230 = vpop.f32.mrf.mxu0
        %v5231 = vadd.f32 %v4690, %v5230
        %v5232 = vpop.f32.mrf.mxu0
        %v5233 = vpop.f32.mrf.mxu0
        %v5234 = vadd.f32 %v4690, %v5233
        %v5235 = vpop.f32.mrf.mxu0
        %5236 = vmatprep.mubr.bf16.mxu0 %v4467
        %5237 = vmatmul.mubr.bf16.gmra.mxu0 %v4466
        %v5238 = vpop.f32.mrf.mxu0
        %v5239 = vadd.f32 %v4690, %v5238
        %v5240 = vpop.f32.mrf.mxu0
        %v5241 = vpop.f32.mrf.mxu0
        %v5242 = vadd.f32 %v4690, %v5241
        %v5243 = vpop.f32.mrf.mxu0
        %5244 = vmatprep.mubr.bf16.mxu0 %v4474
        %5245 = vmatmul.mubr.bf16.gmra.mxu0 %v4473
        %v5246 = vpop.f32.mrf.mxu0
        %v5247 = vadd.f32 %v4690, %v5246
        %v5248 = vpop.f32.mrf.mxu0
        %v5249 = vpop.f32.mrf.mxu0
        %v5250 = vadd.f32 %v4690, %v5249
        %v5251 = vpop.f32.mrf.mxu0
        %5252 = vmatprep.mubr.bf16.mxu0 %v4481
        %5253 = vmatmul.mubr.bf16.gmra.mxu0 %v4480
        %v5254 = vpop.f32.mrf.mxu0
        %v5255 = vadd.f32 %v4690, %v5254
        %v5256 = vpop.f32.mrf.mxu0
        %v5257 = vpop.f32.mrf.mxu0
        %v5258 = vadd.f32 %v4690, %v5257
        %v5259 = vpop.f32.mrf.mxu0
        %5260 = vmatprep.mubr.bf16.mxu0 %v4488
        %5261 = vmatmul.mubr.bf16.gmra.mxu0 %v4487
        %v5262 = vpop.f32.mrf.mxu0
        %v5263 = vadd.f32 %v4690, %v5262
        %v5264 = vpop.f32.mrf.mxu0
        %v5265 = vpop.f32.mrf.mxu0
        %v5266 = vadd.f32 %v4690, %v5265
        %v5267 = vpop.f32.mrf.mxu0
        %5268 = vmatprep.mubr.bf16.mxu0 %v4495
        %5269 = vmatmul.mubr.bf16.gmra.mxu0 %v4494
        %v5270 = vpop.f32.mrf.mxu0
        %v5271 = vadd.f32 %v4690, %v5270
        %v5272 = vpop.f32.mrf.mxu0
        %v5273 = vpop.f32.mrf.mxu0
        %v5274 = vadd.f32 %v4690, %v5273
        %v5275 = vpop.f32.mrf.mxu0
        %5276 = vmatprep.mubr.bf16.mxu0 %v4502
        %5277 = vmatmul.mubr.bf16.gmra.mxu0 %v4501
        %v5278 = vpop.f32.mrf.mxu0
        %v5279 = vadd.f32 %v4690, %v5278
        %v5280 = vpop.f32.mrf.mxu0
        %v5281 = vpop.f32.mrf.mxu0
        %v5282 = vadd.f32 %v4690, %v5281
        %v5283 = vpop.f32.mrf.mxu0
        %5284 = vmatprep.mubr.bf16.mxu0 %v4509
        %5285 = vmatmul.mubr.bf16.gmra.mxu0 %v4508
        %v5286 = vpop.f32.mrf.mxu0
        %v5287 = vadd.f32 %v4690, %v5286
        %v5288 = vpop.f32.mrf.mxu0
        %v5289 = vpop.f32.mrf.mxu0
        %v5290 = vadd.f32 %v4690, %v5289
        %v5291 = vpop.f32.mrf.mxu0
        %5292 = vmatprep.mubr.bf16.mxu0 %v4516
        %5293 = vmatmul.mubr.bf16.gmra.mxu0 %v4515
        %v5294 = vpop.f32.mrf.mxu0
        %v5295 = vadd.f32 %v4690, %v5294
        %v5296 = vpop.f32.mrf.mxu0
        %v5297 = vpop.f32.mrf.mxu0
        %v5298 = vadd.f32 %v4690, %v5297
        %v5299 = vpop.f32.mrf.mxu0
        %5300 = vmatprep.mubr.bf16.mxu0 %v4523
        %5301 = vmatmul.mubr.bf16.gmra.mxu0 %v4522
        %v5302 = vpop.f32.mrf.mxu0
        %v5303 = vadd.f32 %v4690, %v5302
        %v5304 = vpop.f32.mrf.mxu0
        %v5305 = vpop.f32.mrf.mxu0
        %v5306 = vadd.f32 %v4690, %v5305
        %v5307 = vpop.f32.mrf.mxu0
        %5308 = vmatprep.mubr.bf16.mxu0 %v4530
        %5309 = vmatmul.mubr.bf16.gmra.mxu0 %v4529
        %v5310 = vpop.f32.mrf.mxu0
        %v5311 = vadd.f32 %v4690, %v5310
        %v5312 = vpop.f32.mrf.mxu0
        %v5313 = vpop.f32.mrf.mxu0
        %v5314 = vadd.f32 %v4690, %v5313
        %v5315 = vpop.f32.mrf.mxu0
        %5316 = vmatprep.mubr.bf16.mxu0 %v4537
        %5317 = vmatmul.mubr.bf16.gmra.mxu0 %v4536
        %v5318 = vpop.f32.mrf.mxu0
        %v5319 = vadd.f32 %v4690, %v5318
        %v5320 = vpop.f32.mrf.mxu0
        %v5321 = vpop.f32.mrf.mxu0
        %v5322 = vadd.f32 %v4690, %v5321
        %v5323 = vpop.f32.mrf.mxu0
        %5324 = vdwg.mxu0
        %5325 = vmatprep.subr.bf16.mxu0 0
        %5326 = vmatpush1.bf16.msra.mxu0 %v5003
        %5327 = vmatprep.subr.bf16.mxu0 0
        %5328 = vmatpush1.bf16.msra.mxu0 %v5002
        %5329 = vmatprep.subr.bf16.mxu0 0
        %5330 = vmatpush1.bf16.msra.mxu0 %v5001
        %5331 = vmatprep.subr.bf16.mxu0 0
        %5332 = vmatpush1.bf16.msra.mxu0 %v5000
        %5333 = vmatprep.subr.bf16.mxu0 0
        %5334 = vmatpush1.bf16.msra.mxu0 %v4999
        %5335 = vmatprep.subr.bf16.mxu0 0
        %5336 = vmatpush1.bf16.msra.mxu0 %v4998
        %5337 = vmatprep.subr.bf16.mxu0 0
        %5338 = vmatpush1.bf16.msra.mxu0 %v4997
        %5339 = vmatprep.subr.bf16.mxu0 0
        %5340 = vmatpush1.bf16.msra.mxu0 %v4996
        %5341 = vmatprep.subr.bf16.mxu0 0
        %5342 = vmatpush2.bf16.msra.mxu0 %v5011
        %5343 = vmatprep.subr.bf16.mxu0 0
        %5344 = vmatpush2.bf16.msra.mxu0 %v5010
        %5345 = vmatprep.subr.bf16.mxu0 0
        %5346 = vmatpush2.bf16.msra.mxu0 %v5009
        %5347 = vmatprep.subr.bf16.mxu0 0
        %5348 = vmatpush2.bf16.msra.mxu0 %v5008
        %5349 = vmatprep.subr.bf16.mxu0 0
        %5350 = vmatpush2.bf16.msra.mxu0 %v5007
        %5351 = vmatprep.subr.bf16.mxu0 0
        %5352 = vmatpush2.bf16.msra.mxu0 %v5006
        %5353 = vmatprep.subr.bf16.mxu0 0
        %5354 = vmatpush2.bf16.msra.mxu0 %v5005
        %5355 = vmatprep.subr.bf16.mxu0 0
        %5356 = vmatpush2.bf16.msra.mxu0 %v5004
        %5357 = vmatprep.mubr.bf16.mxu0 %v4397
        %5358 = vmatmul.mubr.bf16.gmra.mxu0 %v4396
        %v5359 = vpop.f32.mrf.mxu0
        %v5360 = vadd.f32 %v5159, %v5359
        %v5361 = vpop.f32.mrf.mxu0
        %v5362 = vpop.f32.mrf.mxu0
        %v5363 = vadd.f32 %v5162, %v5362
        %v5364 = vpop.f32.mrf.mxu0
        %5365 = vmatprep.mubr.bf16.mxu0 %v4405
        %5366 = vmatmul.mubr.bf16.gmra.mxu0 %v4397
        %v5367 = vpop.f32.mrf.mxu0
        %v5368 = vadd.f32 %v5167, %v5367
        %v5369 = vpop.f32.mrf.mxu0
        %v5370 = vpop.f32.mrf.mxu0
        %v5371 = vadd.f32 %v5170, %v5370
        %v5372 = vpop.f32.mrf.mxu0
        %5373 = vmatprep.mubr.bf16.mxu0 %v4412
        %5374 = vmatmul.mubr.bf16.gmra.mxu0 %v4405
        %v5375 = vpop.f32.mrf.mxu0
        %v5376 = vadd.f32 %v5175, %v5375
        %v5377 = vpop.f32.mrf.mxu0
        %v5378 = vpop.f32.mrf.mxu0
        %v5379 = vadd.f32 %v5178, %v5378
        %v5380 = vpop.f32.mrf.mxu0
        %5381 = vmatprep.mubr.bf16.mxu0 %v4419
        %5382 = vmatmul.mubr.bf16.gmra.mxu0 %v4412
        %v5383 = vpop.f32.mrf.mxu0
        %v5384 = vadd.f32 %v5183, %v5383
        %v5385 = vpop.f32.mrf.mxu0
        %v5386 = vpop.f32.mrf.mxu0
        %v5387 = vadd.f32 %v5186, %v5386
        %v5388 = vpop.f32.mrf.mxu0
        %5389 = vmatprep.mubr.bf16.mxu0 %v4426
        %5390 = vmatmul.mubr.bf16.gmra.mxu0 %v4419
        %v5391 = vpop.f32.mrf.mxu0
        %v5392 = vadd.f32 %v5191, %v5391
        %v5393 = vpop.f32.mrf.mxu0
        %v5394 = vpop.f32.mrf.mxu0
        %v5395 = vadd.f32 %v5194, %v5394
        %v5396 = vpop.f32.mrf.mxu0
        %5397 = vmatprep.mubr.bf16.mxu0 %v4433
        %5398 = vmatmul.mubr.bf16.gmra.mxu0 %v4426
        %v5399 = vpop.f32.mrf.mxu0
        %v5400 = vadd.f32 %v5199, %v5399
        %v5401 = vpop.f32.mrf.mxu0
        %v5402 = vpop.f32.mrf.mxu0
        %v5403 = vadd.f32 %v5202, %v5402
        %v5404 = vpop.f32.mrf.mxu0
        %5405 = vmatprep.mubr.bf16.mxu0 %v4440
        %5406 = vmatmul.mubr.bf16.gmra.mxu0 %v4433
        %v5407 = vpop.f32.mrf.mxu0
        %v5408 = vadd.f32 %v5207, %v5407
        %v5409 = vpop.f32.mrf.mxu0
        %v5410 = vpop.f32.mrf.mxu0
        %v5411 = vadd.f32 %v5210, %v5410
        %v5412 = vpop.f32.mrf.mxu0
        %5413 = vmatprep.mubr.bf16.mxu0 %v4447
        %5414 = vmatmul.mubr.bf16.gmra.mxu0 %v4440
        %v5415 = vpop.f32.mrf.mxu0
        %v5416 = vadd.f32 %v5215, %v5415
        %v5417 = vpop.f32.mrf.mxu0
        %v5418 = vpop.f32.mrf.mxu0
        %v5419 = vadd.f32 %v5218, %v5418
        %v5420 = vpop.f32.mrf.mxu0
        %5421 = vmatprep.mubr.bf16.mxu0 %v4454
        %5422 = vmatmul.mubr.bf16.gmra.mxu0 %v4447
        %v5423 = vpop.f32.mrf.mxu0
        %v5424 = vadd.f32 %v5223, %v5423
        %v5425 = vpop.f32.mrf.mxu0
        %v5426 = vpop.f32.mrf.mxu0
        %v5427 = vadd.f32 %v5226, %v5426
        %v5428 = vpop.f32.mrf.mxu0
        %5429 = vmatprep.mubr.bf16.mxu0 %v4461
        %5430 = vmatmul.mubr.bf16.gmra.mxu0 %v4454
        %v5431 = vpop.f32.mrf.mxu0
        %v5432 = vadd.f32 %v5231, %v5431
        %v5433 = vpop.f32.mrf.mxu0
        %v5434 = vpop.f32.mrf.mxu0
        %v5435 = vadd.f32 %v5234, %v5434
        %v5436 = vpop.f32.mrf.mxu0
        %5437 = vmatprep.mubr.bf16.mxu0 %v4468
        %5438 = vmatmul.mubr.bf16.gmra.mxu0 %v4461
        %v5439 = vpop.f32.mrf.mxu0
        %v5440 = vadd.f32 %v5239, %v5439
        %v5441 = vpop.f32.mrf.mxu0
        %v5442 = vpop.f32.mrf.mxu0
        %v5443 = vadd.f32 %v5242, %v5442
        %v5444 = vpop.f32.mrf.mxu0
        %5445 = vmatprep.mubr.bf16.mxu0 %v4475
        %5446 = vmatmul.mubr.bf16.gmra.mxu0 %v4468
        %v5447 = vpop.f32.mrf.mxu0
        %v5448 = vadd.f32 %v5247, %v5447
        %v5449 = vpop.f32.mrf.mxu0
        %v5450 = vpop.f32.mrf.mxu0
        %v5451 = vadd.f32 %v5250, %v5450
        %v5452 = vpop.f32.mrf.mxu0
        %5453 = vmatprep.mubr.bf16.mxu0 %v4482
        %5454 = vmatmul.mubr.bf16.gmra.mxu0 %v4475
        %v5455 = vpop.f32.mrf.mxu0
        %v5456 = vadd.f32 %v5255, %v5455
        %v5457 = vpop.f32.mrf.mxu0
        %v5458 = vpop.f32.mrf.mxu0
        %v5459 = vadd.f32 %v5258, %v5458
        %v5460 = vpop.f32.mrf.mxu0
        %5461 = vmatprep.mubr.bf16.mxu0 %v4489
        %5462 = vmatmul.mubr.bf16.gmra.mxu0 %v4482
        %v5463 = vpop.f32.mrf.mxu0
        %v5464 = vadd.f32 %v5263, %v5463
        %v5465 = vpop.f32.mrf.mxu0
        %v5466 = vpop.f32.mrf.mxu0
        %v5467 = vadd.f32 %v5266, %v5466
        %v5468 = vpop.f32.mrf.mxu0
        %5469 = vmatprep.mubr.bf16.mxu0 %v4496
        %5470 = vmatmul.mubr.bf16.gmra.mxu0 %v4489
        %v5471 = vpop.f32.mrf.mxu0
        %v5472 = vadd.f32 %v5271, %v5471
        %v5473 = vpop.f32.mrf.mxu0
        %v5474 = vpop.f32.mrf.mxu0
        %v5475 = vadd.f32 %v5274, %v5474
        %v5476 = vpop.f32.mrf.mxu0
        %5477 = vmatprep.mubr.bf16.mxu0 %v4503
        %5478 = vmatmul.mubr.bf16.gmra.mxu0 %v4496
        %v5479 = vpop.f32.mrf.mxu0
        %v5480 = vadd.f32 %v5279, %v5479
        %v5481 = vpop.f32.mrf.mxu0
        %v5482 = vpop.f32.mrf.mxu0
        %v5483 = vadd.f32 %v5282, %v5482
        %v5484 = vpop.f32.mrf.mxu0
        %5485 = vmatprep.mubr.bf16.mxu0 %v4510
        %5486 = vmatmul.mubr.bf16.gmra.mxu0 %v4503
        %v5487 = vpop.f32.mrf.mxu0
        %v5488 = vadd.f32 %v5287, %v5487
        %v5489 = vpop.f32.mrf.mxu0
        %v5490 = vpop.f32.mrf.mxu0
        %v5491 = vadd.f32 %v5290, %v5490
        %v5492 = vpop.f32.mrf.mxu0
        %5493 = vmatprep.mubr.bf16.mxu0 %v4517
        %5494 = vmatmul.mubr.bf16.gmra.mxu0 %v4510
        %v5495 = vpop.f32.mrf.mxu0
        %v5496 = vadd.f32 %v5295, %v5495
        %v5497 = vpop.f32.mrf.mxu0
        %v5498 = vpop.f32.mrf.mxu0
        %v5499 = vadd.f32 %v5298, %v5498
        %v5500 = vpop.f32.mrf.mxu0
        %5501 = vmatprep.mubr.bf16.mxu0 %v4524
        %5502 = vmatmul.mubr.bf16.gmra.mxu0 %v4517
        %v5503 = vpop.f32.mrf.mxu0
        %v5504 = vadd.f32 %v5303, %v5503
        %v5505 = vpop.f32.mrf.mxu0
        %v5506 = vpop.f32.mrf.mxu0
        %v5507 = vadd.f32 %v5306, %v5506
        %v5508 = vpop.f32.mrf.mxu0
        %5509 = vmatprep.mubr.bf16.mxu0 %v4531
        %5510 = vmatmul.mubr.bf16.gmra.mxu0 %v4524
        %v5511 = vpop.f32.mrf.mxu0
        %v5512 = vadd.f32 %v5311, %v5511
        %v5513 = vpop.f32.mrf.mxu0
        %v5514 = vpop.f32.mrf.mxu0
        %v5515 = vadd.f32 %v5314, %v5514
        %v5516 = vpop.f32.mrf.mxu0
        %5517 = vmatprep.mubr.bf16.mxu0 %v4396
        %5518 = vmatmul.mubr.bf16.gmra.mxu0 %v4531
        %v5519 = vpop.f32.mrf.mxu0
        %v5520 = vadd.f32 %v5319, %v5519
        %v5521 = vpop.f32.mrf.mxu0
        %v5522 = vpop.f32.mrf.mxu0
        %v5523 = vadd.f32 %v5322, %v5522
        %v5524 = vpop.f32.mrf.mxu0
        %5525 = vdwg.mxu0
        %5526 = vmatprep.subr.bf16.mxu0 0
        %5527 = vmatpush1.bf16.msra.mxu0 %v5019
        %5528 = vmatprep.subr.bf16.mxu0 0
        %5529 = vmatpush1.bf16.msra.mxu0 %v5018
        %5530 = vmatprep.subr.bf16.mxu0 0
        %5531 = vmatpush1.bf16.msra.mxu0 %v5017
        %5532 = vmatprep.subr.bf16.mxu0 0
        %5533 = vmatpush1.bf16.msra.mxu0 %v5016
        %5534 = vmatprep.subr.bf16.mxu0 0
        %5535 = vmatpush1.bf16.msra.mxu0 %v5015
        %5536 = vmatprep.subr.bf16.mxu0 0
        %5537 = vmatpush1.bf16.msra.mxu0 %v5014
        %5538 = vmatprep.subr.bf16.mxu0 0
        %5539 = vmatpush1.bf16.msra.mxu0 %v5013
        %5540 = vmatprep.subr.bf16.mxu0 0
        %5541 = vmatpush1.bf16.msra.mxu0 %v5012
        %5542 = vmatprep.subr.bf16.mxu0 0
        %5543 = vmatpush2.bf16.msra.mxu0 %v5027
        %5544 = vmatprep.subr.bf16.mxu0 0
        %5545 = vmatpush2.bf16.msra.mxu0 %v5026
        %5546 = vmatprep.subr.bf16.mxu0 0
        %5547 = vmatpush2.bf16.msra.mxu0 %v5025
        %5548 = vmatprep.subr.bf16.mxu0 0
        %5549 = vmatpush2.bf16.msra.mxu0 %v5024
        %5550 = vmatprep.subr.bf16.mxu0 0
        %5551 = vmatpush2.bf16.msra.mxu0 %v5023
        %5552 = vmatprep.subr.bf16.mxu0 0
        %5553 = vmatpush2.bf16.msra.mxu0 %v5022
        %5554 = vmatprep.subr.bf16.mxu0 0
        %5555 = vmatpush2.bf16.msra.mxu0 %v5021
        %5556 = vmatprep.subr.bf16.mxu0 0
        %5557 = vmatpush2.bf16.msra.mxu0 %v5020
        %5558 = vmatprep.mubr.bf16.mxu0 %v4399
        %5559 = vmatmul.mubr.bf16.gmra.mxu0 %v4398
        %v5560 = vpop.f32.mrf.mxu0
        %v5561 = vadd.f32 %v5360, %v5560
        %v5562 = vpop.f32.mrf.mxu0
        %v5563 = vpop.f32.mrf.mxu0
        %v5564 = vadd.f32 %v5363, %v5563
        %v5565 = vpop.f32.mrf.mxu0
        %5566 = vmatprep.mubr.bf16.mxu0 %v4400
        %5567 = vmatmul.mubr.bf16.gmra.mxu0 %v4406
        %v5568 = vpop.f32.mrf.mxu0
        %v5569 = vadd.f32 %v5368, %v5568
        %v5570 = vpop.f32.mrf.mxu0
        %v5571 = vpop.f32.mrf.mxu0
        %v5572 = vadd.f32 %v5371, %v5571
        %v5573 = vpop.f32.mrf.mxu0
        %5574 = vmatprep.mubr.bf16.mxu0 %v4407
        %5575 = vmatmul.mubr.bf16.gmra.mxu0 %v4413
        %v5576 = vpop.f32.mrf.mxu0
        %v5577 = vadd.f32 %v5376, %v5576
        %v5578 = vpop.f32.mrf.mxu0
        %v5579 = vpop.f32.mrf.mxu0
        %v5580 = vadd.f32 %v5379, %v5579
        %v5581 = vpop.f32.mrf.mxu0
        %5582 = vmatprep.mubr.bf16.mxu0 %v4414
        %5583 = vmatmul.mubr.bf16.gmra.mxu0 %v4420
        %v5584 = vpop.f32.mrf.mxu0
        %v5585 = vadd.f32 %v5384, %v5584
        %v5586 = vpop.f32.mrf.mxu0
        %v5587 = vpop.f32.mrf.mxu0
        %v5588 = vadd.f32 %v5387, %v5587
        %v5589 = vpop.f32.mrf.mxu0
        %5590 = vmatprep.mubr.bf16.mxu0 %v4421
        %5591 = vmatmul.mubr.bf16.gmra.mxu0 %v4427
        %v5592 = vpop.f32.mrf.mxu0
        %v5593 = vadd.f32 %v5392, %v5592
        %v5594 = vpop.f32.mrf.mxu0
        %v5595 = vpop.f32.mrf.mxu0
        %v5596 = vadd.f32 %v5395, %v5595
        %v5597 = vpop.f32.mrf.mxu0
        %5598 = vmatprep.mubr.bf16.mxu0 %v4428
        %5599 = vmatmul.mubr.bf16.gmra.mxu0 %v4434
        %v5600 = vpop.f32.mrf.mxu0
        %v5601 = vadd.f32 %v5400, %v5600
        %v5602 = vpop.f32.mrf.mxu0
        %v5603 = vpop.f32.mrf.mxu0
        %v5604 = vadd.f32 %v5403, %v5603
        %v5605 = vpop.f32.mrf.mxu0
        %5606 = vmatprep.mubr.bf16.mxu0 %v4435
        %5607 = vmatmul.mubr.bf16.gmra.mxu0 %v4441
        %v5608 = vpop.f32.mrf.mxu0
        %v5609 = vadd.f32 %v5408, %v5608
        %v5610 = vpop.f32.mrf.mxu0
        %v5611 = vpop.f32.mrf.mxu0
        %v5612 = vadd.f32 %v5411, %v5611
        %v5613 = vpop.f32.mrf.mxu0
        %5614 = vmatprep.mubr.bf16.mxu0 %v4442
        %5615 = vmatmul.mubr.bf16.gmra.mxu0 %v4448
        %v5616 = vpop.f32.mrf.mxu0
        %v5617 = vadd.f32 %v5416, %v5616
        %v5618 = vpop.f32.mrf.mxu0
        %v5619 = vpop.f32.mrf.mxu0
        %v5620 = vadd.f32 %v5419, %v5619
        %v5621 = vpop.f32.mrf.mxu0
        %5622 = vmatprep.mubr.bf16.mxu0 %v4449
        %5623 = vmatmul.mubr.bf16.gmra.mxu0 %v4455
        %v5624 = vpop.f32.mrf.mxu0
        %v5625 = vadd.f32 %v5424, %v5624
        %v5626 = vpop.f32.mrf.mxu0
        %v5627 = vpop.f32.mrf.mxu0
        %v5628 = vadd.f32 %v5427, %v5627
        %v5629 = vpop.f32.mrf.mxu0
        %5630 = vmatprep.mubr.bf16.mxu0 %v4456
        %5631 = vmatmul.mubr.bf16.gmra.mxu0 %v4462
        %v5632 = vpop.f32.mrf.mxu0
        %v5633 = vadd.f32 %v5432, %v5632
        %v5634 = vpop.f32.mrf.mxu0
        %v5635 = vpop.f32.mrf.mxu0
        %v5636 = vadd.f32 %v5435, %v5635
        %v5637 = vpop.f32.mrf.mxu0
        %5638 = vmatprep.mubr.bf16.mxu0 %v4463
        %5639 = vmatmul.mubr.bf16.gmra.mxu0 %v4469
        %v5640 = vpop.f32.mrf.mxu0
        %v5641 = vadd.f32 %v5440, %v5640
        %v5642 = vpop.f32.mrf.mxu0
        %v5643 = vpop.f32.mrf.mxu0
        %v5644 = vadd.f32 %v5443, %v5643
        %v5645 = vpop.f32.mrf.mxu0
        %5646 = vmatprep.mubr.bf16.mxu0 %v4470
        %5647 = vmatmul.mubr.bf16.gmra.mxu0 %v4476
        %v5648 = vpop.f32.mrf.mxu0
        %v5649 = vadd.f32 %v5448, %v5648
        %v5650 = vpop.f32.mrf.mxu0
        %v5651 = vpop.f32.mrf.mxu0
        %v5652 = vadd.f32 %v5451, %v5651
        %v5653 = vpop.f32.mrf.mxu0
        %5654 = vmatprep.mubr.bf16.mxu0 %v4477
        %5655 = vmatmul.mubr.bf16.gmra.mxu0 %v4483
        %v5656 = vpop.f32.mrf.mxu0
        %v5657 = vadd.f32 %v5456, %v5656
        %v5658 = vpop.f32.mrf.mxu0
        %v5659 = vpop.f32.mrf.mxu0
        %v5660 = vadd.f32 %v5459, %v5659
        %v5661 = vpop.f32.mrf.mxu0
        %5662 = vmatprep.mubr.bf16.mxu0 %v4484
        %5663 = vmatmul.mubr.bf16.gmra.mxu0 %v4490
        %v5664 = vpop.f32.mrf.mxu0
        %v5665 = vadd.f32 %v5464, %v5664
        %v5666 = vpop.f32.mrf.mxu0
        %v5667 = vpop.f32.mrf.mxu0
        %v5668 = vadd.f32 %v5467, %v5667
        %v5669 = vpop.f32.mrf.mxu0
        %5670 = vmatprep.mubr.bf16.mxu0 %v4491
        %5671 = vmatmul.mubr.bf16.gmra.mxu0 %v4497
        %v5672 = vpop.f32.mrf.mxu0
        %v5673 = vadd.f32 %v5472, %v5672
        %v5674 = vpop.f32.mrf.mxu0
        %v5675 = vpop.f32.mrf.mxu0
        %v5676 = vadd.f32 %v5475, %v5675
        %v5677 = vpop.f32.mrf.mxu0
        %5678 = vmatprep.mubr.bf16.mxu0 %v4498
        %5679 = vmatmul.mubr.bf16.gmra.mxu0 %v4504
        %v5680 = vpop.f32.mrf.mxu0
        %v5681 = vadd.f32 %v5480, %v5680
        %v5682 = vpop.f32.mrf.mxu0
        %v5683 = vpop.f32.mrf.mxu0
        %v5684 = vadd.f32 %v5483, %v5683
        %v5685 = vpop.f32.mrf.mxu0
        %5686 = vmatprep.mubr.bf16.mxu0 %v4505
        %5687 = vmatmul.mubr.bf16.gmra.mxu0 %v4511
        %v5688 = vpop.f32.mrf.mxu0
        %v5689 = vadd.f32 %v5488, %v5688
        %v5690 = vpop.f32.mrf.mxu0
        %v5691 = vpop.f32.mrf.mxu0
        %v5692 = vadd.f32 %v5491, %v5691
        %v5693 = vpop.f32.mrf.mxu0
        %5694 = vmatprep.mubr.bf16.mxu0 %v4512
        %5695 = vmatmul.mubr.bf16.gmra.mxu0 %v4518
        %v5696 = vpop.f32.mrf.mxu0
        %v5697 = vadd.f32 %v5496, %v5696
        %v5698 = vpop.f32.mrf.mxu0
        %v5699 = vpop.f32.mrf.mxu0
        %v5700 = vadd.f32 %v5499, %v5699
        %v5701 = vpop.f32.mrf.mxu0
        %5702 = vmatprep.mubr.bf16.mxu0 %v4519
        %5703 = vmatmul.mubr.bf16.gmra.mxu0 %v4525
        %v5704 = vpop.f32.mrf.mxu0
        %v5705 = vadd.f32 %v5504, %v5704
        %v5706 = vpop.f32.mrf.mxu0
        %v5707 = vpop.f32.mrf.mxu0
        %v5708 = vadd.f32 %v5507, %v5707
        %v5709 = vpop.f32.mrf.mxu0
        %5710 = vmatprep.mubr.bf16.mxu0 %v4526
        %5711 = vmatmul.mubr.bf16.gmra.mxu0 %v4532
        %v5712 = vpop.f32.mrf.mxu0
        %v5713 = vadd.f32 %v5512, %v5712
        %v5714 = vpop.f32.mrf.mxu0
        %v5715 = vpop.f32.mrf.mxu0
        %v5716 = vadd.f32 %v5515, %v5715
        %v5717 = vpop.f32.mrf.mxu0
        %5718 = vmatprep.mubr.bf16.mxu0 %v4533
        %5719 = vmatmul.mubr.bf16.gmra.mxu0 %v4538
        %v5720 = vpop.f32.mrf.mxu0
        %v5721 = vadd.f32 %v5520, %v5720
        %v5722 = vpop.f32.mrf.mxu0
        %v5723 = vpop.f32.mrf.mxu0
        %v5724 = vadd.f32 %v5523, %v5723
        %v5725 = vpop.f32.mrf.mxu0
        %5726 = vdwg.mxu0
        %5727 = vmatprep.subr.bf16.mxu0 0
        %5728 = vmatpush1.bf16.msra.mxu0 %v5035
        %5729 = vmatprep.subr.bf16.mxu0 0
        %5730 = vmatpush1.bf16.msra.mxu0 %v5034
        %5731 = vmatprep.subr.bf16.mxu0 0
        %5732 = vmatpush1.bf16.msra.mxu0 %v5033
        %5733 = vmatprep.subr.bf16.mxu0 0
        %5734 = vmatpush1.bf16.msra.mxu0 %v5032
        %5735 = vmatprep.subr.bf16.mxu0 0
        %5736 = vmatpush1.bf16.msra.mxu0 %v5031
        %5737 = vmatprep.subr.bf16.mxu0 0
        %5738 = vmatpush1.bf16.msra.mxu0 %v5030
        %5739 = vmatprep.subr.bf16.mxu0 0
        %5740 = vmatpush1.bf16.msra.mxu0 %v5029
        %5741 = vmatprep.subr.bf16.mxu0 0
        %5742 = vmatpush1.bf16.msra.mxu0 %v5028
        %5743 = vmatprep.subr.bf16.mxu0 0
        %5744 = vmatpush2.bf16.msra.mxu0 %v5043
        %5745 = vmatprep.subr.bf16.mxu0 0
        %5746 = vmatpush2.bf16.msra.mxu0 %v5042
        %5747 = vmatprep.subr.bf16.mxu0 0
        %5748 = vmatpush2.bf16.msra.mxu0 %v5041
        %5749 = vmatprep.subr.bf16.mxu0 0
        %5750 = vmatpush2.bf16.msra.mxu0 %v5040
        %5751 = vmatprep.subr.bf16.mxu0 0
        %5752 = vmatpush2.bf16.msra.mxu0 %v5039
        %5753 = vmatprep.subr.bf16.mxu0 0
        %5754 = vmatpush2.bf16.msra.mxu0 %v5038
        %5755 = vmatprep.subr.bf16.mxu0 0
        %5756 = vmatpush2.bf16.msra.mxu0 %v5037
        %5757 = vmatprep.subr.bf16.mxu0 0
        %5758 = vmatpush2.bf16.msra.mxu0 %v5036
        %5759 = vmatprep.mubr.bf16.mxu0 %v4401
        %5760 = vmatmul.mubr.bf16.gmra.mxu0 %v4400
        %v5761 = vpop.f32.mrf.mxu0
        %v5762 = vadd.f32 %v5561, %v5761
        %v5763 = vpop.f32.mrf.mxu0
        %v5764 = vpop.f32.mrf.mxu0
        %v5765 = vadd.f32 %v5564, %v5764
        %v5766 = vpop.f32.mrf.mxu0
        %5767 = vmatprep.mubr.bf16.mxu0 %v4408
        %5768 = vmatmul.mubr.bf16.gmra.mxu0 %v4407
        %v5769 = vpop.f32.mrf.mxu0
        %v5770 = vadd.f32 %v5569, %v5769
        %v5771 = vpop.f32.mrf.mxu0
        %v5772 = vpop.f32.mrf.mxu0
        %v5773 = vadd.f32 %v5572, %v5772
        %v5774 = vpop.f32.mrf.mxu0
        %5775 = vmatprep.mubr.bf16.mxu0 %v4415
        %5776 = vmatmul.mubr.bf16.gmra.mxu0 %v4414
        %v5777 = vpop.f32.mrf.mxu0
        %v5778 = vadd.f32 %v5577, %v5777
        %v5779 = vpop.f32.mrf.mxu0
        %v5780 = vpop.f32.mrf.mxu0
        %v5781 = vadd.f32 %v5580, %v5780
        %v5782 = vpop.f32.mrf.mxu0
        %5783 = vmatprep.mubr.bf16.mxu0 %v4422
        %5784 = vmatmul.mubr.bf16.gmra.mxu0 %v4421
        %v5785 = vpop.f32.mrf.mxu0
        %v5786 = vadd.f32 %v5585, %v5785
        %v5787 = vpop.f32.mrf.mxu0
        %v5788 = vpop.f32.mrf.mxu0
        %v5789 = vadd.f32 %v5588, %v5788
        %v5790 = vpop.f32.mrf.mxu0
        %5791 = vmatprep.mubr.bf16.mxu0 %v4429
        %5792 = vmatmul.mubr.bf16.gmra.mxu0 %v4428
        %v5793 = vpop.f32.mrf.mxu0
        %v5794 = vadd.f32 %v5593, %v5793
        %v5795 = vpop.f32.mrf.mxu0
        %v5796 = vpop.f32.mrf.mxu0
        %v5797 = vadd.f32 %v5596, %v5796
        %v5798 = vpop.f32.mrf.mxu0
        %5799 = vmatprep.mubr.bf16.mxu0 %v4436
        %5800 = vmatmul.mubr.bf16.gmra.mxu0 %v4435
        %v5801 = vpop.f32.mrf.mxu0
        %v5802 = vadd.f32 %v5601, %v5801
        %v5803 = vpop.f32.mrf.mxu0
        %v5804 = vpop.f32.mrf.mxu0
        %v5805 = vadd.f32 %v5604, %v5804
        %v5806 = vpop.f32.mrf.mxu0
        %5807 = vmatprep.mubr.bf16.mxu0 %v4443
        %5808 = vmatmul.mubr.bf16.gmra.mxu0 %v4442
        %v5809 = vpop.f32.mrf.mxu0
        %v5810 = vadd.f32 %v5609, %v5809
        %v5811 = vpop.f32.mrf.mxu0
        %v5812 = vpop.f32.mrf.mxu0
        %v5813 = vadd.f32 %v5612, %v5812
        %v5814 = vpop.f32.mrf.mxu0
        %5815 = vmatprep.mubr.bf16.mxu0 %v4450
        %5816 = vmatmul.mubr.bf16.gmra.mxu0 %v4449
        %v5817 = vpop.f32.mrf.mxu0
        %v5818 = vadd.f32 %v5617, %v5817
        %v5819 = vpop.f32.mrf.mxu0
        %v5820 = vpop.f32.mrf.mxu0
        %v5821 = vadd.f32 %v5620, %v5820
        %v5822 = vpop.f32.mrf.mxu0
        %5823 = vmatprep.mubr.bf16.mxu0 %v4457
        %5824 = vmatmul.mubr.bf16.gmra.mxu0 %v4456
        %v5825 = vpop.f32.mrf.mxu0
        %v5826 = vadd.f32 %v5625, %v5825
        %v5827 = vpop.f32.mrf.mxu0
        %v5828 = vpop.f32.mrf.mxu0
        %v5829 = vadd.f32 %v5628, %v5828
        %v5830 = vpop.f32.mrf.mxu0
        %5831 = vmatprep.mubr.bf16.mxu0 %v4464
        %5832 = vmatmul.mubr.bf16.gmra.mxu0 %v4463
        %v5833 = vpop.f32.mrf.mxu0
        %v5834 = vadd.f32 %v5633, %v5833
        %v5835 = vpop.f32.mrf.mxu0
        %v5836 = vpop.f32.mrf.mxu0
        %v5837 = vadd.f32 %v5636, %v5836
        %v5838 = vpop.f32.mrf.mxu0
        %5839 = vmatprep.mubr.bf16.mxu0 %v4471
        %5840 = vmatmul.mubr.bf16.gmra.mxu0 %v4470
        %v5841 = vpop.f32.mrf.mxu0
        %v5842 = vadd.f32 %v5641, %v5841
        %v5843 = vpop.f32.mrf.mxu0
        %v5844 = vpop.f32.mrf.mxu0
        %v5845 = vadd.f32 %v5644, %v5844
        %v5846 = vpop.f32.mrf.mxu0
        %5847 = vmatprep.mubr.bf16.mxu0 %v4478
        %5848 = vmatmul.mubr.bf16.gmra.mxu0 %v4477
        %v5849 = vpop.f32.mrf.mxu0
        %v5850 = vadd.f32 %v5649, %v5849
        %v5851 = vpop.f32.mrf.mxu0
        %v5852 = vpop.f32.mrf.mxu0
        %v5853 = vadd.f32 %v5652, %v5852
        %v5854 = vpop.f32.mrf.mxu0
        %5855 = vmatprep.mubr.bf16.mxu0 %v4485
        %5856 = vmatmul.mubr.bf16.gmra.mxu0 %v4484
        %v5857 = vpop.f32.mrf.mxu0
        %v5858 = vadd.f32 %v5657, %v5857
        %v5859 = vpop.f32.mrf.mxu0
        %v5860 = vpop.f32.mrf.mxu0
        %v5861 = vadd.f32 %v5660, %v5860
        %v5862 = vpop.f32.mrf.mxu0
        %5863 = vmatprep.mubr.bf16.mxu0 %v4492
        %5864 = vmatmul.mubr.bf16.gmra.mxu0 %v4491
        %v5865 = vpop.f32.mrf.mxu0
        %v5866 = vadd.f32 %v5665, %v5865
        %v5867 = vpop.f32.mrf.mxu0
        %v5868 = vpop.f32.mrf.mxu0
        %v5869 = vadd.f32 %v5668, %v5868
        %v5870 = vpop.f32.mrf.mxu0
        %5871 = vmatprep.mubr.bf16.mxu0 %v4499
        %5872 = vmatmul.mubr.bf16.gmra.mxu0 %v4498
        %v5873 = vpop.f32.mrf.mxu0
        %v5874 = vadd.f32 %v5673, %v5873
        %v5875 = vpop.f32.mrf.mxu0
        %v5876 = vpop.f32.mrf.mxu0
        %v5877 = vadd.f32 %v5676, %v5876
        %v5878 = vpop.f32.mrf.mxu0
        %5879 = vmatprep.mubr.bf16.mxu0 %v4506
        %5880 = vmatmul.mubr.bf16.gmra.mxu0 %v4505
        %v5881 = vpop.f32.mrf.mxu0
        %v5882 = vadd.f32 %v5681, %v5881
        %v5883 = vpop.f32.mrf.mxu0
        %v5884 = vpop.f32.mrf.mxu0
        %v5885 = vadd.f32 %v5684, %v5884
        %v5886 = vpop.f32.mrf.mxu0
        %5887 = vmatprep.mubr.bf16.mxu0 %v4513
        %5888 = vmatmul.mubr.bf16.gmra.mxu0 %v4512
        %v5889 = vpop.f32.mrf.mxu0
        %v5890 = vadd.f32 %v5689, %v5889
        %v5891 = vpop.f32.mrf.mxu0
        %v5892 = vpop.f32.mrf.mxu0
        %v5893 = vadd.f32 %v5692, %v5892
        %v5894 = vpop.f32.mrf.mxu0
        %5895 = vmatprep.mubr.bf16.mxu0 %v4520
        %5896 = vmatmul.mubr.bf16.gmra.mxu0 %v4519
        %v5897 = vpop.f32.mrf.mxu0
        %v5898 = vadd.f32 %v5697, %v5897
        %v5899 = vpop.f32.mrf.mxu0
        %v5900 = vpop.f32.mrf.mxu0
        %v5901 = vadd.f32 %v5700, %v5900
        %v5902 = vpop.f32.mrf.mxu0
        %5903 = vmatprep.mubr.bf16.mxu0 %v4527
        %5904 = vmatmul.mubr.bf16.gmra.mxu0 %v4526
        %v5905 = vpop.f32.mrf.mxu0
        %v5906 = vadd.f32 %v5705, %v5905
        %v5907 = vpop.f32.mrf.mxu0
        %v5908 = vpop.f32.mrf.mxu0
        %v5909 = vadd.f32 %v5708, %v5908
        %v5910 = vpop.f32.mrf.mxu0
        %5911 = vmatprep.mubr.bf16.mxu0 %v4534
        %5912 = vmatmul.mubr.bf16.gmra.mxu0 %v4533
        %v5913 = vpop.f32.mrf.mxu0
        %v5914 = vadd.f32 %v5713, %v5913
        %v5915 = vpop.f32.mrf.mxu0
        %v5916 = vpop.f32.mrf.mxu0
        %v5917 = vadd.f32 %v5716, %v5916
        %v5918 = vpop.f32.mrf.mxu0
        %5919 = vmatprep.mubr.bf16.mxu0 %v4539
        %5920 = vmatmul.mubr.bf16.gmra.mxu0 %v4399
        %v5921 = vpop.f32.mrf.mxu0
        %v5922 = vadd.f32 %v5721, %v5921
        %v5923 = vpop.f32.mrf.mxu0
        %v5924 = vpop.f32.mrf.mxu0
        %v5925 = vadd.f32 %v5724, %v5924
        %v5926 = vpop.f32.mrf.mxu0
        %5927 = vdwg.mxu0
        %5928 = vmatprep.subr.bf16.mxu0 0
        %5929 = vmatpush1.bf16.msra.mxu0 %v5051
        %5930 = vmatprep.subr.bf16.mxu0 0
        %5931 = vmatpush1.bf16.msra.mxu0 %v5050
        %5932 = vmatprep.subr.bf16.mxu0 0
        %5933 = vmatpush1.bf16.msra.mxu0 %v5049
        %5934 = vmatprep.subr.bf16.mxu0 0
        %5935 = vmatpush1.bf16.msra.mxu0 %v5048
        %5936 = vmatprep.subr.bf16.mxu0 0
        %5937 = vmatpush1.bf16.msra.mxu0 %v5047
        %5938 = vmatprep.subr.bf16.mxu0 0
        %5939 = vmatpush1.bf16.msra.mxu0 %v5046
        %5940 = vmatprep.subr.bf16.mxu0 0
        %5941 = vmatpush1.bf16.msra.mxu0 %v5045
        %5942 = vmatprep.subr.bf16.mxu0 0
        %5943 = vmatpush1.bf16.msra.mxu0 %v5044
        %5944 = vmatprep.subr.bf16.mxu0 0
        %5945 = vmatpush2.bf16.msra.mxu0 0
        %5946 = vmatprep.subr.bf16.mxu0 0
        %5947 = vmatpush2.bf16.msra.mxu0 0
        %5948 = vmatprep.subr.bf16.mxu0 0
        %5949 = vmatpush2.bf16.msra.mxu0 0
        %5950 = vmatprep.subr.bf16.mxu0 0
        %5951 = vmatpush2.bf16.msra.mxu0 0
        %5952 = vmatprep.subr.bf16.mxu0 0
        %5953 = vmatpush2.bf16.msra.mxu0 0
        %5954 = vmatprep.subr.bf16.mxu0 0
        %5955 = vmatpush2.bf16.msra.mxu0 0
        %5956 = vmatprep.subr.bf16.mxu0 0
        %5957 = vmatpush2.bf16.msra.mxu0 0
        %5958 = vmatprep.subr.bf16.mxu0 0
        %5959 = vmatpush2.bf16.msra.mxu0 0
        %5960 = vmatprep.mubr.bf16.mxu0 0
        %5961 = vmatmul.mubr.bf16.gmra.mxu0 %v4402
        %v5962 = vpop.f32.mrf.mxu0
        %v5963 = vadd.f32 %v5762, %v5962
        %v5964 = vpop.f32.mrf.mxu0
        %v5965 = vpop.f32.mrf.mxu0
        %v5966 = vadd.f32 %v5765, %v5965
        %v5967 = vpop.f32.mrf.mxu0
        %5968 = vmatprep.mubr.bf16.mxu0 0
        %5969 = vmatmul.mubr.bf16.gmra.mxu0 %v4409
        %v5970 = vpop.f32.mrf.mxu0
        %v5971 = vadd.f32 %v5770, %v5970
        %v5972 = vpop.f32.mrf.mxu0
        %v5973 = vpop.f32.mrf.mxu0
        %v5974 = vadd.f32 %v5773, %v5973
        %v5975 = vpop.f32.mrf.mxu0
        %5976 = vmatprep.mubr.bf16.mxu0 0
        %5977 = vmatmul.mubr.bf16.gmra.mxu0 %v4416
        %v5978 = vpop.f32.mrf.mxu0
        %v5979 = vadd.f32 %v5778, %v5978
        %v5980 = vpop.f32.mrf.mxu0
        %v5981 = vpop.f32.mrf.mxu0
        %v5982 = vadd.f32 %v5781, %v5981
        %v5983 = vpop.f32.mrf.mxu0
        %5984 = vmatprep.mubr.bf16.mxu0 0
        %5985 = vmatmul.mubr.bf16.gmra.mxu0 %v4423
        %v5986 = vpop.f32.mrf.mxu0
        %v5987 = vadd.f32 %v5786, %v5986
        %v5988 = vpop.f32.mrf.mxu0
        %v5989 = vpop.f32.mrf.mxu0
        %v5990 = vadd.f32 %v5789, %v5989
        %v5991 = vpop.f32.mrf.mxu0
        %5992 = vmatprep.mubr.bf16.mxu0 0
        %5993 = vmatmul.mubr.bf16.gmra.mxu0 %v4430
        %v5994 = vpop.f32.mrf.mxu0
        %v5995 = vadd.f32 %v5794, %v5994
        %v5996 = vpop.f32.mrf.mxu0
        %v5997 = vpop.f32.mrf.mxu0
        %v5998 = vadd.f32 %v5797, %v5997
        %v5999 = vpop.f32.mrf.mxu0
        %6000 = vmatprep.mubr.bf16.mxu0 0
        %6001 = vmatmul.mubr.bf16.gmra.mxu0 %v4437
        %v6002 = vpop.f32.mrf.mxu0
        %v6003 = vadd.f32 %v5802, %v6002
        %v6004 = vpop.f32.mrf.mxu0
        %v6005 = vpop.f32.mrf.mxu0
        %v6006 = vadd.f32 %v5805, %v6005
        %v6007 = vpop.f32.mrf.mxu0
        %6008 = vmatprep.mubr.bf16.mxu0 0
        %6009 = vmatmul.mubr.bf16.gmra.mxu0 %v4444
        %v6010 = vpop.f32.mrf.mxu0
        %v6011 = vadd.f32 %v5810, %v6010
        %v6012 = vpop.f32.mrf.mxu0
        %v6013 = vpop.f32.mrf.mxu0
        %v6014 = vadd.f32 %v5813, %v6013
        %v6015 = vpop.f32.mrf.mxu0
        %6016 = vmatprep.mubr.bf16.mxu0 0
        %6017 = vmatmul.mubr.bf16.gmra.mxu0 %v4451
        %v6018 = vpop.f32.mrf.mxu0
        %v6019 = vadd.f32 %v5818, %v6018
        %v6020 = vpop.f32.mrf.mxu0
        %v6021 = vpop.f32.mrf.mxu0
        %v6022 = vadd.f32 %v5821, %v6021
        %v6023 = vpop.f32.mrf.mxu0
        %6024 = vmatprep.mubr.bf16.mxu0 0
        %6025 = vmatmul.mubr.bf16.gmra.mxu0 %v4458
        %v6026 = vpop.f32.mrf.mxu0
        %v6027 = vadd.f32 %v5826, %v6026
        %v6028 = vpop.f32.mrf.mxu0
        %v6029 = vpop.f32.mrf.mxu0
        %v6030 = vadd.f32 %v5829, %v6029
        %v6031 = vpop.f32.mrf.mxu0
        %6032 = vmatprep.mubr.bf16.mxu0 0
        %6033 = vmatmul.mubr.bf16.gmra.mxu0 %v4465
        %v6034 = vpop.f32.mrf.mxu0
        %v6035 = vadd.f32 %v5834, %v6034
        %v6036 = vpop.f32.mrf.mxu0
        %v6037 = vpop.f32.mrf.mxu0
        %v6038 = vadd.f32 %v5837, %v6037
        %v6039 = vpop.f32.mrf.mxu0
        %6040 = vmatprep.mubr.bf16.mxu0 0
        %6041 = vmatmul.mubr.bf16.gmra.mxu0 %v4472
        %v6042 = vpop.f32.mrf.mxu0
        %v6043 = vadd.f32 %v5842, %v6042
        %v6044 = vpop.f32.mrf.mxu0
        %v6045 = vpop.f32.mrf.mxu0
        %v6046 = vadd.f32 %v5845, %v6045
        %v6047 = vpop.f32.mrf.mxu0
        %6048 = vmatprep.mubr.bf16.mxu0 0
        %6049 = vmatmul.mubr.bf16.gmra.mxu0 %v4479
        %v6050 = vpop.f32.mrf.mxu0
        %v6051 = vadd.f32 %v5850, %v6050
        %v6052 = vpop.f32.mrf.mxu0
        %v6053 = vpop.f32.mrf.mxu0
        %v6054 = vadd.f32 %v5853, %v6053
        %v6055 = vpop.f32.mrf.mxu0
        %6056 = vmatprep.mubr.bf16.mxu0 0
        %6057 = vmatmul.mubr.bf16.gmra.mxu0 %v4486
        %v6058 = vpop.f32.mrf.mxu0
        %v6059 = vadd.f32 %v5858, %v6058
        %v6060 = vpop.f32.mrf.mxu0
        %v6061 = vpop.f32.mrf.mxu0
        %v6062 = vadd.f32 %v5861, %v6061
        %v6063 = vpop.f32.mrf.mxu0
        %6064 = vmatprep.mubr.bf16.mxu0 0
        %6065 = vmatmul.mubr.bf16.gmra.mxu0 %v4493
        %v6066 = vpop.f32.mrf.mxu0
        %v6067 = vadd.f32 %v5866, %v6066
        %v6068 = vpop.f32.mrf.mxu0
        %v6069 = vpop.f32.mrf.mxu0
        %v6070 = vadd.f32 %v5869, %v6069
        %v6071 = vpop.f32.mrf.mxu0
        %6072 = vmatprep.mubr.bf16.mxu0 0
        %6073 = vmatmul.mubr.bf16.gmra.mxu0 %v4500
        %v6074 = vpop.f32.mrf.mxu0
        %v6075 = vadd.f32 %v5874, %v6074
        %v6076 = vpop.f32.mrf.mxu0
        %v6077 = vpop.f32.mrf.mxu0
        %v6078 = vadd.f32 %v5877, %v6077
        %v6079 = vpop.f32.mrf.mxu0
        %6080 = vmatprep.mubr.bf16.mxu0 0
        %6081 = vmatmul.mubr.bf16.gmra.mxu0 %v4507
        %v6082 = vpop.f32.mrf.mxu0
        %v6083 = vadd.f32 %v5882, %v6082
        %v6084 = vpop.f32.mrf.mxu0
        %v6085 = vpop.f32.mrf.mxu0
        %v6086 = vadd.f32 %v5885, %v6085
        %v6087 = vpop.f32.mrf.mxu0
        %6088 = vmatprep.mubr.bf16.mxu0 0
        %6089 = vmatmul.mubr.bf16.gmra.mxu0 %v4514
        %v6090 = vpop.f32.mrf.mxu0
        %v6091 = vadd.f32 %v5890, %v6090
        %v6092 = vpop.f32.mrf.mxu0
        %v6093 = vpop.f32.mrf.mxu0
        %v6094 = vadd.f32 %v5893, %v6093
        %v6095 = vpop.f32.mrf.mxu0
        %6096 = vmatprep.mubr.bf16.mxu0 0
        %6097 = vmatmul.mubr.bf16.gmra.mxu0 %v4521
        %v6098 = vpop.f32.mrf.mxu0
        %v6099 = vadd.f32 %v5898, %v6098
        %v6100 = vpop.f32.mrf.mxu0
        %v6101 = vpop.f32.mrf.mxu0
        %v6102 = vadd.f32 %v5901, %v6101
        %v6103 = vpop.f32.mrf.mxu0
        %6104 = vmatprep.mubr.bf16.mxu0 0
        %6105 = vmatmul.mubr.bf16.gmra.mxu0 %v4528
        %v6106 = vpop.f32.mrf.mxu0
        %v6107 = vadd.f32 %v5906, %v6106
        %v6108 = vpop.f32.mrf.mxu0
        %v6109 = vpop.f32.mrf.mxu0
        %v6110 = vadd.f32 %v5909, %v6109
        %v6111 = vpop.f32.mrf.mxu0
        %6112 = vmatprep.mubr.bf16.mxu0 0
        %6113 = vmatmul.mubr.bf16.gmra.mxu0 %v4535
        %v6114 = vpop.f32.mrf.mxu0
        %v6115 = vadd.f32 %v5914, %v6114
        %v6116 = vpop.f32.mrf.mxu0
        %v6117 = vpop.f32.mrf.mxu0
        %v6118 = vadd.f32 %v5917, %v6117
        %v6119 = vpop.f32.mrf.mxu0
        %6120 = vmatprep.mubr.bf16.mxu0 0
        %6121 = vmatmul.mubr.bf16.gmra.mxu0 %v4540
        %v6122 = vpop.f32.mrf.mxu0
        %v6123 = vadd.f32 %v5922, %v6122
        %v6124 = vpop.f32.mrf.mxu0
        %v6125 = vpop.f32.mrf.mxu0
        %v6126 = vadd.f32 %v5925, %v6125
        %v6127 = vpop.f32.mrf.mxu0
        %6128 = vdwg.mxu0
        %v6129 = vadd.f32 %v5963, %v1517
        %v6130 = vadd.f32 %v5966, %v1518
        %v6131 = vadd.f32 %v5971, %v1519
        %v6132 = vadd.f32 %v5974, %v1520
        %v6133 = vadd.f32 %v5979, %v1521
        %v6134 = vadd.f32 %v5982, %v1522
        %v6135 = vadd.f32 %v5987, %v1523
        %v6136 = vadd.f32 %v5990, %v1524
        %v6137 = vadd.f32 %v5995, %v1525
        %v6138 = vadd.f32 %v5998, %v1526
        %v6139 = vadd.f32 %v6003, %v1527
        %v6140 = vadd.f32 %v6006, %v1528
        %v6141 = vadd.f32 %v6011, %v1529
        %v6142 = vadd.f32 %v6014, %v1530
        %v6143 = vadd.f32 %v6019, %v1531
        %v6144 = vadd.f32 %v6022, %v1532
        %v6145 = vadd.f32 %v6027, %v1533
        %v6146 = vadd.f32 %v6030, %v1534
        %v6147 = vadd.f32 %v6035, %v1535
        %v6148 = vadd.f32 %v6038, %v1536
        %v6149 = vadd.f32 %v6043, %v1537
        %v6150 = vadd.f32 %v6046, %v1538
        %v6151 = vadd.f32 %v6051, %v1539
        %v6152 = vadd.f32 %v6054, %v1540
        %v6153 = vadd.f32 %v6059, %v1541
        %v6154 = vadd.f32 %v6062, %v1542
        %v6155 = vadd.f32 %v6067, %v1543
        %v6156 = vadd.f32 %v6070, %v1544
        %v6157 = vadd.f32 %v6075, %v1545
        %v6158 = vadd.f32 %v6078, %v1546
        %v6159 = vadd.f32 %v6083, %v1547
        %v6160 = vadd.f32 %v6086, %v1548
        %v6161 = vadd.f32 %v6091, %v1549
        %v6162 = vadd.f32 %v6094, %v1550
        %v6163 = vadd.f32 %v6099, %v1551
        %v6164 = vadd.f32 %v6102, %v1552
        %v6165 = vadd.f32 %v6107, %v1553
        %v6166 = vadd.f32 %v6110, %v1554
        %v6167 = vadd.f32 %v6115, %v1555
        %v6168 = vadd.f32 %v6118, %v1556
        %v6169 = vadd.f32 %v6123, %v1557
        %v6170 = vadd.f32 %v6126, %v1558
        %v6171 = vmax.f32 %v6129, 0.0
        %v6172 = vmax.f32 %v6130, 0.0
        %v6173 = vmax.f32 %v6131, 0.0
        %v6174 = vmax.f32 %v6132, 0.0
        %v6175 = vmax.f32 %v6133, 0.0
        %v6176 = vmax.f32 %v6134, 0.0
        %v6177 = vmax.f32 %v6135, 0.0
        %v6178 = vmax.f32 %v6136, 0.0
        %v6179 = vmax.f32 %v6137, 0.0
        %v6180 = vmax.f32 %v6138, 0.0
        %v6181 = vmax.f32 %v6139, 0.0
        %v6182 = vmax.f32 %v6140, 0.0
        %v6183 = vmax.f32 %v6141, 0.0
        %v6184 = vmax.f32 %v6142, 0.0
        %v6185 = vmax.f32 %v6143, 0.0
        %v6186 = vmax.f32 %v6144, 0.0
        %v6187 = vmax.f32 %v6145, 0.0
        %v6188 = vmax.f32 %v6146, 0.0
        %v6189 = vmax.f32 %v6147, 0.0
        %v6190 = vmax.f32 %v6148, 0.0
        %v6191 = vmax.f32 %v6149, 0.0
        %v6192 = vmax.f32 %v6150, 0.0
        %v6193 = vmax.f32 %v6151, 0.0
        %v6194 = vmax.f32 %v6152, 0.0
        %v6195 = vmax.f32 %v6153, 0.0
        %v6196 = vmax.f32 %v6154, 0.0
        %v6197 = vmax.f32 %v6155, 0.0
        %v6198 = vmax.f32 %v6156, 0.0
        %v6199 = vmax.f32 %v6157, 0.0
        %v6200 = vmax.f32 %v6158, 0.0
        %v6201 = vmax.f32 %v6159, 0.0
        %v6202 = vmax.f32 %v6160, 0.0
        %v6203 = vmax.f32 %v6161, 0.0
        %v6204 = vmax.f32 %v6162, 0.0
        %v6205 = vmax.f32 %v6163, 0.0
        %v6206 = vmax.f32 %v6164, 0.0
        %v6207 = vmax.f32 %v6165, 0.0
        %v6208 = vmax.f32 %v6166, 0.0
        %v6209 = vmax.f32 %v6167, 0.0
        %v6210 = vmax.f32 %v6168, 0.0
        %v6211 = vmax.f32 %v6169, 0.0
        %v6212 = vmax.f32 %v6170, 0.0
        %v6213 = vmul.f32 %v6171, %v1310
        %v6214 = vmul.f32 %v6172, %v1315
        %v6215 = vmul.f32 %v6173, %v1320
        %v6216 = vmul.f32 %v6174, %v1325
        %v6217 = vmul.f32 %v6175, %v1330
        %v6218 = vmul.f32 %v6176, %v1335
        %v6219 = vmul.f32 %v6177, %v1340
        %v6220 = vmul.f32 %v6178, %v1345
        %v6221 = vmul.f32 %v6179, %v1350
        %v6222 = vmul.f32 %v6180, %v1355
        %v6223 = vmul.f32 %v6181, %v1360
        %v6224 = vmul.f32 %v6182, %v1365
        %v6225 = vmul.f32 %v6183, %v1370
        %v6226 = vmul.f32 %v6184, %v1375
        %v6227 = vmul.f32 %v6185, %v1380
        %v6228 = vmul.f32 %v6186, %v1385
        %v6229 = vmul.f32 %v6187, %v1390
        %v6230 = vmul.f32 %v6188, %v1395
        %v6231 = vmul.f32 %v6189, %v1400
        %v6232 = vmul.f32 %v6190, %v1405
        %v6233 = vmul.f32 %v6191, %v1410
        %v6234 = vmul.f32 %v6192, %v1415
        %v6235 = vmul.f32 %v6193, %v1420
        %v6236 = vmul.f32 %v6194, %v1425
        %v6237 = vmul.f32 %v6195, %v1430
        %v6238 = vmul.f32 %v6196, %v1435
        %v6239 = vmul.f32 %v6197, %v1440
        %v6240 = vmul.f32 %v6198, %v1445
        %v6241 = vmul.f32 %v6199, %v1450
        %v6242 = vmul.f32 %v6200, %v1455
        %v6243 = vmul.f32 %v6201, %v1460
        %v6244 = vmul.f32 %v6202, %v1465
        %v6245 = vmul.f32 %v6203, %v1470
        %v6246 = vmul.f32 %v6204, %v1475
        %v6247 = vmul.f32 %v6205, %v1480
        %v6248 = vmul.f32 %v6206, %v1485
        %v6249 = vmul.f32 %v6207, %v1490
        %v6250 = vmul.f32 %v6208, %v1495
        %v6251 = vmul.f32 %v6209, %v1500
        %v6252 = vmul.f32 %v6210, %v1505
        %v6253 = vmul.f32 %v6211, %v1510
        %v6254 = vmul.f32 %v6212, %v1515
        %v6255 = vadd.f32 %v6213, %v6214
        %v6256 = vadd.f32 %v6255, %v6215
        %v6257 = vadd.f32 %v6256, %v6216
        %v6258 = vadd.f32 %v6257, %v6217
        %v6259 = vadd.f32 %v6258, %v6218
        %v6260 = vadd.f32 %v6259, %v6219
        %v6261 = vadd.f32 %v6260, %v6220
        %v6262 = vadd.f32 %v6261, %v6221
        %v6263 = vadd.f32 %v6262, %v6222
        %v6264 = vadd.f32 %v6263, %v6223
        %v6265 = vadd.f32 %v6264, %v6224
        %v6266 = vadd.f32 %v6265, %v6225
        %v6267 = vadd.f32 %v6266, %v6226
        %v6268 = vadd.f32 %v6267, %v6227
        %v6269 = vadd.f32 %v6268, %v6228
        %v6270 = vadd.f32 %v6269, %v6229
        %v6271 = vadd.f32 %v6270, %v6230
        %v6272 = vadd.f32 %v6271, %v6231
        %v6273 = vadd.f32 %v6272, %v6232
        %v6274 = vadd.f32 %v6273, %v6233
        %v6275 = vadd.f32 %v6274, %v6234
        %v6276 = vadd.f32 %v6275, %v6235
        %v6277 = vadd.f32 %v6276, %v6236
        %v6278 = vadd.f32 %v6277, %v6237
        %v6279 = vadd.f32 %v6278, %v6238
        %v6280 = vadd.f32 %v6279, %v6239
        %v6281 = vadd.f32 %v6280, %v6240
        %v6282 = vadd.f32 %v6281, %v6241
        %v6283 = vadd.f32 %v6282, %v6242
        %v6284 = vadd.f32 %v6283, %v6243
        %v6285 = vadd.f32 %v6284, %v6244
        %v6286 = vadd.f32 %v6285, %v6245
        %v6287 = vadd.f32 %v6286, %v6246
        %v6288 = vadd.f32 %v6287, %v6247
        %v6289 = vadd.f32 %v6288, %v6248
        %v6290 = vadd.f32 %v6289, %v6249
        %v6291 = vadd.f32 %v6290, %v6250
        %v6292 = vadd.f32 %v6291, %v6251
        %v6293 = vadd.f32 %v6292, %v6252
        %v6294 = vadd.f32 %v6293, %v6253
        %v6295 = vadd.f32 %v6294, %v6254
        %v6296 = vrot.slane %v6295, 4
        %v6297 = vadd.f32 %v6295, %v6296
        %v6298 = vrot.slane %v6297, 2
        %v6299 = vadd.f32 %v6297, %v6298
        %v6300 = vrot.slane %v6299, 1
        %v6301 = vadd.f32 %v6299, %v6300
        %v6302 = vmul.f32 %v6301, 0.00390625
        %v6303 = vld [vmem:[%s10] sm:$0xff]
        %v6304 = vld [vmem:[%s10 + $0x8] sm:$0xff]
        %v6305 = vld [vmem:[%s10 + $0x10] sm:$0xff]
        %v6306 = vld [vmem:[%s10 + $0x18] sm:$0xff]
        %v6307 = vld [vmem:[%s10 + $0x20] sm:$0xff]
        %v6308 = vld [vmem:[%s10 + $0x28] sm:$0xff]
        %v6309 = vld [vmem:[%s10 + $0x30] sm:$0xff]
        %v6310 = vld [vmem:[%s10 + $0x38] sm:$0xff]
        %v6311 = vld [vmem:[%s10 + $0x40] sm:$0xff]
        %v6312 = vld [vmem:[%s10 + $0x48] sm:$0xff]
        %v6313 = vld [vmem:[%s10 + $0x50] sm:$0xff]
        %v6314 = vld [vmem:[%s10 + $0x58] sm:$0xff]
        %v6315 = vld [vmem:[%s10 + $0x60] sm:$0xff]
        %v6316 = vld [vmem:[%s10 + $0x68] sm:$0xff]
        %v6317 = vld [vmem:[%s10 + $0x70] sm:$0xff]
        %v6318 = vld [vmem:[%s10 + $0x78] sm:$0xff]
        %v6319 = vld [vmem:[%s11] sm:$0x1]
        %6320 = vmatprep.subr.mxu0 0.0
        %6321 = vmatpush1.msra.mxu0 %v6318
        %6322 = vmatprep.subr.mxu0 0.0
        %6323 = vmatpush1.msra.mxu0 %v6317
        %6324 = vmatprep.subr.mxu0 0.0
        %6325 = vmatpush1.msra.mxu0 %v6316
        %6326 = vmatprep.subr.mxu0 0.0
        %6327 = vmatpush1.msra.mxu0 %v6315
        %6328 = vmatprep.subr.mxu0 0.0
        %6329 = vmatpush1.msra.mxu0 %v6314
        %6330 = vmatprep.subr.mxu0 0.0
        %6331 = vmatpush1.msra.mxu0 %v6313
        %6332 = vmatprep.subr.mxu0 0.0
        %6333 = vmatpush1.msra.mxu0 %v6312
        %6334 = vmatprep.subr.mxu0 0.0
        %6335 = vmatpush1.msra.mxu0 %v6311
        %6336 = vmatprep.subr.mxu0 0.0
        %6337 = vmatpush1.msra.mxu0 %v6310
        %6338 = vmatprep.subr.mxu0 0.0
        %6339 = vmatpush1.msra.mxu0 %v6309
        %6340 = vmatprep.subr.mxu0 0.0
        %6341 = vmatpush1.msra.mxu0 %v6308
        %6342 = vmatprep.subr.mxu0 0.0
        %6343 = vmatpush1.msra.mxu0 %v6307
        %6344 = vmatprep.subr.mxu0 0.0
        %6345 = vmatpush1.msra.mxu0 %v6306
        %6346 = vmatprep.subr.mxu0 0.0
        %6347 = vmatpush1.msra.mxu0 %v6305
        %6348 = vmatprep.subr.mxu0 0.0
        %6349 = vmatpush1.msra.mxu0 %v6304
        %6350 = vmatprep.subr.mxu0 0.0
        %6351 = vmatpush1.msra.mxu0 %v6303
        %6352 = vmatprep.subr.mxu0 0.0
        %6353 = vmatpush2.msra.mxu0 0.0
        %6354 = vmatprep.subr.mxu0 0.0
        %6355 = vmatpush2.msra.mxu0 0.0
        %6356 = vmatprep.subr.mxu0 0.0
        %6357 = vmatpush2.msra.mxu0 0.0
        %6358 = vmatprep.subr.mxu0 0.0
        %6359 = vmatpush2.msra.mxu0 0.0
        %6360 = vmatprep.subr.mxu0 0.0
        %6361 = vmatpush2.msra.mxu0 0.0
        %6362 = vmatprep.subr.mxu0 0.0
        %6363 = vmatpush2.msra.mxu0 0.0
        %6364 = vmatprep.subr.mxu0 0.0
        %6365 = vmatpush2.msra.mxu0 0.0
        %6366 = vmatprep.subr.mxu0 0.0
        %6367 = vmatpush2.msra.mxu0 0.0
        %6368 = vmatprep.subr.mxu0 0.0
        %6369 = vmatpush2.msra.mxu0 0.0
        %6370 = vmatprep.subr.mxu0 0.0
        %6371 = vmatpush2.msra.mxu0 0.0
        %6372 = vmatprep.subr.mxu0 0.0
        %6373 = vmatpush2.msra.mxu0 0.0
        %6374 = vmatprep.subr.mxu0 0.0
        %6375 = vmatpush2.msra.mxu0 0.0
        %6376 = vmatprep.subr.mxu0 0.0
        %6377 = vmatpush2.msra.mxu0 0.0
        %6378 = vmatprep.subr.mxu0 0.0
        %6379 = vmatpush2.msra.mxu0 0.0
        %6380 = vmatprep.subr.mxu0 0.0
        %6381 = vmatpush2.msra.mxu0 0.0
        %6382 = vmatprep.subr.mxu0 0.0
        %6383 = vmatpush2.msra.mxu0 0.0
        %6384 = vmatprep.mubr.f32.mxu0 0.0
        %6385 = vmatmul.mubr.f32.gmra.mxu0 %v6302
        %v6386 = vpop.f32.mrf.mxu0
        %v6387 = vadd.f32 %v6319, %v6386
        %v6388 = vpop.f32.mrf.mxu0
        %6389 = vdwg.mxu0
        %v6390 = vld [vmem:[%s781] sm:$0xf]
        %v6391 = vld [vmem:[%s781 + $0x4] sm:$0xf]
        %v6392 = vld [vmem:[%s781 + $0x8] sm:$0xf]
        %v6393 = vld [vmem:[%s781 + $0xc] sm:$0xf]
        %v6394 = vld [vmem:[%s781 + $0x10] sm:$0xf]
        %v6395 = vld [vmem:[%s781 + $0x14] sm:$0xf]
        %v6396 = vld [vmem:[%s781 + $0x18] sm:$0xf]
        %v6397 = vld [vmem:[%s781 + $0x1c] sm:$0xf]
        %v6398 = vld [vmem:[%s781 + $0x20] sm:$0xf]
        %v6399 = vld [vmem:[%s781 + $0x24] sm:$0xf]
        %v6400 = vld [vmem:[%s781 + $0x28] sm:$0xf]
        %v6401 = vld [vmem:[%s781 + $0x2c] sm:$0xf]
        %v6402 = vld [vmem:[%s781 + $0x30] sm:$0xf]
        %v6403 = vld [vmem:[%s781 + $0x34] sm:$0xf]
        %v6404 = vld [vmem:[%s3] sm:$0xff]
        %v6405 = vld [vmem:[%s3 + $0x8] sm:$0xff]
        %v6406 = vld [vmem:[%s3 + $0x10] sm:$0xff]
        %v6407 = vld [vmem:[%s3 + $0x18] sm:$0xff]
        %v6408 = vld [vmem:[%s3 + $0x20] sm:$0xff]
        %v6409 = vld [vmem:[%s3 + $0x28] sm:$0xff]
        %v6410 = vld [vmem:[%s3 + $0x30] sm:$0xff]
        %v6411 = vld [vmem:[%s3 + $0x38] sm:$0xff]
        %v6412 = vld [vmem:[%s3 + $0x40] sm:$0xff]
        %v6413 = vld [vmem:[%s3 + $0x48] sm:$0xff]
        %v6414 = vld [vmem:[%s3 + $0x50] sm:$0xff]
        %v6415 = vld [vmem:[%s3 + $0x58] sm:$0xff]
        %v6416 = vld [vmem:[%s3 + $0x60] sm:$0xff]
        %v6417 = vld [vmem:[%s3 + $0x68] sm:$0xff]
        %v6418 = vld [vmem:[%s12] sm:$0xf]
        %v6419 = vld [vmem:[%s12 + $0x4] sm:$0xf]
        %v6420 = vld [vmem:[%s12 + $0x8] sm:$0xf]
        %v6421 = vld [vmem:[%s12 + $0xc] sm:$0xf]
        %v6422 = vld [vmem:[%s12 + $0x10] sm:$0xf]
        %v6423 = vld [vmem:[%s12 + $0x14] sm:$0xf]
        %v6424 = vld [vmem:[%s12 + $0x18] sm:$0xf]
        %v6425 = vld [vmem:[%s12 + $0x1c] sm:$0xf]
        %v6426 = vld [vmem:[%s12 + $0x20] sm:$0xf]
        %v6427 = vld [vmem:[%s12 + $0x24] sm:$0xf]
        %v6428 = vld [vmem:[%s12 + $0x28] sm:$0xf]
        %v6429 = vld [vmem:[%s12 + $0x2c] sm:$0xf]
        %v6430 = vld [vmem:[%s12 + $0x30] sm:$0xf]
        %v6431 = vld [vmem:[%s12 + $0x34] sm:$0xf]
        %v6432 = vld [vmem:[%s12 + $0x38] sm:$0xf]
        %v6433 = vld [vmem:[%s12 + $0x3c] sm:$0xf]
        %v6434 = vld [vmem:[%s13] sm:$0x1]
        %v6436 = vlaneseq
        %v6437 = vshrl.u32 %v6436, 7
        %v6438 = vsub.s32 0, %v6437
        %v6439 = vrot.slane %v6434, %v6438
        %v6455 = vunpack.c.l.b16 %v6390
        %v6456 = vunpack.c.l.b16 %v6391
        %v6457 = vunpack.c.l.b16 %v6392
        %v6458 = vunpack.c.l.b16 %v6393
        %v6459 = vunpack.c.l.b16 %v6394
        %v6460 = vunpack.c.l.b16 %v6395
        %v6461 = vunpack.c.l.b16 %v6396
        %v6462 = vunpack.c.l.b16 %v6397
        %v6463 = vunpack.c.l.b16 %v6398
        %v6464 = vunpack.c.l.b16 %v6399
        %v6465 = vunpack.c.l.b16 %v6400
        %v6466 = vunpack.c.l.b16 %v6401
        %v6467 = vunpack.c.l.b16 %v6402
        %v6468 = vunpack.c.l.b16 %v6403
        %v6469 = vpack.c.b16 %v6456, %v6455
        %v6470 = vpack.c.b16 %v6458, %v6457
        %v6471 = vpack.c.b16 %v6460, %v6459
        %v6472 = vpack.c.b16 %v6462, %v6461
        %v6473 = vpack.c.b16 %v6464, %v6463
        %v6474 = vpack.c.b16 %v6466, %v6465
        %v6475 = vpack.c.b16 %v6468, %v6467
        %v6499 = vunpack.c.l.b16 %v6418
        %v6500 = vunpack.c.l.b16 %v6419
        %v6501 = vunpack.c.l.b16 %v6420
        %v6502 = vunpack.c.l.b16 %v6421
        %v6503 = vunpack.c.l.b16 %v6422
        %v6504 = vunpack.c.l.b16 %v6423
        %v6505 = vunpack.c.l.b16 %v6424
        %v6506 = vunpack.c.l.b16 %v6425
        %v6507 = vunpack.c.l.b16 %v6426
        %v6508 = vunpack.c.l.b16 %v6427
        %v6509 = vunpack.c.l.b16 %v6428
        %v6510 = vunpack.c.l.b16 %v6429
        %v6511 = vunpack.c.l.b16 %v6430
        %v6512 = vunpack.c.l.b16 %v6431
        %v6513 = vunpack.c.l.b16 %v6432
        %v6514 = vunpack.c.l.b16 %v6433
        %v6515 = vpack.c.b16 %v6500, %v6499
        %v6516 = vpack.c.b16 %v6502, %v6501
        %v6517 = vpack.c.b16 %v6504, %v6503
        %v6518 = vpack.c.b16 %v6506, %v6505
        %v6519 = vpack.c.b16 %v6508, %v6507
        %v6520 = vpack.c.b16 %v6510, %v6509
        %v6521 = vpack.c.b16 %v6512, %v6511
        %v6522 = vpack.c.b16 %v6514, %v6513
        %6531 = vmatprep.subr.bf16.mxu0 0
        %6532 = vmatpush1.bf16.msra.mxu0 %v6522
        %6533 = vmatprep.subr.bf16.mxu0 0
        %6534 = vmatpush1.bf16.msra.mxu0 %v6521
        %6535 = vmatprep.subr.bf16.mxu0 0
        %6536 = vmatpush1.bf16.msra.mxu0 %v6520
        %6537 = vmatprep.subr.bf16.mxu0 0
        %6538 = vmatpush1.bf16.msra.mxu0 %v6519
        %6539 = vmatprep.subr.bf16.mxu0 0
        %6540 = vmatpush1.bf16.msra.mxu0 %v6518
        %6541 = vmatprep.subr.bf16.mxu0 0
        %6542 = vmatpush1.bf16.msra.mxu0 %v6517
        %6543 = vmatprep.subr.bf16.mxu0 0
        %6544 = vmatpush1.bf16.msra.mxu0 %v6516
        %6545 = vmatprep.subr.bf16.mxu0 0
        %6546 = vmatpush1.bf16.msra.mxu0 %v6515
        %6547 = vmatprep.subr.bf16.mxu0 0
        %6548 = vmatpush2.bf16.msra.mxu0 0
        %6549 = vmatprep.subr.bf16.mxu0 0
        %6550 = vmatpush2.bf16.msra.mxu0 0
        %6551 = vmatprep.subr.bf16.mxu0 0
        %6552 = vmatpush2.bf16.msra.mxu0 0
        %6553 = vmatprep.subr.bf16.mxu0 0
        %6554 = vmatpush2.bf16.msra.mxu0 0
        %6555 = vmatprep.subr.bf16.mxu0 0
        %6556 = vmatpush2.bf16.msra.mxu0 0
        %6557 = vmatprep.subr.bf16.mxu0 0
        %6558 = vmatpush2.bf16.msra.mxu0 0
        %6559 = vmatprep.subr.bf16.mxu0 0
        %6560 = vmatpush2.bf16.msra.mxu0 0
        %6561 = vmatprep.subr.bf16.mxu0 0
        %6562 = vmatpush2.bf16.msra.mxu0 0
        %6563 = vmatprep.mubr.bf16.mxu0 0
        %6564 = vmatmul.mubr.bf16.gmra.mxu0 %v6469
        %v6565 = vpop.f32.mrf.mxu0
        %v6566 = vadd.f32 %v6439, %v6565
        %v6567 = vpop.f32.mrf.mxu0
        %v6568 = vpop.f32.mrf.mxu0
        %v6569 = vadd.f32 %v6439, %v6568
        %v6570 = vpop.f32.mrf.mxu0
        %6571 = vmatprep.mubr.bf16.mxu0 0
        %6572 = vmatmul.mubr.bf16.gmra.mxu0 %v6470
        %v6573 = vpop.f32.mrf.mxu0
        %v6574 = vadd.f32 %v6439, %v6573
        %v6575 = vpop.f32.mrf.mxu0
        %v6576 = vpop.f32.mrf.mxu0
        %v6577 = vadd.f32 %v6439, %v6576
        %v6578 = vpop.f32.mrf.mxu0
        %6579 = vmatprep.mubr.bf16.mxu0 0
        %6580 = vmatmul.mubr.bf16.gmra.mxu0 %v6471
        %v6581 = vpop.f32.mrf.mxu0
        %v6582 = vadd.f32 %v6439, %v6581
        %v6583 = vpop.f32.mrf.mxu0
        %v6584 = vpop.f32.mrf.mxu0
        %v6585 = vadd.f32 %v6439, %v6584
        %v6586 = vpop.f32.mrf.mxu0
        %6587 = vmatprep.mubr.bf16.mxu0 0
        %6588 = vmatmul.mubr.bf16.gmra.mxu0 %v6472
        %v6589 = vpop.f32.mrf.mxu0
        %v6590 = vadd.f32 %v6439, %v6589
        %v6591 = vpop.f32.mrf.mxu0
        %v6592 = vpop.f32.mrf.mxu0
        %v6593 = vadd.f32 %v6439, %v6592
        %v6594 = vpop.f32.mrf.mxu0
        %6595 = vmatprep.mubr.bf16.mxu0 0
        %6596 = vmatmul.mubr.bf16.gmra.mxu0 %v6473
        %v6597 = vpop.f32.mrf.mxu0
        %v6598 = vadd.f32 %v6439, %v6597
        %v6599 = vpop.f32.mrf.mxu0
        %v6600 = vpop.f32.mrf.mxu0
        %v6601 = vadd.f32 %v6439, %v6600
        %v6602 = vpop.f32.mrf.mxu0
        %6603 = vmatprep.mubr.bf16.mxu0 0
        %6604 = vmatmul.mubr.bf16.gmra.mxu0 %v6474
        %v6605 = vpop.f32.mrf.mxu0
        %v6606 = vadd.f32 %v6439, %v6605
        %v6607 = vpop.f32.mrf.mxu0
        %v6608 = vpop.f32.mrf.mxu0
        %v6609 = vadd.f32 %v6439, %v6608
        %v6610 = vpop.f32.mrf.mxu0
        %6611 = vmatprep.mubr.bf16.mxu0 0
        %6612 = vmatmul.mubr.bf16.gmra.mxu0 %v6475
        %v6613 = vpop.f32.mrf.mxu0
        %v6614 = vadd.f32 %v6439, %v6613
        %v6615 = vpop.f32.mrf.mxu0
        %v6616 = vpop.f32.mrf.mxu0
        %v6617 = vadd.f32 %v6439, %v6616
        %v6618 = vpop.f32.mrf.mxu0
        %6619 = vdwg.mxu0
        %v6620 = vmax.f32 %v6566, 0.0
        %v6621 = vmax.f32 %v6569, 0.0
        %v6622 = vmax.f32 %v6574, 0.0
        %v6623 = vmax.f32 %v6577, 0.0
        %v6624 = vmax.f32 %v6582, 0.0
        %v6625 = vmax.f32 %v6585, 0.0
        %v6626 = vmax.f32 %v6590, 0.0
        %v6627 = vmax.f32 %v6593, 0.0
        %v6628 = vmax.f32 %v6598, 0.0
        %v6629 = vmax.f32 %v6601, 0.0
        %v6630 = vmax.f32 %v6606, 0.0
        %v6631 = vmax.f32 %v6609, 0.0
        %v6632 = vmax.f32 %v6614, 0.0
        %v6633 = vmax.f32 %v6617, 0.0
        %6635 = vset.pattern.permute.xlu0 0
        %6636 = vperm.xlu0 %6635, %v6404
        %v6637 = vpop.permute.xlu0 %6636
        %6640 = vset.pattern.permute.xlu0 0
        %6641 = vperm.xlu0 %6640, %v6405
        %v6642 = vpop.permute.xlu0 %6641
        %6645 = vset.pattern.permute.xlu0 0
        %6646 = vperm.xlu0 %6645, %v6406
        %v6647 = vpop.permute.xlu0 %6646
        %6650 = vset.pattern.permute.xlu0 0
        %6651 = vperm.xlu0 %6650, %v6407
        %v6652 = vpop.permute.xlu0 %6651
        %6655 = vset.pattern.permute.xlu0 0
        %6656 = vperm.xlu0 %6655, %v6408
        %v6657 = vpop.permute.xlu0 %6656
        %6660 = vset.pattern.permute.xlu0 0
        %6661 = vperm.xlu0 %6660, %v6409
        %v6662 = vpop.permute.xlu0 %6661
        %6665 = vset.pattern.permute.xlu0 0
        %6666 = vperm.xlu0 %6665, %v6410
        %v6667 = vpop.permute.xlu0 %6666
        %6670 = vset.pattern.permute.xlu0 0
        %6671 = vperm.xlu0 %6670, %v6411
        %v6672 = vpop.permute.xlu0 %6671
        %6675 = vset.pattern.permute.xlu0 0
        %6676 = vperm.xlu0 %6675, %v6412
        %v6677 = vpop.permute.xlu0 %6676
        %6680 = vset.pattern.permute.xlu0 0
        %6681 = vperm.xlu0 %6680, %v6413
        %v6682 = vpop.permute.xlu0 %6681
        %6685 = vset.pattern.permute.xlu0 0
        %6686 = vperm.xlu0 %6685, %v6414
        %v6687 = vpop.permute.xlu0 %6686
        %6690 = vset.pattern.permute.xlu0 0
        %6691 = vperm.xlu0 %6690, %v6415
        %v6692 = vpop.permute.xlu0 %6691
        %6695 = vset.pattern.permute.xlu0 0
        %6696 = vperm.xlu0 %6695, %v6416
        %v6697 = vpop.permute.xlu0 %6696
        %6700 = vset.pattern.permute.xlu0 0
        %6701 = vperm.xlu0 %6700, %v6417
        %v6702 = vpop.permute.xlu0 %6701
        %v6704 = vmul.f32 %v6620, %v6637
        %v6705 = vmul.f32 %v6621, %v6642
        %v6706 = vmul.f32 %v6622, %v6647
        %v6707 = vmul.f32 %v6623, %v6652
        %v6708 = vmul.f32 %v6624, %v6657
        %v6709 = vmul.f32 %v6625, %v6662
        %v6710 = vmul.f32 %v6626, %v6667
        %v6711 = vmul.f32 %v6627, %v6672
        %v6712 = vmul.f32 %v6628, %v6677
        %v6713 = vmul.f32 %v6629, %v6682
        %v6714 = vmul.f32 %v6630, %v6687
        %v6715 = vmul.f32 %v6631, %v6692
        %v6716 = vmul.f32 %v6632, %v6697
        %v6717 = vmul.f32 %v6633, %v6702
        %v6718 = vrot.slane %v6704, 5
        %v6719 = vrot.slane %v6705, 5
        %v6720 = vrot.slane %v6706, 5
        %v6721 = vrot.slane %v6707, 5
        %v6722 = vrot.slane %v6708, 5
        %v6723 = vrot.slane %v6709, 5
        %v6724 = vrot.slane %v6710, 5
        %v6725 = vrot.slane %v6711, 5
        %v6726 = vrot.slane %v6712, 5
        %v6727 = vrot.slane %v6713, 5
        %v6728 = vrot.slane %v6714, 5
        %v6729 = vrot.slane %v6715, 5
        %v6730 = vrot.slane %v6716, 5
        %v6731 = vrot.slane %v6717, 5
        %v6732 = vsel %vm1603, %v6730, %v6731
        %v6733 = vsel %vm1603, %v6729, %v6730
        %v6734 = vsel %vm1603, %v6728, %v6729
        %v6735 = vsel %vm1603, %v6727, %v6728
        %v6736 = vsel %vm1603, %v6726, %v6727
        %v6737 = vsel %vm1603, %v6725, %v6726
        %v6738 = vsel %vm1603, %v6724, %v6725
        %v6739 = vsel %vm1603, %v6723, %v6724
        %v6740 = vsel %vm1603, %v6722, %v6723
        %v6741 = vsel %vm1603, %v6721, %v6722
        %v6742 = vsel %vm1603, %v6720, %v6721
        %v6743 = vsel %vm1603, %v6719, %v6720
        %v6744 = vsel %vm1603, %v6718, %v6719
        %v6745 = vsel %vm1603, %v6731, %v6718
        %v6746 = vrot.slane %v6704, 6
        %v6747 = vrot.slane %v6705, 6
        %v6748 = vrot.slane %v6706, 6
        %v6749 = vrot.slane %v6707, 6
        %v6750 = vrot.slane %v6708, 6
        %v6751 = vrot.slane %v6709, 6
        %v6752 = vrot.slane %v6710, 6
        %v6753 = vrot.slane %v6711, 6
        %v6754 = vrot.slane %v6712, 6
        %v6755 = vrot.slane %v6713, 6
        %v6756 = vrot.slane %v6714, 6
        %v6757 = vrot.slane %v6715, 6
        %v6758 = vrot.slane %v6716, 6
        %v6759 = vrot.slane %v6717, 6
        %v6760 = vsel %vm1688, %v6758, %v6759
        %v6761 = vsel %vm1688, %v6757, %v6758
        %v6762 = vsel %vm1688, %v6756, %v6757
        %v6763 = vsel %vm1688, %v6755, %v6756
        %v6764 = vsel %vm1688, %v6754, %v6755
        %v6765 = vsel %vm1688, %v6753, %v6754
        %v6766 = vsel %vm1688, %v6752, %v6753
        %v6767 = vsel %vm1688, %v6751, %v6752
        %v6768 = vsel %vm1688, %v6750, %v6751
        %v6769 = vsel %vm1688, %v6749, %v6750
        %v6770 = vsel %vm1688, %v6748, %v6749
        %v6771 = vsel %vm1688, %v6747, %v6748
        %v6772 = vsel %vm1688, %v6746, %v6747
        %v6773 = vsel %vm1688, %v6759, %v6746
        %v6774 = vrot.slane %v6704, 7
        %v6775 = vrot.slane %v6705, 7
        %v6776 = vrot.slane %v6706, 7
        %v6777 = vrot.slane %v6707, 7
        %v6778 = vrot.slane %v6708, 7
        %v6779 = vrot.slane %v6709, 7
        %v6780 = vrot.slane %v6710, 7
        %v6781 = vrot.slane %v6711, 7
        %v6782 = vrot.slane %v6712, 7
        %v6783 = vrot.slane %v6713, 7
        %v6784 = vrot.slane %v6714, 7
        %v6785 = vrot.slane %v6715, 7
        %v6786 = vrot.slane %v6716, 7
        %v6787 = vrot.slane %v6717, 7
        %v6788 = vsel %vm1773, %v6786, %v6787
        %v6789 = vsel %vm1773, %v6785, %v6786
        %v6790 = vsel %vm1773, %v6784, %v6785
        %v6791 = vsel %vm1773, %v6783, %v6784
        %v6792 = vsel %vm1773, %v6782, %v6783
        %v6793 = vsel %vm1773, %v6781, %v6782
        %v6794 = vsel %vm1773, %v6780, %v6781
        %v6795 = vsel %vm1773, %v6779, %v6780
        %v6796 = vsel %vm1773, %v6778, %v6779
        %v6797 = vsel %vm1773, %v6777, %v6778
        %v6798 = vsel %vm1773, %v6776, %v6777
        %v6799 = vsel %vm1773, %v6775, %v6776
        %v6800 = vsel %vm1773, %v6774, %v6775
        %v6801 = vsel %vm1773, %v6787, %v6774
        %v6802 = vrot.slane %v6704, 1
        %v6803 = vrot.slane %v6705, 1
        %v6804 = vrot.slane %v6706, 1
        %v6805 = vrot.slane %v6707, 1
        %v6806 = vrot.slane %v6708, 1
        %v6807 = vrot.slane %v6709, 1
        %v6808 = vrot.slane %v6710, 1
        %v6809 = vrot.slane %v6711, 1
        %v6810 = vrot.slane %v6712, 1
        %v6811 = vrot.slane %v6713, 1
        %v6812 = vrot.slane %v6714, 1
        %v6813 = vrot.slane %v6715, 1
        %v6814 = vrot.slane %v6716, 1
        %v6815 = vrot.slane %v6717, 1
        %v6816 = vsel %vm1858, %v6814, %v6815
        %v6817 = vsel %vm1858, %v6813, %v6814
        %v6818 = vsel %vm1858, %v6812, %v6813
        %v6819 = vsel %vm1858, %v6811, %v6812
        %v6820 = vsel %vm1858, %v6810, %v6811
        %v6821 = vsel %vm1858, %v6809, %v6810
        %v6822 = vsel %vm1858, %v6808, %v6809
        %v6823 = vsel %vm1858, %v6807, %v6808
        %v6824 = vsel %vm1858, %v6806, %v6807
        %v6825 = vsel %vm1858, %v6805, %v6806
        %v6826 = vsel %vm1858, %v6804, %v6805
        %v6827 = vsel %vm1858, %v6803, %v6804
        %v6828 = vsel %vm1858, %v6802, %v6803
        %v6829 = vsel %vm1858, %v6815, %v6802
        %v6830 = vrot.slane %v6704, 2
        %v6831 = vrot.slane %v6705, 2
        %v6832 = vrot.slane %v6706, 2
        %v6833 = vrot.slane %v6707, 2
        %v6834 = vrot.slane %v6708, 2
        %v6835 = vrot.slane %v6709, 2
        %v6836 = vrot.slane %v6710, 2
        %v6837 = vrot.slane %v6711, 2
        %v6838 = vrot.slane %v6712, 2
        %v6839 = vrot.slane %v6713, 2
        %v6840 = vrot.slane %v6714, 2
        %v6841 = vrot.slane %v6715, 2
        %v6842 = vrot.slane %v6716, 2
        %v6843 = vrot.slane %v6717, 2
        %v6844 = vsel %vm1943, %v6842, %v6843
        %v6845 = vsel %vm1943, %v6841, %v6842
        %v6846 = vsel %vm1943, %v6840, %v6841
        %v6847 = vsel %vm1943, %v6839, %v6840
        %v6848 = vsel %vm1943, %v6838, %v6839
        %v6849 = vsel %vm1943, %v6837, %v6838
        %v6850 = vsel %vm1943, %v6836, %v6837
        %v6851 = vsel %vm1943, %v6835, %v6836
        %v6852 = vsel %vm1943, %v6834, %v6835
        %v6853 = vsel %vm1943, %v6833, %v6834
        %v6854 = vsel %vm1943, %v6832, %v6833
        %v6855 = vsel %vm1943, %v6831, %v6832
        %v6856 = vsel %vm1943, %v6830, %v6831
        %v6857 = vsel %vm1943, %v6843, %v6830
        %v6858 = vrot.slane %v6704, 3
        %v6859 = vrot.slane %v6705, 3
        %v6860 = vrot.slane %v6706, 3
        %v6861 = vrot.slane %v6707, 3
        %v6862 = vrot.slane %v6708, 3
        %v6863 = vrot.slane %v6709, 3
        %v6864 = vrot.slane %v6710, 3
        %v6865 = vrot.slane %v6711, 3
        %v6866 = vrot.slane %v6712, 3
        %v6867 = vrot.slane %v6713, 3
        %v6868 = vrot.slane %v6714, 3
        %v6869 = vrot.slane %v6715, 3
        %v6870 = vrot.slane %v6716, 3
        %v6871 = vrot.slane %v6717, 3
        %v6872 = vsel %vm2028, %v6870, %v6871
        %v6873 = vsel %vm2028, %v6869, %v6870
        %v6874 = vsel %vm2028, %v6868, %v6869
        %v6875 = vsel %vm2028, %v6867, %v6868
        %v6876 = vsel %vm2028, %v6866, %v6867
        %v6877 = vsel %vm2028, %v6865, %v6866
        %v6878 = vsel %vm2028, %v6864, %v6865
        %v6879 = vsel %vm2028, %v6863, %v6864
        %v6880 = vsel %vm2028, %v6862, %v6863
        %v6881 = vsel %vm2028, %v6861, %v6862
        %v6882 = vsel %vm2028, %v6860, %v6861
        %v6883 = vsel %vm2028, %v6859, %v6860
        %v6884 = vsel %vm2028, %v6858, %v6859
        %v6885 = vsel %vm2028, %v6871, %v6858
        %v6886 = vpack.c.bf16 %v6745, %v6732
        %v6887 = vpack.c.bf16 %v6773, %v6760
        %v6888 = vpack.c.bf16 %v6801, %v6788
        %v6889 = vpack.c.bf16 %v6800, %v6801
        %v6890 = vpack.c.bf16 %v6705, %v6704
        %v6891 = vpack.c.bf16 %v6827, %v6828
        %v6892 = vpack.c.bf16 %v6826, %v6827
        %v6893 = vpack.c.bf16 %v6854, %v6855
        %v6894 = vpack.c.bf16 %v6882, %v6883
        %v6895 = vpack.c.bf16 %v6743, %v6744
        %v6896 = vpack.c.bf16 %v6771, %v6772
        %v6897 = vpack.c.bf16 %v6799, %v6800
        %v6898 = vpack.c.bf16 %v6798, %v6799
        %v6899 = vpack.c.bf16 %v6707, %v6706
        %v6900 = vpack.c.bf16 %v6825, %v6826
        %v6901 = vpack.c.bf16 %v6824, %v6825
        %v6902 = vpack.c.bf16 %v6852, %v6853
        %v6903 = vpack.c.bf16 %v6880, %v6881
        %v6904 = vpack.c.bf16 %v6741, %v6742
        %v6905 = vpack.c.bf16 %v6769, %v6770
        %v6906 = vpack.c.bf16 %v6797, %v6798
        %v6907 = vpack.c.bf16 %v6796, %v6797
        %v6908 = vpack.c.bf16 %v6709, %v6708
        %v6909 = vpack.c.bf16 %v6823, %v6824
        %v6910 = vpack.c.bf16 %v6822, %v6823
        %v6911 = vpack.c.bf16 %v6850, %v6851
        %v6912 = vpack.c.bf16 %v6878, %v6879
        %v6913 = vpack.c.bf16 %v6739, %v6740
        %v6914 = vpack.c.bf16 %v6767, %v6768
        %v6915 = vpack.c.bf16 %v6795, %v6796
        %v6916 = vpack.c.bf16 %v6794, %v6795
        %v6917 = vpack.c.bf16 %v6711, %v6710
        %v6918 = vpack.c.bf16 %v6821, %v6822
        %v6919 = vpack.c.bf16 %v6820, %v6821
        %v6920 = vpack.c.bf16 %v6848, %v6849
        %v6921 = vpack.c.bf16 %v6876, %v6877
        %v6922 = vpack.c.bf16 %v6737, %v6738
        %v6923 = vpack.c.bf16 %v6765, %v6766
        %v6924 = vpack.c.bf16 %v6793, %v6794
        %v6925 = vpack.c.bf16 %v6792, %v6793
        %v6926 = vpack.c.bf16 %v6713, %v6712
        %v6927 = vpack.c.bf16 %v6819, %v6820
        %v6928 = vpack.c.bf16 %v6818, %v6819
        %v6929 = vpack.c.bf16 %v6846, %v6847
        %v6930 = vpack.c.bf16 %v6874, %v6875
        %v6931 = vpack.c.bf16 %v6735, %v6736
        %v6932 = vpack.c.bf16 %v6763, %v6764
        %v6933 = vpack.c.bf16 %v6791, %v6792
        %v6934 = vpack.c.bf16 %v6790, %v6791
        %v6935 = vpack.c.bf16 %v6715, %v6714
        %v6936 = vpack.c.bf16 %v6817, %v6818
        %v6937 = vpack.c.bf16 %v6816, %v6817
        %v6938 = vpack.c.bf16 %v6844, %v6845
        %v6939 = vpack.c.bf16 %v6872, %v6873
        %v6940 = vpack.c.bf16 %v6733, %v6734
        %v6941 = vpack.c.bf16 %v6761, %v6762
        %v6942 = vpack.c.bf16 %v6789, %v6790
        %v6943 = vpack.c.bf16 %v6788, %v6789
        %v6944 = vpack.c.bf16 %v6717, %v6716
        %v6945 = vpack.c.bf16 %v6829, %v6816
        %v6946 = vpack.c.bf16 %v6828, %v6829
        %v6947 = vpack.c.bf16 %v6856, %v6857
        %v6948 = vpack.c.bf16 %v6884, %v6885
        %v6949 = vld [vmem:[%s14] sm:$0xf]
        %v6950 = vld [vmem:[%s14 + $0x4] sm:$0xf]
        %v6951 = vld [vmem:[%s14 + $0x8] sm:$0xf]
        %v6952 = vld [vmem:[%s14 + $0xc] sm:$0xf]
        %v6953 = vld [vmem:[%s14 + $0x10] sm:$0xf]
        %v6954 = vld [vmem:[%s14 + $0x14] sm:$0xf]
        %v6955 = vld [vmem:[%s14 + $0x18] sm:$0xf]
        %v6956 = vld [vmem:[%s14 + $0x1c] sm:$0xf]
        %v6957 = vld [vmem:[%s14 + $0x20] sm:$0xf]
        %v6958 = vld [vmem:[%s14 + $0x24] sm:$0xf]
        %v6959 = vld [vmem:[%s14 + $0x28] sm:$0xf]
        %v6960 = vld [vmem:[%s14 + $0x2c] sm:$0xf]
        %v6961 = vld [vmem:[%s14 + $0x30] sm:$0xf]
        %v6962 = vld [vmem:[%s14 + $0x34] sm:$0xf]
        %v6963 = vld [vmem:[%s14 + $0x38] sm:$0xf]
        %v6964 = vld [vmem:[%s14 + $0x3c] sm:$0xf]
        %v6965 = vld [vmem:[%s14 + $0x40] sm:$0xf]
        %v6966 = vld [vmem:[%s14 + $0x44] sm:$0xf]
        %v6967 = vld [vmem:[%s14 + $0x48] sm:$0xf]
        %v6968 = vld [vmem:[%s14 + $0x4c] sm:$0xf]
        %v6969 = vld [vmem:[%s14 + $0x50] sm:$0xf]
        %v6970 = vld [vmem:[%s14 + $0x54] sm:$0xf]
        %v6971 = vld [vmem:[%s14 + $0x58] sm:$0xf]
        %v6972 = vld [vmem:[%s14 + $0x5c] sm:$0xf]
        %v6973 = vld [vmem:[%s14 + $0x60] sm:$0xf]
        %v6974 = vld [vmem:[%s14 + $0x64] sm:$0xf]
        %v6975 = vld [vmem:[%s14 + $0x68] sm:$0xf]
        %v6976 = vld [vmem:[%s14 + $0x6c] sm:$0xf]
        %v6977 = vld [vmem:[%s14 + $0x70] sm:$0xf]
        %v6978 = vld [vmem:[%s14 + $0x74] sm:$0xf]
        %v6979 = vld [vmem:[%s14 + $0x78] sm:$0xf]
        %v6980 = vld [vmem:[%s14 + $0x7c] sm:$0xf]
        %v6981 = vld [vmem:[%s14 + $0x80] sm:$0xf]
        %v6982 = vld [vmem:[%s14 + $0x84] sm:$0xf]
        %v6983 = vld [vmem:[%s14 + $0x88] sm:$0xf]
        %v6984 = vld [vmem:[%s14 + $0x8c] sm:$0xf]
        %v6985 = vld [vmem:[%s14 + $0x90] sm:$0xf]
        %v6986 = vld [vmem:[%s14 + $0x94] sm:$0xf]
        %v6987 = vld [vmem:[%s14 + $0x98] sm:$0xf]
        %v6988 = vld [vmem:[%s14 + $0x9c] sm:$0xf]
        %v6989 = vld [vmem:[%s14 + $0xa0] sm:$0xf]
        %v6990 = vld [vmem:[%s14 + $0xa4] sm:$0xf]
        %v6991 = vld [vmem:[%s14 + $0xa8] sm:$0xf]
        %v6992 = vld [vmem:[%s14 + $0xac] sm:$0xf]
        %v6993 = vld [vmem:[%s14 + $0xb0] sm:$0xf]
        %v6994 = vld [vmem:[%s14 + $0xb4] sm:$0xf]
        %v6995 = vld [vmem:[%s14 + $0xb8] sm:$0xf]
        %v6996 = vld [vmem:[%s14 + $0xbc] sm:$0xf]
        %v6997 = vld [vmem:[%s14 + $0xc0] sm:$0xf]
        %v6998 = vld [vmem:[%s14 + $0xc4] sm:$0xf]
        %v6999 = vld [vmem:[%s14 + $0xc8] sm:$0xf]
        %v7000 = vld [vmem:[%s14 + $0xcc] sm:$0xf]
        %v7001 = vld [vmem:[%s14 + $0xd0] sm:$0xf]
        %v7002 = vld [vmem:[%s14 + $0xd4] sm:$0xf]
        %v7003 = vld [vmem:[%s14 + $0xd8] sm:$0xf]
        %v7004 = vld [vmem:[%s14 + $0xdc] sm:$0xf]
        %v7005 = vld [vmem:[%s14 + $0xe0] sm:$0xf]
        %v7006 = vld [vmem:[%s14 + $0xe4] sm:$0xf]
        %v7007 = vld [vmem:[%s14 + $0xe8] sm:$0xf]
        %v7008 = vld [vmem:[%s14 + $0xec] sm:$0xf]
        %v7009 = vld [vmem:[%s14 + $0xf0] sm:$0xf]
        %v7010 = vld [vmem:[%s14 + $0xf4] sm:$0xf]
        %v7011 = vld [vmem:[%s14 + $0xf8] sm:$0xf]
        %v7012 = vld [vmem:[%s14 + $0xfc] sm:$0xf]
        %v7013 = vld [vmem:[%s14 + $0x100] sm:$0xf]
        %v7014 = vld [vmem:[%s14 + $0x104] sm:$0xf]
        %v7015 = vld [vmem:[%s14 + $0x108] sm:$0xf]
        %v7016 = vld [vmem:[%s14 + $0x10c] sm:$0xf]
        %v7017 = vld [vmem:[%s14 + $0x110] sm:$0xf]
        %v7018 = vld [vmem:[%s14 + $0x114] sm:$0xf]
        %v7019 = vld [vmem:[%s14 + $0x118] sm:$0xf]
        %v7020 = vld [vmem:[%s14 + $0x11c] sm:$0xf]
        %v7021 = vld [vmem:[%s14 + $0x120] sm:$0xf]
        %v7022 = vld [vmem:[%s14 + $0x124] sm:$0xf]
        %v7023 = vld [vmem:[%s14 + $0x128] sm:$0xf]
        %v7024 = vld [vmem:[%s14 + $0x12c] sm:$0xf]
        %v7025 = vld [vmem:[%s14 + $0x130] sm:$0xf]
        %v7026 = vld [vmem:[%s14 + $0x134] sm:$0xf]
        %v7027 = vld [vmem:[%s14 + $0x138] sm:$0xf]
        %v7028 = vld [vmem:[%s14 + $0x13c] sm:$0xf]
        %v7029 = vld [vmem:[%s14 + $0x140] sm:$0xf]
        %v7030 = vld [vmem:[%s14 + $0x144] sm:$0xf]
        %v7031 = vld [vmem:[%s14 + $0x148] sm:$0xf]
        %v7032 = vld [vmem:[%s14 + $0x14c] sm:$0xf]
        %v7033 = vld [vmem:[%s14 + $0x150] sm:$0xf]
        %v7034 = vld [vmem:[%s14 + $0x154] sm:$0xf]
        %v7035 = vld [vmem:[%s14 + $0x158] sm:$0xf]
        %v7036 = vld [vmem:[%s14 + $0x15c] sm:$0xf]
        %v7037 = vld [vmem:[%s14 + $0x160] sm:$0xf]
        %v7038 = vld [vmem:[%s14 + $0x164] sm:$0xf]
        %v7039 = vld [vmem:[%s14 + $0x168] sm:$0xf]
        %v7040 = vld [vmem:[%s14 + $0x16c] sm:$0xf]
        %v7041 = vld [vmem:[%s14 + $0x170] sm:$0xf]
        %v7042 = vld [vmem:[%s14 + $0x174] sm:$0xf]
        %v7043 = vld [vmem:[%s14 + $0x178] sm:$0xf]
        %v7044 = vld [vmem:[%s14 + $0x17c] sm:$0xf]
        %v7045 = vld [vmem:[%s14 + $0x180] sm:$0xf]
        %v7046 = vld [vmem:[%s14 + $0x184] sm:$0xf]
        %v7047 = vld [vmem:[%s14 + $0x188] sm:$0xf]
        %v7048 = vld [vmem:[%s14 + $0x18c] sm:$0xf]
        %v7049 = vld [vmem:[%s14 + $0x190] sm:$0xf]
        %v7050 = vld [vmem:[%s14 + $0x194] sm:$0xf]
        %v7051 = vld [vmem:[%s14 + $0x198] sm:$0xf]
        %v7052 = vld [vmem:[%s14 + $0x19c] sm:$0xf]
        %v7053 = vld [vmem:[%s14 + $0x1a0] sm:$0xf]
        %v7054 = vld [vmem:[%s14 + $0x1a4] sm:$0xf]
        %v7055 = vld [vmem:[%s14 + $0x1a8] sm:$0xf]
        %v7056 = vld [vmem:[%s14 + $0x1ac] sm:$0xf]
        %v7057 = vld [vmem:[%s14 + $0x1b0] sm:$0xf]
        %v7058 = vld [vmem:[%s14 + $0x1b4] sm:$0xf]
        %v7059 = vld [vmem:[%s14 + $0x1b8] sm:$0xf]
        %v7060 = vld [vmem:[%s14 + $0x1bc] sm:$0xf]
        %v7061 = vld [vmem:[%s14 + $0x1c0] sm:$0xf]
        %v7062 = vld [vmem:[%s14 + $0x1c4] sm:$0xf]
        %v7063 = vld [vmem:[%s14 + $0x1c8] sm:$0xf]
        %v7064 = vld [vmem:[%s14 + $0x1cc] sm:$0xf]
        %v7065 = vld [vmem:[%s14 + $0x1d0] sm:$0xf]
        %v7066 = vld [vmem:[%s14 + $0x1d4] sm:$0xf]
        %v7067 = vld [vmem:[%s14 + $0x1d8] sm:$0xf]
        %v7068 = vld [vmem:[%s14 + $0x1dc] sm:$0xf]
        %v7069 = vld [vmem:[%s14 + $0x1e0] sm:$0xf]
        %v7070 = vld [vmem:[%s14 + $0x1e4] sm:$0xf]
        %v7071 = vld [vmem:[%s14 + $0x1e8] sm:$0xf]
        %v7072 = vld [vmem:[%s14 + $0x1ec] sm:$0xf]
        %v7073 = vld [vmem:[%s14 + $0x1f0] sm:$0xf]
        %v7074 = vld [vmem:[%s14 + $0x1f4] sm:$0xf]
        %v7075 = vld [vmem:[%s14 + $0x1f8] sm:$0xf]
        %v7076 = vld [vmem:[%s14 + $0x1fc] sm:$0xf]
        %v7077 = vld [vmem:[%s14 + $0x200] sm:$0xf]
        %v7078 = vld [vmem:[%s14 + $0x204] sm:$0xf]
        %v7079 = vld [vmem:[%s14 + $0x208] sm:$0xf]
        %v7080 = vld [vmem:[%s14 + $0x20c] sm:$0xf]
        %v7081 = vld [vmem:[%s14 + $0x210] sm:$0xf]
        %v7082 = vld [vmem:[%s14 + $0x214] sm:$0xf]
        %v7083 = vld [vmem:[%s14 + $0x218] sm:$0xf]
        %v7084 = vld [vmem:[%s14 + $0x21c] sm:$0xf]
        %v7085 = vld [vmem:[%s14 + $0x220] sm:$0xf]
        %v7086 = vld [vmem:[%s14 + $0x224] sm:$0xf]
        %v7087 = vld [vmem:[%s14 + $0x228] sm:$0xf]
        %v7088 = vld [vmem:[%s14 + $0x22c] sm:$0xf]
        %v7089 = vld [vmem:[%s14 + $0x230] sm:$0xf]
        %v7090 = vld [vmem:[%s14 + $0x234] sm:$0xf]
        %v7091 = vld [vmem:[%s14 + $0x238] sm:$0xf]
        %v7092 = vld [vmem:[%s14 + $0x23c] sm:$0xf]
        %v7093 = vld [vmem:[%s15] sm:$0x1]
        %v7095 = vlaneseq
        %v7096 = vshrl.u32 %v7095, 7
        %v7097 = vsub.s32 0, %v7096
        %v7098 = vrot.slane %v7093, %v7097
        %v7244 = vunpack.c.l.b16 %v6949
        %v7245 = vunpack.c.l.b16 %v6950
        %v7246 = vunpack.c.l.b16 %v6951
        %v7247 = vunpack.c.l.b16 %v6952
        %v7248 = vunpack.c.l.b16 %v6953
        %v7249 = vunpack.c.l.b16 %v6954
        %v7250 = vunpack.c.l.b16 %v6955
        %v7251 = vunpack.c.l.b16 %v6956
        %v7252 = vunpack.c.l.b16 %v6957
        %v7253 = vunpack.c.l.b16 %v6958
        %v7254 = vunpack.c.l.b16 %v6959
        %v7255 = vunpack.c.l.b16 %v6960
        %v7256 = vunpack.c.l.b16 %v6961
        %v7257 = vunpack.c.l.b16 %v6962
        %v7258 = vunpack.c.l.b16 %v6963
        %v7259 = vunpack.c.l.b16 %v6964
        %v7260 = vunpack.c.l.b16 %v6965
        %v7261 = vunpack.c.l.b16 %v6966
        %v7262 = vunpack.c.l.b16 %v6967
        %v7263 = vunpack.c.l.b16 %v6968
        %v7264 = vunpack.c.l.b16 %v6969
        %v7265 = vunpack.c.l.b16 %v6970
        %v7266 = vunpack.c.l.b16 %v6971
        %v7267 = vunpack.c.l.b16 %v6972
        %v7268 = vunpack.c.l.b16 %v6973
        %v7269 = vunpack.c.l.b16 %v6974
        %v7270 = vunpack.c.l.b16 %v6975
        %v7271 = vunpack.c.l.b16 %v6976
        %v7272 = vunpack.c.l.b16 %v6977
        %v7273 = vunpack.c.l.b16 %v6978
        %v7274 = vunpack.c.l.b16 %v6979
        %v7275 = vunpack.c.l.b16 %v6980
        %v7276 = vunpack.c.l.b16 %v6981
        %v7277 = vunpack.c.l.b16 %v6982
        %v7278 = vunpack.c.l.b16 %v6983
        %v7279 = vunpack.c.l.b16 %v6984
        %v7280 = vunpack.c.l.b16 %v6985
        %v7281 = vunpack.c.l.b16 %v6986
        %v7282 = vunpack.c.l.b16 %v6987
        %v7283 = vunpack.c.l.b16 %v6988
        %v7284 = vunpack.c.l.b16 %v6989
        %v7285 = vunpack.c.l.b16 %v6990
        %v7286 = vunpack.c.l.b16 %v6991
        %v7287 = vunpack.c.l.b16 %v6992
        %v7288 = vunpack.c.l.b16 %v6993
        %v7289 = vunpack.c.l.b16 %v6994
        %v7290 = vunpack.c.l.b16 %v6995
        %v7291 = vunpack.c.l.b16 %v6996
        %v7292 = vunpack.c.l.b16 %v6997
        %v7293 = vunpack.c.l.b16 %v6998
        %v7294 = vunpack.c.l.b16 %v6999
        %v7295 = vunpack.c.l.b16 %v7000
        %v7296 = vunpack.c.l.b16 %v7001
        %v7297 = vunpack.c.l.b16 %v7002
        %v7298 = vunpack.c.l.b16 %v7003
        %v7299 = vunpack.c.l.b16 %v7004
        %v7300 = vunpack.c.l.b16 %v7005
        %v7301 = vunpack.c.l.b16 %v7006
        %v7302 = vunpack.c.l.b16 %v7007
        %v7303 = vunpack.c.l.b16 %v7008
        %v7304 = vunpack.c.l.b16 %v7009
        %v7305 = vunpack.c.l.b16 %v7010
        %v7306 = vunpack.c.l.b16 %v7011
        %v7307 = vunpack.c.l.b16 %v7012
        %v7308 = vunpack.c.l.b16 %v7013
        %v7309 = vunpack.c.l.b16 %v7014
        %v7310 = vunpack.c.l.b16 %v7015
        %v7311 = vunpack.c.l.b16 %v7016
        %v7312 = vunpack.c.l.b16 %v7017
        %v7313 = vunpack.c.l.b16 %v7018
        %v7314 = vunpack.c.l.b16 %v7019
        %v7315 = vunpack.c.l.b16 %v7020
        %v7316 = vunpack.c.l.b16 %v7021
        %v7317 = vunpack.c.l.b16 %v7022
        %v7318 = vunpack.c.l.b16 %v7023
        %v7319 = vunpack.c.l.b16 %v7024
        %v7320 = vunpack.c.l.b16 %v7025
        %v7321 = vunpack.c.l.b16 %v7026
        %v7322 = vunpack.c.l.b16 %v7027
        %v7323 = vunpack.c.l.b16 %v7028
        %v7324 = vunpack.c.l.b16 %v7029
        %v7325 = vunpack.c.l.b16 %v7030
        %v7326 = vunpack.c.l.b16 %v7031
        %v7327 = vunpack.c.l.b16 %v7032
        %v7328 = vunpack.c.l.b16 %v7033
        %v7329 = vunpack.c.l.b16 %v7034
        %v7330 = vunpack.c.l.b16 %v7035
        %v7331 = vunpack.c.l.b16 %v7036
        %v7332 = vunpack.c.l.b16 %v7037
        %v7333 = vunpack.c.l.b16 %v7038
        %v7334 = vunpack.c.l.b16 %v7039
        %v7335 = vunpack.c.l.b16 %v7040
        %v7336 = vunpack.c.l.b16 %v7041
        %v7337 = vunpack.c.l.b16 %v7042
        %v7338 = vunpack.c.l.b16 %v7043
        %v7339 = vunpack.c.l.b16 %v7044
        %v7340 = vunpack.c.l.b16 %v7045
        %v7341 = vunpack.c.l.b16 %v7046
        %v7342 = vunpack.c.l.b16 %v7047
        %v7343 = vunpack.c.l.b16 %v7048
        %v7344 = vunpack.c.l.b16 %v7049
        %v7345 = vunpack.c.l.b16 %v7050
        %v7346 = vunpack.c.l.b16 %v7051
        %v7347 = vunpack.c.l.b16 %v7052
        %v7348 = vunpack.c.l.b16 %v7053
        %v7349 = vunpack.c.l.b16 %v7054
        %v7350 = vunpack.c.l.b16 %v7055
        %v7351 = vunpack.c.l.b16 %v7056
        %v7352 = vunpack.c.l.b16 %v7057
        %v7353 = vunpack.c.l.b16 %v7058
        %v7354 = vunpack.c.l.b16 %v7059
        %v7355 = vunpack.c.l.b16 %v7060
        %v7356 = vunpack.c.l.b16 %v7061
        %v7357 = vunpack.c.l.b16 %v7062
        %v7358 = vunpack.c.l.b16 %v7063
        %v7359 = vunpack.c.l.b16 %v7064
        %v7360 = vunpack.c.l.b16 %v7065
        %v7361 = vunpack.c.l.b16 %v7066
        %v7362 = vunpack.c.l.b16 %v7067
        %v7363 = vunpack.c.l.b16 %v7068
        %v7364 = vunpack.c.l.b16 %v7069
        %v7365 = vunpack.c.l.b16 %v7070
        %v7366 = vunpack.c.l.b16 %v7071
        %v7367 = vunpack.c.l.b16 %v7072
        %v7368 = vunpack.c.l.b16 %v7073
        %v7369 = vunpack.c.l.b16 %v7074
        %v7370 = vunpack.c.l.b16 %v7075
        %v7371 = vunpack.c.l.b16 %v7076
        %v7372 = vunpack.c.l.b16 %v7077
        %v7373 = vunpack.c.l.b16 %v7078
        %v7374 = vunpack.c.l.b16 %v7079
        %v7375 = vunpack.c.l.b16 %v7080
        %v7376 = vunpack.c.l.b16 %v7081
        %v7377 = vunpack.c.l.b16 %v7082
        %v7378 = vunpack.c.l.b16 %v7083
        %v7379 = vunpack.c.l.b16 %v7084
        %v7380 = vunpack.c.l.b16 %v7085
        %v7381 = vunpack.c.l.b16 %v7086
        %v7382 = vunpack.c.l.b16 %v7087
        %v7383 = vunpack.c.l.b16 %v7088
        %v7384 = vunpack.c.l.b16 %v7089
        %v7385 = vunpack.c.l.b16 %v7090
        %v7386 = vunpack.c.l.b16 %v7091
        %v7387 = vunpack.c.l.b16 %v7092
        %v7388 = vpack.c.b16 %v7245, %v7244
        %v7389 = vpack.c.b16 %v7247, %v7246
        %v7390 = vpack.c.b16 %v7249, %v7248
        %v7391 = vpack.c.b16 %v7251, %v7250
        %v7392 = vpack.c.b16 %v7253, %v7252
        %v7393 = vpack.c.b16 %v7255, %v7254
        %v7394 = vpack.c.b16 %v7257, %v7256
        %v7395 = vpack.c.b16 %v7259, %v7258
        %v7396 = vpack.c.b16 %v7261, %v7260
        %v7397 = vpack.c.b16 %v7263, %v7262
        %v7398 = vpack.c.b16 %v7265, %v7264
        %v7399 = vpack.c.b16 %v7267, %v7266
        %v7400 = vpack.c.b16 %v7269, %v7268
        %v7401 = vpack.c.b16 %v7271, %v7270
        %v7402 = vpack.c.b16 %v7273, %v7272
        %v7403 = vpack.c.b16 %v7275, %v7274
        %v7404 = vpack.c.b16 %v7277, %v7276
        %v7405 = vpack.c.b16 %v7279, %v7278
        %v7406 = vpack.c.b16 %v7281, %v7280
        %v7407 = vpack.c.b16 %v7283, %v7282
        %v7408 = vpack.c.b16 %v7285, %v7284
        %v7409 = vpack.c.b16 %v7287, %v7286
        %v7410 = vpack.c.b16 %v7289, %v7288
        %v7411 = vpack.c.b16 %v7291, %v7290
        %v7412 = vpack.c.b16 %v7293, %v7292
        %v7413 = vpack.c.b16 %v7295, %v7294
        %v7414 = vpack.c.b16 %v7297, %v7296
        %v7415 = vpack.c.b16 %v7299, %v7298
        %v7416 = vpack.c.b16 %v7301, %v7300
        %v7417 = vpack.c.b16 %v7303, %v7302
        %v7418 = vpack.c.b16 %v7305, %v7304
        %v7419 = vpack.c.b16 %v7307, %v7306
        %v7420 = vpack.c.b16 %v7309, %v7308
        %v7421 = vpack.c.b16 %v7311, %v7310
        %v7422 = vpack.c.b16 %v7313, %v7312
        %v7423 = vpack.c.b16 %v7315, %v7314
        %v7424 = vpack.c.b16 %v7317, %v7316
        %v7425 = vpack.c.b16 %v7319, %v7318
        %v7426 = vpack.c.b16 %v7321, %v7320
        %v7427 = vpack.c.b16 %v7323, %v7322
        %v7428 = vpack.c.b16 %v7325, %v7324
        %v7429 = vpack.c.b16 %v7327, %v7326
        %v7430 = vpack.c.b16 %v7329, %v7328
        %v7431 = vpack.c.b16 %v7331, %v7330
        %v7432 = vpack.c.b16 %v7333, %v7332
        %v7433 = vpack.c.b16 %v7335, %v7334
        %v7434 = vpack.c.b16 %v7337, %v7336
        %v7435 = vpack.c.b16 %v7339, %v7338
        %v7436 = vpack.c.b16 %v7341, %v7340
        %v7437 = vpack.c.b16 %v7343, %v7342
        %v7438 = vpack.c.b16 %v7345, %v7344
        %v7439 = vpack.c.b16 %v7347, %v7346
        %v7440 = vpack.c.b16 %v7349, %v7348
        %v7441 = vpack.c.b16 %v7351, %v7350
        %v7442 = vpack.c.b16 %v7353, %v7352
        %v7443 = vpack.c.b16 %v7355, %v7354
        %v7444 = vpack.c.b16 %v7357, %v7356
        %v7445 = vpack.c.b16 %v7359, %v7358
        %v7446 = vpack.c.b16 %v7361, %v7360
        %v7447 = vpack.c.b16 %v7363, %v7362
        %v7448 = vpack.c.b16 %v7365, %v7364
        %v7449 = vpack.c.b16 %v7367, %v7366
        %v7450 = vpack.c.b16 %v7369, %v7368
        %v7451 = vpack.c.b16 %v7371, %v7370
        %v7452 = vpack.c.b16 %v7373, %v7372
        %v7453 = vpack.c.b16 %v7375, %v7374
        %v7454 = vpack.c.b16 %v7377, %v7376
        %v7455 = vpack.c.b16 %v7379, %v7378
        %v7456 = vpack.c.b16 %v7381, %v7380
        %v7457 = vpack.c.b16 %v7383, %v7382
        %v7458 = vpack.c.b16 %v7385, %v7384
        %v7459 = vpack.c.b16 %v7387, %v7386
        %7532 = vmatprep.subr.bf16.mxu0 0
        %7533 = vmatpush1.bf16.msra.mxu0 %v7395
        %7534 = vmatprep.subr.bf16.mxu0 0
        %7535 = vmatpush1.bf16.msra.mxu0 %v7394
        %7536 = vmatprep.subr.bf16.mxu0 0
        %7537 = vmatpush1.bf16.msra.mxu0 %v7393
        %7538 = vmatprep.subr.bf16.mxu0 0
        %7539 = vmatpush1.bf16.msra.mxu0 %v7392
        %7540 = vmatprep.subr.bf16.mxu0 0
        %7541 = vmatpush1.bf16.msra.mxu0 %v7391
        %7542 = vmatprep.subr.bf16.mxu0 0
        %7543 = vmatpush1.bf16.msra.mxu0 %v7390
        %7544 = vmatprep.subr.bf16.mxu0 0
        %7545 = vmatpush1.bf16.msra.mxu0 %v7389
        %7546 = vmatprep.subr.bf16.mxu0 0
        %7547 = vmatpush1.bf16.msra.mxu0 %v7388
        %7548 = vmatprep.subr.bf16.mxu0 0
        %7549 = vmatpush2.bf16.msra.mxu0 %v7403
        %7550 = vmatprep.subr.bf16.mxu0 0
        %7551 = vmatpush2.bf16.msra.mxu0 %v7402
        %7552 = vmatprep.subr.bf16.mxu0 0
        %7553 = vmatpush2.bf16.msra.mxu0 %v7401
        %7554 = vmatprep.subr.bf16.mxu0 0
        %7555 = vmatpush2.bf16.msra.mxu0 %v7400
        %7556 = vmatprep.subr.bf16.mxu0 0
        %7557 = vmatpush2.bf16.msra.mxu0 %v7399
        %7558 = vmatprep.subr.bf16.mxu0 0
        %7559 = vmatpush2.bf16.msra.mxu0 %v7398
        %7560 = vmatprep.subr.bf16.mxu0 0
        %7561 = vmatpush2.bf16.msra.mxu0 %v7397
        %7562 = vmatprep.subr.bf16.mxu0 0
        %7563 = vmatpush2.bf16.msra.mxu0 %v7396
        %7564 = vmatprep.mubr.bf16.mxu0 %v6887
        %7565 = vmatmul.mubr.bf16.gmra.mxu0 %v6886
        %v7566 = vpop.f32.mrf.mxu0
        %v7567 = vadd.f32 %v7098, %v7566
        %v7568 = vpop.f32.mrf.mxu0
        %v7569 = vpop.f32.mrf.mxu0
        %v7570 = vadd.f32 %v7098, %v7569
        %v7571 = vpop.f32.mrf.mxu0
        %7572 = vmatprep.mubr.bf16.mxu0 %v6896
        %7573 = vmatmul.mubr.bf16.gmra.mxu0 %v6895
        %v7574 = vpop.f32.mrf.mxu0
        %v7575 = vadd.f32 %v7098, %v7574
        %v7576 = vpop.f32.mrf.mxu0
        %v7577 = vpop.f32.mrf.mxu0
        %v7578 = vadd.f32 %v7098, %v7577
        %v7579 = vpop.f32.mrf.mxu0
        %7580 = vmatprep.mubr.bf16.mxu0 %v6905
        %7581 = vmatmul.mubr.bf16.gmra.mxu0 %v6904
        %v7582 = vpop.f32.mrf.mxu0
        %v7583 = vadd.f32 %v7098, %v7582
        %v7584 = vpop.f32.mrf.mxu0
        %v7585 = vpop.f32.mrf.mxu0
        %v7586 = vadd.f32 %v7098, %v7585
        %v7587 = vpop.f32.mrf.mxu0
        %7588 = vmatprep.mubr.bf16.mxu0 %v6914
        %7589 = vmatmul.mubr.bf16.gmra.mxu0 %v6913
        %v7590 = vpop.f32.mrf.mxu0
        %v7591 = vadd.f32 %v7098, %v7590
        %v7592 = vpop.f32.mrf.mxu0
        %v7593 = vpop.f32.mrf.mxu0
        %v7594 = vadd.f32 %v7098, %v7593
        %v7595 = vpop.f32.mrf.mxu0
        %7596 = vmatprep.mubr.bf16.mxu0 %v6923
        %7597 = vmatmul.mubr.bf16.gmra.mxu0 %v6922
        %v7598 = vpop.f32.mrf.mxu0
        %v7599 = vadd.f32 %v7098, %v7598
        %v7600 = vpop.f32.mrf.mxu0
        %v7601 = vpop.f32.mrf.mxu0
        %v7602 = vadd.f32 %v7098, %v7601
        %v7603 = vpop.f32.mrf.mxu0
        %7604 = vmatprep.mubr.bf16.mxu0 %v6932
        %7605 = vmatmul.mubr.bf16.gmra.mxu0 %v6931
        %v7606 = vpop.f32.mrf.mxu0
        %v7607 = vadd.f32 %v7098, %v7606
        %v7608 = vpop.f32.mrf.mxu0
        %v7609 = vpop.f32.mrf.mxu0
        %v7610 = vadd.f32 %v7098, %v7609
        %v7611 = vpop.f32.mrf.mxu0
        %7612 = vmatprep.mubr.bf16.mxu0 %v6941
        %7613 = vmatmul.mubr.bf16.gmra.mxu0 %v6940
        %v7614 = vpop.f32.mrf.mxu0
        %v7615 = vadd.f32 %v7098, %v7614
        %v7616 = vpop.f32.mrf.mxu0
        %v7617 = vpop.f32.mrf.mxu0
        %v7618 = vadd.f32 %v7098, %v7617
        %v7619 = vpop.f32.mrf.mxu0
        %7620 = vdwg.mxu0
        %7621 = vmatprep.subr.bf16.mxu0 0
        %7622 = vmatpush1.bf16.msra.mxu0 %v7411
        %7623 = vmatprep.subr.bf16.mxu0 0
        %7624 = vmatpush1.bf16.msra.mxu0 %v7410
        %7625 = vmatprep.subr.bf16.mxu0 0
        %7626 = vmatpush1.bf16.msra.mxu0 %v7409
        %7627 = vmatprep.subr.bf16.mxu0 0
        %7628 = vmatpush1.bf16.msra.mxu0 %v7408
        %7629 = vmatprep.subr.bf16.mxu0 0
        %7630 = vmatpush1.bf16.msra.mxu0 %v7407
        %7631 = vmatprep.subr.bf16.mxu0 0
        %7632 = vmatpush1.bf16.msra.mxu0 %v7406
        %7633 = vmatprep.subr.bf16.mxu0 0
        %7634 = vmatpush1.bf16.msra.mxu0 %v7405
        %7635 = vmatprep.subr.bf16.mxu0 0
        %7636 = vmatpush1.bf16.msra.mxu0 %v7404
        %7637 = vmatprep.subr.bf16.mxu0 0
        %7638 = vmatpush2.bf16.msra.mxu0 %v7419
        %7639 = vmatprep.subr.bf16.mxu0 0
        %7640 = vmatpush2.bf16.msra.mxu0 %v7418
        %7641 = vmatprep.subr.bf16.mxu0 0
        %7642 = vmatpush2.bf16.msra.mxu0 %v7417
        %7643 = vmatprep.subr.bf16.mxu0 0
        %7644 = vmatpush2.bf16.msra.mxu0 %v7416
        %7645 = vmatprep.subr.bf16.mxu0 0
        %7646 = vmatpush2.bf16.msra.mxu0 %v7415
        %7647 = vmatprep.subr.bf16.mxu0 0
        %7648 = vmatpush2.bf16.msra.mxu0 %v7414
        %7649 = vmatprep.subr.bf16.mxu0 0
        %7650 = vmatpush2.bf16.msra.mxu0 %v7413
        %7651 = vmatprep.subr.bf16.mxu0 0
        %7652 = vmatpush2.bf16.msra.mxu0 %v7412
        %7653 = vmatprep.mubr.bf16.mxu0 %v6889
        %7654 = vmatmul.mubr.bf16.gmra.mxu0 %v6888
        %v7655 = vpop.f32.mrf.mxu0
        %v7656 = vadd.f32 %v7567, %v7655
        %v7657 = vpop.f32.mrf.mxu0
        %v7658 = vpop.f32.mrf.mxu0
        %v7659 = vadd.f32 %v7570, %v7658
        %v7660 = vpop.f32.mrf.mxu0
        %7661 = vmatprep.mubr.bf16.mxu0 %v6898
        %7662 = vmatmul.mubr.bf16.gmra.mxu0 %v6897
        %v7663 = vpop.f32.mrf.mxu0
        %v7664 = vadd.f32 %v7575, %v7663
        %v7665 = vpop.f32.mrf.mxu0
        %v7666 = vpop.f32.mrf.mxu0
        %v7667 = vadd.f32 %v7578, %v7666
        %v7668 = vpop.f32.mrf.mxu0
        %7669 = vmatprep.mubr.bf16.mxu0 %v6907
        %7670 = vmatmul.mubr.bf16.gmra.mxu0 %v6906
        %v7671 = vpop.f32.mrf.mxu0
        %v7672 = vadd.f32 %v7583, %v7671
        %v7673 = vpop.f32.mrf.mxu0
        %v7674 = vpop.f32.mrf.mxu0
        %v7675 = vadd.f32 %v7586, %v7674
        %v7676 = vpop.f32.mrf.mxu0
        %7677 = vmatprep.mubr.bf16.mxu0 %v6916
        %7678 = vmatmul.mubr.bf16.gmra.mxu0 %v6915
        %v7679 = vpop.f32.mrf.mxu0
        %v7680 = vadd.f32 %v7591, %v7679
        %v7681 = vpop.f32.mrf.mxu0
        %v7682 = vpop.f32.mrf.mxu0
        %v7683 = vadd.f32 %v7594, %v7682
        %v7684 = vpop.f32.mrf.mxu0
        %7685 = vmatprep.mubr.bf16.mxu0 %v6925
        %7686 = vmatmul.mubr.bf16.gmra.mxu0 %v6924
        %v7687 = vpop.f32.mrf.mxu0
        %v7688 = vadd.f32 %v7599, %v7687
        %v7689 = vpop.f32.mrf.mxu0
        %v7690 = vpop.f32.mrf.mxu0
        %v7691 = vadd.f32 %v7602, %v7690
        %v7692 = vpop.f32.mrf.mxu0
        %7693 = vmatprep.mubr.bf16.mxu0 %v6934
        %7694 = vmatmul.mubr.bf16.gmra.mxu0 %v6933
        %v7695 = vpop.f32.mrf.mxu0
        %v7696 = vadd.f32 %v7607, %v7695
        %v7697 = vpop.f32.mrf.mxu0
        %v7698 = vpop.f32.mrf.mxu0
        %v7699 = vadd.f32 %v7610, %v7698
        %v7700 = vpop.f32.mrf.mxu0
        %7701 = vmatprep.mubr.bf16.mxu0 %v6943
        %7702 = vmatmul.mubr.bf16.gmra.mxu0 %v6942
        %v7703 = vpop.f32.mrf.mxu0
        %v7704 = vadd.f32 %v7615, %v7703
        %v7705 = vpop.f32.mrf.mxu0
        %v7706 = vpop.f32.mrf.mxu0
        %v7707 = vadd.f32 %v7618, %v7706
        %v7708 = vpop.f32.mrf.mxu0
        %7709 = vdwg.mxu0
        %7710 = vmatprep.subr.bf16.mxu0 0
        %7711 = vmatpush1.bf16.msra.mxu0 %v7427
        %7712 = vmatprep.subr.bf16.mxu0 0
        %7713 = vmatpush1.bf16.msra.mxu0 %v7426
        %7714 = vmatprep.subr.bf16.mxu0 0
        %7715 = vmatpush1.bf16.msra.mxu0 %v7425
        %7716 = vmatprep.subr.bf16.mxu0 0
        %7717 = vmatpush1.bf16.msra.mxu0 %v7424
        %7718 = vmatprep.subr.bf16.mxu0 0
        %7719 = vmatpush1.bf16.msra.mxu0 %v7423
        %7720 = vmatprep.subr.bf16.mxu0 0
        %7721 = vmatpush1.bf16.msra.mxu0 %v7422
        %7722 = vmatprep.subr.bf16.mxu0 0
        %7723 = vmatpush1.bf16.msra.mxu0 %v7421
        %7724 = vmatprep.subr.bf16.mxu0 0
        %7725 = vmatpush1.bf16.msra.mxu0 %v7420
        %7726 = vmatprep.subr.bf16.mxu0 0
        %7727 = vmatpush2.bf16.msra.mxu0 %v7435
        %7728 = vmatprep.subr.bf16.mxu0 0
        %7729 = vmatpush2.bf16.msra.mxu0 %v7434
        %7730 = vmatprep.subr.bf16.mxu0 0
        %7731 = vmatpush2.bf16.msra.mxu0 %v7433
        %7732 = vmatprep.subr.bf16.mxu0 0
        %7733 = vmatpush2.bf16.msra.mxu0 %v7432
        %7734 = vmatprep.subr.bf16.mxu0 0
        %7735 = vmatpush2.bf16.msra.mxu0 %v7431
        %7736 = vmatprep.subr.bf16.mxu0 0
        %7737 = vmatpush2.bf16.msra.mxu0 %v7430
        %7738 = vmatprep.subr.bf16.mxu0 0
        %7739 = vmatpush2.bf16.msra.mxu0 %v7429
        %7740 = vmatprep.subr.bf16.mxu0 0
        %7741 = vmatpush2.bf16.msra.mxu0 %v7428
        %7742 = vmatprep.mubr.bf16.mxu0 %v6891
        %7743 = vmatmul.mubr.bf16.gmra.mxu0 %v6890
        %v7744 = vpop.f32.mrf.mxu0
        %v7745 = vadd.f32 %v7656, %v7744
        %v7746 = vpop.f32.mrf.mxu0
        %v7747 = vpop.f32.mrf.mxu0
        %v7748 = vadd.f32 %v7659, %v7747
        %v7749 = vpop.f32.mrf.mxu0
        %7750 = vmatprep.mubr.bf16.mxu0 %v6900
        %7751 = vmatmul.mubr.bf16.gmra.mxu0 %v6899
        %v7752 = vpop.f32.mrf.mxu0
        %v7753 = vadd.f32 %v7664, %v7752
        %v7754 = vpop.f32.mrf.mxu0
        %v7755 = vpop.f32.mrf.mxu0
        %v7756 = vadd.f32 %v7667, %v7755
        %v7757 = vpop.f32.mrf.mxu0
        %7758 = vmatprep.mubr.bf16.mxu0 %v6909
        %7759 = vmatmul.mubr.bf16.gmra.mxu0 %v6908
        %v7760 = vpop.f32.mrf.mxu0
        %v7761 = vadd.f32 %v7672, %v7760
        %v7762 = vpop.f32.mrf.mxu0
        %v7763 = vpop.f32.mrf.mxu0
        %v7764 = vadd.f32 %v7675, %v7763
        %v7765 = vpop.f32.mrf.mxu0
        %7766 = vmatprep.mubr.bf16.mxu0 %v6918
        %7767 = vmatmul.mubr.bf16.gmra.mxu0 %v6917
        %v7768 = vpop.f32.mrf.mxu0
        %v7769 = vadd.f32 %v7680, %v7768
        %v7770 = vpop.f32.mrf.mxu0
        %v7771 = vpop.f32.mrf.mxu0
        %v7772 = vadd.f32 %v7683, %v7771
        %v7773 = vpop.f32.mrf.mxu0
        %7774 = vmatprep.mubr.bf16.mxu0 %v6927
        %7775 = vmatmul.mubr.bf16.gmra.mxu0 %v6926
        %v7776 = vpop.f32.mrf.mxu0
        %v7777 = vadd.f32 %v7688, %v7776
        %v7778 = vpop.f32.mrf.mxu0
        %v7779 = vpop.f32.mrf.mxu0
        %v7780 = vadd.f32 %v7691, %v7779
        %v7781 = vpop.f32.mrf.mxu0
        %7782 = vmatprep.mubr.bf16.mxu0 %v6936
        %7783 = vmatmul.mubr.bf16.gmra.mxu0 %v6935
        %v7784 = vpop.f32.mrf.mxu0
        %v7785 = vadd.f32 %v7696, %v7784
        %v7786 = vpop.f32.mrf.mxu0
        %v7787 = vpop.f32.mrf.mxu0
        %v7788 = vadd.f32 %v7699, %v7787
        %v7789 = vpop.f32.mrf.mxu0
        %7790 = vmatprep.mubr.bf16.mxu0 %v6945
        %7791 = vmatmul.mubr.bf16.gmra.mxu0 %v6944
        %v7792 = vpop.f32.mrf.mxu0
        %v7793 = vadd.f32 %v7704, %v7792
        %v7794 = vpop.f32.mrf.mxu0
        %v7795 = vpop.f32.mrf.mxu0
        %v7796 = vadd.f32 %v7707, %v7795
        %v7797 = vpop.f32.mrf.mxu0
        %7798 = vdwg.mxu0
        %7799 = vmatprep.subr.bf16.mxu0 0
        %7800 = vmatpush1.bf16.msra.mxu0 %v7443
        %7801 = vmatprep.subr.bf16.mxu0 0
        %7802 = vmatpush1.bf16.msra.mxu0 %v7442
        %7803 = vmatprep.subr.bf16.mxu0 0
        %7804 = vmatpush1.bf16.msra.mxu0 %v7441
        %7805 = vmatprep.subr.bf16.mxu0 0
        %7806 = vmatpush1.bf16.msra.mxu0 %v7440
        %7807 = vmatprep.subr.bf16.mxu0 0
        %7808 = vmatpush1.bf16.msra.mxu0 %v7439
        %7809 = vmatprep.subr.bf16.mxu0 0
        %7810 = vmatpush1.bf16.msra.mxu0 %v7438
        %7811 = vmatprep.subr.bf16.mxu0 0
        %7812 = vmatpush1.bf16.msra.mxu0 %v7437
        %7813 = vmatprep.subr.bf16.mxu0 0
        %7814 = vmatpush1.bf16.msra.mxu0 %v7436
        %7815 = vmatprep.subr.bf16.mxu0 0
        %7816 = vmatpush2.bf16.msra.mxu0 %v7451
        %7817 = vmatprep.subr.bf16.mxu0 0
        %7818 = vmatpush2.bf16.msra.mxu0 %v7450
        %7819 = vmatprep.subr.bf16.mxu0 0
        %7820 = vmatpush2.bf16.msra.mxu0 %v7449
        %7821 = vmatprep.subr.bf16.mxu0 0
        %7822 = vmatpush2.bf16.msra.mxu0 %v7448
        %7823 = vmatprep.subr.bf16.mxu0 0
        %7824 = vmatpush2.bf16.msra.mxu0 %v7447
        %7825 = vmatprep.subr.bf16.mxu0 0
        %7826 = vmatpush2.bf16.msra.mxu0 %v7446
        %7827 = vmatprep.subr.bf16.mxu0 0
        %7828 = vmatpush2.bf16.msra.mxu0 %v7445
        %7829 = vmatprep.subr.bf16.mxu0 0
        %7830 = vmatpush2.bf16.msra.mxu0 %v7444
        %7831 = vmatprep.mubr.bf16.mxu0 %v6893
        %7832 = vmatmul.mubr.bf16.gmra.mxu0 %v6892
        %v7833 = vpop.f32.mrf.mxu0
        %v7834 = vadd.f32 %v7745, %v7833
        %v7835 = vpop.f32.mrf.mxu0
        %v7836 = vpop.f32.mrf.mxu0
        %v7837 = vadd.f32 %v7748, %v7836
        %v7838 = vpop.f32.mrf.mxu0
        %7839 = vmatprep.mubr.bf16.mxu0 %v6902
        %7840 = vmatmul.mubr.bf16.gmra.mxu0 %v6901
        %v7841 = vpop.f32.mrf.mxu0
        %v7842 = vadd.f32 %v7753, %v7841
        %v7843 = vpop.f32.mrf.mxu0
        %v7844 = vpop.f32.mrf.mxu0
        %v7845 = vadd.f32 %v7756, %v7844
        %v7846 = vpop.f32.mrf.mxu0
        %7847 = vmatprep.mubr.bf16.mxu0 %v6911
        %7848 = vmatmul.mubr.bf16.gmra.mxu0 %v6910
        %v7849 = vpop.f32.mrf.mxu0
        %v7850 = vadd.f32 %v7761, %v7849
        %v7851 = vpop.f32.mrf.mxu0
        %v7852 = vpop.f32.mrf.mxu0
        %v7853 = vadd.f32 %v7764, %v7852
        %v7854 = vpop.f32.mrf.mxu0
        %7855 = vmatprep.mubr.bf16.mxu0 %v6920
        %7856 = vmatmul.mubr.bf16.gmra.mxu0 %v6919
        %v7857 = vpop.f32.mrf.mxu0
        %v7858 = vadd.f32 %v7769, %v7857
        %v7859 = vpop.f32.mrf.mxu0
        %v7860 = vpop.f32.mrf.mxu0
        %v7861 = vadd.f32 %v7772, %v7860
        %v7862 = vpop.f32.mrf.mxu0
        %7863 = vmatprep.mubr.bf16.mxu0 %v6929
        %7864 = vmatmul.mubr.bf16.gmra.mxu0 %v6928
        %v7865 = vpop.f32.mrf.mxu0
        %v7866 = vadd.f32 %v7777, %v7865
        %v7867 = vpop.f32.mrf.mxu0
        %v7868 = vpop.f32.mrf.mxu0
        %v7869 = vadd.f32 %v7780, %v7868
        %v7870 = vpop.f32.mrf.mxu0
        %7871 = vmatprep.mubr.bf16.mxu0 %v6938
        %7872 = vmatmul.mubr.bf16.gmra.mxu0 %v6937
        %v7873 = vpop.f32.mrf.mxu0
        %v7874 = vadd.f32 %v7785, %v7873
        %v7875 = vpop.f32.mrf.mxu0
        %v7876 = vpop.f32.mrf.mxu0
        %v7877 = vadd.f32 %v7788, %v7876
        %v7878 = vpop.f32.mrf.mxu0
        %7879 = vmatprep.mubr.bf16.mxu0 %v6947
        %7880 = vmatmul.mubr.bf16.gmra.mxu0 %v6946
        %v7881 = vpop.f32.mrf.mxu0
        %v7882 = vadd.f32 %v7793, %v7881
        %v7883 = vpop.f32.mrf.mxu0
        %v7884 = vpop.f32.mrf.mxu0
        %v7885 = vadd.f32 %v7796, %v7884
        %v7886 = vpop.f32.mrf.mxu0
        %7887 = vdwg.mxu0
        %7888 = vmatprep.subr.bf16.mxu0 0
        %7889 = vmatpush1.bf16.msra.mxu0 %v7459
        %7890 = vmatprep.subr.bf16.mxu0 0
        %7891 = vmatpush1.bf16.msra.mxu0 %v7458
        %7892 = vmatprep.subr.bf16.mxu0 0
        %7893 = vmatpush1.bf16.msra.mxu0 %v7457
        %7894 = vmatprep.subr.bf16.mxu0 0
        %7895 = vmatpush1.bf16.msra.mxu0 %v7456
        %7896 = vmatprep.subr.bf16.mxu0 0
        %7897 = vmatpush1.bf16.msra.mxu0 %v7455
        %7898 = vmatprep.subr.bf16.mxu0 0
        %7899 = vmatpush1.bf16.msra.mxu0 %v7454
        %7900 = vmatprep.subr.bf16.mxu0 0
        %7901 = vmatpush1.bf16.msra.mxu0 %v7453
        %7902 = vmatprep.subr.bf16.mxu0 0
        %7903 = vmatpush1.bf16.msra.mxu0 %v7452
        %7904 = vmatprep.subr.bf16.mxu0 0
        %7905 = vmatpush2.bf16.msra.mxu0 0
        %7906 = vmatprep.subr.bf16.mxu0 0
        %7907 = vmatpush2.bf16.msra.mxu0 0
        %7908 = vmatprep.subr.bf16.mxu0 0
        %7909 = vmatpush2.bf16.msra.mxu0 0
        %7910 = vmatprep.subr.bf16.mxu0 0
        %7911 = vmatpush2.bf16.msra.mxu0 0
        %7912 = vmatprep.subr.bf16.mxu0 0
        %7913 = vmatpush2.bf16.msra.mxu0 0
        %7914 = vmatprep.subr.bf16.mxu0 0
        %7915 = vmatpush2.bf16.msra.mxu0 0
        %7916 = vmatprep.subr.bf16.mxu0 0
        %7917 = vmatpush2.bf16.msra.mxu0 0
        %7918 = vmatprep.subr.bf16.mxu0 0
        %7919 = vmatpush2.bf16.msra.mxu0 0
        %7920 = vmatprep.mubr.bf16.mxu0 0
        %7921 = vmatmul.mubr.bf16.gmra.mxu0 %v6894
        %v7922 = vpop.f32.mrf.mxu0
        %v7923 = vadd.f32 %v7834, %v7922
        %v7924 = vpop.f32.mrf.mxu0
        %v7925 = vpop.f32.mrf.mxu0
        %v7926 = vadd.f32 %v7837, %v7925
        %v7927 = vpop.f32.mrf.mxu0
        %7928 = vmatprep.mubr.bf16.mxu0 0
        %7929 = vmatmul.mubr.bf16.gmra.mxu0 %v6903
        %v7930 = vpop.f32.mrf.mxu0
        %v7931 = vadd.f32 %v7842, %v7930
        %v7932 = vpop.f32.mrf.mxu0
        %v7933 = vpop.f32.mrf.mxu0
        %v7934 = vadd.f32 %v7845, %v7933
        %v7935 = vpop.f32.mrf.mxu0
        %7936 = vmatprep.mubr.bf16.mxu0 0
        %7937 = vmatmul.mubr.bf16.gmra.mxu0 %v6912
        %v7938 = vpop.f32.mrf.mxu0
        %v7939 = vadd.f32 %v7850, %v7938
        %v7940 = vpop.f32.mrf.mxu0
        %v7941 = vpop.f32.mrf.mxu0
        %v7942 = vadd.f32 %v7853, %v7941
        %v7943 = vpop.f32.mrf.mxu0
        %7944 = vmatprep.mubr.bf16.mxu0 0
        %7945 = vmatmul.mubr.bf16.gmra.mxu0 %v6921
        %v7946 = vpop.f32.mrf.mxu0
        %v7947 = vadd.f32 %v7858, %v7946
        %v7948 = vpop.f32.mrf.mxu0
        %v7949 = vpop.f32.mrf.mxu0
        %v7950 = vadd.f32 %v7861, %v7949
        %v7951 = vpop.f32.mrf.mxu0
        %7952 = vmatprep.mubr.bf16.mxu0 0
        %7953 = vmatmul.mubr.bf16.gmra.mxu0 %v6930
        %v7954 = vpop.f32.mrf.mxu0
        %v7955 = vadd.f32 %v7866, %v7954
        %v7956 = vpop.f32.mrf.mxu0
        %v7957 = vpop.f32.mrf.mxu0
        %v7958 = vadd.f32 %v7869, %v7957
        %v7959 = vpop.f32.mrf.mxu0
        %7960 = vmatprep.mubr.bf16.mxu0 0
        %7961 = vmatmul.mubr.bf16.gmra.mxu0 %v6939
        %v7962 = vpop.f32.mrf.mxu0
        %v7963 = vadd.f32 %v7874, %v7962
        %v7964 = vpop.f32.mrf.mxu0
        %v7965 = vpop.f32.mrf.mxu0
        %v7966 = vadd.f32 %v7877, %v7965
        %v7967 = vpop.f32.mrf.mxu0
        %7968 = vmatprep.mubr.bf16.mxu0 0
        %7969 = vmatmul.mubr.bf16.gmra.mxu0 %v6948
        %v7970 = vpop.f32.mrf.mxu0
        %v7971 = vadd.f32 %v7882, %v7970
        %v7972 = vpop.f32.mrf.mxu0
        %v7973 = vpop.f32.mrf.mxu0
        %v7974 = vadd.f32 %v7885, %v7973
        %v7975 = vpop.f32.mrf.mxu0
        %7976 = vdwg.mxu0
        %v7977 = vmax.f32 %v7923, 0.0
        %v7978 = vmax.f32 %v7926, 0.0
        %v7979 = vmax.f32 %v7931, 0.0
        %v7980 = vmax.f32 %v7934, 0.0
        %v7981 = vmax.f32 %v7939, 0.0
        %v7982 = vmax.f32 %v7942, 0.0
        %v7983 = vmax.f32 %v7947, 0.0
        %v7984 = vmax.f32 %v7950, 0.0
        %v7985 = vmax.f32 %v7955, 0.0
        %v7986 = vmax.f32 %v7958, 0.0
        %v7987 = vmax.f32 %v7963, 0.0
        %v7988 = vmax.f32 %v7966, 0.0
        %v7989 = vmax.f32 %v7971, 0.0
        %v7990 = vmax.f32 %v7974, 0.0
        %v7991 = vmul.f32 %v7977, %v6637
        %v7992 = vmul.f32 %v7978, %v6642
        %v7993 = vmul.f32 %v7979, %v6647
        %v7994 = vmul.f32 %v7980, %v6652
        %v7995 = vmul.f32 %v7981, %v6657
        %v7996 = vmul.f32 %v7982, %v6662
        %v7997 = vmul.f32 %v7983, %v6667
        %v7998 = vmul.f32 %v7984, %v6672
        %v7999 = vmul.f32 %v7985, %v6677
        %v8000 = vmul.f32 %v7986, %v6682
        %v8001 = vmul.f32 %v7987, %v6687
        %v8002 = vmul.f32 %v7988, %v6692
        %v8003 = vmul.f32 %v7989, %v6697
        %v8004 = vmul.f32 %v7990, %v6702
        %v8005 = vrot.slane %v7991, 5
        %v8006 = vrot.slane %v7992, 5
        %v8007 = vrot.slane %v7993, 5
        %v8008 = vrot.slane %v7994, 5
        %v8009 = vrot.slane %v7995, 5
        %v8010 = vrot.slane %v7996, 5
        %v8011 = vrot.slane %v7997, 5
        %v8012 = vrot.slane %v7998, 5
        %v8013 = vrot.slane %v7999, 5
        %v8014 = vrot.slane %v8000, 5
        %v8015 = vrot.slane %v8001, 5
        %v8016 = vrot.slane %v8002, 5
        %v8017 = vrot.slane %v8003, 5
        %v8018 = vrot.slane %v8004, 5
        %v8019 = vsel %vm1603, %v8017, %v8018
        %v8020 = vsel %vm1603, %v8016, %v8017
        %v8021 = vsel %vm1603, %v8015, %v8016
        %v8022 = vsel %vm1603, %v8014, %v8015
        %v8023 = vsel %vm1603, %v8013, %v8014
        %v8024 = vsel %vm1603, %v8012, %v8013
        %v8025 = vsel %vm1603, %v8011, %v8012
        %v8026 = vsel %vm1603, %v8010, %v8011
        %v8027 = vsel %vm1603, %v8009, %v8010
        %v8028 = vsel %vm1603, %v8008, %v8009
        %v8029 = vsel %vm1603, %v8007, %v8008
        %v8030 = vsel %vm1603, %v8006, %v8007
        %v8031 = vsel %vm1603, %v8005, %v8006
        %v8032 = vsel %vm1603, %v8018, %v8005
        %v8033 = vrot.slane %v7991, 6
        %v8034 = vrot.slane %v7992, 6
        %v8035 = vrot.slane %v7993, 6
        %v8036 = vrot.slane %v7994, 6
        %v8037 = vrot.slane %v7995, 6
        %v8038 = vrot.slane %v7996, 6
        %v8039 = vrot.slane %v7997, 6
        %v8040 = vrot.slane %v7998, 6
        %v8041 = vrot.slane %v7999, 6
        %v8042 = vrot.slane %v8000, 6
        %v8043 = vrot.slane %v8001, 6
        %v8044 = vrot.slane %v8002, 6
        %v8045 = vrot.slane %v8003, 6
        %v8046 = vrot.slane %v8004, 6
        %v8047 = vsel %vm1688, %v8045, %v8046
        %v8048 = vsel %vm1688, %v8044, %v8045
        %v8049 = vsel %vm1688, %v8043, %v8044
        %v8050 = vsel %vm1688, %v8042, %v8043
        %v8051 = vsel %vm1688, %v8041, %v8042
        %v8052 = vsel %vm1688, %v8040, %v8041
        %v8053 = vsel %vm1688, %v8039, %v8040
        %v8054 = vsel %vm1688, %v8038, %v8039
        %v8055 = vsel %vm1688, %v8037, %v8038
        %v8056 = vsel %vm1688, %v8036, %v8037
        %v8057 = vsel %vm1688, %v8035, %v8036
        %v8058 = vsel %vm1688, %v8034, %v8035
        %v8059 = vsel %vm1688, %v8033, %v8034
        %v8060 = vsel %vm1688, %v8046, %v8033
        %v8061 = vrot.slane %v7991, 7
        %v8062 = vrot.slane %v7992, 7
        %v8063 = vrot.slane %v7993, 7
        %v8064 = vrot.slane %v7994, 7
        %v8065 = vrot.slane %v7995, 7
        %v8066 = vrot.slane %v7996, 7
        %v8067 = vrot.slane %v7997, 7
        %v8068 = vrot.slane %v7998, 7
        %v8069 = vrot.slane %v7999, 7
        %v8070 = vrot.slane %v8000, 7
        %v8071 = vrot.slane %v8001, 7
        %v8072 = vrot.slane %v8002, 7
        %v8073 = vrot.slane %v8003, 7
        %v8074 = vrot.slane %v8004, 7
        %v8075 = vsel %vm1773, %v8073, %v8074
        %v8076 = vsel %vm1773, %v8072, %v8073
        %v8077 = vsel %vm1773, %v8071, %v8072
        %v8078 = vsel %vm1773, %v8070, %v8071
        %v8079 = vsel %vm1773, %v8069, %v8070
        %v8080 = vsel %vm1773, %v8068, %v8069
        %v8081 = vsel %vm1773, %v8067, %v8068
        %v8082 = vsel %vm1773, %v8066, %v8067
        %v8083 = vsel %vm1773, %v8065, %v8066
        %v8084 = vsel %vm1773, %v8064, %v8065
        %v8085 = vsel %vm1773, %v8063, %v8064
        %v8086 = vsel %vm1773, %v8062, %v8063
        %v8087 = vsel %vm1773, %v8061, %v8062
        %v8088 = vsel %vm1773, %v8074, %v8061
        %v8089 = vrot.slane %v7991, 1
        %v8090 = vrot.slane %v7992, 1
        %v8091 = vrot.slane %v7993, 1
        %v8092 = vrot.slane %v7994, 1
        %v8093 = vrot.slane %v7995, 1
        %v8094 = vrot.slane %v7996, 1
        %v8095 = vrot.slane %v7997, 1
        %v8096 = vrot.slane %v7998, 1
        %v8097 = vrot.slane %v7999, 1
        %v8098 = vrot.slane %v8000, 1
        %v8099 = vrot.slane %v8001, 1
        %v8100 = vrot.slane %v8002, 1
        %v8101 = vrot.slane %v8003, 1
        %v8102 = vrot.slane %v8004, 1
        %v8103 = vsel %vm1858, %v8101, %v8102
        %v8104 = vsel %vm1858, %v8100, %v8101
        %v8105 = vsel %vm1858, %v8099, %v8100
        %v8106 = vsel %vm1858, %v8098, %v8099
        %v8107 = vsel %vm1858, %v8097, %v8098
        %v8108 = vsel %vm1858, %v8096, %v8097
        %v8109 = vsel %vm1858, %v8095, %v8096
        %v8110 = vsel %vm1858, %v8094, %v8095
        %v8111 = vsel %vm1858, %v8093, %v8094
        %v8112 = vsel %vm1858, %v8092, %v8093
        %v8113 = vsel %vm1858, %v8091, %v8092
        %v8114 = vsel %vm1858, %v8090, %v8091
        %v8115 = vsel %vm1858, %v8089, %v8090
        %v8116 = vsel %vm1858, %v8102, %v8089
        %v8117 = vrot.slane %v7991, 2
        %v8118 = vrot.slane %v7992, 2
        %v8119 = vrot.slane %v7993, 2
        %v8120 = vrot.slane %v7994, 2
        %v8121 = vrot.slane %v7995, 2
        %v8122 = vrot.slane %v7996, 2
        %v8123 = vrot.slane %v7997, 2
        %v8124 = vrot.slane %v7998, 2
        %v8125 = vrot.slane %v7999, 2
        %v8126 = vrot.slane %v8000, 2
        %v8127 = vrot.slane %v8001, 2
        %v8128 = vrot.slane %v8002, 2
        %v8129 = vrot.slane %v8003, 2
        %v8130 = vrot.slane %v8004, 2
        %v8131 = vsel %vm1943, %v8129, %v8130
        %v8132 = vsel %vm1943, %v8128, %v8129
        %v8133 = vsel %vm1943, %v8127, %v8128
        %v8134 = vsel %vm1943, %v8126, %v8127
        %v8135 = vsel %vm1943, %v8125, %v8126
        %v8136 = vsel %vm1943, %v8124, %v8125
        %v8137 = vsel %vm1943, %v8123, %v8124
        %v8138 = vsel %vm1943, %v8122, %v8123
        %v8139 = vsel %vm1943, %v8121, %v8122
        %v8140 = vsel %vm1943, %v8120, %v8121
        %v8141 = vsel %vm1943, %v8119, %v8120
        %v8142 = vsel %vm1943, %v8118, %v8119
        %v8143 = vsel %vm1943, %v8117, %v8118
        %v8144 = vsel %vm1943, %v8130, %v8117
        %v8145 = vrot.slane %v7991, 3
        %v8146 = vrot.slane %v7992, 3
        %v8147 = vrot.slane %v7993, 3
        %v8148 = vrot.slane %v7994, 3
        %v8149 = vrot.slane %v7995, 3
        %v8150 = vrot.slane %v7996, 3
        %v8151 = vrot.slane %v7997, 3
        %v8152 = vrot.slane %v7998, 3
        %v8153 = vrot.slane %v7999, 3
        %v8154 = vrot.slane %v8000, 3
        %v8155 = vrot.slane %v8001, 3
        %v8156 = vrot.slane %v8002, 3
        %v8157 = vrot.slane %v8003, 3
        %v8158 = vrot.slane %v8004, 3
        %v8159 = vsel %vm2028, %v8157, %v8158
        %v8160 = vsel %vm2028, %v8156, %v8157
        %v8161 = vsel %vm2028, %v8155, %v8156
        %v8162 = vsel %vm2028, %v8154, %v8155
        %v8163 = vsel %vm2028, %v8153, %v8154
        %v8164 = vsel %vm2028, %v8152, %v8153
        %v8165 = vsel %vm2028, %v8151, %v8152
        %v8166 = vsel %vm2028, %v8150, %v8151
        %v8167 = vsel %vm2028, %v8149, %v8150
        %v8168 = vsel %vm2028, %v8148, %v8149
        %v8169 = vsel %vm2028, %v8147, %v8148
        %v8170 = vsel %vm2028, %v8146, %v8147
        %v8171 = vsel %vm2028, %v8145, %v8146
        %v8172 = vsel %vm2028, %v8158, %v8145
        %v8173 = vpack.c.bf16 %v8032, %v8019
        %v8174 = vpack.c.bf16 %v8060, %v8047
        %v8175 = vpack.c.bf16 %v8088, %v8075
        %v8176 = vpack.c.bf16 %v8087, %v8088
        %v8177 = vpack.c.bf16 %v7992, %v7991
        %v8178 = vpack.c.bf16 %v8114, %v8115
        %v8179 = vpack.c.bf16 %v8113, %v8114
        %v8180 = vpack.c.bf16 %v8141, %v8142
        %v8181 = vpack.c.bf16 %v8169, %v8170
        %v8182 = vpack.c.bf16 %v8030, %v8031
        %v8183 = vpack.c.bf16 %v8058, %v8059
        %v8184 = vpack.c.bf16 %v8086, %v8087
        %v8185 = vpack.c.bf16 %v8085, %v8086
        %v8186 = vpack.c.bf16 %v7994, %v7993
        %v8187 = vpack.c.bf16 %v8112, %v8113
        %v8188 = vpack.c.bf16 %v8111, %v8112
        %v8189 = vpack.c.bf16 %v8139, %v8140
        %v8190 = vpack.c.bf16 %v8167, %v8168
        %v8191 = vpack.c.bf16 %v8028, %v8029
        %v8192 = vpack.c.bf16 %v8056, %v8057
        %v8193 = vpack.c.bf16 %v8084, %v8085
        %v8194 = vpack.c.bf16 %v8083, %v8084
        %v8195 = vpack.c.bf16 %v7996, %v7995
        %v8196 = vpack.c.bf16 %v8110, %v8111
        %v8197 = vpack.c.bf16 %v8109, %v8110
        %v8198 = vpack.c.bf16 %v8137, %v8138
        %v8199 = vpack.c.bf16 %v8165, %v8166
        %v8200 = vpack.c.bf16 %v8026, %v8027
        %v8201 = vpack.c.bf16 %v8054, %v8055
        %v8202 = vpack.c.bf16 %v8082, %v8083
        %v8203 = vpack.c.bf16 %v8081, %v8082
        %v8204 = vpack.c.bf16 %v7998, %v7997
        %v8205 = vpack.c.bf16 %v8108, %v8109
        %v8206 = vpack.c.bf16 %v8107, %v8108
        %v8207 = vpack.c.bf16 %v8135, %v8136
        %v8208 = vpack.c.bf16 %v8163, %v8164
        %v8209 = vpack.c.bf16 %v8024, %v8025
        %v8210 = vpack.c.bf16 %v8052, %v8053
        %v8211 = vpack.c.bf16 %v8080, %v8081
        %v8212 = vpack.c.bf16 %v8079, %v8080
        %v8213 = vpack.c.bf16 %v8000, %v7999
        %v8214 = vpack.c.bf16 %v8106, %v8107
        %v8215 = vpack.c.bf16 %v8105, %v8106
        %v8216 = vpack.c.bf16 %v8133, %v8134
        %v8217 = vpack.c.bf16 %v8161, %v8162
        %v8218 = vpack.c.bf16 %v8022, %v8023
        %v8219 = vpack.c.bf16 %v8050, %v8051
        %v8220 = vpack.c.bf16 %v8078, %v8079
        %v8221 = vpack.c.bf16 %v8077, %v8078
        %v8222 = vpack.c.bf16 %v8002, %v8001
        %v8223 = vpack.c.bf16 %v8104, %v8105
        %v8224 = vpack.c.bf16 %v8103, %v8104
        %v8225 = vpack.c.bf16 %v8131, %v8132
        %v8226 = vpack.c.bf16 %v8159, %v8160
        %v8227 = vpack.c.bf16 %v8020, %v8021
        %v8228 = vpack.c.bf16 %v8048, %v8049
        %v8229 = vpack.c.bf16 %v8076, %v8077
        %v8230 = vpack.c.bf16 %v8075, %v8076
        %v8231 = vpack.c.bf16 %v8004, %v8003
        %v8232 = vpack.c.bf16 %v8116, %v8103
        %v8233 = vpack.c.bf16 %v8115, %v8116
        %v8234 = vpack.c.bf16 %v8143, %v8144
        %v8235 = vpack.c.bf16 %v8171, %v8172
        %v8236 = vld [vmem:[%s16] sm:$0xf]
        %v8237 = vld [vmem:[%s16 + $0x4] sm:$0xf]
        %v8238 = vld [vmem:[%s16 + $0x8] sm:$0xf]
        %v8239 = vld [vmem:[%s16 + $0xc] sm:$0xf]
        %v8240 = vld [vmem:[%s16 + $0x10] sm:$0xf]
        %v8241 = vld [vmem:[%s16 + $0x14] sm:$0xf]
        %v8242 = vld [vmem:[%s16 + $0x18] sm:$0xf]
        %v8243 = vld [vmem:[%s16 + $0x1c] sm:$0xf]
        %v8244 = vld [vmem:[%s16 + $0x20] sm:$0xf]
        %v8245 = vld [vmem:[%s16 + $0x24] sm:$0xf]
        %v8246 = vld [vmem:[%s16 + $0x28] sm:$0xf]
        %v8247 = vld [vmem:[%s16 + $0x2c] sm:$0xf]
        %v8248 = vld [vmem:[%s16 + $0x30] sm:$0xf]
        %v8249 = vld [vmem:[%s16 + $0x34] sm:$0xf]
        %v8250 = vld [vmem:[%s16 + $0x38] sm:$0xf]
        %v8251 = vld [vmem:[%s16 + $0x3c] sm:$0xf]
        %v8252 = vld [vmem:[%s16 + $0x40] sm:$0xf]
        %v8253 = vld [vmem:[%s16 + $0x44] sm:$0xf]
        %v8254 = vld [vmem:[%s16 + $0x48] sm:$0xf]
        %v8255 = vld [vmem:[%s16 + $0x4c] sm:$0xf]
        %v8256 = vld [vmem:[%s16 + $0x50] sm:$0xf]
        %v8257 = vld [vmem:[%s16 + $0x54] sm:$0xf]
        %v8258 = vld [vmem:[%s16 + $0x58] sm:$0xf]
        %v8259 = vld [vmem:[%s16 + $0x5c] sm:$0xf]
        %v8260 = vld [vmem:[%s16 + $0x60] sm:$0xf]
        %v8261 = vld [vmem:[%s16 + $0x64] sm:$0xf]
        %v8262 = vld [vmem:[%s16 + $0x68] sm:$0xf]
        %v8263 = vld [vmem:[%s16 + $0x6c] sm:$0xf]
        %v8264 = vld [vmem:[%s16 + $0x70] sm:$0xf]
        %v8265 = vld [vmem:[%s16 + $0x74] sm:$0xf]
        %v8266 = vld [vmem:[%s16 + $0x78] sm:$0xf]
        %v8267 = vld [vmem:[%s16 + $0x7c] sm:$0xf]
        %v8268 = vld [vmem:[%s16 + $0x80] sm:$0xf]
        %v8269 = vld [vmem:[%s16 + $0x84] sm:$0xf]
        %v8270 = vld [vmem:[%s16 + $0x88] sm:$0xf]
        %v8271 = vld [vmem:[%s16 + $0x8c] sm:$0xf]
        %v8272 = vld [vmem:[%s16 + $0x90] sm:$0xf]
        %v8273 = vld [vmem:[%s16 + $0x94] sm:$0xf]
        %v8274 = vld [vmem:[%s16 + $0x98] sm:$0xf]
        %v8275 = vld [vmem:[%s16 + $0x9c] sm:$0xf]
        %v8276 = vld [vmem:[%s16 + $0xa0] sm:$0xf]
        %v8277 = vld [vmem:[%s16 + $0xa4] sm:$0xf]
        %v8278 = vld [vmem:[%s16 + $0xa8] sm:$0xf]
        %v8279 = vld [vmem:[%s16 + $0xac] sm:$0xf]
        %v8280 = vld [vmem:[%s16 + $0xb0] sm:$0xf]
        %v8281 = vld [vmem:[%s16 + $0xb4] sm:$0xf]
        %v8282 = vld [vmem:[%s16 + $0xb8] sm:$0xf]
        %v8283 = vld [vmem:[%s16 + $0xbc] sm:$0xf]
        %v8284 = vld [vmem:[%s16 + $0xc0] sm:$0xf]
        %v8285 = vld [vmem:[%s16 + $0xc4] sm:$0xf]
        %v8286 = vld [vmem:[%s16 + $0xc8] sm:$0xf]
        %v8287 = vld [vmem:[%s16 + $0xcc] sm:$0xf]
        %v8288 = vld [vmem:[%s16 + $0xd0] sm:$0xf]
        %v8289 = vld [vmem:[%s16 + $0xd4] sm:$0xf]
        %v8290 = vld [vmem:[%s16 + $0xd8] sm:$0xf]
        %v8291 = vld [vmem:[%s16 + $0xdc] sm:$0xf]
        %v8292 = vld [vmem:[%s16 + $0xe0] sm:$0xf]
        %v8293 = vld [vmem:[%s16 + $0xe4] sm:$0xf]
        %v8294 = vld [vmem:[%s16 + $0xe8] sm:$0xf]
        %v8295 = vld [vmem:[%s16 + $0xec] sm:$0xf]
        %v8296 = vld [vmem:[%s16 + $0xf0] sm:$0xf]
        %v8297 = vld [vmem:[%s16 + $0xf4] sm:$0xf]
        %v8298 = vld [vmem:[%s16 + $0xf8] sm:$0xf]
        %v8299 = vld [vmem:[%s16 + $0xfc] sm:$0xf]
        %v8300 = vld [vmem:[%s16 + $0x100] sm:$0xf]
        %v8301 = vld [vmem:[%s16 + $0x104] sm:$0xf]
        %v8302 = vld [vmem:[%s16 + $0x108] sm:$0xf]
        %v8303 = vld [vmem:[%s16 + $0x10c] sm:$0xf]
        %v8304 = vld [vmem:[%s16 + $0x110] sm:$0xf]
        %v8305 = vld [vmem:[%s16 + $0x114] sm:$0xf]
        %v8306 = vld [vmem:[%s16 + $0x118] sm:$0xf]
        %v8307 = vld [vmem:[%s16 + $0x11c] sm:$0xf]
        %v8308 = vld [vmem:[%s16 + $0x120] sm:$0xf]
        %v8309 = vld [vmem:[%s16 + $0x124] sm:$0xf]
        %v8310 = vld [vmem:[%s16 + $0x128] sm:$0xf]
        %v8311 = vld [vmem:[%s16 + $0x12c] sm:$0xf]
        %v8312 = vld [vmem:[%s16 + $0x130] sm:$0xf]
        %v8313 = vld [vmem:[%s16 + $0x134] sm:$0xf]
        %v8314 = vld [vmem:[%s16 + $0x138] sm:$0xf]
        %v8315 = vld [vmem:[%s16 + $0x13c] sm:$0xf]
        %v8316 = vld [vmem:[%s16 + $0x140] sm:$0xf]
        %v8317 = vld [vmem:[%s16 + $0x144] sm:$0xf]
        %v8318 = vld [vmem:[%s16 + $0x148] sm:$0xf]
        %v8319 = vld [vmem:[%s16 + $0x14c] sm:$0xf]
        %v8320 = vld [vmem:[%s16 + $0x150] sm:$0xf]
        %v8321 = vld [vmem:[%s16 + $0x154] sm:$0xf]
        %v8322 = vld [vmem:[%s16 + $0x158] sm:$0xf]
        %v8323 = vld [vmem:[%s16 + $0x15c] sm:$0xf]
        %v8324 = vld [vmem:[%s16 + $0x160] sm:$0xf]
        %v8325 = vld [vmem:[%s16 + $0x164] sm:$0xf]
        %v8326 = vld [vmem:[%s16 + $0x168] sm:$0xf]
        %v8327 = vld [vmem:[%s16 + $0x16c] sm:$0xf]
        %v8328 = vld [vmem:[%s16 + $0x170] sm:$0xf]
        %v8329 = vld [vmem:[%s16 + $0x174] sm:$0xf]
        %v8330 = vld [vmem:[%s16 + $0x178] sm:$0xf]
        %v8331 = vld [vmem:[%s16 + $0x17c] sm:$0xf]
        %v8332 = vld [vmem:[%s16 + $0x180] sm:$0xf]
        %v8333 = vld [vmem:[%s16 + $0x184] sm:$0xf]
        %v8334 = vld [vmem:[%s16 + $0x188] sm:$0xf]
        %v8335 = vld [vmem:[%s16 + $0x18c] sm:$0xf]
        %v8336 = vld [vmem:[%s16 + $0x190] sm:$0xf]
        %v8337 = vld [vmem:[%s16 + $0x194] sm:$0xf]
        %v8338 = vld [vmem:[%s16 + $0x198] sm:$0xf]
        %v8339 = vld [vmem:[%s16 + $0x19c] sm:$0xf]
        %v8340 = vld [vmem:[%s16 + $0x1a0] sm:$0xf]
        %v8341 = vld [vmem:[%s16 + $0x1a4] sm:$0xf]
        %v8342 = vld [vmem:[%s16 + $0x1a8] sm:$0xf]
        %v8343 = vld [vmem:[%s16 + $0x1ac] sm:$0xf]
        %v8344 = vld [vmem:[%s16 + $0x1b0] sm:$0xf]
        %v8345 = vld [vmem:[%s16 + $0x1b4] sm:$0xf]
        %v8346 = vld [vmem:[%s16 + $0x1b8] sm:$0xf]
        %v8347 = vld [vmem:[%s16 + $0x1bc] sm:$0xf]
        %v8348 = vld [vmem:[%s16 + $0x1c0] sm:$0xf]
        %v8349 = vld [vmem:[%s16 + $0x1c4] sm:$0xf]
        %v8350 = vld [vmem:[%s16 + $0x1c8] sm:$0xf]
        %v8351 = vld [vmem:[%s16 + $0x1cc] sm:$0xf]
        %v8352 = vld [vmem:[%s16 + $0x1d0] sm:$0xf]
        %v8353 = vld [vmem:[%s16 + $0x1d4] sm:$0xf]
        %v8354 = vld [vmem:[%s16 + $0x1d8] sm:$0xf]
        %v8355 = vld [vmem:[%s16 + $0x1dc] sm:$0xf]
        %v8356 = vld [vmem:[%s16 + $0x1e0] sm:$0xf]
        %v8357 = vld [vmem:[%s16 + $0x1e4] sm:$0xf]
        %v8358 = vld [vmem:[%s16 + $0x1e8] sm:$0xf]
        %v8359 = vld [vmem:[%s16 + $0x1ec] sm:$0xf]
        %v8360 = vld [vmem:[%s16 + $0x1f0] sm:$0xf]
        %v8361 = vld [vmem:[%s16 + $0x1f4] sm:$0xf]
        %v8362 = vld [vmem:[%s16 + $0x1f8] sm:$0xf]
        %v8363 = vld [vmem:[%s16 + $0x1fc] sm:$0xf]
        %v8364 = vld [vmem:[%s16 + $0x200] sm:$0xf]
        %v8365 = vld [vmem:[%s16 + $0x204] sm:$0xf]
        %v8366 = vld [vmem:[%s16 + $0x208] sm:$0xf]
        %v8367 = vld [vmem:[%s16 + $0x20c] sm:$0xf]
        %v8368 = vld [vmem:[%s16 + $0x210] sm:$0xf]
        %v8369 = vld [vmem:[%s16 + $0x214] sm:$0xf]
        %v8370 = vld [vmem:[%s16 + $0x218] sm:$0xf]
        %v8371 = vld [vmem:[%s16 + $0x21c] sm:$0xf]
        %v8372 = vld [vmem:[%s16 + $0x220] sm:$0xf]
        %v8373 = vld [vmem:[%s16 + $0x224] sm:$0xf]
        %v8374 = vld [vmem:[%s16 + $0x228] sm:$0xf]
        %v8375 = vld [vmem:[%s16 + $0x22c] sm:$0xf]
        %v8376 = vld [vmem:[%s16 + $0x230] sm:$0xf]
        %v8377 = vld [vmem:[%s16 + $0x234] sm:$0xf]
        %v8378 = vld [vmem:[%s16 + $0x238] sm:$0xf]
        %v8379 = vld [vmem:[%s16 + $0x23c] sm:$0xf]
        %v8380 = vld [vmem:[%s17] sm:$0x1]
        %v8382 = vlaneseq
        %v8383 = vshrl.u32 %v8382, 7
        %v8384 = vsub.s32 0, %v8383
        %v8385 = vrot.slane %v8380, %v8384
        %v8531 = vunpack.c.l.b16 %v8236
        %v8532 = vunpack.c.l.b16 %v8237
        %v8533 = vunpack.c.l.b16 %v8238
        %v8534 = vunpack.c.l.b16 %v8239
        %v8535 = vunpack.c.l.b16 %v8240
        %v8536 = vunpack.c.l.b16 %v8241
        %v8537 = vunpack.c.l.b16 %v8242
        %v8538 = vunpack.c.l.b16 %v8243
        %v8539 = vunpack.c.l.b16 %v8244
        %v8540 = vunpack.c.l.b16 %v8245
        %v8541 = vunpack.c.l.b16 %v8246
        %v8542 = vunpack.c.l.b16 %v8247
        %v8543 = vunpack.c.l.b16 %v8248
        %v8544 = vunpack.c.l.b16 %v8249
        %v8545 = vunpack.c.l.b16 %v8250
        %v8546 = vunpack.c.l.b16 %v8251
        %v8547 = vunpack.c.l.b16 %v8252
        %v8548 = vunpack.c.l.b16 %v8253
        %v8549 = vunpack.c.l.b16 %v8254
        %v8550 = vunpack.c.l.b16 %v8255
        %v8551 = vunpack.c.l.b16 %v8256
        %v8552 = vunpack.c.l.b16 %v8257
        %v8553 = vunpack.c.l.b16 %v8258
        %v8554 = vunpack.c.l.b16 %v8259
        %v8555 = vunpack.c.l.b16 %v8260
        %v8556 = vunpack.c.l.b16 %v8261
        %v8557 = vunpack.c.l.b16 %v8262
        %v8558 = vunpack.c.l.b16 %v8263
        %v8559 = vunpack.c.l.b16 %v8264
        %v8560 = vunpack.c.l.b16 %v8265
        %v8561 = vunpack.c.l.b16 %v8266
        %v8562 = vunpack.c.l.b16 %v8267
        %v8563 = vunpack.c.l.b16 %v8268
        %v8564 = vunpack.c.l.b16 %v8269
        %v8565 = vunpack.c.l.b16 %v8270
        %v8566 = vunpack.c.l.b16 %v8271
        %v8567 = vunpack.c.l.b16 %v8272
        %v8568 = vunpack.c.l.b16 %v8273
        %v8569 = vunpack.c.l.b16 %v8274
        %v8570 = vunpack.c.l.b16 %v8275
        %v8571 = vunpack.c.l.b16 %v8276
        %v8572 = vunpack.c.l.b16 %v8277
        %v8573 = vunpack.c.l.b16 %v8278
        %v8574 = vunpack.c.l.b16 %v8279
        %v8575 = vunpack.c.l.b16 %v8280
        %v8576 = vunpack.c.l.b16 %v8281
        %v8577 = vunpack.c.l.b16 %v8282
        %v8578 = vunpack.c.l.b16 %v8283
        %v8579 = vunpack.c.l.b16 %v8284
        %v8580 = vunpack.c.l.b16 %v8285
        %v8581 = vunpack.c.l.b16 %v8286
        %v8582 = vunpack.c.l.b16 %v8287
        %v8583 = vunpack.c.l.b16 %v8288
        %v8584 = vunpack.c.l.b16 %v8289
        %v8585 = vunpack.c.l.b16 %v8290
        %v8586 = vunpack.c.l.b16 %v8291
        %v8587 = vunpack.c.l.b16 %v8292
        %v8588 = vunpack.c.l.b16 %v8293
        %v8589 = vunpack.c.l.b16 %v8294
        %v8590 = vunpack.c.l.b16 %v8295
        %v8591 = vunpack.c.l.b16 %v8296
        %v8592 = vunpack.c.l.b16 %v8297
        %v8593 = vunpack.c.l.b16 %v8298
        %v8594 = vunpack.c.l.b16 %v8299
        %v8595 = vunpack.c.l.b16 %v8300
        %v8596 = vunpack.c.l.b16 %v8301
        %v8597 = vunpack.c.l.b16 %v8302
        %v8598 = vunpack.c.l.b16 %v8303
        %v8599 = vunpack.c.l.b16 %v8304
        %v8600 = vunpack.c.l.b16 %v8305
        %v8601 = vunpack.c.l.b16 %v8306
        %v8602 = vunpack.c.l.b16 %v8307
        %v8603 = vunpack.c.l.b16 %v8308
        %v8604 = vunpack.c.l.b16 %v8309
        %v8605 = vunpack.c.l.b16 %v8310
        %v8606 = vunpack.c.l.b16 %v8311
        %v8607 = vunpack.c.l.b16 %v8312
        %v8608 = vunpack.c.l.b16 %v8313
        %v8609 = vunpack.c.l.b16 %v8314
        %v8610 = vunpack.c.l.b16 %v8315
        %v8611 = vunpack.c.l.b16 %v8316
        %v8612 = vunpack.c.l.b16 %v8317
        %v8613 = vunpack.c.l.b16 %v8318
        %v8614 = vunpack.c.l.b16 %v8319
        %v8615 = vunpack.c.l.b16 %v8320
        %v8616 = vunpack.c.l.b16 %v8321
        %v8617 = vunpack.c.l.b16 %v8322
        %v8618 = vunpack.c.l.b16 %v8323
        %v8619 = vunpack.c.l.b16 %v8324
        %v8620 = vunpack.c.l.b16 %v8325
        %v8621 = vunpack.c.l.b16 %v8326
        %v8622 = vunpack.c.l.b16 %v8327
        %v8623 = vunpack.c.l.b16 %v8328
        %v8624 = vunpack.c.l.b16 %v8329
        %v8625 = vunpack.c.l.b16 %v8330
        %v8626 = vunpack.c.l.b16 %v8331
        %v8627 = vunpack.c.l.b16 %v8332
        %v8628 = vunpack.c.l.b16 %v8333
        %v8629 = vunpack.c.l.b16 %v8334
        %v8630 = vunpack.c.l.b16 %v8335
        %v8631 = vunpack.c.l.b16 %v8336
        %v8632 = vunpack.c.l.b16 %v8337
        %v8633 = vunpack.c.l.b16 %v8338
        %v8634 = vunpack.c.l.b16 %v8339
        %v8635 = vunpack.c.l.b16 %v8340
        %v8636 = vunpack.c.l.b16 %v8341
        %v8637 = vunpack.c.l.b16 %v8342
        %v8638 = vunpack.c.l.b16 %v8343
        %v8639 = vunpack.c.l.b16 %v8344
        %v8640 = vunpack.c.l.b16 %v8345
        %v8641 = vunpack.c.l.b16 %v8346
        %v8642 = vunpack.c.l.b16 %v8347
        %v8643 = vunpack.c.l.b16 %v8348
        %v8644 = vunpack.c.l.b16 %v8349
        %v8645 = vunpack.c.l.b16 %v8350
        %v8646 = vunpack.c.l.b16 %v8351
        %v8647 = vunpack.c.l.b16 %v8352
        %v8648 = vunpack.c.l.b16 %v8353
        %v8649 = vunpack.c.l.b16 %v8354
        %v8650 = vunpack.c.l.b16 %v8355
        %v8651 = vunpack.c.l.b16 %v8356
        %v8652 = vunpack.c.l.b16 %v8357
        %v8653 = vunpack.c.l.b16 %v8358
        %v8654 = vunpack.c.l.b16 %v8359
        %v8655 = vunpack.c.l.b16 %v8360
        %v8656 = vunpack.c.l.b16 %v8361
        %v8657 = vunpack.c.l.b16 %v8362
        %v8658 = vunpack.c.l.b16 %v8363
        %v8659 = vunpack.c.l.b16 %v8364
        %v8660 = vunpack.c.l.b16 %v8365
        %v8661 = vunpack.c.l.b16 %v8366
        %v8662 = vunpack.c.l.b16 %v8367
        %v8663 = vunpack.c.l.b16 %v8368
        %v8664 = vunpack.c.l.b16 %v8369
        %v8665 = vunpack.c.l.b16 %v8370
        %v8666 = vunpack.c.l.b16 %v8371
        %v8667 = vunpack.c.l.b16 %v8372
        %v8668 = vunpack.c.l.b16 %v8373
        %v8669 = vunpack.c.l.b16 %v8374
        %v8670 = vunpack.c.l.b16 %v8375
        %v8671 = vunpack.c.l.b16 %v8376
        %v8672 = vunpack.c.l.b16 %v8377
        %v8673 = vunpack.c.l.b16 %v8378
        %v8674 = vunpack.c.l.b16 %v8379
        %v8675 = vpack.c.b16 %v8532, %v8531
        %v8676 = vpack.c.b16 %v8534, %v8533
        %v8677 = vpack.c.b16 %v8536, %v8535
        %v8678 = vpack.c.b16 %v8538, %v8537
        %v8679 = vpack.c.b16 %v8540, %v8539
        %v8680 = vpack.c.b16 %v8542, %v8541
        %v8681 = vpack.c.b16 %v8544, %v8543
        %v8682 = vpack.c.b16 %v8546, %v8545
        %v8683 = vpack.c.b16 %v8548, %v8547
        %v8684 = vpack.c.b16 %v8550, %v8549
        %v8685 = vpack.c.b16 %v8552, %v8551
        %v8686 = vpack.c.b16 %v8554, %v8553
        %v8687 = vpack.c.b16 %v8556, %v8555
        %v8688 = vpack.c.b16 %v8558, %v8557
        %v8689 = vpack.c.b16 %v8560, %v8559
        %v8690 = vpack.c.b16 %v8562, %v8561
        %v8691 = vpack.c.b16 %v8564, %v8563
        %v8692 = vpack.c.b16 %v8566, %v8565
        %v8693 = vpack.c.b16 %v8568, %v8567
        %v8694 = vpack.c.b16 %v8570, %v8569
        %v8695 = vpack.c.b16 %v8572, %v8571
        %v8696 = vpack.c.b16 %v8574, %v8573
        %v8697 = vpack.c.b16 %v8576, %v8575
        %v8698 = vpack.c.b16 %v8578, %v8577
        %v8699 = vpack.c.b16 %v8580, %v8579
        %v8700 = vpack.c.b16 %v8582, %v8581
        %v8701 = vpack.c.b16 %v8584, %v8583
        %v8702 = vpack.c.b16 %v8586, %v8585
        %v8703 = vpack.c.b16 %v8588, %v8587
        %v8704 = vpack.c.b16 %v8590, %v8589
        %v8705 = vpack.c.b16 %v8592, %v8591
        %v8706 = vpack.c.b16 %v8594, %v8593
        %v8707 = vpack.c.b16 %v8596, %v8595
        %v8708 = vpack.c.b16 %v8598, %v8597
        %v8709 = vpack.c.b16 %v8600, %v8599
        %v8710 = vpack.c.b16 %v8602, %v8601
        %v8711 = vpack.c.b16 %v8604, %v8603
        %v8712 = vpack.c.b16 %v8606, %v8605
        %v8713 = vpack.c.b16 %v8608, %v8607
        %v8714 = vpack.c.b16 %v8610, %v8609
        %v8715 = vpack.c.b16 %v8612, %v8611
        %v8716 = vpack.c.b16 %v8614, %v8613
        %v8717 = vpack.c.b16 %v8616, %v8615
        %v8718 = vpack.c.b16 %v8618, %v8617
        %v8719 = vpack.c.b16 %v8620, %v8619
        %v8720 = vpack.c.b16 %v8622, %v8621
        %v8721 = vpack.c.b16 %v8624, %v8623
        %v8722 = vpack.c.b16 %v8626, %v8625
        %v8723 = vpack.c.b16 %v8628, %v8627
        %v8724 = vpack.c.b16 %v8630, %v8629
        %v8725 = vpack.c.b16 %v8632, %v8631
        %v8726 = vpack.c.b16 %v8634, %v8633
        %v8727 = vpack.c.b16 %v8636, %v8635
        %v8728 = vpack.c.b16 %v8638, %v8637
        %v8729 = vpack.c.b16 %v8640, %v8639
        %v8730 = vpack.c.b16 %v8642, %v8641
        %v8731 = vpack.c.b16 %v8644, %v8643
        %v8732 = vpack.c.b16 %v8646, %v8645
        %v8733 = vpack.c.b16 %v8648, %v8647
        %v8734 = vpack.c.b16 %v8650, %v8649
        %v8735 = vpack.c.b16 %v8652, %v8651
        %v8736 = vpack.c.b16 %v8654, %v8653
        %v8737 = vpack.c.b16 %v8656, %v8655
        %v8738 = vpack.c.b16 %v8658, %v8657
        %v8739 = vpack.c.b16 %v8660, %v8659
        %v8740 = vpack.c.b16 %v8662, %v8661
        %v8741 = vpack.c.b16 %v8664, %v8663
        %v8742 = vpack.c.b16 %v8666, %v8665
        %v8743 = vpack.c.b16 %v8668, %v8667
        %v8744 = vpack.c.b16 %v8670, %v8669
        %v8745 = vpack.c.b16 %v8672, %v8671
        %v8746 = vpack.c.b16 %v8674, %v8673
        %8819 = vmatprep.subr.bf16.mxu0 0
        %8820 = vmatpush1.bf16.msra.mxu0 %v8682
        %8821 = vmatprep.subr.bf16.mxu0 0
        %8822 = vmatpush1.bf16.msra.mxu0 %v8681
        %8823 = vmatprep.subr.bf16.mxu0 0
        %8824 = vmatpush1.bf16.msra.mxu0 %v8680
        %8825 = vmatprep.subr.bf16.mxu0 0
        %8826 = vmatpush1.bf16.msra.mxu0 %v8679
        %8827 = vmatprep.subr.bf16.mxu0 0
        %8828 = vmatpush1.bf16.msra.mxu0 %v8678
        %8829 = vmatprep.subr.bf16.mxu0 0
        %8830 = vmatpush1.bf16.msra.mxu0 %v8677
        %8831 = vmatprep.subr.bf16.mxu0 0
        %8832 = vmatpush1.bf16.msra.mxu0 %v8676
        %8833 = vmatprep.subr.bf16.mxu0 0
        %8834 = vmatpush1.bf16.msra.mxu0 %v8675
        %8835 = vmatprep.subr.bf16.mxu0 0
        %8836 = vmatpush2.bf16.msra.mxu0 %v8690
        %8837 = vmatprep.subr.bf16.mxu0 0
        %8838 = vmatpush2.bf16.msra.mxu0 %v8689
        %8839 = vmatprep.subr.bf16.mxu0 0
        %8840 = vmatpush2.bf16.msra.mxu0 %v8688
        %8841 = vmatprep.subr.bf16.mxu0 0
        %8842 = vmatpush2.bf16.msra.mxu0 %v8687
        %8843 = vmatprep.subr.bf16.mxu0 0
        %8844 = vmatpush2.bf16.msra.mxu0 %v8686
        %8845 = vmatprep.subr.bf16.mxu0 0
        %8846 = vmatpush2.bf16.msra.mxu0 %v8685
        %8847 = vmatprep.subr.bf16.mxu0 0
        %8848 = vmatpush2.bf16.msra.mxu0 %v8684
        %8849 = vmatprep.subr.bf16.mxu0 0
        %8850 = vmatpush2.bf16.msra.mxu0 %v8683
        %8851 = vmatprep.mubr.bf16.mxu0 %v8174
        %8852 = vmatmul.mubr.bf16.gmra.mxu0 %v8173
        %v8853 = vpop.f32.mrf.mxu0
        %v8854 = vadd.f32 %v8385, %v8853
        %v8855 = vpop.f32.mrf.mxu0
        %v8856 = vpop.f32.mrf.mxu0
        %v8857 = vadd.f32 %v8385, %v8856
        %v8858 = vpop.f32.mrf.mxu0
        %8859 = vmatprep.mubr.bf16.mxu0 %v8183
        %8860 = vmatmul.mubr.bf16.gmra.mxu0 %v8182
        %v8861 = vpop.f32.mrf.mxu0
        %v8862 = vadd.f32 %v8385, %v8861
        %v8863 = vpop.f32.mrf.mxu0
        %v8864 = vpop.f32.mrf.mxu0
        %v8865 = vadd.f32 %v8385, %v8864
        %v8866 = vpop.f32.mrf.mxu0
        %8867 = vmatprep.mubr.bf16.mxu0 %v8192
        %8868 = vmatmul.mubr.bf16.gmra.mxu0 %v8191
        %v8869 = vpop.f32.mrf.mxu0
        %v8870 = vadd.f32 %v8385, %v8869
        %v8871 = vpop.f32.mrf.mxu0
        %v8872 = vpop.f32.mrf.mxu0
        %v8873 = vadd.f32 %v8385, %v8872
        %v8874 = vpop.f32.mrf.mxu0
        %8875 = vmatprep.mubr.bf16.mxu0 %v8201
        %8876 = vmatmul.mubr.bf16.gmra.mxu0 %v8200
        %v8877 = vpop.f32.mrf.mxu0
        %v8878 = vadd.f32 %v8385, %v8877
        %v8879 = vpop.f32.mrf.mxu0
        %v8880 = vpop.f32.mrf.mxu0
        %v8881 = vadd.f32 %v8385, %v8880
        %v8882 = vpop.f32.mrf.mxu0
        %8883 = vmatprep.mubr.bf16.mxu0 %v8210
        %8884 = vmatmul.mubr.bf16.gmra.mxu0 %v8209
        %v8885 = vpop.f32.mrf.mxu0
        %v8886 = vadd.f32 %v8385, %v8885
        %v8887 = vpop.f32.mrf.mxu0
        %v8888 = vpop.f32.mrf.mxu0
        %v8889 = vadd.f32 %v8385, %v8888
        %v8890 = vpop.f32.mrf.mxu0
        %8891 = vmatprep.mubr.bf16.mxu0 %v8219
        %8892 = vmatmul.mubr.bf16.gmra.mxu0 %v8218
        %v8893 = vpop.f32.mrf.mxu0
        %v8894 = vadd.f32 %v8385, %v8893
        %v8895 = vpop.f32.mrf.mxu0
        %v8896 = vpop.f32.mrf.mxu0
        %v8897 = vadd.f32 %v8385, %v8896
        %v8898 = vpop.f32.mrf.mxu0
        %8899 = vmatprep.mubr.bf16.mxu0 %v8228
        %8900 = vmatmul.mubr.bf16.gmra.mxu0 %v8227
        %v8901 = vpop.f32.mrf.mxu0
        %v8902 = vadd.f32 %v8385, %v8901
        %v8903 = vpop.f32.mrf.mxu0
        %v8904 = vpop.f32.mrf.mxu0
        %v8905 = vadd.f32 %v8385, %v8904
        %v8906 = vpop.f32.mrf.mxu0
        %8907 = vdwg.mxu0
        %8908 = vmatprep.subr.bf16.mxu0 0
        %8909 = vmatpush1.bf16.msra.mxu0 %v8698
        %8910 = vmatprep.subr.bf16.mxu0 0
        %8911 = vmatpush1.bf16.msra.mxu0 %v8697
        %8912 = vmatprep.subr.bf16.mxu0 0
        %8913 = vmatpush1.bf16.msra.mxu0 %v8696
        %8914 = vmatprep.subr.bf16.mxu0 0
        %8915 = vmatpush1.bf16.msra.mxu0 %v8695
        %8916 = vmatprep.subr.bf16.mxu0 0
        %8917 = vmatpush1.bf16.msra.mxu0 %v8694
        %8918 = vmatprep.subr.bf16.mxu0 0
        %8919 = vmatpush1.bf16.msra.mxu0 %v8693
        %8920 = vmatprep.subr.bf16.mxu0 0
        %8921 = vmatpush1.bf16.msra.mxu0 %v8692
        %8922 = vmatprep.subr.bf16.mxu0 0
        %8923 = vmatpush1.bf16.msra.mxu0 %v8691
        %8924 = vmatprep.subr.bf16.mxu0 0
        %8925 = vmatpush2.bf16.msra.mxu0 %v8706
        %8926 = vmatprep.subr.bf16.mxu0 0
        %8927 = vmatpush2.bf16.msra.mxu0 %v8705
        %8928 = vmatprep.subr.bf16.mxu0 0
        %8929 = vmatpush2.bf16.msra.mxu0 %v8704
        %8930 = vmatprep.subr.bf16.mxu0 0
        %8931 = vmatpush2.bf16.msra.mxu0 %v8703
        %8932 = vmatprep.subr.bf16.mxu0 0
        %8933 = vmatpush2.bf16.msra.mxu0 %v8702
        %8934 = vmatprep.subr.bf16.mxu0 0
        %8935 = vmatpush2.bf16.msra.mxu0 %v8701
        %8936 = vmatprep.subr.bf16.mxu0 0
        %8937 = vmatpush2.bf16.msra.mxu0 %v8700
        %8938 = vmatprep.subr.bf16.mxu0 0
        %8939 = vmatpush2.bf16.msra.mxu0 %v8699
        %8940 = vmatprep.mubr.bf16.mxu0 %v8176
        %8941 = vmatmul.mubr.bf16.gmra.mxu0 %v8175
        %v8942 = vpop.f32.mrf.mxu0
        %v8943 = vadd.f32 %v8854, %v8942
        %v8944 = vpop.f32.mrf.mxu0
        %v8945 = vpop.f32.mrf.mxu0
        %v8946 = vadd.f32 %v8857, %v8945
        %v8947 = vpop.f32.mrf.mxu0
        %8948 = vmatprep.mubr.bf16.mxu0 %v8185
        %8949 = vmatmul.mubr.bf16.gmra.mxu0 %v8184
        %v8950 = vpop.f32.mrf.mxu0
        %v8951 = vadd.f32 %v8862, %v8950
        %v8952 = vpop.f32.mrf.mxu0
        %v8953 = vpop.f32.mrf.mxu0
        %v8954 = vadd.f32 %v8865, %v8953
        %v8955 = vpop.f32.mrf.mxu0
        %8956 = vmatprep.mubr.bf16.mxu0 %v8194
        %8957 = vmatmul.mubr.bf16.gmra.mxu0 %v8193
        %v8958 = vpop.f32.mrf.mxu0
        %v8959 = vadd.f32 %v8870, %v8958
        %v8960 = vpop.f32.mrf.mxu0
        %v8961 = vpop.f32.mrf.mxu0
        %v8962 = vadd.f32 %v8873, %v8961
        %v8963 = vpop.f32.mrf.mxu0
        %8964 = vmatprep.mubr.bf16.mxu0 %v8203
        %8965 = vmatmul.mubr.bf16.gmra.mxu0 %v8202
        %v8966 = vpop.f32.mrf.mxu0
        %v8967 = vadd.f32 %v8878, %v8966
        %v8968 = vpop.f32.mrf.mxu0
        %v8969 = vpop.f32.mrf.mxu0
        %v8970 = vadd.f32 %v8881, %v8969
        %v8971 = vpop.f32.mrf.mxu0
        %8972 = vmatprep.mubr.bf16.mxu0 %v8212
        %8973 = vmatmul.mubr.bf16.gmra.mxu0 %v8211
        %v8974 = vpop.f32.mrf.mxu0
        %v8975 = vadd.f32 %v8886, %v8974
        %v8976 = vpop.f32.mrf.mxu0
        %v8977 = vpop.f32.mrf.mxu0
        %v8978 = vadd.f32 %v8889, %v8977
        %v8979 = vpop.f32.mrf.mxu0
        %8980 = vmatprep.mubr.bf16.mxu0 %v8221
        %8981 = vmatmul.mubr.bf16.gmra.mxu0 %v8220
        %v8982 = vpop.f32.mrf.mxu0
        %v8983 = vadd.f32 %v8894, %v8982
        %v8984 = vpop.f32.mrf.mxu0
        %v8985 = vpop.f32.mrf.mxu0
        %v8986 = vadd.f32 %v8897, %v8985
        %v8987 = vpop.f32.mrf.mxu0
        %8988 = vmatprep.mubr.bf16.mxu0 %v8230
        %8989 = vmatmul.mubr.bf16.gmra.mxu0 %v8229
        %v8990 = vpop.f32.mrf.mxu0
        %v8991 = vadd.f32 %v8902, %v8990
        %v8992 = vpop.f32.mrf.mxu0
        %v8993 = vpop.f32.mrf.mxu0
        %v8994 = vadd.f32 %v8905, %v8993
        %v8995 = vpop.f32.mrf.mxu0
        %8996 = vdwg.mxu0
        %8997 = vmatprep.subr.bf16.mxu0 0
        %8998 = vmatpush1.bf16.msra.mxu0 %v8714
        %8999 = vmatprep.subr.bf16.mxu0 0
        %9000 = vmatpush1.bf16.msra.mxu0 %v8713
        %9001 = vmatprep.subr.bf16.mxu0 0
        %9002 = vmatpush1.bf16.msra.mxu0 %v8712
        %9003 = vmatprep.subr.bf16.mxu0 0
        %9004 = vmatpush1.bf16.msra.mxu0 %v8711
        %9005 = vmatprep.subr.bf16.mxu0 0
        %9006 = vmatpush1.bf16.msra.mxu0 %v8710
        %9007 = vmatprep.subr.bf16.mxu0 0
        %9008 = vmatpush1.bf16.msra.mxu0 %v8709
        %9009 = vmatprep.subr.bf16.mxu0 0
        %9010 = vmatpush1.bf16.msra.mxu0 %v8708
        %9011 = vmatprep.subr.bf16.mxu0 0
        %9012 = vmatpush1.bf16.msra.mxu0 %v8707
        %9013 = vmatprep.subr.bf16.mxu0 0
        %9014 = vmatpush2.bf16.msra.mxu0 %v8722
        %9015 = vmatprep.subr.bf16.mxu0 0
        %9016 = vmatpush2.bf16.msra.mxu0 %v8721
        %9017 = vmatprep.subr.bf16.mxu0 0
        %9018 = vmatpush2.bf16.msra.mxu0 %v8720
        %9019 = vmatprep.subr.bf16.mxu0 0
        %9020 = vmatpush2.bf16.msra.mxu0 %v8719
        %9021 = vmatprep.subr.bf16.mxu0 0
        %9022 = vmatpush2.bf16.msra.mxu0 %v8718
        %9023 = vmatprep.subr.bf16.mxu0 0
        %9024 = vmatpush2.bf16.msra.mxu0 %v8717
        %9025 = vmatprep.subr.bf16.mxu0 0
        %9026 = vmatpush2.bf16.msra.mxu0 %v8716
        %9027 = vmatprep.subr.bf16.mxu0 0
        %9028 = vmatpush2.bf16.msra.mxu0 %v8715
        %9029 = vmatprep.mubr.bf16.mxu0 %v8178
        %9030 = vmatmul.mubr.bf16.gmra.mxu0 %v8177
        %v9031 = vpop.f32.mrf.mxu0
        %v9032 = vadd.f32 %v8943, %v9031
        %v9033 = vpop.f32.mrf.mxu0
        %v9034 = vpop.f32.mrf.mxu0
        %v9035 = vadd.f32 %v8946, %v9034
        %v9036 = vpop.f32.mrf.mxu0
        %9037 = vmatprep.mubr.bf16.mxu0 %v8187
        %9038 = vmatmul.mubr.bf16.gmra.mxu0 %v8186
        %v9039 = vpop.f32.mrf.mxu0
        %v9040 = vadd.f32 %v8951, %v9039
        %v9041 = vpop.f32.mrf.mxu0
        %v9042 = vpop.f32.mrf.mxu0
        %v9043 = vadd.f32 %v8954, %v9042
        %v9044 = vpop.f32.mrf.mxu0
        %9045 = vmatprep.mubr.bf16.mxu0 %v8196
        %9046 = vmatmul.mubr.bf16.gmra.mxu0 %v8195
        %v9047 = vpop.f32.mrf.mxu0
        %v9048 = vadd.f32 %v8959, %v9047
        %v9049 = vpop.f32.mrf.mxu0
        %v9050 = vpop.f32.mrf.mxu0
        %v9051 = vadd.f32 %v8962, %v9050
        %v9052 = vpop.f32.mrf.mxu0
        %9053 = vmatprep.mubr.bf16.mxu0 %v8205
        %9054 = vmatmul.mubr.bf16.gmra.mxu0 %v8204
        %v9055 = vpop.f32.mrf.mxu0
        %v9056 = vadd.f32 %v8967, %v9055
        %v9057 = vpop.f32.mrf.mxu0
        %v9058 = vpop.f32.mrf.mxu0
        %v9059 = vadd.f32 %v8970, %v9058
        %v9060 = vpop.f32.mrf.mxu0
        %9061 = vmatprep.mubr.bf16.mxu0 %v8214
        %9062 = vmatmul.mubr.bf16.gmra.mxu0 %v8213
        %v9063 = vpop.f32.mrf.mxu0
        %v9064 = vadd.f32 %v8975, %v9063
        %v9065 = vpop.f32.mrf.mxu0
        %v9066 = vpop.f32.mrf.mxu0
        %v9067 = vadd.f32 %v8978, %v9066
        %v9068 = vpop.f32.mrf.mxu0
        %9069 = vmatprep.mubr.bf16.mxu0 %v8223
        %9070 = vmatmul.mubr.bf16.gmra.mxu0 %v8222
        %v9071 = vpop.f32.mrf.mxu0
        %v9072 = vadd.f32 %v8983, %v9071
        %v9073 = vpop.f32.mrf.mxu0
        %v9074 = vpop.f32.mrf.mxu0
        %v9075 = vadd.f32 %v8986, %v9074
        %v9076 = vpop.f32.mrf.mxu0
        %9077 = vmatprep.mubr.bf16.mxu0 %v8232
        %9078 = vmatmul.mubr.bf16.gmra.mxu0 %v8231
        %v9079 = vpop.f32.mrf.mxu0
        %v9080 = vadd.f32 %v8991, %v9079
        %v9081 = vpop.f32.mrf.mxu0
        %v9082 = vpop.f32.mrf.mxu0
        %v9083 = vadd.f32 %v8994, %v9082
        %v9084 = vpop.f32.mrf.mxu0
        %9085 = vdwg.mxu0
        %9086 = vmatprep.subr.bf16.mxu0 0
        %9087 = vmatpush1.bf16.msra.mxu0 %v8730
        %9088 = vmatprep.subr.bf16.mxu0 0
        %9089 = vmatpush1.bf16.msra.mxu0 %v8729
        %9090 = vmatprep.subr.bf16.mxu0 0
        %9091 = vmatpush1.bf16.msra.mxu0 %v8728
        %9092 = vmatprep.subr.bf16.mxu0 0
        %9093 = vmatpush1.bf16.msra.mxu0 %v8727
        %9094 = vmatprep.subr.bf16.mxu0 0
        %9095 = vmatpush1.bf16.msra.mxu0 %v8726
        %9096 = vmatprep.subr.bf16.mxu0 0
        %9097 = vmatpush1.bf16.msra.mxu0 %v8725
        %9098 = vmatprep.subr.bf16.mxu0 0
        %9099 = vmatpush1.bf16.msra.mxu0 %v8724
        %9100 = vmatprep.subr.bf16.mxu0 0
        %9101 = vmatpush1.bf16.msra.mxu0 %v8723
        %9102 = vmatprep.subr.bf16.mxu0 0
        %9103 = vmatpush2.bf16.msra.mxu0 %v8738
        %9104 = vmatprep.subr.bf16.mxu0 0
        %9105 = vmatpush2.bf16.msra.mxu0 %v8737
        %9106 = vmatprep.subr.bf16.mxu0 0
        %9107 = vmatpush2.bf16.msra.mxu0 %v8736
        %9108 = vmatprep.subr.bf16.mxu0 0
        %9109 = vmatpush2.bf16.msra.mxu0 %v8735
        %9110 = vmatprep.subr.bf16.mxu0 0
        %9111 = vmatpush2.bf16.msra.mxu0 %v8734
        %9112 = vmatprep.subr.bf16.mxu0 0
        %9113 = vmatpush2.bf16.msra.mxu0 %v8733
        %9114 = vmatprep.subr.bf16.mxu0 0
        %9115 = vmatpush2.bf16.msra.mxu0 %v8732
        %9116 = vmatprep.subr.bf16.mxu0 0
        %9117 = vmatpush2.bf16.msra.mxu0 %v8731
        %9118 = vmatprep.mubr.bf16.mxu0 %v8180
        %9119 = vmatmul.mubr.bf16.gmra.mxu0 %v8179
        %v9120 = vpop.f32.mrf.mxu0
        %v9121 = vadd.f32 %v9032, %v9120
        %v9122 = vpop.f32.mrf.mxu0
        %v9123 = vpop.f32.mrf.mxu0
        %v9124 = vadd.f32 %v9035, %v9123
        %v9125 = vpop.f32.mrf.mxu0
        %9126 = vmatprep.mubr.bf16.mxu0 %v8189
        %9127 = vmatmul.mubr.bf16.gmra.mxu0 %v8188
        %v9128 = vpop.f32.mrf.mxu0
        %v9129 = vadd.f32 %v9040, %v9128
        %v9130 = vpop.f32.mrf.mxu0
        %v9131 = vpop.f32.mrf.mxu0
        %v9132 = vadd.f32 %v9043, %v9131
        %v9133 = vpop.f32.mrf.mxu0
        %9134 = vmatprep.mubr.bf16.mxu0 %v8198
        %9135 = vmatmul.mubr.bf16.gmra.mxu0 %v8197
        %v9136 = vpop.f32.mrf.mxu0
        %v9137 = vadd.f32 %v9048, %v9136
        %v9138 = vpop.f32.mrf.mxu0
        %v9139 = vpop.f32.mrf.mxu0
        %v9140 = vadd.f32 %v9051, %v9139
        %v9141 = vpop.f32.mrf.mxu0
        %9142 = vmatprep.mubr.bf16.mxu0 %v8207
        %9143 = vmatmul.mubr.bf16.gmra.mxu0 %v8206
        %v9144 = vpop.f32.mrf.mxu0
        %v9145 = vadd.f32 %v9056, %v9144
        %v9146 = vpop.f32.mrf.mxu0
        %v9147 = vpop.f32.mrf.mxu0
        %v9148 = vadd.f32 %v9059, %v9147
        %v9149 = vpop.f32.mrf.mxu0
        %9150 = vmatprep.mubr.bf16.mxu0 %v8216
        %9151 = vmatmul.mubr.bf16.gmra.mxu0 %v8215
        %v9152 = vpop.f32.mrf.mxu0
        %v9153 = vadd.f32 %v9064, %v9152
        %v9154 = vpop.f32.mrf.mxu0
        %v9155 = vpop.f32.mrf.mxu0
        %v9156 = vadd.f32 %v9067, %v9155
        %v9157 = vpop.f32.mrf.mxu0
        %9158 = vmatprep.mubr.bf16.mxu0 %v8225
        %9159 = vmatmul.mubr.bf16.gmra.mxu0 %v8224
        %v9160 = vpop.f32.mrf.mxu0
        %v9161 = vadd.f32 %v9072, %v9160
        %v9162 = vpop.f32.mrf.mxu0
        %v9163 = vpop.f32.mrf.mxu0
        %v9164 = vadd.f32 %v9075, %v9163
        %v9165 = vpop.f32.mrf.mxu0
        %9166 = vmatprep.mubr.bf16.mxu0 %v8234
        %9167 = vmatmul.mubr.bf16.gmra.mxu0 %v8233
        %v9168 = vpop.f32.mrf.mxu0
        %v9169 = vadd.f32 %v9080, %v9168
        %v9170 = vpop.f32.mrf.mxu0
        %v9171 = vpop.f32.mrf.mxu0
        %v9172 = vadd.f32 %v9083, %v9171
        %v9173 = vpop.f32.mrf.mxu0
        %9174 = vdwg.mxu0
        %9175 = vmatprep.subr.bf16.mxu0 0
        %9176 = vmatpush1.bf16.msra.mxu0 %v8746
        %9177 = vmatprep.subr.bf16.mxu0 0
        %9178 = vmatpush1.bf16.msra.mxu0 %v8745
        %9179 = vmatprep.subr.bf16.mxu0 0
        %9180 = vmatpush1.bf16.msra.mxu0 %v8744
        %9181 = vmatprep.subr.bf16.mxu0 0
        %9182 = vmatpush1.bf16.msra.mxu0 %v8743
        %9183 = vmatprep.subr.bf16.mxu0 0
        %9184 = vmatpush1.bf16.msra.mxu0 %v8742
        %9185 = vmatprep.subr.bf16.mxu0 0
        %9186 = vmatpush1.bf16.msra.mxu0 %v8741
        %9187 = vmatprep.subr.bf16.mxu0 0
        %9188 = vmatpush1.bf16.msra.mxu0 %v8740
        %9189 = vmatprep.subr.bf16.mxu0 0
        %9190 = vmatpush1.bf16.msra.mxu0 %v8739
        %9191 = vmatprep.subr.bf16.mxu0 0
        %9192 = vmatpush2.bf16.msra.mxu0 0
        %9193 = vmatprep.subr.bf16.mxu0 0
        %9194 = vmatpush2.bf16.msra.mxu0 0
        %9195 = vmatprep.subr.bf16.mxu0 0
        %9196 = vmatpush2.bf16.msra.mxu0 0
        %9197 = vmatprep.subr.bf16.mxu0 0
        %9198 = vmatpush2.bf16.msra.mxu0 0
        %9199 = vmatprep.subr.bf16.mxu0 0
        %9200 = vmatpush2.bf16.msra.mxu0 0
        %9201 = vmatprep.subr.bf16.mxu0 0
        %9202 = vmatpush2.bf16.msra.mxu0 0
        %9203 = vmatprep.subr.bf16.mxu0 0
        %9204 = vmatpush2.bf16.msra.mxu0 0
        %9205 = vmatprep.subr.bf16.mxu0 0
        %9206 = vmatpush2.bf16.msra.mxu0 0
        %9207 = vmatprep.mubr.bf16.mxu0 0
        %9208 = vmatmul.mubr.bf16.gmra.mxu0 %v8181
        %v9209 = vpop.f32.mrf.mxu0
        %v9210 = vadd.f32 %v9121, %v9209
        %v9211 = vpop.f32.mrf.mxu0
        %v9212 = vpop.f32.mrf.mxu0
        %v9213 = vadd.f32 %v9124, %v9212
        %v9214 = vpop.f32.mrf.mxu0
        %9215 = vmatprep.mubr.bf16.mxu0 0
        %9216 = vmatmul.mubr.bf16.gmra.mxu0 %v8190
        %v9217 = vpop.f32.mrf.mxu0
        %v9218 = vadd.f32 %v9129, %v9217
        %v9219 = vpop.f32.mrf.mxu0
        %v9220 = vpop.f32.mrf.mxu0
        %v9221 = vadd.f32 %v9132, %v9220
        %v9222 = vpop.f32.mrf.mxu0
        %9223 = vmatprep.mubr.bf16.mxu0 0
        %9224 = vmatmul.mubr.bf16.gmra.mxu0 %v8199
        %v9225 = vpop.f32.mrf.mxu0
        %v9226 = vadd.f32 %v9137, %v9225
        %v9227 = vpop.f32.mrf.mxu0
        %v9228 = vpop.f32.mrf.mxu0
        %v9229 = vadd.f32 %v9140, %v9228
        %v9230 = vpop.f32.mrf.mxu0
        %9231 = vmatprep.mubr.bf16.mxu0 0
        %9232 = vmatmul.mubr.bf16.gmra.mxu0 %v8208
        %v9233 = vpop.f32.mrf.mxu0
        %v9234 = vadd.f32 %v9145, %v9233
        %v9235 = vpop.f32.mrf.mxu0
        %v9236 = vpop.f32.mrf.mxu0
        %v9237 = vadd.f32 %v9148, %v9236
        %v9238 = vpop.f32.mrf.mxu0
        %9239 = vmatprep.mubr.bf16.mxu0 0
        %9240 = vmatmul.mubr.bf16.gmra.mxu0 %v8217
        %v9241 = vpop.f32.mrf.mxu0
        %v9242 = vadd.f32 %v9153, %v9241
        %v9243 = vpop.f32.mrf.mxu0
        %v9244 = vpop.f32.mrf.mxu0
        %v9245 = vadd.f32 %v9156, %v9244
        %v9246 = vpop.f32.mrf.mxu0
        %9247 = vmatprep.mubr.bf16.mxu0 0
        %9248 = vmatmul.mubr.bf16.gmra.mxu0 %v8226
        %v9249 = vpop.f32.mrf.mxu0
        %v9250 = vadd.f32 %v9161, %v9249
        %v9251 = vpop.f32.mrf.mxu0
        %v9252 = vpop.f32.mrf.mxu0
        %v9253 = vadd.f32 %v9164, %v9252
        %v9254 = vpop.f32.mrf.mxu0
        %9255 = vmatprep.mubr.bf16.mxu0 0
        %9256 = vmatmul.mubr.bf16.gmra.mxu0 %v8235
        %v9257 = vpop.f32.mrf.mxu0
        %v9258 = vadd.f32 %v9169, %v9257
        %v9259 = vpop.f32.mrf.mxu0
        %v9260 = vpop.f32.mrf.mxu0
        %v9261 = vadd.f32 %v9172, %v9260
        %v9262 = vpop.f32.mrf.mxu0
        %9263 = vdwg.mxu0
        %v9264 = vadd.f32 %v9210, %v6704
        %v9265 = vadd.f32 %v9213, %v6705
        %v9266 = vadd.f32 %v9218, %v6706
        %v9267 = vadd.f32 %v9221, %v6707
        %v9268 = vadd.f32 %v9226, %v6708
        %v9269 = vadd.f32 %v9229, %v6709
        %v9270 = vadd.f32 %v9234, %v6710
        %v9271 = vadd.f32 %v9237, %v6711
        %v9272 = vadd.f32 %v9242, %v6712
        %v9273 = vadd.f32 %v9245, %v6713
        %v9274 = vadd.f32 %v9250, %v6714
        %v9275 = vadd.f32 %v9253, %v6715
        %v9276 = vadd.f32 %v9258, %v6716
        %v9277 = vadd.f32 %v9261, %v6717
        %v9278 = vmax.f32 %v9264, 0.0
        %v9279 = vmax.f32 %v9265, 0.0
        %v9280 = vmax.f32 %v9266, 0.0
        %v9281 = vmax.f32 %v9267, 0.0
        %v9282 = vmax.f32 %v9268, 0.0
        %v9283 = vmax.f32 %v9269, 0.0
        %v9284 = vmax.f32 %v9270, 0.0
        %v9285 = vmax.f32 %v9271, 0.0
        %v9286 = vmax.f32 %v9272, 0.0
        %v9287 = vmax.f32 %v9273, 0.0
        %v9288 = vmax.f32 %v9274, 0.0
        %v9289 = vmax.f32 %v9275, 0.0
        %v9290 = vmax.f32 %v9276, 0.0
        %v9291 = vmax.f32 %v9277, 0.0
        %v9292 = vmul.f32 %v9278, %v6637
        %v9293 = vmul.f32 %v9279, %v6642
        %v9294 = vmul.f32 %v9280, %v6647
        %v9295 = vmul.f32 %v9281, %v6652
        %v9296 = vmul.f32 %v9282, %v6657
        %v9297 = vmul.f32 %v9283, %v6662
        %v9298 = vmul.f32 %v9284, %v6667
        %v9299 = vmul.f32 %v9285, %v6672
        %v9300 = vmul.f32 %v9286, %v6677
        %v9301 = vmul.f32 %v9287, %v6682
        %v9302 = vmul.f32 %v9288, %v6687
        %v9303 = vmul.f32 %v9289, %v6692
        %v9304 = vmul.f32 %v9290, %v6697
        %v9305 = vmul.f32 %v9291, %v6702
        %v9306 = vadd.f32 %v9292, %v9293
        %v9307 = vadd.f32 %v9306, %v9294
        %v9308 = vadd.f32 %v9307, %v9295
        %v9309 = vadd.f32 %v9308, %v9296
        %v9310 = vadd.f32 %v9309, %v9297
        %v9311 = vadd.f32 %v9310, %v9298
        %v9312 = vadd.f32 %v9311, %v9299
        %v9313 = vadd.f32 %v9312, %v9300
        %v9314 = vadd.f32 %v9313, %v9301
        %v9315 = vadd.f32 %v9314, %v9302
        %v9316 = vadd.f32 %v9315, %v9303
        %v9317 = vadd.f32 %v9316, %v9304
        %v9318 = vadd.f32 %v9317, %v9305
        %v9319 = vrot.slane %v9318, 4
        %v9320 = vadd.f32 %v9318, %v9319
        %v9321 = vrot.slane %v9320, 2
        %v9322 = vadd.f32 %v9320, %v9321
        %v9323 = vrot.slane %v9322, 1
        %v9324 = vadd.f32 %v9322, %v9323
        %v9325 = vmul.f32 %v9324, 0.015625
        %v9326 = vld [vmem:[%s18] sm:$0xff]
        %v9327 = vld [vmem:[%s18 + $0x8] sm:$0xff]
        %v9328 = vld [vmem:[%s18 + $0x10] sm:$0xff]
        %v9329 = vld [vmem:[%s18 + $0x18] sm:$0xff]
        %v9330 = vld [vmem:[%s18 + $0x20] sm:$0xff]
        %v9331 = vld [vmem:[%s18 + $0x28] sm:$0xff]
        %v9332 = vld [vmem:[%s18 + $0x30] sm:$0xff]
        %v9333 = vld [vmem:[%s18 + $0x38] sm:$0xff]
        %v9334 = vld [vmem:[%s18 + $0x40] sm:$0xff]
        %v9335 = vld [vmem:[%s18 + $0x48] sm:$0xff]
        %v9336 = vld [vmem:[%s18 + $0x50] sm:$0xff]
        %v9337 = vld [vmem:[%s18 + $0x58] sm:$0xff]
        %v9338 = vld [vmem:[%s18 + $0x60] sm:$0xff]
        %v9339 = vld [vmem:[%s18 + $0x68] sm:$0xff]
        %v9340 = vld [vmem:[%s18 + $0x70] sm:$0xff]
        %v9341 = vld [vmem:[%s18 + $0x78] sm:$0xff]
        %v9342 = vld [vmem:[%s19] sm:$0x1]
        %9343 = vmatprep.subr.mxu0 0.0
        %9344 = vmatpush1.msra.mxu0 %v9341
        %9345 = vmatprep.subr.mxu0 0.0
        %9346 = vmatpush1.msra.mxu0 %v9340
        %9347 = vmatprep.subr.mxu0 0.0
        %9348 = vmatpush1.msra.mxu0 %v9339
        %9349 = vmatprep.subr.mxu0 0.0
        %9350 = vmatpush1.msra.mxu0 %v9338
        %9351 = vmatprep.subr.mxu0 0.0
        %9352 = vmatpush1.msra.mxu0 %v9337
        %9353 = vmatprep.subr.mxu0 0.0
        %9354 = vmatpush1.msra.mxu0 %v9336
        %9355 = vmatprep.subr.mxu0 0.0
        %9356 = vmatpush1.msra.mxu0 %v9335
        %9357 = vmatprep.subr.mxu0 0.0
        %9358 = vmatpush1.msra.mxu0 %v9334
        %9359 = vmatprep.subr.mxu0 0.0
        %9360 = vmatpush1.msra.mxu0 %v9333
        %9361 = vmatprep.subr.mxu0 0.0
        %9362 = vmatpush1.msra.mxu0 %v9332
        %9363 = vmatprep.subr.mxu0 0.0
        %9364 = vmatpush1.msra.mxu0 %v9331
        %9365 = vmatprep.subr.mxu0 0.0
        %9366 = vmatpush1.msra.mxu0 %v9330
        %9367 = vmatprep.subr.mxu0 0.0
        %9368 = vmatpush1.msra.mxu0 %v9329
        %9369 = vmatprep.subr.mxu0 0.0
        %9370 = vmatpush1.msra.mxu0 %v9328
        %9371 = vmatprep.subr.mxu0 0.0
        %9372 = vmatpush1.msra.mxu0 %v9327
        %9373 = vmatprep.subr.mxu0 0.0
        %9374 = vmatpush1.msra.mxu0 %v9326
        %9375 = vmatprep.subr.mxu0 0.0
        %9376 = vmatpush2.msra.mxu0 0.0
        %9377 = vmatprep.subr.mxu0 0.0
        %9378 = vmatpush2.msra.mxu0 0.0
        %9379 = vmatprep.subr.mxu0 0.0
        %9380 = vmatpush2.msra.mxu0 0.0
        %9381 = vmatprep.subr.mxu0 0.0
        %9382 = vmatpush2.msra.mxu0 0.0
        %9383 = vmatprep.subr.mxu0 0.0
        %9384 = vmatpush2.msra.mxu0 0.0
        %9385 = vmatprep.subr.mxu0 0.0
        %9386 = vmatpush2.msra.mxu0 0.0
        %9387 = vmatprep.subr.mxu0 0.0
        %9388 = vmatpush2.msra.mxu0 0.0
        %9389 = vmatprep.subr.mxu0 0.0
        %9390 = vmatpush2.msra.mxu0 0.0
        %9391 = vmatprep.subr.mxu0 0.0
        %9392 = vmatpush2.msra.mxu0 0.0
        %9393 = vmatprep.subr.mxu0 0.0
        %9394 = vmatpush2.msra.mxu0 0.0
        %9395 = vmatprep.subr.mxu0 0.0
        %9396 = vmatpush2.msra.mxu0 0.0
        %9397 = vmatprep.subr.mxu0 0.0
        %9398 = vmatpush2.msra.mxu0 0.0
        %9399 = vmatprep.subr.mxu0 0.0
        %9400 = vmatpush2.msra.mxu0 0.0
        %9401 = vmatprep.subr.mxu0 0.0
        %9402 = vmatpush2.msra.mxu0 0.0
        %9403 = vmatprep.subr.mxu0 0.0
        %9404 = vmatpush2.msra.mxu0 0.0
        %9405 = vmatprep.subr.mxu0 0.0
        %9406 = vmatpush2.msra.mxu0 0.0
        %9407 = vmatprep.mubr.f32.mxu0 0.0
        %9408 = vmatmul.mubr.f32.gmra.mxu0 %v9325
        %v9409 = vpop.f32.mrf.mxu0
        %v9410 = vadd.f32 %v9342, %v9409
        %v9411 = vpop.f32.mrf.mxu0
        %9412 = vdwg.mxu0
        %v9413 = vld [vmem:[%s20] sm:$0xff]
        %v9414 = vld [vmem:[%s20 + $0x8] sm:$0x3]
        %v9415 = vld [vmem:[%s21] sm:$0xff]
        %v9416 = vld [vmem:[%s21 + $0x8] sm:$0x3]
        %vm9417 = vcmask 80896
        %v9419 = vsel %vm9417, %v9410, 0
        %vm9421 = vcmask 1041408
        %v9423 = vsel %vm9421, %v9416, 0
        %9425 = vmatprep.subr.mxu0 0.0
        %9426 = vmatpush1.msra.mxu0 0.0
        %9427 = vmatprep.subr.mxu0 0.0
        %9428 = vmatpush1.msra.mxu0 0.0
        %9429 = vmatprep.subr.mxu0 0.0
        %9430 = vmatpush1.msra.mxu0 0.0
        %9431 = vmatprep.subr.mxu0 0.0
        %9432 = vmatpush1.msra.mxu0 0.0
        %9433 = vmatprep.subr.mxu0 0.0
        %9434 = vmatpush1.msra.mxu0 0.0
        %9435 = vmatprep.subr.mxu0 0.0
        %9436 = vmatpush1.msra.mxu0 0.0
        %9437 = vmatprep.subr.mxu0 0.0
        %9438 = vmatpush1.msra.mxu0 0.0
        %9439 = vmatprep.subr.mxu0 0.0
        %9440 = vmatpush1.msra.mxu0 0.0
        %9441 = vmatprep.subr.mxu0 0.0
        %9442 = vmatpush1.msra.mxu0 0.0
        %9443 = vmatprep.subr.mxu0 0.0
        %9444 = vmatpush1.msra.mxu0 0.0
        %9445 = vmatprep.subr.mxu0 0.0
        %9446 = vmatpush1.msra.mxu0 0.0
        %9447 = vmatprep.subr.mxu0 0.0
        %9448 = vmatpush1.msra.mxu0 0.0
        %9449 = vmatprep.subr.mxu0 0.0
        %9450 = vmatpush1.msra.mxu0 0.0
        %9451 = vmatprep.subr.mxu0 0.0
        %9452 = vmatpush1.msra.mxu0 0.0
        %9453 = vmatprep.subr.mxu0 0.0
        %9454 = vmatpush1.msra.mxu0 %v9423
        %9455 = vmatprep.subr.mxu0 0.0
        %9456 = vmatpush1.msra.mxu0 %v9415
        %9457 = vmatprep.subr.mxu0 0.0
        %9458 = vmatpush2.msra.mxu0 0.0
        %9459 = vmatprep.subr.mxu0 0.0
        %9460 = vmatpush2.msra.mxu0 0.0
        %9461 = vmatprep.subr.mxu0 0.0
        %9462 = vmatpush2.msra.mxu0 0.0
        %9463 = vmatprep.subr.mxu0 0.0
        %9464 = vmatpush2.msra.mxu0 0.0
        %9465 = vmatprep.subr.mxu0 0.0
        %9466 = vmatpush2.msra.mxu0 0.0
        %9467 = vmatprep.subr.mxu0 0.0
        %9468 = vmatpush2.msra.mxu0 0.0
        %9469 = vmatprep.subr.mxu0 0.0
        %9470 = vmatpush2.msra.mxu0 0.0
        %9471 = vmatprep.subr.mxu0 0.0
        %9472 = vmatpush2.msra.mxu0 0.0
        %9473 = vmatprep.subr.mxu0 0.0
        %9474 = vmatpush2.msra.mxu0 0.0
        %9475 = vmatprep.subr.mxu0 0.0
        %9476 = vmatpush2.msra.mxu0 0.0
        %9477 = vmatprep.subr.mxu0 0.0
        %9478 = vmatpush2.msra.mxu0 0.0
        %9479 = vmatprep.subr.mxu0 0.0
        %9480 = vmatpush2.msra.mxu0 0.0
        %9481 = vmatprep.subr.mxu0 0.0
        %9482 = vmatpush2.msra.mxu0 0.0
        %9483 = vmatprep.subr.mxu0 0.0
        %9484 = vmatpush2.msra.mxu0 0.0
        %9485 = vmatprep.subr.mxu0 0.0
        %9486 = vmatpush2.msra.mxu0 0.0
        %9487 = vmatprep.subr.mxu0 0.0
        %9488 = vmatpush2.msra.mxu0 0.0
        %9489 = vmatprep.mubr.f32.mxu0 0.0
        %9490 = vmatmul.mubr.f32.gmra.mxu0 %v9419
        %v9491 = vpop.f32.mrf.mxu0
        %v9492 = vadd.f32 0.0, %v9491
        %v9493 = vpop.f32.mrf.mxu0
        %9494 = vdwg.mxu0
        %v9496 = vsel %vm9417, %v6387, 0
        %v9499 = vsel %vm9421, %v9414, 0
        %9501 = vmatprep.subr.mxu0 0.0
        %9502 = vmatpush1.msra.mxu0 0.0
        %9503 = vmatprep.subr.mxu0 0.0
        %9504 = vmatpush1.msra.mxu0 0.0
        %9505 = vmatprep.subr.mxu0 0.0
        %9506 = vmatpush1.msra.mxu0 0.0
        %9507 = vmatprep.subr.mxu0 0.0
        %9508 = vmatpush1.msra.mxu0 0.0
        %9509 = vmatprep.subr.mxu0 0.0
        %9510 = vmatpush1.msra.mxu0 0.0
        %9511 = vmatprep.subr.mxu0 0.0
        %9512 = vmatpush1.msra.mxu0 0.0
        %9513 = vmatprep.subr.mxu0 0.0
        %9514 = vmatpush1.msra.mxu0 0.0
        %9515 = vmatprep.subr.mxu0 0.0
        %9516 = vmatpush1.msra.mxu0 0.0
        %9517 = vmatprep.subr.mxu0 0.0
        %9518 = vmatpush1.msra.mxu0 0.0
        %9519 = vmatprep.subr.mxu0 0.0
        %9520 = vmatpush1.msra.mxu0 0.0
        %9521 = vmatprep.subr.mxu0 0.0
        %9522 = vmatpush1.msra.mxu0 0.0
        %9523 = vmatprep.subr.mxu0 0.0
        %9524 = vmatpush1.msra.mxu0 0.0
        %9525 = vmatprep.subr.mxu0 0.0
        %9526 = vmatpush1.msra.mxu0 0.0
        %9527 = vmatprep.subr.mxu0 0.0
        %9528 = vmatpush1.msra.mxu0 0.0
        %9529 = vmatprep.subr.mxu0 0.0
        %9530 = vmatpush1.msra.mxu0 %v9499
        %9531 = vmatprep.subr.mxu0 0.0
        %9532 = vmatpush1.msra.mxu0 %v9413
        %9533 = vmatprep.subr.mxu0 0.0
        %9534 = vmatpush2.msra.mxu0 0.0
        %9535 = vmatprep.subr.mxu0 0.0
        %9536 = vmatpush2.msra.mxu0 0.0
        %9537 = vmatprep.subr.mxu0 0.0
        %9538 = vmatpush2.msra.mxu0 0.0
        %9539 = vmatprep.subr.mxu0 0.0
        %9540 = vmatpush2.msra.mxu0 0.0
        %9541 = vmatprep.subr.mxu0 0.0
        %9542 = vmatpush2.msra.mxu0 0.0
        %9543 = vmatprep.subr.mxu0 0.0
        %9544 = vmatpush2.msra.mxu0 0.0
        %9545 = vmatprep.subr.mxu0 0.0
        %9546 = vmatpush2.msra.mxu0 0.0
        %9547 = vmatprep.subr.mxu0 0.0
        %9548 = vmatpush2.msra.mxu0 0.0
        %9549 = vmatprep.subr.mxu0 0.0
        %9550 = vmatpush2.msra.mxu0 0.0
        %9551 = vmatprep.subr.mxu0 0.0
        %9552 = vmatpush2.msra.mxu0 0.0
        %9553 = vmatprep.subr.mxu0 0.0
        %9554 = vmatpush2.msra.mxu0 0.0
        %9555 = vmatprep.subr.mxu0 0.0
        %9556 = vmatpush2.msra.mxu0 0.0
        %9557 = vmatprep.subr.mxu0 0.0
        %9558 = vmatpush2.msra.mxu0 0.0
        %9559 = vmatprep.subr.mxu0 0.0
        %9560 = vmatpush2.msra.mxu0 0.0
        %9561 = vmatprep.subr.mxu0 0.0
        %9562 = vmatpush2.msra.mxu0 0.0
        %9563 = vmatprep.subr.mxu0 0.0
        %9564 = vmatpush2.msra.mxu0 0.0
        %9565 = vmatprep.mubr.f32.mxu0 0.0
        %9566 = vmatmul.mubr.f32.gmra.mxu0 %v9496
        %v9567 = vpop.f32.mrf.mxu0
        %v9568 = vadd.f32 %v9492, %v9567
        %v9569 = vpop.f32.mrf.mxu0
        %9570 = vdwg.mxu0
        %v9571 = vld [vmem:[%s22] sm:$0x1]
        %v9572 = vadd.f32 %v9568, %v9571
        %v9573 = vmax.f32 %v9572, 0.0
        %v9574 = vld [vmem:[%s23] sm:$0xff]
        %v9575 = vld [vmem:[%s23 + $0x8] sm:$0xff]
        %v9576 = vld [vmem:[%s23 + $0x10] sm:$0xff]
        %v9577 = vld [vmem:[%s23 + $0x18] sm:$0xff]
        %v9578 = vld [vmem:[%s24] sm:$0x1]
        %vm9579 = vcmask 261120
        %v9581 = vsel %vm9579, %v9573, 0
        %9583 = vmatprep.subr.mxu0 0.0
        %9584 = vmatpush1.msra.mxu0 0.0
        %9585 = vmatprep.subr.mxu0 0.0
        %9586 = vmatpush1.msra.mxu0 0.0
        %9587 = vmatprep.subr.mxu0 0.0
        %9588 = vmatpush1.msra.mxu0 0.0
        %9589 = vmatprep.subr.mxu0 0.0
        %9590 = vmatpush1.msra.mxu0 0.0
        %9591 = vmatprep.subr.mxu0 0.0
        %9592 = vmatpush1.msra.mxu0 0.0
        %9593 = vmatprep.subr.mxu0 0.0
        %9594 = vmatpush1.msra.mxu0 0.0
        %9595 = vmatprep.subr.mxu0 0.0
        %9596 = vmatpush1.msra.mxu0 0.0
        %9597 = vmatprep.subr.mxu0 0.0
        %9598 = vmatpush1.msra.mxu0 0.0
        %9599 = vmatprep.subr.mxu0 0.0
        %9600 = vmatpush1.msra.mxu0 0.0
        %9601 = vmatprep.subr.mxu0 0.0
        %9602 = vmatpush1.msra.mxu0 0.0
        %9603 = vmatprep.subr.mxu0 0.0
        %9604 = vmatpush1.msra.mxu0 0.0
        %9605 = vmatprep.subr.mxu0 0.0
        %9606 = vmatpush1.msra.mxu0 0.0
        %9607 = vmatprep.subr.mxu0 0.0
        %9608 = vmatpush1.msra.mxu0 %v9577
        %9609 = vmatprep.subr.mxu0 0.0
        %9610 = vmatpush1.msra.mxu0 %v9576
        %9611 = vmatprep.subr.mxu0 0.0
        %9612 = vmatpush1.msra.mxu0 %v9575
        %9613 = vmatprep.subr.mxu0 0.0
        %9614 = vmatpush1.msra.mxu0 %v9574
        %9615 = vmatprep.subr.mxu0 0.0
        %9616 = vmatpush2.msra.mxu0 0.0
        %9617 = vmatprep.subr.mxu0 0.0
        %9618 = vmatpush2.msra.mxu0 0.0
        %9619 = vmatprep.subr.mxu0 0.0
        %9620 = vmatpush2.msra.mxu0 0.0
        %9621 = vmatprep.subr.mxu0 0.0
        %9622 = vmatpush2.msra.mxu0 0.0
        %9623 = vmatprep.subr.mxu0 0.0
        %9624 = vmatpush2.msra.mxu0 0.0
        %9625 = vmatprep.subr.mxu0 0.0
        %9626 = vmatpush2.msra.mxu0 0.0
        %9627 = vmatprep.subr.mxu0 0.0
        %9628 = vmatpush2.msra.mxu0 0.0
        %9629 = vmatprep.subr.mxu0 0.0
        %9630 = vmatpush2.msra.mxu0 0.0
        %9631 = vmatprep.subr.mxu0 0.0
        %9632 = vmatpush2.msra.mxu0 0.0
        %9633 = vmatprep.subr.mxu0 0.0
        %9634 = vmatpush2.msra.mxu0 0.0
        %9635 = vmatprep.subr.mxu0 0.0
        %9636 = vmatpush2.msra.mxu0 0.0
        %9637 = vmatprep.subr.mxu0 0.0
        %9638 = vmatpush2.msra.mxu0 0.0
        %9639 = vmatprep.subr.mxu0 0.0
        %9640 = vmatpush2.msra.mxu0 0.0
        %9641 = vmatprep.subr.mxu0 0.0
        %9642 = vmatpush2.msra.mxu0 0.0
        %9643 = vmatprep.subr.mxu0 0.0
        %9644 = vmatpush2.msra.mxu0 0.0
        %9645 = vmatprep.subr.mxu0 0.0
        %9646 = vmatpush2.msra.mxu0 0.0
        %9647 = vmatprep.mubr.f32.mxu0 0.0
        %9648 = vmatmul.mubr.f32.gmra.mxu0 %v9581
        %v9649 = vpop.f32.mrf.mxu0
        %v9650 = vadd.f32 %v9578, %v9649
        %v9651 = vpop.f32.mrf.mxu0
        %9652 = vdwg.mxu0
        %vm9653 = vcmask 16384
        %v9654 = vsel %vm9653, %v9650, -inf
        %9655 = vmax.xlane.f32.xlu0 %v9654
        %v9656 = vpop.xlane.xlu0 %9655
        %v9657 = vsub.f32 %v9650, %v9656
        %v9658 = vmul.f32 %v9657, 1.442695
        %v9659 = vpow.pop %v9658
        %v9660 = vsel %vm9653, %v9659, 0.0
        %9661 = vadd.xlane.f32.xlu0 %v9660
        %v9662 = vpop.xlane.xlu0 %9661
        %v9663 = vrcp.pop %v9662
        %v9664 = vmul.f32 %v9659, %v9663
        %9666 = vrot.lane.b32.xlu0 %v9664, 127
        %v9667 = vpop.permute.xlu0 %9666
        %v9669 = vmax.f32 %v9664, %v9667
        %vm9670 = vcmask 7168
        %v9671 = vsel %vm9670, %v9664, %v9669
        %vm9672 = vcmask 8192
        %9673 = vst.msk [vmem:[%s771] sm:$0x1] %vm9672, %v9671
        %s9674 = sand.u32 %s582, 1
        %s9675 = scalar_lea.sflag [#allocation3], %s9674
        %s9676 = sand.u32 %s582, 1
        %s9677 = scalar_lea.vmem [#allocation2], %s9676
        // Predicated region
        $region121: #{combined_detector.1} parent=119 // pred_check
          %p9678 = pneg %p592
        $region122: #{combined_detector.1} parent=119 // pred_check_branch
          %9680 = sbr.rel (%p9678) target = $region124
        $region123: #{combined_detector.1} parent=119 // pred_region
          %s9682 = ssub.s32 16, 16
          %9683 = vsyncadd %s9675, %s9682
          %s9684 = smul.addr %s39, 16
          %s9685 = scalar_lea.hbm %s25, %s9684
          %s9687 = sshll.u32 %s9677, 4
          %s9688 = int_to_ptr.vmem [resolvable:$true] %s9687
          %9690 = dma.vmem_to_hbm [thread:$0]  %s9688, 16, %s9685, %s9675
        $region124: #{combined_detector.1} parent=119 // pred_fallthru
          _
      $region120: #{combined_detector.1} parent=5 // pred_fallthru
        _
      %p9691 = scmp.le.s32.totalorder 2, %s34
      // Predicated region
      $region125: #{combined_detector.1} parent=5 // pred_check
        %p9692 = pneg %p9691
      $region126: #{combined_detector.1} parent=5 // pred_check_branch
        %9694 = sbr.rel (%p9692) target = $region128
      $region127: #{combined_detector.1} parent=5 // pred_region
        %s9695 = ssub.s32 %s34, 2
        // Predicated region
        $region129: #{combined_detector.1} parent=127 // pred_check
          %p9696 = pneg %p598
        $region130: #{combined_detector.1} parent=127 // pred_check_branch
          %9698 = sbr.rel (%p9696) target = $region132
        $region131: #{combined_detector.1} parent=127 // pred_region
          %s9699 = sand.u32 %s583, 1
          %s9700 = scalar_lea.sflag [#allocation3], %s9699
          %s9701 = sand.u32 %s583, 1
          %s9702 = scalar_lea.vmem [#allocation2], %s9701
          %9703 = dma.done %s9700, 16
        $region132: #{combined_detector.1} parent=127 // pred_fallthru
          _
      $region128: #{combined_detector.1} parent=5 // pred_fallthru
        _
    $region6: #{combined_detector.1} parent=1 // loop_footer
      %s38 = sadd.s32 1, %s34
    $region7: #{combined_detector.1} parent=1 // loop_footer_branch
      %33 = sbr.rel target = $region3
    $region8: #{combined_detector.1} parent=1 // loop_exit
      _
    %9704 = vsyncpa [#allocation3], 1
    %s9705 = scalar_lea.sflag [#allocation3], 1
    %9706 = vsyncpa %s9705, 1

</llo_original>
